<compile_context>
chip_gen: v7x
topology: tpu7x:2x2x1
jax: 0.10.0
libtpu: 0.0.40
codegen_flags: <defaults>
</compile_context>

<pallas_src>
import math
import numpy as np
import jax
import jax.numpy as jnp
from jax.experimental import pallas as pl
from jax.experimental.pallas import tpu as pltpu

# ---------------- constants hard-coded in AE_DCASEBaseline.__init__ ----------------
SAMPLE_RATE = 16000
N_FFT = 1024
WIN_LENGTH = 1024
HOP_LENGTH = 512
N_MELS = 128
FRAMES = 5
T_BINS = 1 + 10 * SAMPLE_RATE // HOP_LENGTH          # 313 time bins (10 s audio)
VECTOR_ARRAY_SIZE = T_BINS - FRAMES + 1              # 309 feature vectors per clip
VEC_DIM = FRAMES * N_MELS                            # 640
N_FREQS = N_FFT // 2 + 1                             # 513
N_FREQS_PAD = 640                                    # lane-dense spectral axis (mult. of 128)
BN_EPS = 1e-5
BN_SCALE = 1.0 / math.sqrt(1.0 + BN_EPS)             # eval BN, default running stats

N_LAYERS = 10   # 4 encoder + 1 bottleneck + 4 decoder + final linear
N_BN = 9        # every layer except the last has BatchNorm1d + ReLU
N_MID = 8       # eight 128x128 hidden layers (incl. zero-padded bottleneck pair)

T_PAD = 320     # 313 time bins  -> multiple of 8 (sublane-dense)
V_PAD = 312     # 309 vectors    -> multiple of 8 ; V_PAD + FRAMES - 1 = 316 <= T_PAD

LOG10_SCALE = np.float32(10.0 / np.log(10.0))

# True -> cast matmul operands to bf16 (f32 accumulation kept): ~2-3x MXU throughput on
# v6e/v7x.  False -> f32 operands, closest to the fp32 PyTorch reference.
USE_BF16_MATMUL = False


# ---------------------------------------------------------------------------
# Mel filterbank (htk mel scale, slaney norm) -- mirrors torchaudio.melscale_fbanks.
# Zero-padded to (N_FREQS_PAD, N_MELS) so the in-kernel matmul sees a lane-dense K axis.
# ---------------------------------------------------------------------------
def _mel_filterbank():
    def hz_to_mel(f):
        return 2595.0 * np.log10(1.0 + f / 700.0)

    def mel_to_hz(m):
        return 700.0 * (10.0 ** (m / 2595.0) - 1.0)

    all_freqs = np.linspace(0.0, SAMPLE_RATE / 2.0, N_FREQS)
    m_pts = np.linspace(hz_to_mel(0.0), hz_to_mel(SAMPLE_RATE / 2.0), N_MELS + 2)
    f_pts = mel_to_hz(m_pts)
    f_diff = f_pts[1:] - f_pts[:-1]
    slopes = f_pts[None, :] - all_freqs[:, None]          # (n_freqs, n_mels+2)
    down = -slopes[:, :-2] / f_diff[:-1]
    up = slopes[:, 2:] / f_diff[1:]
    fb = np.maximum(0.0, np.minimum(down, up))
    enorm = 2.0 / (f_pts[2:N_MELS + 2] - f_pts[:N_MELS])  # slaney normalization
    fb = fb * enorm[None, :]
    fb_pad = np.zeros((N_FREQS_PAD, N_MELS), np.float32)
    fb_pad[:N_FREQS, :] = fb
    return jnp.asarray(fb_pad, jnp.float32)               # (640, 128)


# ---------------------------------------------------------------------------
# STFT power spectrogram (plain JAX glue)
# ---------------------------------------------------------------------------
def _power_spectrogram(x):
    # TODO(synk): the STFT rfft has no Pallas/TPU-kernel equivalent; kept in plain JAX.
    # Frames are built with hop-aligned reshape + concat (50% overlap), no index gather.
    B = x.shape[0]
    pad = N_FFT // 2
    xp = jnp.pad(x, ((0, 0), (pad, pad)), mode="reflect")          # center=True, reflect
    n_frames = 1 + (xp.shape[1] - N_FFT) // HOP_LENGTH             # == T_BINS for 10 s audio
    hops = xp[:, :(n_frames + 1) * HOP_LENGTH].reshape(B, n_frames + 1, HOP_LENGTH)
    frames = jnp.concatenate([hops[:, :-1, :], hops[:, 1:, :]], axis=-1)   # (B, T, 1024)
    n = np.arange(N_FFT)
    win = jnp.asarray(0.5 - 0.5 * np.cos(2.0 * np.pi * n / N_FFT), jnp.float32)  # periodic hann
    spec = jnp.fft.rfft(frames * win, axis=-1)                     # (B, T, 513)
    return (spec.real ** 2 + spec.imag ** 2).astype(jnp.float32)   # power=2.0


# ---------------------------------------------------------------------------
# Fused Pallas kernel: mel matmul + 10*log10 + frame stacking + 10-layer MLP
# ---------------------------------------------------------------------------
def _mm(a, b):
    if USE_BF16_MATMUL:
        a = a.astype(jnp.bfloat16)
        b = b.astype(jnp.bfloat16)
    return jnp.dot(a, b, preferred_element_type=jnp.float32)


def _fused_kernel(p_ref, fbw0_ref, wmid_ref, wlast_ref, bias_ref,
                  orig_ref, recon_ref, logmel_sc, feat_sc):
    # ---- 1) mel filterbank matmul + 10*log10(. + 1e-8)  (per the module's preprocessing)
    mel = _mm(p_ref[...], fbw0_ref[:N_FREQS_PAD, :])              # (T_PAD, 128)
    logmel_sc[...] = LOG10_SCALE * jnp.log(mel + 1e-8)

    # ---- 2) frame stacking in VMEM: feat[v, 128*i + m] = logmel[v + i, m]
    for i in range(FRAMES):
        feat_sc[:, i * N_MELS:(i + 1) * N_MELS] = logmel_sc[i:i + V_PAD, :]

    orig_ref[...] = feat_sc[:VECTOR_ARRAY_SIZE, :]

    # ---- 3) 10 Linear layers (eval BN folded into W/b); ReLU after the first 9
    h = feat_sc[...]                                              # (V_PAD, 640)
    h = jnp.maximum(_mm(h, fbw0_ref[N_FREQS_PAD:, :]) + bias_ref[0:1, :N_MELS], 0.0)
    for li in range(1, 1 + N_MID):                                # layers 1..8, 128x128
        w = wmid_ref[(li - 1) * N_MELS:li * N_MELS, :]
        h = jnp.maximum(_mm(h, w) + bias_ref[li:li + 1, :N_MELS], 0.0)
    h = _mm(h, wlast_ref[...]) + bias_ref[N_LAYERS - 1:N_LAYERS, :VEC_DIM]
    recon_ref[...] = h[:VECTOR_ARRAY_SIZE, :]


def fused_forward_pallas(power_pad, fbw0, wmid, wlast, bias):
    B = power_pad.shape[0]
    flops = B * 2 * (T_PAD * N_FREQS_PAD * N_MELS
                     + V_PAD * (VEC_DIM * N_MELS
                                + N_MID * N_MELS * N_MELS
                                + N_MELS * VEC_DIM))
    bytes_acc = (B * 4 * (T_PAD * N_FREQS_PAD + 2 * VECTOR_ARRAY_SIZE * VEC_DIM)
                 + 4 * (fbw0.size + wmid.size + wlast.size + bias.size))
    out_sds = jax.ShapeDtypeStruct((B, VECTOR_ARRAY_SIZE, VEC_DIM), jnp.float32)

    grid_spec = pltpu.PrefetchScalarGridSpec(
        num_scalar_prefetch=0,
        grid=(B,),
        in_specs=[
            pl.BlockSpec((None, T_PAD, N_FREQS_PAD), lambda b: (b, 0, 0)),
            pl.BlockSpec(fbw0.shape, lambda b: (0, 0)),   # fb rows 0:640, W0 rows 640:1280
            pl.BlockSpec(wmid.shape, lambda b: (0, 0)),   # eight 128x128 hidden weights
            pl.BlockSpec(wlast.shape, lambda b: (0, 0)),  # (128, 640)
            pl.BlockSpec(bias.shape, lambda b: (0, 0)),   # (16, 640) packed biases
        ],
        out_specs=[
            pl.BlockSpec((None, VECTOR_ARRAY_SIZE, VEC_DIM), lambda b: (b, 0, 0)),
            pl.BlockSpec((None, VECTOR_ARRAY_SIZE, VEC_DIM), lambda b: (b, 0, 0)),
        ],
        scratch_shapes=[
            pltpu.VMEM((T_PAD, N_MELS), jnp.float32),     # per-clip log-mel
            pltpu.VMEM((V_PAD, VEC_DIM), jnp.float32),    # per-clip stacked features
        ],
    )
    return pl.pallas_call(
        _fused_kernel,
        out_shape=(out_sds, out_sds),
        grid_spec=grid_spec,
        compiler_params=pltpu.CompilerParams(dimension_semantics=("parallel",)),
        cost_estimate=pl.CostEstimate(flops=int(flops),
                                      transcendentals=int(B * T_PAD * N_MELS),
                                      bytes_accessed=int(bytes_acc)),
    )(power_pad, fbw0, wmid, wlast, bias)


# ---------------------------------------------------------------------------
# Parameter init (deterministic; mirrors xavier_uniform_ weights + zero biases),
# eval-mode BN folded in, bottleneck zero-padded, everything packed into 4 slabs.
# ---------------------------------------------------------------------------
def init_params(key):
    dims = [(VEC_DIM, 128), (128, 128), (128, 128), (128, 128),   # encoder
            (128, 8),                                             # bottleneck
            (8, 128), (128, 128), (128, 128), (128, 128),         # decoder
            (128, VEC_DIM)]                                       # decoder output
    ws, bs = [], []
    for li, (fi, fo) in enumerate(dims):
        key, sub = jax.random.split(key)
        bound = math.sqrt(6.0 / (fi + fo))                        # xavier_uniform
        w = jax.random.uniform(sub, (fi, fo), jnp.float32, -bound, bound)
        b = jnp.zeros((fo,), jnp.float32)
        if li < N_BN:
            # fold eval-mode BN (default running stats): y = (x@W + b) / sqrt(1 + eps)
            # TODO(synk): non-default per-position running stats cannot be folded this way.
            w = w * np.float32(BN_SCALE)
            b = b * np.float32(BN_SCALE)
        ws.append(w)
        bs.append(b)
    # zero-pad the bottleneck pair to lane-dense 128x128 (exact: zero cols/rows cancel)
    ws[4] = jnp.pad(ws[4], ((0, 0), (0, N_MELS - 8)))
    bs[4] = jnp.pad(bs[4], (0, N_MELS - 8))
    ws[5] = jnp.pad(ws[5], ((0, N_MELS - 8), (0, 0)))
    # pack parameters into 4 contiguous slabs (cuts 21 input DMAs to 5)
    fbw0 = jnp.concatenate([_mel_filterbank(), ws[0]], axis=0)    # (1280, 128)
    wmid = jnp.concatenate(ws[1:9], axis=0)                       # (1024, 128)
    wlast = ws[9]                                                 # (128, 640)
    bias = np.zeros((16, VEC_DIM), np.float32)                    # rows 0..9 used, rest pad
    for li, b in enumerate(bs):
        bias[li, :b.shape[0]] = np.asarray(b)
    return fbw0, wmid, wlast, jnp.asarray(bias)


# ---------------------------------------------------------------------------
# Full forward: preprocessing + autoencoder.  Returns (original, reconstruction).
# ---------------------------------------------------------------------------
def ae_dcase_forward(audio, fbw0, wmid, wlast, bias):
    power = _power_spectrogram(audio)                             # (B, 313, 513)
    # single pad: time 313->320 (sublane mult. of 8), freq 513->640 (lane mult. of 128);
    # padded entries are zero -> inert in the mel matmul / unused by frame stacking.
    power_pad = jnp.pad(power, ((0, 0), (0, T_PAD - T_BINS), (0, N_FREQS_PAD - N_FREQS)))
    return fused_forward_pallas(power_pad, fbw0, wmid, wlast, bias)


if __name__ == "__main__":
    key = jax.random.PRNGKey(0)
    pkey, xkey = jax.random.split(key)
    fbw0, wmid, wlast, bias = init_params(pkey)

    # batch=2 clips of 10 s @ 16 kHz (the module hard-codes t_bins for 10 s audio)
    audio = 0.1 * jax.random.normal(xkey, (2, 10 * SAMPLE_RATE), jnp.float32)

    fwd = jax.jit(ae_dcase_forward)
    original, recon = fwd(audio, fbw0, wmid, wlast, bias)
    jax.block_until_ready((original, recon))

    assert original.shape == (2, VECTOR_ARRAY_SIZE, VEC_DIM)
    assert recon.shape == (2, VECTOR_ARRAY_SIZE, VEC_DIM)
    assert bool(jnp.all(jnp.isfinite(original))) and bool(jnp.all(jnp.isfinite(recon)))
    print("KERNEL_OK")
</pallas_src>

<mosaic_0001>
module attributes {stable_mosaic.version = 11 : i64} {
  func.func @_fused_kernel(%arg0: i32, %arg1: memref<1x320x640xf32, #tpu.memory_space<vmem>>, %arg2: memref<1280x128xf32, #tpu.memory_space<vmem>>, %arg3: memref<1024x128xf32, #tpu.memory_space<vmem>>, %arg4: memref<128x640xf32, #tpu.memory_space<vmem>>, %arg5: memref<16x640xf32, #tpu.memory_space<vmem>>, %arg6: memref<1x309x640xf32, #tpu.memory_space<vmem>>, %arg7: memref<1x309x640xf32, #tpu.memory_space<vmem>>, %arg8: memref<320x128xf32, #tpu.memory_space<vmem>>, %arg9: memref<312x640xf32, #tpu.memory_space<vmem>>) attributes {dimension_semantics = [#tpu.dimension_semantics<parallel>], iteration_bounds = array<i64: 2>, scalar_prefetch = 0 : i64, scratch_operands = 2 : i64, tpu.core_type = #tpu.core_type<tc>, window_params = [{transform_indices = @transform_0, window_bounds = array<i64: 1, 320, 640>}, {pipeline_mode = #tpu.pipeline_mode<synchronous>, transform_indices = @transform_1, window_bounds = array<i64: 1280, 128>}, {pipeline_mode = #tpu.pipeline_mode<synchronous>, transform_indices = @transform_2, window_bounds = array<i64: 1024, 128>}, {pipeline_mode = #tpu.pipeline_mode<synchronous>, transform_indices = @transform_3, window_bounds = array<i64: 128, 640>}, {pipeline_mode = #tpu.pipeline_mode<synchronous>, transform_indices = @transform_4, window_bounds = array<i64: 16, 640>}, {transform_indices = @transform_5, window_bounds = array<i64: 1, 309, 640>}, {transform_indices = @transform_6, window_bounds = array<i64: 1, 309, 640>}]} {
    %c0 = arith.constant 0 : index
    %c0_0 = arith.constant 0 : index
    %c0_1 = arith.constant 0 : index
    %0 = vector.load %arg1[%c0, %c0_0, %c0_1] : memref<1x320x640xf32, #tpu.memory_space<vmem>>, vector<1x320x640xf32>
    %1 = vector.shape_cast %0 : vector<1x320x640xf32> to vector<320x640xf32>
    %c0_2 = arith.constant 0 : index
    %c0_3 = arith.constant 0 : index
    %2 = vector.load %arg2[%c0_2, %c0_3] : memref<1280x128xf32, #tpu.memory_space<vmem>>, vector<640x128xf32>
    %cst = arith.constant dense<0.000000e+00> : vector<320x128xf32>
    %3 = tpu.matmul %1, %2, %cst {dimension_numbers = #tpu.dot_dimension_numbers<[1], [0], [0], [1], [0, 0, 1, 1], [], []>} : vector<320x640xf32>, vector<640x128xf32>, vector<320x128xf32> -> vector<320x128xf32>
    %cst_4 = arith.constant 9.99999993E-9 : f32
    %4 = vector.broadcast %cst_4 : f32 to vector<320x128xf32>
    %5 = arith.addf %3, %4 : vector<320x128xf32>
    %6 = math.log %5 : vector<320x128xf32>
    %cst_5 = arith.constant 4.34294462 : f32
    %7 = vector.broadcast %cst_5 : f32 to vector<320x128xf32>
    %8 = arith.mulf %7, %6 : vector<320x128xf32>
    %c0_6 = arith.constant 0 : index
    %c0_7 = arith.constant 0 : index
    %9 = vector.load %arg8[%c0_6, %c0_7] : memref<320x128xf32, #tpu.memory_space<vmem>>, vector<320x128xf32>
    tpu.vector_store %arg8[%c0_6, %c0_7], %8 {strides = array<i32>} : memref<320x128xf32, #tpu.memory_space<vmem>>, vector<320x128xf32>,
    %c0_8 = arith.constant 0 : index
    %c0_9 = arith.constant 0 : index
    %10 = vector.load %arg8[%c0_8, %c0_9] : memref<320x128xf32, #tpu.memory_space<vmem>>, vector<312x128xf32>
    %c0_10 = arith.constant 0 : index
    %c0_11 = arith.constant 0 : index
    %11 = vector.load %arg9[%c0_10, %c0_11] : memref<312x640xf32, #tpu.memory_space<vmem>>, vector<312x128xf32>
    tpu.vector_store %arg9[%c0_10, %c0_11], %10 {strides = array<i32>} : memref<312x640xf32, #tpu.memory_space<vmem>>, vector<312x128xf32>,
    %c1 = arith.constant 1 : index
    %c0_12 = arith.constant 0 : index
    %12 = vector.load %arg8[%c1, %c0_12] : memref<320x128xf32, #tpu.memory_space<vmem>>, vector<312x128xf32>
    %c0_13 = arith.constant 0 : index
    %c128 = arith.constant 128 : index
    %13 = vector.load %arg9[%c0_13, %c128] : memref<312x640xf32, #tpu.memory_space<vmem>>, vector<312x128xf32>
    tpu.vector_store %arg9[%c0_13, %c128], %12 {strides = array<i32>} : memref<312x640xf32, #tpu.memory_space<vmem>>, vector<312x128xf32>,
    %c2 = arith.constant 2 : index
    %c0_14 = arith.constant 0 : index
    %14 = vector.load %arg8[%c2, %c0_14] : memref<320x128xf32, #tpu.memory_space<vmem>>, vector<312x128xf32>
    %c0_15 = arith.constant 0 : index
    %c256 = arith.constant 256 : index
    %15 = vector.load %arg9[%c0_15, %c256] : memref<312x640xf32, #tpu.memory_space<vmem>>, vector<312x128xf32>
    tpu.vector_store %arg9[%c0_15, %c256], %14 {strides = array<i32>} : memref<312x640xf32, #tpu.memory_space<vmem>>, vector<312x128xf32>,
    %c3 = arith.constant 3 : index
    %c0_16 = arith.constant 0 : index
    %16 = vector.load %arg8[%c3, %c0_16] : memref<320x128xf32, #tpu.memory_space<vmem>>, vector<312x128xf32>
    %c0_17 = arith.constant 0 : index
    %c384 = arith.constant 384 : index
    %17 = vector.load %arg9[%c0_17, %c384] : memref<312x640xf32, #tpu.memory_space<vmem>>, vector<312x128xf32>
    tpu.vector_store %arg9[%c0_17, %c384], %16 {strides = array<i32>} : memref<312x640xf32, #tpu.memory_space<vmem>>, vector<312x128xf32>,
    %c4 = arith.constant 4 : index
    %c0_18 = arith.constant 0 : index
    %18 = vector.load %arg8[%c4, %c0_18] : memref<320x128xf32, #tpu.memory_space<vmem>>, vector<312x128xf32>
    %c0_19 = arith.constant 0 : index
    %c512 = arith.constant 512 : index
    %19 = vector.load %arg9[%c0_19, %c512] : memref<312x640xf32, #tpu.memory_space<vmem>>, vector<312x128xf32>
    tpu.vector_store %arg9[%c0_19, %c512], %18 {strides = array<i32>} : memref<312x640xf32, #tpu.memory_space<vmem>>, vector<312x128xf32>,
    %c0_20 = arith.constant 0 : index
    %c0_21 = arith.constant 0 : index
    %20 = vector.load %arg9[%c0_20, %c0_21] : memref<312x640xf32, #tpu.memory_space<vmem>>, vector<309x640xf32>
    %c0_22 = arith.constant 0 : index
    %c0_23 = arith.constant 0 : index
    %c0_24 = arith.constant 0 : index
    %21 = vector.load %arg6[%c0_22, %c0_23, %c0_24] : memref<1x309x640xf32, #tpu.memory_space<vmem>>, vector<1x309x640xf32>
    %22 = vector.shape_cast %21 : vector<1x309x640xf32> to vector<309x640xf32>
    %23 = vector.shape_cast %20 : vector<309x640xf32> to vector<1x309x640xf32>
    tpu.vector_store %arg6[%c0_22, %c0_23, %c0_24], %23 {strides = array<i32>} : memref<1x309x640xf32, #tpu.memory_space<vmem>>, vector<1x309x640xf32>,
    %c0_25 = arith.constant 0 : index
    %c0_26 = arith.constant 0 : index
    %24 = vector.load %arg9[%c0_25, %c0_26] : memref<312x640xf32, #tpu.memory_space<vmem>>, vector<312x640xf32>
    %c640 = arith.constant 640 : index
    %c0_27 = arith.constant 0 : index
    %25 = vector.load %arg2[%c640, %c0_27] : memref<1280x128xf32, #tpu.memory_space<vmem>>, vector<640x128xf32>
    %cst_28 = arith.constant dense<0.000000e+00> : vector<312x128xf32>
    %26 = tpu.matmul %24, %25, %cst_28 {dimension_numbers = #tpu.dot_dimension_numbers<[1], [0], [0], [1], [0, 0, 1, 1], [], []>} : vector<312x640xf32>, vector<640x128xf32>, vector<312x128xf32> -> vector<312x128xf32>
    %c0_29 = arith.constant 0 : index
    %c0_30 = arith.constant 0 : index
    %27 = vector.load %arg5[%c0_29, %c0_30] : memref<16x640xf32, #tpu.memory_space<vmem>>, vector<1x128xf32>
    %28 = vector.broadcast %27 : vector<1x128xf32> to vector<312x128xf32>
    %29 = arith.addf %26, %28 : vector<312x128xf32>
    %cst_31 = arith.constant 0.000000e+00 : f32
    %30 = vector.broadcast %cst_31 : f32 to vector<312x128xf32>
    %31 = arith.maximumf %29, %30 : vector<312x128xf32>
    %c0_32 = arith.constant 0 : index
    %c0_33 = arith.constant 0 : index
    %32 = vector.load %arg3[%c0_32, %c0_33] : memref<1024x128xf32, #tpu.memory_space<vmem>>, vector<128x128xf32>
    %cst_34 = arith.constant dense<0.000000e+00> : vector<312x128xf32>
    %33 = tpu.matmul %31, %32, %cst_34 {dimension_numbers = #tpu.dot_dimension_numbers<[1], [0], [0], [1], [0, 0, 1, 1], [], []>} : vector<312x128xf32>, vector<128x128xf32>, vector<312x128xf32> -> vector<312x128xf32>
    %c1_35 = arith.constant 1 : index
    %c0_36 = arith.constant 0 : index
    %34 = vector.load %arg5[%c1_35, %c0_36] : memref<16x640xf32, #tpu.memory_space<vmem>>, vector<1x128xf32>
    %35 = vector.broadcast %34 : vector<1x128xf32> to vector<312x128xf32>
    %36 = arith.addf %33, %35 : vector<312x128xf32>
    %cst_37 = arith.constant 0.000000e+00 : f32
    %37 = vector.broadcast %cst_37 : f32 to vector<312x128xf32>
    %38 = arith.maximumf %36, %37 : vector<312x128xf32>
    %c128_38 = arith.constant 128 : index
    %c0_39 = arith.constant 0 : index
    %39 = vector.load %arg3[%c128_38, %c0_39] : memref<1024x128xf32, #tpu.memory_space<vmem>>, vector<128x128xf32>
    %cst_40 = arith.constant dense<0.000000e+00> : vector<312x128xf32>
    %40 = tpu.matmul %38, %39, %cst_40 {dimension_numbers = #tpu.dot_dimension_numbers<[1], [0], [0], [1], [0, 0, 1, 1], [], []>} : vector<312x128xf32>, vector<128x128xf32>, vector<312x128xf32> -> vector<312x128xf32>
    %c2_41 = arith.constant 2 : index
    %c0_42 = arith.constant 0 : index
    %41 = vector.load %arg5[%c2_41, %c0_42] : memref<16x640xf32, #tpu.memory_space<vmem>>, vector<1x128xf32>
    %42 = vector.broadcast %41 : vector<1x128xf32> to vector<312x128xf32>
    %43 = arith.addf %40, %42 : vector<312x128xf32>
    %cst_43 = arith.constant 0.000000e+00 : f32
    %44 = vector.broadcast %cst_43 : f32 to vector<312x128xf32>
    %45 = arith.maximumf %43, %44 : vector<312x128xf32>
    %c256_44 = arith.constant 256 : index
    %c0_45 = arith.constant 0 : index
    %46 = vector.load %arg3[%c256_44, %c0_45] : memref<1024x128xf32, #tpu.memory_space<vmem>>, vector<128x128xf32>
    %cst_46 = arith.constant dense<0.000000e+00> : vector<312x128xf32>
    %47 = tpu.matmul %45, %46, %cst_46 {dimension_numbers = #tpu.dot_dimension_numbers<[1], [0], [0], [1], [0, 0, 1, 1], [], []>} : vector<312x128xf32>, vector<128x128xf32>, vector<312x128xf32> -> vector<312x128xf32>
    %c3_47 = arith.constant 3 : index
    %c0_48 = arith.constant 0 : index
    %48 = vector.load %arg5[%c3_47, %c0_48] : memref<16x640xf32, #tpu.memory_space<vmem>>, vector<1x128xf32>
    %49 = vector.broadcast %48 : vector<1x128xf32> to vector<312x128xf32>
    %50 = arith.addf %47, %49 : vector<312x128xf32>
    %cst_49 = arith.constant 0.000000e+00 : f32
    %51 = vector.broadcast %cst_49 : f32 to vector<312x128xf32>
    %52 = arith.maximumf %50, %51 : vector<312x128xf32>
    %c384_50 = arith.constant 384 : index
    %c0_51 = arith.constant 0 : index
    %53 = vector.load %arg3[%c384_50, %c0_51] : memref<1024x128xf32, #tpu.memory_space<vmem>>, vector<128x128xf32>
    %cst_52 = arith.constant dense<0.000000e+00> : vector<312x128xf32>
    %54 = tpu.matmul %52, %53, %cst_52 {dimension_numbers = #tpu.dot_dimension_numbers<[1], [0], [0], [1], [0, 0, 1, 1], [], []>} : vector<312x128xf32>, vector<128x128xf32>, vector<312x128xf32> -> vector<312x128xf32>
    %c4_53 = arith.constant 4 : index
    %c0_54 = arith.constant 0 : index
    %55 = vector.load %arg5[%c4_53, %c0_54] : memref<16x640xf32, #tpu.memory_space<vmem>>, vector<1x128xf32>
    %56 = vector.broadcast %55 : vector<1x128xf32> to vector<312x128xf32>
    %57 = arith.addf %54, %56 : vector<312x128xf32>
    %cst_55 = arith.constant 0.000000e+00 : f32
    %58 = vector.broadcast %cst_55 : f32 to vector<312x128xf32>
    %59 = arith.maximumf %57, %58 : vector<312x128xf32>
    %c512_56 = arith.constant 512 : index
    %c0_57 = arith.constant 0 : index
    %60 = vector.load %arg3[%c512_56, %c0_57] : memref<1024x128xf32, #tpu.memory_space<vmem>>, vector<128x128xf32>
    %cst_58 = arith.constant dense<0.000000e+00> : vector<312x128xf32>
    %61 = tpu.matmul %59, %60, %cst_58 {dimension_numbers = #tpu.dot_dimension_numbers<[1], [0], [0], [1], [0, 0, 1, 1], [], []>} : vector<312x128xf32>, vector<128x128xf32>, vector<312x128xf32> -> vector<312x128xf32>
    %c5 = arith.constant 5 : index
    %c0_59 = arith.constant 0 : index
    %62 = vector.load %arg5[%c5, %c0_59] : memref<16x640xf32, #tpu.memory_space<vmem>>, vector<1x128xf32>
    %63 = vector.broadcast %62 : vector<1x128xf32> to vector<312x128xf32>
    %64 = arith.addf %61, %63 : vector<312x128xf32>
    %cst_60 = arith.constant 0.000000e+00 : f32
    %65 = vector.broadcast %cst_60 : f32 to vector<312x128xf32>
    %66 = arith.maximumf %64, %65 : vector<312x128xf32>
    %c640_61 = arith.constant 640 : index
    %c0_62 = arith.constant 0 : index
    %67 = vector.load %arg3[%c640_61, %c0_62] : memref<1024x128xf32, #tpu.memory_space<vmem>>, vector<128x128xf32>
    %cst_63 = arith.constant dense<0.000000e+00> : vector<312x128xf32>
    %68 = tpu.matmul %66, %67, %cst_63 {dimension_numbers = #tpu.dot_dimension_numbers<[1], [0], [0], [1], [0, 0, 1, 1], [], []>} : vector<312x128xf32>, vector<128x128xf32>, vector<312x128xf32> -> vector<312x128xf32>
    %c6 = arith.constant 6 : index
    %c0_64 = arith.constant 0 : index
    %69 = vector.load %arg5[%c6, %c0_64] : memref<16x640xf32, #tpu.memory_space<vmem>>, vector<1x128xf32>
    %70 = vector.broadcast %69 : vector<1x128xf32> to vector<312x128xf32>
    %71 = arith.addf %68, %70 : vector<312x128xf32>
    %cst_65 = arith.constant 0.000000e+00 : f32
    %72 = vector.broadcast %cst_65 : f32 to vector<312x128xf32>
    %73 = arith.maximumf %71, %72 : vector<312x128xf32>
    %c768 = arith.constant 768 : index
    %c0_66 = arith.constant 0 : index
    %74 = vector.load %arg3[%c768, %c0_66] : memref<1024x128xf32, #tpu.memory_space<vmem>>, vector<128x128xf32>
    %cst_67 = arith.constant dense<0.000000e+00> : vector<312x128xf32>
    %75 = tpu.matmul %73, %74, %cst_67 {dimension_numbers = #tpu.dot_dimension_numbers<[1], [0], [0], [1], [0, 0, 1, 1], [], []>} : vector<312x128xf32>, vector<128x128xf32>, vector<312x128xf32> -> vector<312x128xf32>
    %c7 = arith.constant 7 : index
    %c0_68 = arith.constant 0 : index
    %76 = vector.load %arg5[%c7, %c0_68] : memref<16x640xf32, #tpu.memory_space<vmem>>, vector<1x128xf32>
    %77 = vector.broadcast %76 : vector<1x128xf32> to vector<312x128xf32>
    %78 = arith.addf %75, %77 : vector<312x128xf32>
    %cst_69 = arith.constant 0.000000e+00 : f32
    %79 = vector.broadcast %cst_69 : f32 to vector<312x128xf32>
    %80 = arith.maximumf %78, %79 : vector<312x128xf32>
    %c896 = arith.constant 896 : index
    %c0_70 = arith.constant 0 : index
    %81 = vector.load %arg3[%c896, %c0_70] : memref<1024x128xf32, #tpu.memory_space<vmem>>, vector<128x128xf32>
    %cst_71 = arith.constant dense<0.000000e+00> : vector<312x128xf32>
    %82 = tpu.matmul %80, %81, %cst_71 {dimension_numbers = #tpu.dot_dimension_numbers<[1], [0], [0], [1], [0, 0, 1, 1], [], []>} : vector<312x128xf32>, vector<128x128xf32>, vector<312x128xf32> -> vector<312x128xf32>
    %c8 = arith.constant 8 : index
    %c0_72 = arith.constant 0 : index
    %83 = vector.load %arg5[%c8, %c0_72] : memref<16x640xf32, #tpu.memory_space<vmem>>, vector<1x128xf32>
    %84 = vector.broadcast %83 : vector<1x128xf32> to vector<312x128xf32>
    %85 = arith.addf %82, %84 : vector<312x128xf32>
    %cst_73 = arith.constant 0.000000e+00 : f32
    %86 = vector.broadcast %cst_73 : f32 to vector<312x128xf32>
    %87 = arith.maximumf %85, %86 : vector<312x128xf32>
    %c0_74 = arith.constant 0 : index
    %c0_75 = arith.constant 0 : index
    %88 = vector.load %arg4[%c0_74, %c0_75] : memref<128x640xf32, #tpu.memory_space<vmem>>, vector<128x640xf32>
    %cst_76 = arith.constant dense<0.000000e+00> : vector<312x640xf32>
    %89 = tpu.matmul %87, %88, %cst_76 {dimension_numbers = #tpu.dot_dimension_numbers<[1], [0], [0], [1], [0, 0, 1, 1], [], []>} : vector<312x128xf32>, vector<128x640xf32>, vector<312x640xf32> -> vector<312x640xf32>
    %c9 = arith.constant 9 : index
    %c0_77 = arith.constant 0 : index
    %90 = vector.load %arg5[%c9, %c0_77] : memref<16x640xf32, #tpu.memory_space<vmem>>, vector<1x640xf32>
    %91 = vector.broadcast %90 : vector<1x640xf32> to vector<312x640xf32>
    %92 = arith.addf %89, %91 : vector<312x640xf32>
    %93 = vector.extract_strided_slice %92 {offsets = [0, 0], sizes = [309, 640], strides = [1, 1]} : vector<312x640xf32> to vector<309x640xf32>
    %c0_78 = arith.constant 0 : index
    %c0_79 = arith.constant 0 : index
    %c0_80 = arith.constant 0 : index
    %94 = vector.load %arg7[%c0_78, %c0_79, %c0_80] : memref<1x309x640xf32, #tpu.memory_space<vmem>>, vector<1x309x640xf32>
    %95 = vector.shape_cast %94 : vector<1x309x640xf32> to vector<309x640xf32>
    %96 = vector.shape_cast %93 : vector<309x640xf32> to vector<1x309x640xf32>
    tpu.vector_store %arg7[%c0_78, %c0_79, %c0_80], %96 {strides = array<i32>} : memref<1x309x640xf32, #tpu.memory_space<vmem>>, vector<1x309x640xf32>,
    return
  }
  func.func @transform_0(%arg0: i32) -> (i32, i32, i32) {
    %c0_i32 = arith.constant 0 : i32
    %c0_i32_0 = arith.constant 0 : i32
    %c0_i32_1 = arith.constant 0 : i32
    return %arg0, %c0_i32, %c0_i32_0 : i32, i32, i32
  }
  func.func @transform_1(%arg0: i32) -> (i32, i32) {
    %c0_i32 = arith.constant 0 : i32
    %c0_i32_0 = arith.constant 0 : i32
    %c0_i32_1 = arith.constant 0 : i32
    return %c0_i32, %c0_i32_0 : i32, i32
  }
  func.func @transform_2(%arg0: i32) -> (i32, i32) {
    %c0_i32 = arith.constant 0 : i32
    %c0_i32_0 = arith.constant 0 : i32
    %c0_i32_1 = arith.constant 0 : i32
    return %c0_i32, %c0_i32_0 : i32, i32
  }
  func.func @transform_3(%arg0: i32) -> (i32, i32) {
    %c0_i32 = arith.constant 0 : i32
    %c0_i32_0 = arith.constant 0 : i32
    %c0_i32_1 = arith.constant 0 : i32
    return %c0_i32, %c0_i32_0 : i32, i32
  }
  func.func @transform_4(%arg0: i32) -> (i32, i32) {
    %c0_i32 = arith.constant 0 : i32
    %c0_i32_0 = arith.constant 0 : i32
    %c0_i32_1 = arith.constant 0 : i32
    return %c0_i32, %c0_i32_0 : i32, i32
  }
  func.func @transform_5(%arg0: i32) -> (i32, i32, i32) {
    %c0_i32 = arith.constant 0 : i32
    %c0_i32_0 = arith.constant 0 : i32
    %c0_i32_1 = arith.constant 0 : i32
    return %arg0, %c0_i32, %c0_i32_0 : i32, i32, i32
  }
  func.func @transform_6(%arg0: i32) -> (i32, i32, i32) {
    %c0_i32 = arith.constant 0 : i32
    %c0_i32_0 = arith.constant 0 : i32
    %c0_i32_1 = arith.constant 0 : i32
    return %arg0, %c0_i32, %c0_i32_0 : i32, i32, i32
  }
}

</mosaic_0001>

<llo_original>
// kernel: ae_dcase_forward.1
$region0: #{ae_dcase_forward.1}
  #allocation0 [shape = 'u32[]', space=smem, size = 0x4, offset = 0x4, fixed_abs, tag = 'smem constant byte address 0x4 - core index']
  #allocation1 [shape = 'u32[144,128]{1,0:T(1,128)}', space=vmem, size = 0x12000, scoped, tag = 'internal scratch']
  #allocation2 [shape = 'f32[320,128]{1,0:T(8,128)}', space=vmem, size = 0x28000, scoped, tag = 'scratch operand']
  #allocation3 [shape = 'f32[312,640]{1,0:T(8,128)}', space=vmem, size = 0xc3000, scoped, tag = 'scratch operand']
  %s0 = inlined_call_operand.vmem [shape: f32[2,320,640], index: 0, kind: input, shape index: {}]
  %s1 = inlined_call_operand.vmem [shape: f32[1280,128], index: 1, kind: input, shape index: {}]
  %s2 = inlined_call_operand.vmem [shape: f32[1024,128], index: 2, kind: input, shape index: {}]
  %s3 = inlined_call_operand.vmem [shape: f32[128,640], index: 3, kind: input, shape index: {}]
  %s4 = inlined_call_operand.vmem [shape: f32[16,640], index: 4, kind: input, shape index: {}]
  %s5 = inlined_call_operand.vmem [shape: f32[2,309,640], index: 5, kind: output, shape index: {0}]
  %s6 = inlined_call_operand.vmem [shape: f32[2,309,640], index: 6, kind: output, shape index: {1}]
  %7 = xla_tuple %s5, %s6
  %s8 = sld [smem:[#allocation0]]
  $region61: #{ae_dcase_forward.1} parent=0
    _
  %s10 = ssub.s32 1, %s8
  %s11 = scalar_select 0, %s10, %s8
  loop: start=0, step=1, limit=4
  $region2: #{ae_dcase_forward.1} parent=0 // loop_pre_header
    _
  $region3: #{ae_dcase_forward.1} parent=0 // loop_header
    %s13 = sphi 0, %s17
    %p14 = scmp.ge.s32.totalorder %s13, 4
    %s23 = sphi 0, %s25
    %s26 = sphi 0, %s23
    %s27 = sphi 0, %s26
    %s43 = sphi 0, %s27
    %s47 = sphi 0, %s47
    %s49 = sphi 0, %s47
    %s50 = sphi 0, %s49
    %s64 = sphi 0, %s50
    %s68 = sphi 0, %s68
    %s70 = sphi 0, %s68
    %s71 = sphi 0, %s70
    %s85 = sphi 0, %s71
    %s89 = sphi 0, %s89
    %s91 = sphi 0, %s89
    %s92 = sphi 0, %s91
    %s106 = sphi 0, %s92
    %s110 = sphi 0, %s110
    %s112 = sphi 0, %s110
    %s113 = sphi 0, %s112
    %s127 = sphi 0, %s113
    %s133 = sphi 0, %s135
    %s136 = sphi 0, %s133
    %s137 = sphi 0, %s136
    %s153 = sphi 0, %s137
    %s159 = sphi 0, %s161
    %s162 = sphi 0, %s159
    %s163 = sphi 0, %s162
    %s179 = sphi 0, %s163
  $region4: #{ae_dcase_forward.1} parent=0 // loop_header_branch
    %16 = sbr.rel (%p14) target = $region8
  $region5: #{ae_dcase_forward.1} parent=0 // loop_body
    %s18 = ssub.s32 %s13, 1
    %s19 = ssub.s32 %s13, 2
    %s20 = sadd.s32 %s13, 1
    %s21 = ssub.s32 %s13, %s20
    %p22 = scmp.eq.s32.totalorder %s21, 0
    %s24 = sadd.s32 %s23, 1
    %s25 = scalar_select %p22, %s23, %s24
    %p28 = pneg %p22
    %p29 = scmp.eq.s32.totalorder %s13, 1
    %p30 = por %p28, %p29
    %p31 = scmp.ne.s32.totalorder %s23, %s26
    %p32 = scmp.eq.s32.totalorder %s13, 0
    %p33 = por %p31, %p32
    %p34 = scmp.ne.s32.totalorder %s23, %s26
    %p35 = scmp.eq.s32.totalorder %s18, 1
    %p36 = por %p34, %p35
    %p37 = scmp.ne.s32.totalorder %s26, %s27
    %p38 = scmp.eq.s32.totalorder %s18, 0
    %p39 = por %p37, %p38
    %p40 = scmp.ne.s32.totalorder %s26, %s27
    %p41 = scmp.eq.s32.totalorder %s19, 1
    %p42 = por %p40, %p41
    %p44 = scmp.ne.s32.totalorder %s27, %s43
    %p45 = scmp.eq.s32.totalorder %s19, 0
    %p46 = por %p44, %p45
    %s48 = sadd.s32 %s47, 1
    %p51 = scmp.eq.s32.totalorder %s13, 1
    %p52 = scmp.ne.s32.totalorder %s47, %s49
    %p53 = scmp.eq.s32.totalorder %s13, 0
    %p54 = por %p52, %p53
    %p55 = scmp.ne.s32.totalorder %s47, %s49
    %p56 = scmp.eq.s32.totalorder %s18, 1
    %p57 = por %p55, %p56
    %p58 = scmp.ne.s32.totalorder %s49, %s50
    %p59 = scmp.eq.s32.totalorder %s18, 0
    %p60 = por %p58, %p59
    %p61 = scmp.ne.s32.totalorder %s49, %s50
    %p62 = scmp.eq.s32.totalorder %s19, 1
    %p63 = por %p61, %p62
    %p65 = scmp.ne.s32.totalorder %s50, %s64
    %p66 = scmp.eq.s32.totalorder %s19, 0
    %p67 = por %p65, %p66
    %s69 = sadd.s32 %s68, 1
    %p72 = scmp.eq.s32.totalorder %s13, 1
    %p73 = scmp.ne.s32.totalorder %s68, %s70
    %p74 = scmp.eq.s32.totalorder %s13, 0
    %p75 = por %p73, %p74
    %p76 = scmp.ne.s32.totalorder %s68, %s70
    %p77 = scmp.eq.s32.totalorder %s18, 1
    %p78 = por %p76, %p77
    %p79 = scmp.ne.s32.totalorder %s70, %s71
    %p80 = scmp.eq.s32.totalorder %s18, 0
    %p81 = por %p79, %p80
    %p82 = scmp.ne.s32.totalorder %s70, %s71
    %p83 = scmp.eq.s32.totalorder %s19, 1
    %p84 = por %p82, %p83
    %p86 = scmp.ne.s32.totalorder %s71, %s85
    %p87 = scmp.eq.s32.totalorder %s19, 0
    %p88 = por %p86, %p87
    %s90 = sadd.s32 %s89, 1
    %p93 = scmp.eq.s32.totalorder %s13, 1
    %p94 = scmp.ne.s32.totalorder %s89, %s91
    %p95 = scmp.eq.s32.totalorder %s13, 0
    %p96 = por %p94, %p95
    %p97 = scmp.ne.s32.totalorder %s89, %s91
    %p98 = scmp.eq.s32.totalorder %s18, 1
    %p99 = por %p97, %p98
    %p100 = scmp.ne.s32.totalorder %s91, %s92
    %p101 = scmp.eq.s32.totalorder %s18, 0
    %p102 = por %p100, %p101
    %p103 = scmp.ne.s32.totalorder %s91, %s92
    %p104 = scmp.eq.s32.totalorder %s19, 1
    %p105 = por %p103, %p104
    %p107 = scmp.ne.s32.totalorder %s92, %s106
    %p108 = scmp.eq.s32.totalorder %s19, 0
    %p109 = por %p107, %p108
    %s111 = sadd.s32 %s110, 1
    %p114 = scmp.eq.s32.totalorder %s13, 1
    %p115 = scmp.ne.s32.totalorder %s110, %s112
    %p116 = scmp.eq.s32.totalorder %s13, 0
    %p117 = por %p115, %p116
    %p118 = scmp.ne.s32.totalorder %s110, %s112
    %p119 = scmp.eq.s32.totalorder %s18, 1
    %p120 = por %p118, %p119
    %p121 = scmp.ne.s32.totalorder %s112, %s113
    %p122 = scmp.eq.s32.totalorder %s18, 0
    %p123 = por %p121, %p122
    %p124 = scmp.ne.s32.totalorder %s112, %s113
    %p125 = scmp.eq.s32.totalorder %s19, 1
    %p126 = por %p124, %p125
    %p128 = scmp.ne.s32.totalorder %s113, %s127
    %p129 = scmp.eq.s32.totalorder %s19, 0
    %p130 = por %p128, %p129
    %s131 = ssub.s32 %s13, %s20
    %p132 = scmp.eq.s32.totalorder %s131, 0
    %s134 = sadd.s32 %s133, 1
    %s135 = scalar_select %p132, %s133, %s134
    %p138 = pneg %p132
    %p139 = scmp.eq.s32.totalorder %s13, 1
    %p140 = por %p138, %p139
    %p141 = scmp.ne.s32.totalorder %s133, %s136
    %p142 = scmp.eq.s32.totalorder %s13, 0
    %p143 = por %p141, %p142
    %p144 = scmp.ne.s32.totalorder %s133, %s136
    %p145 = scmp.eq.s32.totalorder %s18, 1
    %p146 = por %p144, %p145
    %p147 = scmp.ne.s32.totalorder %s136, %s137
    %p148 = scmp.eq.s32.totalorder %s18, 0
    %p149 = por %p147, %p148
    %p150 = scmp.ne.s32.totalorder %s136, %s137
    %p151 = scmp.eq.s32.totalorder %s19, 1
    %p152 = por %p150, %p151
    %p154 = scmp.ne.s32.totalorder %s137, %s153
    %p155 = scmp.eq.s32.totalorder %s19, 0
    %p156 = por %p154, %p155
    %s157 = ssub.s32 %s13, %s20
    %p158 = scmp.eq.s32.totalorder %s157, 0
    %s160 = sadd.s32 %s159, 1
    %s161 = scalar_select %p158, %s159, %s160
    %p164 = pneg %p158
    %p165 = scmp.eq.s32.totalorder %s13, 1
    %p166 = por %p164, %p165
    %p167 = scmp.ne.s32.totalorder %s159, %s162
    %p168 = scmp.eq.s32.totalorder %s13, 0
    %p169 = por %p167, %p168
    %p170 = scmp.ne.s32.totalorder %s159, %s162
    %p171 = scmp.eq.s32.totalorder %s18, 1
    %p172 = por %p170, %p171
    %p173 = scmp.ne.s32.totalorder %s162, %s163
    %p174 = scmp.eq.s32.totalorder %s18, 0
    %p175 = por %p173, %p174
    %p176 = scmp.ne.s32.totalorder %s162, %s163
    %p177 = scmp.eq.s32.totalorder %s19, 1
    %p178 = por %p176, %p177
    %p180 = scmp.ne.s32.totalorder %s163, %s179
    %p181 = scmp.eq.s32.totalorder %s19, 0
    %p182 = por %p180, %p181
    %p183 = scmp.le.s32.totalorder 1, %s13
    %p184 = scmp.lt.s32.totalorder %s13, 3
    %p185 = pnand %p183, %p184
    %p186 = pneg %p185
    // Predicated region
    $region9: #{ae_dcase_forward.1} parent=5 // pred_check
      _
    $region10: #{ae_dcase_forward.1} parent=5 // pred_check_branch
      %188 = sbr.rel (%p185) target = $region12
    $region11: #{ae_dcase_forward.1} parent=5 // pred_region
      %s189 = ssub.s32 %s13, 1
      // Predicated region
      $region13: #{ae_dcase_forward.1} parent=11 // pred_check
        %p190 = pneg %p60
      $region14: #{ae_dcase_forward.1} parent=11 // pred_check_branch
        %192 = sbr.rel (%p190) target = $region16
      $region15: #{ae_dcase_forward.1} parent=11 // pred_region
        _
      $region16: #{ae_dcase_forward.1} parent=11 // pred_fallthru
        _
      // Predicated region
      $region17: #{ae_dcase_forward.1} parent=11 // pred_check
        %p193 = pneg %p81
      $region18: #{ae_dcase_forward.1} parent=11 // pred_check_branch
        %195 = sbr.rel (%p193) target = $region20
      $region19: #{ae_dcase_forward.1} parent=11 // pred_region
        _
      $region20: #{ae_dcase_forward.1} parent=11 // pred_fallthru
        _
      // Predicated region
      $region21: #{ae_dcase_forward.1} parent=11 // pred_check
        %p196 = pneg %p102
      $region22: #{ae_dcase_forward.1} parent=11 // pred_check_branch
        %198 = sbr.rel (%p196) target = $region24
      $region23: #{ae_dcase_forward.1} parent=11 // pred_region
        _
      $region24: #{ae_dcase_forward.1} parent=11 // pred_fallthru
        _
      // Predicated region
      $region25: #{ae_dcase_forward.1} parent=11 // pred_check
        %p199 = pneg %p123
      $region26: #{ae_dcase_forward.1} parent=11 // pred_check_branch
        %201 = sbr.rel (%p199) target = $region28
      $region27: #{ae_dcase_forward.1} parent=11 // pred_region
        _
      $region28: #{ae_dcase_forward.1} parent=11 // pred_fallthru
        _
    $region12: #{ae_dcase_forward.1} parent=5 // pred_fallthru
      _
    %p202 = scmp.lt.s32.totalorder %s13, 2
    // Predicated region
    $region29: #{ae_dcase_forward.1} parent=5 // pred_check
      %p203 = pneg %p202
    $region30: #{ae_dcase_forward.1} parent=5 // pred_check_branch
      %205 = sbr.rel (%p203) target = $region32
    $region31: #{ae_dcase_forward.1} parent=5 // pred_region
      // Predicated region
      $region33: #{ae_dcase_forward.1} parent=31 // pred_check
        %p206 = pneg %p33
      $region34: #{ae_dcase_forward.1} parent=31 // pred_check_branch
        %208 = sbr.rel (%p206) target = $region36
      $region35: #{ae_dcase_forward.1} parent=31 // pred_region
        %p209 = scmp.lt.s32.totalorder %s13, 1
        %s210 = scalar_select %p209, %s13, 1
        %s211 = smul.addr %s210, 200
        %s212 = smul.addr %s211, 8
        %s213 = scalar_lea.vmem %s0, %s212
      $region36: #{ae_dcase_forward.1} parent=31 // pred_fallthru
        _
    $region32: #{ae_dcase_forward.1} parent=5 // pred_fallthru
      _
    %p214 = scmp.le.s32.totalorder 1, %s13
    %p215 = scmp.lt.s32.totalorder %s13, 3
    %p216 = pnand %p214, %p215
    %p217 = pneg %p216
    // Predicated region
    $region37: #{ae_dcase_forward.1} parent=5 // pred_check
      _
    $region38: #{ae_dcase_forward.1} parent=5 // pred_check_branch
      %219 = sbr.rel (%p216) target = $region40
    $region39: #{ae_dcase_forward.1} parent=5 // pred_region
      %s220 = ssub.s32 %s13, 1
      %p221 = scmp.lt.s32.totalorder %s18, 1
      %s222 = scalar_select %p221, %s18, 1
      %s223 = smul.addr %s222, 200
      %s224 = smul.addr %s223, 8
      %s225 = scalar_lea.vmem %s0, %s224
      %p226 = pneg %p39
      %p227 = pneg %p36
      %p228 = pneg %p60
      %p229 = pneg %p57
      %p230 = pneg %p81
      %p231 = pneg %p78
      %p232 = pneg %p102
      %p233 = pneg %p99
      %p234 = pneg %p123
      %p235 = pneg %p120
      %p236 = pneg %p149
      %p237 = pneg %p146
      %p238 = scmp.lt.s32.totalorder %s18, 1
      %s239 = scalar_select %p238, %s18, 1
      %s240 = smul.addr %s239, 195
      %s241 = smul.addr %s240, 8
      %s242 = scalar_lea.vmem %s5, %s241
      %p243 = pneg %p175
      %p244 = pneg %p172
      %p245 = scmp.lt.s32.totalorder %s18, 1
      %s246 = scalar_select %p245, %s18, 1
      %s247 = smul.addr %s246, 195
      %s248 = smul.addr %s247, 8
      %s249 = scalar_lea.vmem %s6, %s248
      %p250 = scmp.lt.s32.totalorder %s18, 1
      %s251 = scalar_select %p250, %s18, 1
      %s252 = smul.addr %s251, 200
      %s253 = smul.addr %s252, 8
      %s254 = scalar_lea.vmem %s0, %s253
      %p255 = scmp.lt.s32.totalorder %s18, 1
      %s256 = scalar_select %p255, %s18, 1
      %s257 = smul.addr %s256, 195
      %s258 = smul.addr %s257, 8
      %s259 = scalar_lea.vmem %s5, %s258
      %p260 = scmp.lt.s32.totalorder %s18, 1
      %s261 = scalar_select %p260, %s18, 1
      %s262 = smul.addr %s261, 195
      %s263 = smul.addr %s262, 8
      %s264 = scalar_lea.vmem %s6, %s263
      %v265 = vld [vmem:[%s254] sm:$0xff]
      %v266 = vld [vmem:[%s254 + $0x8] sm:$0xff]
      %v267 = vld [vmem:[%s254 + $0x10] sm:$0xff]
      %v268 = vld [vmem:[%s254 + $0x18] sm:$0xff]
      %v269 = vld [vmem:[%s254 + $0x20] sm:$0xff]
      %v270 = vld [vmem:[%s254 + $0x28] sm:$0xff]
      %v271 = vld [vmem:[%s254 + $0x30] sm:$0xff]
      %v272 = vld [vmem:[%s254 + $0x38] sm:$0xff]
      %v273 = vld [vmem:[%s254 + $0x40] sm:$0xff]
      %v274 = vld [vmem:[%s254 + $0x48] sm:$0xff]
      %v275 = vld [vmem:[%s254 + $0x50] sm:$0xff]
      %v276 = vld [vmem:[%s254 + $0x58] sm:$0xff]
      %v277 = vld [vmem:[%s254 + $0x60] sm:$0xff]
      %v278 = vld [vmem:[%s254 + $0x68] sm:$0xff]
      %v279 = vld [vmem:[%s254 + $0x70] sm:$0xff]
      %v280 = vld [vmem:[%s254 + $0x78] sm:$0xff]
      %v281 = vld [vmem:[%s254 + $0x80] sm:$0xff]
      %v282 = vld [vmem:[%s254 + $0x88] sm:$0xff]
      %v283 = vld [vmem:[%s254 + $0x90] sm:$0xff]
      %v284 = vld [vmem:[%s254 + $0x98] sm:$0xff]
      %v285 = vld [vmem:[%s254 + $0xa0] sm:$0xff]
      %v286 = vld [vmem:[%s254 + $0xa8] sm:$0xff]
      %v287 = vld [vmem:[%s254 + $0xb0] sm:$0xff]
      %v288 = vld [vmem:[%s254 + $0xb8] sm:$0xff]
      %v289 = vld [vmem:[%s254 + $0xc0] sm:$0xff]
      %v290 = vld [vmem:[%s254 + $0xc8] sm:$0xff]
      %v291 = vld [vmem:[%s254 + $0xd0] sm:$0xff]
      %v292 = vld [vmem:[%s254 + $0xd8] sm:$0xff]
      %v293 = vld [vmem:[%s254 + $0xe0] sm:$0xff]
      %v294 = vld [vmem:[%s254 + $0xe8] sm:$0xff]
      %v295 = vld [vmem:[%s254 + $0xf0] sm:$0xff]
      %v296 = vld [vmem:[%s254 + $0xf8] sm:$0xff]
      %v297 = vld [vmem:[%s254 + $0x100] sm:$0xff]
      %v298 = vld [vmem:[%s254 + $0x108] sm:$0xff]
      %v299 = vld [vmem:[%s254 + $0x110] sm:$0xff]
      %v300 = vld [vmem:[%s254 + $0x118] sm:$0xff]
      %v301 = vld [vmem:[%s254 + $0x120] sm:$0xff]
      %v302 = vld [vmem:[%s254 + $0x128] sm:$0xff]
      %v303 = vld [vmem:[%s254 + $0x130] sm:$0xff]
      %v304 = vld [vmem:[%s254 + $0x138] sm:$0xff]
      %v305 = vld [vmem:[%s254 + $0x140] sm:$0xff]
      %v306 = vld [vmem:[%s254 + $0x148] sm:$0xff]
      %v307 = vld [vmem:[%s254 + $0x150] sm:$0xff]
      %v308 = vld [vmem:[%s254 + $0x158] sm:$0xff]
      %v309 = vld [vmem:[%s254 + $0x160] sm:$0xff]
      %v310 = vld [vmem:[%s254 + $0x168] sm:$0xff]
      %v311 = vld [vmem:[%s254 + $0x170] sm:$0xff]
      %v312 = vld [vmem:[%s254 + $0x178] sm:$0xff]
      %v313 = vld [vmem:[%s254 + $0x180] sm:$0xff]
      %v314 = vld [vmem:[%s254 + $0x188] sm:$0xff]
      %v315 = vld [vmem:[%s254 + $0x190] sm:$0xff]
      %v316 = vld [vmem:[%s254 + $0x198] sm:$0xff]
      %v317 = vld [vmem:[%s254 + $0x1a0] sm:$0xff]
      %v318 = vld [vmem:[%s254 + $0x1a8] sm:$0xff]
      %v319 = vld [vmem:[%s254 + $0x1b0] sm:$0xff]
      %v320 = vld [vmem:[%s254 + $0x1b8] sm:$0xff]
      %v321 = vld [vmem:[%s254 + $0x1c0] sm:$0xff]
      %v322 = vld [vmem:[%s254 + $0x1c8] sm:$0xff]
      %v323 = vld [vmem:[%s254 + $0x1d0] sm:$0xff]
      %v324 = vld [vmem:[%s254 + $0x1d8] sm:$0xff]
      %v325 = vld [vmem:[%s254 + $0x1e0] sm:$0xff]
      %v326 = vld [vmem:[%s254 + $0x1e8] sm:$0xff]
      %v327 = vld [vmem:[%s254 + $0x1f0] sm:$0xff]
      %v328 = vld [vmem:[%s254 + $0x1f8] sm:$0xff]
      %v329 = vld [vmem:[%s254 + $0x200] sm:$0xff]
      %v330 = vld [vmem:[%s254 + $0x208] sm:$0xff]
      %v331 = vld [vmem:[%s254 + $0x210] sm:$0xff]
      %v332 = vld [vmem:[%s254 + $0x218] sm:$0xff]
      %v333 = vld [vmem:[%s254 + $0x220] sm:$0xff]
      %v334 = vld [vmem:[%s254 + $0x228] sm:$0xff]
      %v335 = vld [vmem:[%s254 + $0x230] sm:$0xff]
      %v336 = vld [vmem:[%s254 + $0x238] sm:$0xff]
      %v337 = vld [vmem:[%s254 + $0x240] sm:$0xff]
      %v338 = vld [vmem:[%s254 + $0x248] sm:$0xff]
      %v339 = vld [vmem:[%s254 + $0x250] sm:$0xff]
      %v340 = vld [vmem:[%s254 + $0x258] sm:$0xff]
      %v341 = vld [vmem:[%s254 + $0x260] sm:$0xff]
      %v342 = vld [vmem:[%s254 + $0x268] sm:$0xff]
      %v343 = vld [vmem:[%s254 + $0x270] sm:$0xff]
      %v344 = vld [vmem:[%s254 + $0x278] sm:$0xff]
      %v345 = vld [vmem:[%s254 + $0x280] sm:$0xff]
      %v346 = vld [vmem:[%s254 + $0x288] sm:$0xff]
      %v347 = vld [vmem:[%s254 + $0x290] sm:$0xff]
      %v348 = vld [vmem:[%s254 + $0x298] sm:$0xff]
      %v349 = vld [vmem:[%s254 + $0x2a0] sm:$0xff]
      %v350 = vld [vmem:[%s254 + $0x2a8] sm:$0xff]
      %v351 = vld [vmem:[%s254 + $0x2b0] sm:$0xff]
      %v352 = vld [vmem:[%s254 + $0x2b8] sm:$0xff]
      %v353 = vld [vmem:[%s254 + $0x2c0] sm:$0xff]
      %v354 = vld [vmem:[%s254 + $0x2c8] sm:$0xff]
      %v355 = vld [vmem:[%s254 + $0x2d0] sm:$0xff]
      %v356 = vld [vmem:[%s254 + $0x2d8] sm:$0xff]
      %v357 = vld [vmem:[%s254 + $0x2e0] sm:$0xff]
      %v358 = vld [vmem:[%s254 + $0x2e8] sm:$0xff]
      %v359 = vld [vmem:[%s254 + $0x2f0] sm:$0xff]
      %v360 = vld [vmem:[%s254 + $0x2f8] sm:$0xff]
      %v361 = vld [vmem:[%s254 + $0x300] sm:$0xff]
      %v362 = vld [vmem:[%s254 + $0x308] sm:$0xff]
      %v363 = vld [vmem:[%s254 + $0x310] sm:$0xff]
      %v364 = vld [vmem:[%s254 + $0x318] sm:$0xff]
      %v365 = vld [vmem:[%s254 + $0x320] sm:$0xff]
      %v366 = vld [vmem:[%s254 + $0x328] sm:$0xff]
      %v367 = vld [vmem:[%s254 + $0x330] sm:$0xff]
      %v368 = vld [vmem:[%s254 + $0x338] sm:$0xff]
      %v369 = vld [vmem:[%s254 + $0x340] sm:$0xff]
      %v370 = vld [vmem:[%s254 + $0x348] sm:$0xff]
      %v371 = vld [vmem:[%s254 + $0x350] sm:$0xff]
      %v372 = vld [vmem:[%s254 + $0x358] sm:$0xff]
      %v373 = vld [vmem:[%s254 + $0x360] sm:$0xff]
      %v374 = vld [vmem:[%s254 + $0x368] sm:$0xff]
      %v375 = vld [vmem:[%s254 + $0x370] sm:$0xff]
      %v376 = vld [vmem:[%s254 + $0x378] sm:$0xff]
      %v377 = vld [vmem:[%s254 + $0x380] sm:$0xff]
      %v378 = vld [vmem:[%s254 + $0x388] sm:$0xff]
      %v379 = vld [vmem:[%s254 + $0x390] sm:$0xff]
      %v380 = vld [vmem:[%s254 + $0x398] sm:$0xff]
      %v381 = vld [vmem:[%s254 + $0x3a0] sm:$0xff]
      %v382 = vld [vmem:[%s254 + $0x3a8] sm:$0xff]
      %v383 = vld [vmem:[%s254 + $0x3b0] sm:$0xff]
      %v384 = vld [vmem:[%s254 + $0x3b8] sm:$0xff]
      %v385 = vld [vmem:[%s254 + $0x3c0] sm:$0xff]
      %v386 = vld [vmem:[%s254 + $0x3c8] sm:$0xff]
      %v387 = vld [vmem:[%s254 + $0x3d0] sm:$0xff]
      %v388 = vld [vmem:[%s254 + $0x3d8] sm:$0xff]
      %v389 = vld [vmem:[%s254 + $0x3e0] sm:$0xff]
      %v390 = vld [vmem:[%s254 + $0x3e8] sm:$0xff]
      %v391 = vld [vmem:[%s254 + $0x3f0] sm:$0xff]
      %v392 = vld [vmem:[%s254 + $0x3f8] sm:$0xff]
      %v393 = vld [vmem:[%s254 + $0x400] sm:$0xff]
      %v394 = vld [vmem:[%s254 + $0x408] sm:$0xff]
      %v395 = vld [vmem:[%s254 + $0x410] sm:$0xff]
      %v396 = vld [vmem:[%s254 + $0x418] sm:$0xff]
      %v397 = vld [vmem:[%s254 + $0x420] sm:$0xff]
      %v398 = vld [vmem:[%s254 + $0x428] sm:$0xff]
      %v399 = vld [vmem:[%s254 + $0x430] sm:$0xff]
      %v400 = vld [vmem:[%s254 + $0x438] sm:$0xff]
      %v401 = vld [vmem:[%s254 + $0x440] sm:$0xff]
      %v402 = vld [vmem:[%s254 + $0x448] sm:$0xff]
      %v403 = vld [vmem:[%s254 + $0x450] sm:$0xff]
      %v404 = vld [vmem:[%s254 + $0x458] sm:$0xff]
      %v405 = vld [vmem:[%s254 + $0x460] sm:$0xff]
      %v406 = vld [vmem:[%s254 + $0x468] sm:$0xff]
      %v407 = vld [vmem:[%s254 + $0x470] sm:$0xff]
      %v408 = vld [vmem:[%s254 + $0x478] sm:$0xff]
      %v409 = vld [vmem:[%s254 + $0x480] sm:$0xff]
      %v410 = vld [vmem:[%s254 + $0x488] sm:$0xff]
      %v411 = vld [vmem:[%s254 + $0x490] sm:$0xff]
      %v412 = vld [vmem:[%s254 + $0x498] sm:$0xff]
      %v413 = vld [vmem:[%s254 + $0x4a0] sm:$0xff]
      %v414 = vld [vmem:[%s254 + $0x4a8] sm:$0xff]
      %v415 = vld [vmem:[%s254 + $0x4b0] sm:$0xff]
      %v416 = vld [vmem:[%s254 + $0x4b8] sm:$0xff]
      %v417 = vld [vmem:[%s254 + $0x4c0] sm:$0xff]
      %v418 = vld [vmem:[%s254 + $0x4c8] sm:$0xff]
      %v419 = vld [vmem:[%s254 + $0x4d0] sm:$0xff]
      %v420 = vld [vmem:[%s254 + $0x4d8] sm:$0xff]
      %v421 = vld [vmem:[%s254 + $0x4e0] sm:$0xff]
      %v422 = vld [vmem:[%s254 + $0x4e8] sm:$0xff]
      %v423 = vld [vmem:[%s254 + $0x4f0] sm:$0xff]
      %v424 = vld [vmem:[%s254 + $0x4f8] sm:$0xff]
      %v425 = vld [vmem:[%s254 + $0x500] sm:$0xff]
      %v426 = vld [vmem:[%s254 + $0x508] sm:$0xff]
      %v427 = vld [vmem:[%s254 + $0x510] sm:$0xff]
      %v428 = vld [vmem:[%s254 + $0x518] sm:$0xff]
      %v429 = vld [vmem:[%s254 + $0x520] sm:$0xff]
      %v430 = vld [vmem:[%s254 + $0x528] sm:$0xff]
      %v431 = vld [vmem:[%s254 + $0x530] sm:$0xff]
      %v432 = vld [vmem:[%s254 + $0x538] sm:$0xff]
      %v433 = vld [vmem:[%s254 + $0x540] sm:$0xff]
      %v434 = vld [vmem:[%s254 + $0x548] sm:$0xff]
      %v435 = vld [vmem:[%s254 + $0x550] sm:$0xff]
      %v436 = vld [vmem:[%s254 + $0x558] sm:$0xff]
      %v437 = vld [vmem:[%s254 + $0x560] sm:$0xff]
      %v438 = vld [vmem:[%s254 + $0x568] sm:$0xff]
      %v439 = vld [vmem:[%s254 + $0x570] sm:$0xff]
      %v440 = vld [vmem:[%s254 + $0x578] sm:$0xff]
      %v441 = vld [vmem:[%s254 + $0x580] sm:$0xff]
      %v442 = vld [vmem:[%s254 + $0x588] sm:$0xff]
      %v443 = vld [vmem:[%s254 + $0x590] sm:$0xff]
      %v444 = vld [vmem:[%s254 + $0x598] sm:$0xff]
      %v445 = vld [vmem:[%s254 + $0x5a0] sm:$0xff]
      %v446 = vld [vmem:[%s254 + $0x5a8] sm:$0xff]
      %v447 = vld [vmem:[%s254 + $0x5b0] sm:$0xff]
      %v448 = vld [vmem:[%s254 + $0x5b8] sm:$0xff]
      %v449 = vld [vmem:[%s254 + $0x5c0] sm:$0xff]
      %v450 = vld [vmem:[%s254 + $0x5c8] sm:$0xff]
      %v451 = vld [vmem:[%s254 + $0x5d0] sm:$0xff]
      %v452 = vld [vmem:[%s254 + $0x5d8] sm:$0xff]
      %v453 = vld [vmem:[%s254 + $0x5e0] sm:$0xff]
      %v454 = vld [vmem:[%s254 + $0x5e8] sm:$0xff]
      %v455 = vld [vmem:[%s254 + $0x5f0] sm:$0xff]
      %v456 = vld [vmem:[%s254 + $0x5f8] sm:$0xff]
      %v457 = vld [vmem:[%s254 + $0x600] sm:$0xff]
      %v458 = vld [vmem:[%s254 + $0x608] sm:$0xff]
      %v459 = vld [vmem:[%s254 + $0x610] sm:$0xff]
      %v460 = vld [vmem:[%s254 + $0x618] sm:$0xff]
      %v461 = vld [vmem:[%s254 + $0x620] sm:$0xff]
      %v462 = vld [vmem:[%s254 + $0x628] sm:$0xff]
      %v463 = vld [vmem:[%s254 + $0x630] sm:$0xff]
      %v464 = vld [vmem:[%s254 + $0x638] sm:$0xff]
      %v465 = vld [vmem:[%s1] sm:$0xff]
      %v466 = vld [vmem:[%s1 + $0x8] sm:$0xff]
      %v467 = vld [vmem:[%s1 + $0x10] sm:$0xff]
      %v468 = vld [vmem:[%s1 + $0x18] sm:$0xff]
      %v469 = vld [vmem:[%s1 + $0x20] sm:$0xff]
      %v470 = vld [vmem:[%s1 + $0x28] sm:$0xff]
      %v471 = vld [vmem:[%s1 + $0x30] sm:$0xff]
      %v472 = vld [vmem:[%s1 + $0x38] sm:$0xff]
      %v473 = vld [vmem:[%s1 + $0x40] sm:$0xff]
      %v474 = vld [vmem:[%s1 + $0x48] sm:$0xff]
      %v475 = vld [vmem:[%s1 + $0x50] sm:$0xff]
      %v476 = vld [vmem:[%s1 + $0x58] sm:$0xff]
      %v477 = vld [vmem:[%s1 + $0x60] sm:$0xff]
      %v478 = vld [vmem:[%s1 + $0x68] sm:$0xff]
      %v479 = vld [vmem:[%s1 + $0x70] sm:$0xff]
      %v480 = vld [vmem:[%s1 + $0x78] sm:$0xff]
      %v481 = vld [vmem:[%s1 + $0x80] sm:$0xff]
      %v482 = vld [vmem:[%s1 + $0x88] sm:$0xff]
      %v483 = vld [vmem:[%s1 + $0x90] sm:$0xff]
      %v484 = vld [vmem:[%s1 + $0x98] sm:$0xff]
      %v485 = vld [vmem:[%s1 + $0xa0] sm:$0xff]
      %v486 = vld [vmem:[%s1 + $0xa8] sm:$0xff]
      %v487 = vld [vmem:[%s1 + $0xb0] sm:$0xff]
      %v488 = vld [vmem:[%s1 + $0xb8] sm:$0xff]
      %v489 = vld [vmem:[%s1 + $0xc0] sm:$0xff]
      %v490 = vld [vmem:[%s1 + $0xc8] sm:$0xff]
      %v491 = vld [vmem:[%s1 + $0xd0] sm:$0xff]
      %v492 = vld [vmem:[%s1 + $0xd8] sm:$0xff]
      %v493 = vld [vmem:[%s1 + $0xe0] sm:$0xff]
      %v494 = vld [vmem:[%s1 + $0xe8] sm:$0xff]
      %v495 = vld [vmem:[%s1 + $0xf0] sm:$0xff]
      %v496 = vld [vmem:[%s1 + $0xf8] sm:$0xff]
      %v497 = vld [vmem:[%s1 + $0x100] sm:$0xff]
      %v498 = vld [vmem:[%s1 + $0x108] sm:$0xff]
      %v499 = vld [vmem:[%s1 + $0x110] sm:$0xff]
      %v500 = vld [vmem:[%s1 + $0x118] sm:$0xff]
      %v501 = vld [vmem:[%s1 + $0x120] sm:$0xff]
      %v502 = vld [vmem:[%s1 + $0x128] sm:$0xff]
      %v503 = vld [vmem:[%s1 + $0x130] sm:$0xff]
      %v504 = vld [vmem:[%s1 + $0x138] sm:$0xff]
      %v505 = vld [vmem:[%s1 + $0x140] sm:$0xff]
      %v506 = vld [vmem:[%s1 + $0x148] sm:$0xff]
      %v507 = vld [vmem:[%s1 + $0x150] sm:$0xff]
      %v508 = vld [vmem:[%s1 + $0x158] sm:$0xff]
      %v509 = vld [vmem:[%s1 + $0x160] sm:$0xff]
      %v510 = vld [vmem:[%s1 + $0x168] sm:$0xff]
      %v511 = vld [vmem:[%s1 + $0x170] sm:$0xff]
      %v512 = vld [vmem:[%s1 + $0x178] sm:$0xff]
      %v513 = vld [vmem:[%s1 + $0x180] sm:$0xff]
      %v514 = vld [vmem:[%s1 + $0x188] sm:$0xff]
      %v515 = vld [vmem:[%s1 + $0x190] sm:$0xff]
      %v516 = vld [vmem:[%s1 + $0x198] sm:$0xff]
      %v517 = vld [vmem:[%s1 + $0x1a0] sm:$0xff]
      %v518 = vld [vmem:[%s1 + $0x1a8] sm:$0xff]
      %v519 = vld [vmem:[%s1 + $0x1b0] sm:$0xff]
      %v520 = vld [vmem:[%s1 + $0x1b8] sm:$0xff]
      %v521 = vld [vmem:[%s1 + $0x1c0] sm:$0xff]
      %v522 = vld [vmem:[%s1 + $0x1c8] sm:$0xff]
      %v523 = vld [vmem:[%s1 + $0x1d0] sm:$0xff]
      %v524 = vld [vmem:[%s1 + $0x1d8] sm:$0xff]
      %v525 = vld [vmem:[%s1 + $0x1e0] sm:$0xff]
      %v526 = vld [vmem:[%s1 + $0x1e8] sm:$0xff]
      %v527 = vld [vmem:[%s1 + $0x1f0] sm:$0xff]
      %v528 = vld [vmem:[%s1 + $0x1f8] sm:$0xff]
      %v529 = vld [vmem:[%s1 + $0x200] sm:$0xff]
      %v530 = vld [vmem:[%s1 + $0x208] sm:$0xff]
      %v531 = vld [vmem:[%s1 + $0x210] sm:$0xff]
      %v532 = vld [vmem:[%s1 + $0x218] sm:$0xff]
      %v533 = vld [vmem:[%s1 + $0x220] sm:$0xff]
      %v534 = vld [vmem:[%s1 + $0x228] sm:$0xff]
      %v535 = vld [vmem:[%s1 + $0x230] sm:$0xff]
      %v536 = vld [vmem:[%s1 + $0x238] sm:$0xff]
      %v537 = vld [vmem:[%s1 + $0x240] sm:$0xff]
      %v538 = vld [vmem:[%s1 + $0x248] sm:$0xff]
      %v539 = vld [vmem:[%s1 + $0x250] sm:$0xff]
      %v540 = vld [vmem:[%s1 + $0x258] sm:$0xff]
      %v541 = vld [vmem:[%s1 + $0x260] sm:$0xff]
      %v542 = vld [vmem:[%s1 + $0x268] sm:$0xff]
      %v543 = vld [vmem:[%s1 + $0x270] sm:$0xff]
      %v544 = vld [vmem:[%s1 + $0x278] sm:$0xff]
      %545 = vmatprep.subr.mxu0 0.0
      %546 = vmatpush1.msra.mxu0 %v465
      %547 = vmatprep.subr.mxu0 0.0
      %548 = vmatpush1.msra.mxu0 %v466
      %549 = vmatprep.subr.mxu0 0.0
      %550 = vmatpush1.msra.mxu0 %v467
      %551 = vmatprep.subr.mxu0 0.0
      %552 = vmatpush1.msra.mxu0 %v468
      %553 = vmatprep.subr.mxu0 0.0
      %554 = vmatpush1.msra.mxu0 %v469
      %555 = vmatprep.subr.mxu0 0.0
      %556 = vmatpush1.msra.mxu0 %v470
      %557 = vmatprep.subr.mxu0 0.0
      %558 = vmatpush1.msra.mxu0 %v471
      %559 = vmatprep.subr.mxu0 0.0
      %560 = vmatpush1.msra.mxu0 %v472
      %561 = vmatprep.subr.mxu0 0.0
      %562 = vmatpush1.msra.mxu0 %v473
      %563 = vmatprep.subr.mxu0 0.0
      %564 = vmatpush1.msra.mxu0 %v474
      %565 = vmatprep.subr.mxu0 0.0
      %566 = vmatpush1.msra.mxu0 %v475
      %567 = vmatprep.subr.mxu0 0.0
      %568 = vmatpush1.msra.mxu0 %v476
      %569 = vmatprep.subr.mxu0 0.0
      %570 = vmatpush1.msra.mxu0 %v477
      %571 = vmatprep.subr.mxu0 0.0
      %572 = vmatpush1.msra.mxu0 %v478
      %573 = vmatprep.subr.mxu0 0.0
      %574 = vmatpush1.msra.mxu0 %v479
      %575 = vmatprep.subr.mxu0 0.0
      %576 = vmatpush1.msra.mxu0 %v480
      %577 = vmatprep.subr.mxu0 0.0
      %578 = vmatpush1.msra.mxu0 %v481
      %579 = vmatprep.subr.mxu0 0.0
      %580 = vmatpush1.msra.mxu0 %v482
      %581 = vmatprep.subr.mxu0 0.0
      %582 = vmatpush1.msra.mxu0 %v483
      %583 = vmatprep.subr.mxu0 0.0
      %584 = vmatpush1.msra.mxu0 %v484
      %585 = vmatprep.subr.mxu0 0.0
      %586 = vmatpush1.msra.mxu0 %v485
      %587 = vmatprep.subr.mxu0 0.0
      %588 = vmatpush1.msra.mxu0 %v486
      %589 = vmatprep.subr.mxu0 0.0
      %590 = vmatpush1.msra.mxu0 %v487
      %591 = vmatprep.subr.mxu0 0.0
      %592 = vmatpush1.msra.mxu0 %v488
      %593 = vmatprep.subr.mxu0 0.0
      %594 = vmatpush1.msra.mxu0 %v489
      %595 = vmatprep.subr.mxu0 0.0
      %596 = vmatpush1.msra.mxu0 %v490
      %597 = vmatprep.subr.mxu0 0.0
      %598 = vmatpush1.msra.mxu0 %v491
      %599 = vmatprep.subr.mxu0 0.0
      %600 = vmatpush1.msra.mxu0 %v492
      %601 = vmatprep.subr.mxu0 0.0
      %602 = vmatpush1.msra.mxu0 %v493
      %603 = vmatprep.subr.mxu0 0.0
      %604 = vmatpush1.msra.mxu0 %v494
      %605 = vmatprep.subr.mxu0 0.0
      %606 = vmatpush1.msra.mxu0 %v495
      %607 = vmatprep.subr.mxu0 0.0
      %608 = vmatpush1.msra.mxu0 %v496
      %609 = vmatprep.mubr.f32.mxu0 %v266
      %610 = vmatmul.mubr.f32.gmra.mrb[0].mxu0 %v265
      %v611 = vpop.f32.mrb[0].mxu0
      %v612 = vadd.f32 1e-08, %v611
      %v613 = vpop.f32.mrb[0].mxu0
      %614 = vmatprep.mubr.f32.mxu0 %v271
      %615 = vmatmul.mubr.f32.gmra.mrb[0].mxu0 %v270
      %v616 = vpop.f32.mrb[0].mxu0
      %v617 = vadd.f32 1e-08, %v616
      %v618 = vpop.f32.mrb[0].mxu0
      %619 = vmatprep.mubr.f32.mxu0 %v276
      %620 = vmatmul.mubr.f32.gmra.mrb[0].mxu0 %v275
      %v621 = vpop.f32.mrb[0].mxu0
      %v622 = vadd.f32 1e-08, %v621
      %v623 = vpop.f32.mrb[0].mxu0
      %624 = vmatprep.mubr.f32.mxu0 %v281
      %625 = vmatmul.mubr.f32.gmra.mrb[0].mxu0 %v280
      %v626 = vpop.f32.mrb[0].mxu0
      %v627 = vadd.f32 1e-08, %v626
      %v628 = vpop.f32.mrb[0].mxu0
      %629 = vmatprep.mubr.f32.mxu0 %v286
      %630 = vmatmul.mubr.f32.gmra.mrb[0].mxu0 %v285
      %v631 = vpop.f32.mrb[0].mxu0
      %v632 = vadd.f32 1e-08, %v631
      %v633 = vpop.f32.mrb[0].mxu0
      %634 = vmatprep.mubr.f32.mxu0 %v291
      %635 = vmatmul.mubr.f32.gmra.mrb[0].mxu0 %v290
      %v636 = vpop.f32.mrb[0].mxu0
      %v637 = vadd.f32 1e-08, %v636
      %v638 = vpop.f32.mrb[0].mxu0
      %639 = vmatprep.mubr.f32.mxu0 %v296
      %640 = vmatmul.mubr.f32.gmra.mrb[0].mxu0 %v295
      %v641 = vpop.f32.mrb[0].mxu0
      %v642 = vadd.f32 1e-08, %v641
      %v643 = vpop.f32.mrb[0].mxu0
      %644 = vmatprep.mubr.f32.mxu0 %v301
      %645 = vmatmul.mubr.f32.gmra.mrb[0].mxu0 %v300
      %v646 = vpop.f32.mrb[0].mxu0
      %v647 = vadd.f32 1e-08, %v646
      %v648 = vpop.f32.mrb[0].mxu0
      %649 = vmatprep.mubr.f32.mxu0 %v306
      %650 = vmatmul.mubr.f32.gmra.mrb[0].mxu0 %v305
      %v651 = vpop.f32.mrb[0].mxu0
      %v652 = vadd.f32 1e-08, %v651
      %v653 = vpop.f32.mrb[0].mxu0
      %654 = vmatprep.mubr.f32.mxu0 %v311
      %655 = vmatmul.mubr.f32.gmra.mrb[0].mxu0 %v310
      %v656 = vpop.f32.mrb[0].mxu0
      %v657 = vadd.f32 1e-08, %v656
      %v658 = vpop.f32.mrb[0].mxu0
      %659 = vmatprep.mubr.f32.mxu0 %v316
      %660 = vmatmul.mubr.f32.gmra.mrb[0].mxu0 %v315
      %v661 = vpop.f32.mrb[0].mxu0
      %v662 = vadd.f32 1e-08, %v661
      %v663 = vpop.f32.mrb[0].mxu0
      %664 = vmatprep.mubr.f32.mxu0 %v321
      %665 = vmatmul.mubr.f32.gmra.mrb[0].mxu0 %v320
      %v666 = vpop.f32.mrb[0].mxu0
      %v667 = vadd.f32 1e-08, %v666
      %v668 = vpop.f32.mrb[0].mxu0
      %669 = vmatprep.mubr.f32.mxu0 %v326
      %670 = vmatmul.mubr.f32.gmra.mrb[0].mxu0 %v325
      %v671 = vpop.f32.mrb[0].mxu0
      %v672 = vadd.f32 1e-08, %v671
      %v673 = vpop.f32.mrb[0].mxu0
      %674 = vmatprep.mubr.f32.mxu0 %v331
      %675 = vmatmul.mubr.f32.gmra.mrb[0].mxu0 %v330
      %v676 = vpop.f32.mrb[0].mxu0
      %v677 = vadd.f32 1e-08, %v676
      %v678 = vpop.f32.mrb[0].mxu0
      %679 = vmatprep.mubr.f32.mxu0 %v336
      %680 = vmatmul.mubr.f32.gmra.mrb[0].mxu0 %v335
      %v681 = vpop.f32.mrb[0].mxu0
      %v682 = vadd.f32 1e-08, %v681
      %v683 = vpop.f32.mrb[0].mxu0
      %684 = vmatprep.mubr.f32.mxu0 %v341
      %685 = vmatmul.mubr.f32.gmra.mrb[0].mxu0 %v340
      %v686 = vpop.f32.mrb[0].mxu0
      %v687 = vadd.f32 1e-08, %v686
      %v688 = vpop.f32.mrb[0].mxu0
      %689 = vmatprep.mubr.f32.mxu0 %v346
      %690 = vmatmul.mubr.f32.gmra.mrb[0].mxu0 %v345
      %v691 = vpop.f32.mrb[0].mxu0
      %v692 = vadd.f32 1e-08, %v691
      %v693 = vpop.f32.mrb[0].mxu0
      %694 = vmatprep.mubr.f32.mxu0 %v351
      %695 = vmatmul.mubr.f32.gmra.mrb[0].mxu0 %v350
      %v696 = vpop.f32.mrb[0].mxu0
      %v697 = vadd.f32 1e-08, %v696
      %v698 = vpop.f32.mrb[0].mxu0
      %699 = vmatprep.mubr.f32.mxu0 %v356
      %700 = vmatmul.mubr.f32.gmra.mrb[0].mxu0 %v355
      %v701 = vpop.f32.mrb[0].mxu0
      %v702 = vadd.f32 1e-08, %v701
      %v703 = vpop.f32.mrb[0].mxu0
      %704 = vmatprep.mubr.f32.mxu0 %v361
      %705 = vmatmul.mubr.f32.gmra.mrb[0].mxu0 %v360
      %v706 = vpop.f32.mrb[0].mxu0
      %v707 = vadd.f32 1e-08, %v706
      %v708 = vpop.f32.mrb[0].mxu0
      %709 = vmatprep.mubr.f32.mxu0 %v366
      %710 = vmatmul.mubr.f32.gmra.mrb[0].mxu0 %v365
      %v711 = vpop.f32.mrb[0].mxu0
      %v712 = vadd.f32 1e-08, %v711
      %v713 = vpop.f32.mrb[0].mxu0
      %714 = vmatprep.mubr.f32.mxu0 %v371
      %715 = vmatmul.mubr.f32.gmra.mrb[0].mxu0 %v370
      %v716 = vpop.f32.mrb[0].mxu0
      %v717 = vadd.f32 1e-08, %v716
      %v718 = vpop.f32.mrb[0].mxu0
      %719 = vmatprep.mubr.f32.mxu0 %v376
      %720 = vmatmul.mubr.f32.gmra.mrb[0].mxu0 %v375
      %v721 = vpop.f32.mrb[0].mxu0
      %v722 = vadd.f32 1e-08, %v721
      %v723 = vpop.f32.mrb[0].mxu0
      %724 = vmatprep.mubr.f32.mxu0 %v381
      %725 = vmatmul.mubr.f32.gmra.mrb[0].mxu0 %v380
      %v726 = vpop.f32.mrb[0].mxu0
      %v727 = vadd.f32 1e-08, %v726
      %v728 = vpop.f32.mrb[0].mxu0
      %729 = vmatprep.mubr.f32.mxu0 %v386
      %730 = vmatmul.mubr.f32.gmra.mrb[0].mxu0 %v385
      %v731 = vpop.f32.mrb[0].mxu0
      %v732 = vadd.f32 1e-08, %v731
      %v733 = vpop.f32.mrb[0].mxu0
      %734 = vmatprep.mubr.f32.mxu0 %v391
      %735 = vmatmul.mubr.f32.gmra.mrb[0].mxu0 %v390
      %v736 = vpop.f32.mrb[0].mxu0
      %v737 = vadd.f32 1e-08, %v736
      %v738 = vpop.f32.mrb[0].mxu0
      %739 = vmatprep.mubr.f32.mxu0 %v396
      %740 = vmatmul.mubr.f32.gmra.mrb[0].mxu0 %v395
      %v741 = vpop.f32.mrb[0].mxu0
      %v742 = vadd.f32 1e-08, %v741
      %v743 = vpop.f32.mrb[0].mxu0
      %744 = vmatprep.mubr.f32.mxu0 %v401
      %745 = vmatmul.mubr.f32.gmra.mrb[0].mxu0 %v400
      %v746 = vpop.f32.mrb[0].mxu0
      %v747 = vadd.f32 1e-08, %v746
      %v748 = vpop.f32.mrb[0].mxu0
      %749 = vmatprep.mubr.f32.mxu0 %v406
      %750 = vmatmul.mubr.f32.gmra.mrb[0].mxu0 %v405
      %v751 = vpop.f32.mrb[0].mxu0
      %v752 = vadd.f32 1e-08, %v751
      %v753 = vpop.f32.mrb[0].mxu0
      %754 = vmatprep.mubr.f32.mxu0 %v411
      %755 = vmatmul.mubr.f32.gmra.mrb[0].mxu0 %v410
      %v756 = vpop.f32.mrb[0].mxu0
      %v757 = vadd.f32 1e-08, %v756
      %v758 = vpop.f32.mrb[0].mxu0
      %759 = vmatprep.mubr.f32.mxu0 %v416
      %760 = vmatmul.mubr.f32.gmra.mrb[0].mxu0 %v415
      %v761 = vpop.f32.mrb[0].mxu0
      %v762 = vadd.f32 1e-08, %v761
      %v763 = vpop.f32.mrb[0].mxu0
      %764 = vmatprep.mubr.f32.mxu0 %v421
      %765 = vmatmul.mubr.f32.gmra.mrb[0].mxu0 %v420
      %v766 = vpop.f32.mrb[0].mxu0
      %v767 = vadd.f32 1e-08, %v766
      %v768 = vpop.f32.mrb[0].mxu0
      %769 = vmatprep.mubr.f32.mxu0 %v426
      %770 = vmatmul.mubr.f32.gmra.mrb[0].mxu0 %v425
      %v771 = vpop.f32.mrb[0].mxu0
      %v772 = vadd.f32 1e-08, %v771
      %v773 = vpop.f32.mrb[0].mxu0
      %774 = vmatprep.mubr.f32.mxu0 %v431
      %775 = vmatmul.mubr.f32.gmra.mrb[0].mxu0 %v430
      %v776 = vpop.f32.mrb[0].mxu0
      %v777 = vadd.f32 1e-08, %v776
      %v778 = vpop.f32.mrb[0].mxu0
      %779 = vmatprep.mubr.f32.mxu0 %v436
      %780 = vmatmul.mubr.f32.gmra.mrb[0].mxu0 %v435
      %v781 = vpop.f32.mrb[0].mxu0
      %v782 = vadd.f32 1e-08, %v781
      %v783 = vpop.f32.mrb[0].mxu0
      %784 = vmatprep.mubr.f32.mxu0 %v441
      %785 = vmatmul.mubr.f32.gmra.mrb[0].mxu0 %v440
      %v786 = vpop.f32.mrb[0].mxu0
      %v787 = vadd.f32 1e-08, %v786
      %v788 = vpop.f32.mrb[0].mxu0
      %789 = vmatprep.mubr.f32.mxu0 %v446
      %790 = vmatmul.mubr.f32.gmra.mrb[0].mxu0 %v445
      %v791 = vpop.f32.mrb[0].mxu0
      %v792 = vadd.f32 1e-08, %v791
      %v793 = vpop.f32.mrb[0].mxu0
      %794 = vmatprep.mubr.f32.mxu0 %v451
      %795 = vmatmul.mubr.f32.gmra.mrb[0].mxu0 %v450
      %v796 = vpop.f32.mrb[0].mxu0
      %v797 = vadd.f32 1e-08, %v796
      %v798 = vpop.f32.mrb[0].mxu0
      %799 = vmatprep.mubr.f32.mxu0 %v456
      %800 = vmatmul.mubr.f32.gmra.mrb[0].mxu0 %v455
      %v801 = vpop.f32.mrb[0].mxu0
      %v802 = vadd.f32 1e-08, %v801
      %v803 = vpop.f32.mrb[0].mxu0
      %804 = vmatprep.mubr.f32.mxu0 %v461
      %805 = vmatmul.mubr.f32.gmra.mrb[0].mxu0 %v460
      %v806 = vpop.f32.mrb[0].mxu0
      %v807 = vadd.f32 1e-08, %v806
      %v808 = vpop.f32.mrb[0].mxu0
      %809 = vdwg.mxu0
      %810 = vmatprep.subr.mxu0 0.0
      %811 = vmatpush1.msra.mxu0 %v497
      %812 = vmatprep.subr.mxu0 0.0
      %813 = vmatpush1.msra.mxu0 %v498
      %814 = vmatprep.subr.mxu0 0.0
      %815 = vmatpush1.msra.mxu0 %v499
      %816 = vmatprep.subr.mxu0 0.0
      %817 = vmatpush1.msra.mxu0 %v500
      %818 = vmatprep.subr.mxu0 0.0
      %819 = vmatpush1.msra.mxu0 %v501
      %820 = vmatprep.subr.mxu0 0.0
      %821 = vmatpush1.msra.mxu0 %v502
      %822 = vmatprep.subr.mxu0 0.0
      %823 = vmatpush1.msra.mxu0 %v503
      %824 = vmatprep.subr.mxu0 0.0
      %825 = vmatpush1.msra.mxu0 %v504
      %826 = vmatprep.subr.mxu0 0.0
      %827 = vmatpush1.msra.mxu0 %v505
      %828 = vmatprep.subr.mxu0 0.0
      %829 = vmatpush1.msra.mxu0 %v506
      %830 = vmatprep.subr.mxu0 0.0
      %831 = vmatpush1.msra.mxu0 %v507
      %832 = vmatprep.subr.mxu0 0.0
      %833 = vmatpush1.msra.mxu0 %v508
      %834 = vmatprep.subr.mxu0 0.0
      %835 = vmatpush1.msra.mxu0 %v509
      %836 = vmatprep.subr.mxu0 0.0
      %837 = vmatpush1.msra.mxu0 %v510
      %838 = vmatprep.subr.mxu0 0.0
      %839 = vmatpush1.msra.mxu0 %v511
      %840 = vmatprep.subr.mxu0 0.0
      %841 = vmatpush1.msra.mxu0 %v512
      %842 = vmatprep.subr.mxu0 0.0
      %843 = vmatpush1.msra.mxu0 %v513
      %844 = vmatprep.subr.mxu0 0.0
      %845 = vmatpush1.msra.mxu0 %v514
      %846 = vmatprep.subr.mxu0 0.0
      %847 = vmatpush1.msra.mxu0 %v515
      %848 = vmatprep.subr.mxu0 0.0
      %849 = vmatpush1.msra.mxu0 %v516
      %850 = vmatprep.subr.mxu0 0.0
      %851 = vmatpush1.msra.mxu0 %v517
      %852 = vmatprep.subr.mxu0 0.0
      %853 = vmatpush1.msra.mxu0 %v518
      %854 = vmatprep.subr.mxu0 0.0
      %855 = vmatpush1.msra.mxu0 %v519
      %856 = vmatprep.subr.mxu0 0.0
      %857 = vmatpush1.msra.mxu0 %v520
      %858 = vmatprep.subr.mxu0 0.0
      %859 = vmatpush1.msra.mxu0 %v521
      %860 = vmatprep.subr.mxu0 0.0
      %861 = vmatpush1.msra.mxu0 %v522
      %862 = vmatprep.subr.mxu0 0.0
      %863 = vmatpush1.msra.mxu0 %v523
      %864 = vmatprep.subr.mxu0 0.0
      %865 = vmatpush1.msra.mxu0 %v524
      %866 = vmatprep.subr.mxu0 0.0
      %867 = vmatpush1.msra.mxu0 %v525
      %868 = vmatprep.subr.mxu0 0.0
      %869 = vmatpush1.msra.mxu0 %v526
      %870 = vmatprep.subr.mxu0 0.0
      %871 = vmatpush1.msra.mxu0 %v527
      %872 = vmatprep.subr.mxu0 0.0
      %873 = vmatpush1.msra.mxu0 %v528
      %874 = vmatprep.mubr.f32.mxu0 %v268
      %875 = vmatmul.mubr.f32.gmra.mrb[0].mxu0 %v267
      %v876 = vpop.f32.mrb[0].mxu0
      %v877 = vadd.f32 %v612, %v876
      %v878 = vpop.f32.mrb[0].mxu0
      %879 = vmatprep.mubr.f32.mxu0 %v273
      %880 = vmatmul.mubr.f32.gmra.mrb[0].mxu0 %v272
      %v881 = vpop.f32.mrb[0].mxu0
      %v882 = vadd.f32 %v617, %v881
      %v883 = vpop.f32.mrb[0].mxu0
      %884 = vmatprep.mubr.f32.mxu0 %v278
      %885 = vmatmul.mubr.f32.gmra.mrb[0].mxu0 %v277
      %v886 = vpop.f32.mrb[0].mxu0
      %v887 = vadd.f32 %v622, %v886
      %v888 = vpop.f32.mrb[0].mxu0
      %889 = vmatprep.mubr.f32.mxu0 %v283
      %890 = vmatmul.mubr.f32.gmra.mrb[0].mxu0 %v282
      %v891 = vpop.f32.mrb[0].mxu0
      %v892 = vadd.f32 %v627, %v891
      %v893 = vpop.f32.mrb[0].mxu0
      %894 = vmatprep.mubr.f32.mxu0 %v288
      %895 = vmatmul.mubr.f32.gmra.mrb[0].mxu0 %v287
      %v896 = vpop.f32.mrb[0].mxu0
      %v897 = vadd.f32 %v632, %v896
      %v898 = vpop.f32.mrb[0].mxu0
      %899 = vmatprep.mubr.f32.mxu0 %v293
      %900 = vmatmul.mubr.f32.gmra.mrb[0].mxu0 %v292
      %v901 = vpop.f32.mrb[0].mxu0
      %v902 = vadd.f32 %v637, %v901
      %v903 = vpop.f32.mrb[0].mxu0
      %904 = vmatprep.mubr.f32.mxu0 %v298
      %905 = vmatmul.mubr.f32.gmra.mrb[0].mxu0 %v297
      %v906 = vpop.f32.mrb[0].mxu0
      %v907 = vadd.f32 %v642, %v906
      %v908 = vpop.f32.mrb[0].mxu0
      %909 = vmatprep.mubr.f32.mxu0 %v303
      %910 = vmatmul.mubr.f32.gmra.mrb[0].mxu0 %v302
      %v911 = vpop.f32.mrb[0].mxu0
      %v912 = vadd.f32 %v647, %v911
      %v913 = vpop.f32.mrb[0].mxu0
      %914 = vmatprep.mubr.f32.mxu0 %v308
      %915 = vmatmul.mubr.f32.gmra.mrb[0].mxu0 %v307
      %v916 = vpop.f32.mrb[0].mxu0
      %v917 = vadd.f32 %v652, %v916
      %v918 = vpop.f32.mrb[0].mxu0
      %919 = vmatprep.mubr.f32.mxu0 %v313
      %920 = vmatmul.mubr.f32.gmra.mrb[0].mxu0 %v312
      %v921 = vpop.f32.mrb[0].mxu0
      %v922 = vadd.f32 %v657, %v921
      %v923 = vpop.f32.mrb[0].mxu0
      %924 = vmatprep.mubr.f32.mxu0 %v318
      %925 = vmatmul.mubr.f32.gmra.mrb[0].mxu0 %v317
      %v926 = vpop.f32.mrb[0].mxu0
      %v927 = vadd.f32 %v662, %v926
      %v928 = vpop.f32.mrb[0].mxu0
      %929 = vmatprep.mubr.f32.mxu0 %v323
      %930 = vmatmul.mubr.f32.gmra.mrb[0].mxu0 %v322
      %v931 = vpop.f32.mrb[0].mxu0
      %v932 = vadd.f32 %v667, %v931
      %v933 = vpop.f32.mrb[0].mxu0
      %934 = vmatprep.mubr.f32.mxu0 %v328
      %935 = vmatmul.mubr.f32.gmra.mrb[0].mxu0 %v327
      %v936 = vpop.f32.mrb[0].mxu0
      %v937 = vadd.f32 %v672, %v936
      %v938 = vpop.f32.mrb[0].mxu0
      %939 = vmatprep.mubr.f32.mxu0 %v333
      %940 = vmatmul.mubr.f32.gmra.mrb[0].mxu0 %v332
      %v941 = vpop.f32.mrb[0].mxu0
      %v942 = vadd.f32 %v677, %v941
      %v943 = vpop.f32.mrb[0].mxu0
      %944 = vmatprep.mubr.f32.mxu0 %v338
      %945 = vmatmul.mubr.f32.gmra.mrb[0].mxu0 %v337
      %v946 = vpop.f32.mrb[0].mxu0
      %v947 = vadd.f32 %v682, %v946
      %v948 = vpop.f32.mrb[0].mxu0
      %949 = vmatprep.mubr.f32.mxu0 %v343
      %950 = vmatmul.mubr.f32.gmra.mrb[0].mxu0 %v342
      %v951 = vpop.f32.mrb[0].mxu0
      %v952 = vadd.f32 %v687, %v951
      %v953 = vpop.f32.mrb[0].mxu0
      %954 = vmatprep.mubr.f32.mxu0 %v348
      %955 = vmatmul.mubr.f32.gmra.mrb[0].mxu0 %v347
      %v956 = vpop.f32.mrb[0].mxu0
      %v957 = vadd.f32 %v692, %v956
      %v958 = vpop.f32.mrb[0].mxu0
      %959 = vmatprep.mubr.f32.mxu0 %v353
      %960 = vmatmul.mubr.f32.gmra.mrb[0].mxu0 %v352
      %v961 = vpop.f32.mrb[0].mxu0
      %v962 = vadd.f32 %v697, %v961
      %v963 = vpop.f32.mrb[0].mxu0
      %964 = vmatprep.mubr.f32.mxu0 %v358
      %965 = vmatmul.mubr.f32.gmra.mrb[0].mxu0 %v357
      %v966 = vpop.f32.mrb[0].mxu0
      %v967 = vadd.f32 %v702, %v966
      %v968 = vpop.f32.mrb[0].mxu0
      %969 = vmatprep.mubr.f32.mxu0 %v363
      %970 = vmatmul.mubr.f32.gmra.mrb[0].mxu0 %v362
      %v971 = vpop.f32.mrb[0].mxu0
      %v972 = vadd.f32 %v707, %v971
      %v973 = vpop.f32.mrb[0].mxu0
      %974 = vmatprep.mubr.f32.mxu0 %v368
      %975 = vmatmul.mubr.f32.gmra.mrb[0].mxu0 %v367
      %v976 = vpop.f32.mrb[0].mxu0
      %v977 = vadd.f32 %v712, %v976
      %v978 = vpop.f32.mrb[0].mxu0
      %979 = vmatprep.mubr.f32.mxu0 %v373
      %980 = vmatmul.mubr.f32.gmra.mrb[0].mxu0 %v372
      %v981 = vpop.f32.mrb[0].mxu0
      %v982 = vadd.f32 %v717, %v981
      %v983 = vpop.f32.mrb[0].mxu0
      %984 = vmatprep.mubr.f32.mxu0 %v378
      %985 = vmatmul.mubr.f32.gmra.mrb[0].mxu0 %v377
      %v986 = vpop.f32.mrb[0].mxu0
      %v987 = vadd.f32 %v722, %v986
      %v988 = vpop.f32.mrb[0].mxu0
      %989 = vmatprep.mubr.f32.mxu0 %v383
      %990 = vmatmul.mubr.f32.gmra.mrb[0].mxu0 %v382
      %v991 = vpop.f32.mrb[0].mxu0
      %v992 = vadd.f32 %v727, %v991
      %v993 = vpop.f32.mrb[0].mxu0
      %994 = vmatprep.mubr.f32.mxu0 %v388
      %995 = vmatmul.mubr.f32.gmra.mrb[0].mxu0 %v387
      %v996 = vpop.f32.mrb[0].mxu0
      %v997 = vadd.f32 %v732, %v996
      %v998 = vpop.f32.mrb[0].mxu0
      %999 = vmatprep.mubr.f32.mxu0 %v393
      %1000 = vmatmul.mubr.f32.gmra.mrb[0].mxu0 %v392
      %v1001 = vpop.f32.mrb[0].mxu0
      %v1002 = vadd.f32 %v737, %v1001
      %v1003 = vpop.f32.mrb[0].mxu0
      %1004 = vmatprep.mubr.f32.mxu0 %v398
      %1005 = vmatmul.mubr.f32.gmra.mrb[0].mxu0 %v397
      %v1006 = vpop.f32.mrb[0].mxu0
      %v1007 = vadd.f32 %v742, %v1006
      %v1008 = vpop.f32.mrb[0].mxu0
      %1009 = vmatprep.mubr.f32.mxu0 %v403
      %1010 = vmatmul.mubr.f32.gmra.mrb[0].mxu0 %v402
      %v1011 = vpop.f32.mrb[0].mxu0
      %v1012 = vadd.f32 %v747, %v1011
      %v1013 = vpop.f32.mrb[0].mxu0
      %1014 = vmatprep.mubr.f32.mxu0 %v408
      %1015 = vmatmul.mubr.f32.gmra.mrb[0].mxu0 %v407
      %v1016 = vpop.f32.mrb[0].mxu0
      %v1017 = vadd.f32 %v752, %v1016
      %v1018 = vpop.f32.mrb[0].mxu0
      %1019 = vmatprep.mubr.f32.mxu0 %v413
      %1020 = vmatmul.mubr.f32.gmra.mrb[0].mxu0 %v412
      %v1021 = vpop.f32.mrb[0].mxu0
      %v1022 = vadd.f32 %v757, %v1021
      %v1023 = vpop.f32.mrb[0].mxu0
      %1024 = vmatprep.mubr.f32.mxu0 %v418
      %1025 = vmatmul.mubr.f32.gmra.mrb[0].mxu0 %v417
      %v1026 = vpop.f32.mrb[0].mxu0
      %v1027 = vadd.f32 %v762, %v1026
      %v1028 = vpop.f32.mrb[0].mxu0
      %1029 = vmatprep.mubr.f32.mxu0 %v423
      %1030 = vmatmul.mubr.f32.gmra.mrb[0].mxu0 %v422
      %v1031 = vpop.f32.mrb[0].mxu0
      %v1032 = vadd.f32 %v767, %v1031
      %v1033 = vpop.f32.mrb[0].mxu0
      %1034 = vmatprep.mubr.f32.mxu0 %v428
      %1035 = vmatmul.mubr.f32.gmra.mrb[0].mxu0 %v427
      %v1036 = vpop.f32.mrb[0].mxu0
      %v1037 = vadd.f32 %v772, %v1036
      %v1038 = vpop.f32.mrb[0].mxu0
      %1039 = vmatprep.mubr.f32.mxu0 %v433
      %1040 = vmatmul.mubr.f32.gmra.mrb[0].mxu0 %v432
      %v1041 = vpop.f32.mrb[0].mxu0
      %v1042 = vadd.f32 %v777, %v1041
      %v1043 = vpop.f32.mrb[0].mxu0
      %1044 = vmatprep.mubr.f32.mxu0 %v438
      %1045 = vmatmul.mubr.f32.gmra.mrb[0].mxu0 %v437
      %v1046 = vpop.f32.mrb[0].mxu0
      %v1047 = vadd.f32 %v782, %v1046
      %v1048 = vpop.f32.mrb[0].mxu0
      %1049 = vmatprep.mubr.f32.mxu0 %v443
      %1050 = vmatmul.mubr.f32.gmra.mrb[0].mxu0 %v442
      %v1051 = vpop.f32.mrb[0].mxu0
      %v1052 = vadd.f32 %v787, %v1051
      %v1053 = vpop.f32.mrb[0].mxu0
      %1054 = vmatprep.mubr.f32.mxu0 %v448
      %1055 = vmatmul.mubr.f32.gmra.mrb[0].mxu0 %v447
      %v1056 = vpop.f32.mrb[0].mxu0
      %v1057 = vadd.f32 %v792, %v1056
      %v1058 = vpop.f32.mrb[0].mxu0
      %1059 = vmatprep.mubr.f32.mxu0 %v453
      %1060 = vmatmul.mubr.f32.gmra.mrb[0].mxu0 %v452
      %v1061 = vpop.f32.mrb[0].mxu0
      %v1062 = vadd.f32 %v797, %v1061
      %v1063 = vpop.f32.mrb[0].mxu0
      %1064 = vmatprep.mubr.f32.mxu0 %v458
      %1065 = vmatmul.mubr.f32.gmra.mrb[0].mxu0 %v457
      %v1066 = vpop.f32.mrb[0].mxu0
      %v1067 = vadd.f32 %v802, %v1066
      %v1068 = vpop.f32.mrb[0].mxu0
      %1069 = vmatprep.mubr.f32.mxu0 %v463
      %1070 = vmatmul.mubr.f32.gmra.mrb[0].mxu0 %v462
      %v1071 = vpop.f32.mrb[0].mxu0
      %v1072 = vadd.f32 %v807, %v1071
      %v1073 = vpop.f32.mrb[0].mxu0
      %1074 = vdwg.mxu0
      %1075 = vmatprep.subr.mxu0 0.0
      %1076 = vmatpush1.msra.mxu0 %v529
      %1077 = vmatprep.subr.mxu0 0.0
      %1078 = vmatpush1.msra.mxu0 %v530
      %1079 = vmatprep.subr.mxu0 0.0
      %1080 = vmatpush1.msra.mxu0 %v531
      %1081 = vmatprep.subr.mxu0 0.0
      %1082 = vmatpush1.msra.mxu0 %v532
      %1083 = vmatprep.subr.mxu0 0.0
      %1084 = vmatpush1.msra.mxu0 %v533
      %1085 = vmatprep.subr.mxu0 0.0
      %1086 = vmatpush1.msra.mxu0 %v534
      %1087 = vmatprep.subr.mxu0 0.0
      %1088 = vmatpush1.msra.mxu0 %v535
      %1089 = vmatprep.subr.mxu0 0.0
      %1090 = vmatpush1.msra.mxu0 %v536
      %1091 = vmatprep.subr.mxu0 0.0
      %1092 = vmatpush1.msra.mxu0 %v537
      %1093 = vmatprep.subr.mxu0 0.0
      %1094 = vmatpush1.msra.mxu0 %v538
      %1095 = vmatprep.subr.mxu0 0.0
      %1096 = vmatpush1.msra.mxu0 %v539
      %1097 = vmatprep.subr.mxu0 0.0
      %1098 = vmatpush1.msra.mxu0 %v540
      %1099 = vmatprep.subr.mxu0 0.0
      %1100 = vmatpush1.msra.mxu0 %v541
      %1101 = vmatprep.subr.mxu0 0.0
      %1102 = vmatpush1.msra.mxu0 %v542
      %1103 = vmatprep.subr.mxu0 0.0
      %1104 = vmatpush1.msra.mxu0 %v543
      %1105 = vmatprep.subr.mxu0 0.0
      %1106 = vmatpush1.msra.mxu0 %v544
      %1107 = vmatprep.subr.mxu0 0.0
      %1108 = vmatpush1.msra.mxu0 0.0
      %1109 = vmatprep.subr.mxu0 0.0
      %1110 = vmatpush1.msra.mxu0 0.0
      %1111 = vmatprep.subr.mxu0 0.0
      %1112 = vmatpush1.msra.mxu0 0.0
      %1113 = vmatprep.subr.mxu0 0.0
      %1114 = vmatpush1.msra.mxu0 0.0
      %1115 = vmatprep.subr.mxu0 0.0
      %1116 = vmatpush1.msra.mxu0 0.0
      %1117 = vmatprep.subr.mxu0 0.0
      %1118 = vmatpush1.msra.mxu0 0.0
      %1119 = vmatprep.subr.mxu0 0.0
      %1120 = vmatpush1.msra.mxu0 0.0
      %1121 = vmatprep.subr.mxu0 0.0
      %1122 = vmatpush1.msra.mxu0 0.0
      %1123 = vmatprep.subr.mxu0 0.0
      %1124 = vmatpush1.msra.mxu0 0.0
      %1125 = vmatprep.subr.mxu0 0.0
      %1126 = vmatpush1.msra.mxu0 0.0
      %1127 = vmatprep.subr.mxu0 0.0
      %1128 = vmatpush1.msra.mxu0 0.0
      %1129 = vmatprep.subr.mxu0 0.0
      %1130 = vmatpush1.msra.mxu0 0.0
      %1131 = vmatprep.subr.mxu0 0.0
      %1132 = vmatpush1.msra.mxu0 0.0
      %1133 = vmatprep.subr.mxu0 0.0
      %1134 = vmatpush1.msra.mxu0 0.0
      %1135 = vmatprep.subr.mxu0 0.0
      %1136 = vmatpush1.msra.mxu0 0.0
      %1137 = vmatprep.subr.mxu0 0.0
      %1138 = vmatpush1.msra.mxu0 0.0
      %1139 = vmatprep.mubr.f32.mxu0 0.0
      %1140 = vmatmul.mubr.f32.gmra.mrb[0].mxu0 %v269
      %v1141 = vpop.f32.mrb[0].mxu0
      %v1142 = vadd.f32 %v877, %v1141
      %v1143 = vpop.f32.mrb[0].mxu0
      %1144 = vmatprep.mubr.f32.mxu0 0.0
      %1145 = vmatmul.mubr.f32.gmra.mrb[0].mxu0 %v274
      %v1146 = vpop.f32.mrb[0].mxu0
      %v1147 = vadd.f32 %v882, %v1146
      %v1148 = vpop.f32.mrb[0].mxu0
      %1149 = vmatprep.mubr.f32.mxu0 0.0
      %1150 = vmatmul.mubr.f32.gmra.mrb[0].mxu0 %v279
      %v1151 = vpop.f32.mrb[0].mxu0
      %v1152 = vadd.f32 %v887, %v1151
      %v1153 = vpop.f32.mrb[0].mxu0
      %1154 = vmatprep.mubr.f32.mxu0 0.0
      %1155 = vmatmul.mubr.f32.gmra.mrb[0].mxu0 %v284
      %v1156 = vpop.f32.mrb[0].mxu0
      %v1157 = vadd.f32 %v892, %v1156
      %v1158 = vpop.f32.mrb[0].mxu0
      %1159 = vmatprep.mubr.f32.mxu0 0.0
      %1160 = vmatmul.mubr.f32.gmra.mrb[0].mxu0 %v289
      %v1161 = vpop.f32.mrb[0].mxu0
      %v1162 = vadd.f32 %v897, %v1161
      %v1163 = vpop.f32.mrb[0].mxu0
      %1164 = vmatprep.mubr.f32.mxu0 0.0
      %1165 = vmatmul.mubr.f32.gmra.mrb[0].mxu0 %v294
      %v1166 = vpop.f32.mrb[0].mxu0
      %v1167 = vadd.f32 %v902, %v1166
      %v1168 = vpop.f32.mrb[0].mxu0
      %1169 = vmatprep.mubr.f32.mxu0 0.0
      %1170 = vmatmul.mubr.f32.gmra.mrb[0].mxu0 %v299
      %v1171 = vpop.f32.mrb[0].mxu0
      %v1172 = vadd.f32 %v907, %v1171
      %v1173 = vpop.f32.mrb[0].mxu0
      %1174 = vmatprep.mubr.f32.mxu0 0.0
      %1175 = vmatmul.mubr.f32.gmra.mrb[0].mxu0 %v304
      %v1176 = vpop.f32.mrb[0].mxu0
      %v1177 = vadd.f32 %v912, %v1176
      %v1178 = vpop.f32.mrb[0].mxu0
      %1179 = vmatprep.mubr.f32.mxu0 0.0
      %1180 = vmatmul.mubr.f32.gmra.mrb[0].mxu0 %v309
      %v1181 = vpop.f32.mrb[0].mxu0
      %v1182 = vadd.f32 %v917, %v1181
      %v1183 = vpop.f32.mrb[0].mxu0
      %1184 = vmatprep.mubr.f32.mxu0 0.0
      %1185 = vmatmul.mubr.f32.gmra.mrb[0].mxu0 %v314
      %v1186 = vpop.f32.mrb[0].mxu0
      %v1187 = vadd.f32 %v922, %v1186
      %v1188 = vpop.f32.mrb[0].mxu0
      %1189 = vmatprep.mubr.f32.mxu0 0.0
      %1190 = vmatmul.mubr.f32.gmra.mrb[0].mxu0 %v319
      %v1191 = vpop.f32.mrb[0].mxu0
      %v1192 = vadd.f32 %v927, %v1191
      %v1193 = vpop.f32.mrb[0].mxu0
      %1194 = vmatprep.mubr.f32.mxu0 0.0
      %1195 = vmatmul.mubr.f32.gmra.mrb[0].mxu0 %v324
      %v1196 = vpop.f32.mrb[0].mxu0
      %v1197 = vadd.f32 %v932, %v1196
      %v1198 = vpop.f32.mrb[0].mxu0
      %1199 = vmatprep.mubr.f32.mxu0 0.0
      %1200 = vmatmul.mubr.f32.gmra.mrb[0].mxu0 %v329
      %v1201 = vpop.f32.mrb[0].mxu0
      %v1202 = vadd.f32 %v937, %v1201
      %v1203 = vpop.f32.mrb[0].mxu0
      %1204 = vmatprep.mubr.f32.mxu0 0.0
      %1205 = vmatmul.mubr.f32.gmra.mrb[0].mxu0 %v334
      %v1206 = vpop.f32.mrb[0].mxu0
      %v1207 = vadd.f32 %v942, %v1206
      %v1208 = vpop.f32.mrb[0].mxu0
      %1209 = vmatprep.mubr.f32.mxu0 0.0
      %1210 = vmatmul.mubr.f32.gmra.mrb[0].mxu0 %v339
      %v1211 = vpop.f32.mrb[0].mxu0
      %v1212 = vadd.f32 %v947, %v1211
      %v1213 = vpop.f32.mrb[0].mxu0
      %1214 = vmatprep.mubr.f32.mxu0 0.0
      %1215 = vmatmul.mubr.f32.gmra.mrb[0].mxu0 %v344
      %v1216 = vpop.f32.mrb[0].mxu0
      %v1217 = vadd.f32 %v952, %v1216
      %v1218 = vpop.f32.mrb[0].mxu0
      %1219 = vmatprep.mubr.f32.mxu0 0.0
      %1220 = vmatmul.mubr.f32.gmra.mrb[0].mxu0 %v349
      %v1221 = vpop.f32.mrb[0].mxu0
      %v1222 = vadd.f32 %v957, %v1221
      %v1223 = vpop.f32.mrb[0].mxu0
      %1224 = vmatprep.mubr.f32.mxu0 0.0
      %1225 = vmatmul.mubr.f32.gmra.mrb[0].mxu0 %v354
      %v1226 = vpop.f32.mrb[0].mxu0
      %v1227 = vadd.f32 %v962, %v1226
      %v1228 = vpop.f32.mrb[0].mxu0
      %1229 = vmatprep.mubr.f32.mxu0 0.0
      %1230 = vmatmul.mubr.f32.gmra.mrb[0].mxu0 %v359
      %v1231 = vpop.f32.mrb[0].mxu0
      %v1232 = vadd.f32 %v967, %v1231
      %v1233 = vpop.f32.mrb[0].mxu0
      %1234 = vmatprep.mubr.f32.mxu0 0.0
      %1235 = vmatmul.mubr.f32.gmra.mrb[0].mxu0 %v364
      %v1236 = vpop.f32.mrb[0].mxu0
      %v1237 = vadd.f32 %v972, %v1236
      %v1238 = vpop.f32.mrb[0].mxu0
      %1239 = vmatprep.mubr.f32.mxu0 0.0
      %1240 = vmatmul.mubr.f32.gmra.mrb[0].mxu0 %v369
      %v1241 = vpop.f32.mrb[0].mxu0
      %v1242 = vadd.f32 %v977, %v1241
      %v1243 = vpop.f32.mrb[0].mxu0
      %1244 = vmatprep.mubr.f32.mxu0 0.0
      %1245 = vmatmul.mubr.f32.gmra.mrb[0].mxu0 %v374
      %v1246 = vpop.f32.mrb[0].mxu0
      %v1247 = vadd.f32 %v982, %v1246
      %v1248 = vpop.f32.mrb[0].mxu0
      %1249 = vmatprep.mubr.f32.mxu0 0.0
      %1250 = vmatmul.mubr.f32.gmra.mrb[0].mxu0 %v379
      %v1251 = vpop.f32.mrb[0].mxu0
      %v1252 = vadd.f32 %v987, %v1251
      %v1253 = vpop.f32.mrb[0].mxu0
      %1254 = vmatprep.mubr.f32.mxu0 0.0
      %1255 = vmatmul.mubr.f32.gmra.mrb[0].mxu0 %v384
      %v1256 = vpop.f32.mrb[0].mxu0
      %v1257 = vadd.f32 %v992, %v1256
      %v1258 = vpop.f32.mrb[0].mxu0
      %1259 = vmatprep.mubr.f32.mxu0 0.0
      %1260 = vmatmul.mubr.f32.gmra.mrb[0].mxu0 %v389
      %v1261 = vpop.f32.mrb[0].mxu0
      %v1262 = vadd.f32 %v997, %v1261
      %v1263 = vpop.f32.mrb[0].mxu0
      %1264 = vmatprep.mubr.f32.mxu0 0.0
      %1265 = vmatmul.mubr.f32.gmra.mrb[0].mxu0 %v394
      %v1266 = vpop.f32.mrb[0].mxu0
      %v1267 = vadd.f32 %v1002, %v1266
      %v1268 = vpop.f32.mrb[0].mxu0
      %1269 = vmatprep.mubr.f32.mxu0 0.0
      %1270 = vmatmul.mubr.f32.gmra.mrb[0].mxu0 %v399
      %v1271 = vpop.f32.mrb[0].mxu0
      %v1272 = vadd.f32 %v1007, %v1271
      %v1273 = vpop.f32.mrb[0].mxu0
      %1274 = vmatprep.mubr.f32.mxu0 0.0
      %1275 = vmatmul.mubr.f32.gmra.mrb[0].mxu0 %v404
      %v1276 = vpop.f32.mrb[0].mxu0
      %v1277 = vadd.f32 %v1012, %v1276
      %v1278 = vpop.f32.mrb[0].mxu0
      %1279 = vmatprep.mubr.f32.mxu0 0.0
      %1280 = vmatmul.mubr.f32.gmra.mrb[0].mxu0 %v409
      %v1281 = vpop.f32.mrb[0].mxu0
      %v1282 = vadd.f32 %v1017, %v1281
      %v1283 = vpop.f32.mrb[0].mxu0
      %1284 = vmatprep.mubr.f32.mxu0 0.0
      %1285 = vmatmul.mubr.f32.gmra.mrb[0].mxu0 %v414
      %v1286 = vpop.f32.mrb[0].mxu0
      %v1287 = vadd.f32 %v1022, %v1286
      %v1288 = vpop.f32.mrb[0].mxu0
      %1289 = vmatprep.mubr.f32.mxu0 0.0
      %1290 = vmatmul.mubr.f32.gmra.mrb[0].mxu0 %v419
      %v1291 = vpop.f32.mrb[0].mxu0
      %v1292 = vadd.f32 %v1027, %v1291
      %v1293 = vpop.f32.mrb[0].mxu0
      %1294 = vmatprep.mubr.f32.mxu0 0.0
      %1295 = vmatmul.mubr.f32.gmra.mrb[0].mxu0 %v424
      %v1296 = vpop.f32.mrb[0].mxu0
      %v1297 = vadd.f32 %v1032, %v1296
      %v1298 = vpop.f32.mrb[0].mxu0
      %1299 = vmatprep.mubr.f32.mxu0 0.0
      %1300 = vmatmul.mubr.f32.gmra.mrb[0].mxu0 %v429
      %v1301 = vpop.f32.mrb[0].mxu0
      %v1302 = vadd.f32 %v1037, %v1301
      %v1303 = vpop.f32.mrb[0].mxu0
      %1304 = vmatprep.mubr.f32.mxu0 0.0
      %1305 = vmatmul.mubr.f32.gmra.mrb[0].mxu0 %v434
      %v1306 = vpop.f32.mrb[0].mxu0
      %v1307 = vadd.f32 %v1042, %v1306
      %v1308 = vpop.f32.mrb[0].mxu0
      %1309 = vmatprep.mubr.f32.mxu0 0.0
      %1310 = vmatmul.mubr.f32.gmra.mrb[0].mxu0 %v439
      %v1311 = vpop.f32.mrb[0].mxu0
      %v1312 = vadd.f32 %v1047, %v1311
      %v1313 = vpop.f32.mrb[0].mxu0
      %1314 = vmatprep.mubr.f32.mxu0 0.0
      %1315 = vmatmul.mubr.f32.gmra.mrb[0].mxu0 %v444
      %v1316 = vpop.f32.mrb[0].mxu0
      %v1317 = vadd.f32 %v1052, %v1316
      %v1318 = vpop.f32.mrb[0].mxu0
      %1319 = vmatprep.mubr.f32.mxu0 0.0
      %1320 = vmatmul.mubr.f32.gmra.mrb[0].mxu0 %v449
      %v1321 = vpop.f32.mrb[0].mxu0
      %v1322 = vadd.f32 %v1057, %v1321
      %v1323 = vpop.f32.mrb[0].mxu0
      %1324 = vmatprep.mubr.f32.mxu0 0.0
      %1325 = vmatmul.mubr.f32.gmra.mrb[0].mxu0 %v454
      %v1326 = vpop.f32.mrb[0].mxu0
      %v1327 = vadd.f32 %v1062, %v1326
      %v1328 = vpop.f32.mrb[0].mxu0
      %1329 = vmatprep.mubr.f32.mxu0 0.0
      %1330 = vmatmul.mubr.f32.gmra.mrb[0].mxu0 %v459
      %v1331 = vpop.f32.mrb[0].mxu0
      %v1332 = vadd.f32 %v1067, %v1331
      %v1333 = vpop.f32.mrb[0].mxu0
      %1334 = vmatprep.mubr.f32.mxu0 0.0
      %1335 = vmatmul.mubr.f32.gmra.mrb[0].mxu0 %v464
      %v1336 = vpop.f32.mrb[0].mxu0
      %v1337 = vadd.f32 %v1072, %v1336
      %v1338 = vpop.f32.mrb[0].mxu0
      %1339 = vdwg.mxu0
      %v1340 = vlog2.pop %v1142
      %v1341 = vmul.f32 %v1340, 0.6931472
      %v1342 = vlog2.pop %v1147
      %v1343 = vmul.f32 %v1342, 0.6931472
      %v1344 = vlog2.pop %v1152
      %v1345 = vmul.f32 %v1344, 0.6931472
      %v1346 = vlog2.pop %v1157
      %v1347 = vmul.f32 %v1346, 0.6931472
      %v1348 = vlog2.pop %v1162
      %v1349 = vmul.f32 %v1348, 0.6931472
      %v1350 = vlog2.pop %v1167
      %v1351 = vmul.f32 %v1350, 0.6931472
      %v1352 = vlog2.pop %v1172
      %v1353 = vmul.f32 %v1352, 0.6931472
      %v1354 = vlog2.pop %v1177
      %v1355 = vmul.f32 %v1354, 0.6931472
      %v1356 = vlog2.pop %v1182
      %v1357 = vmul.f32 %v1356, 0.6931472
      %v1358 = vlog2.pop %v1187
      %v1359 = vmul.f32 %v1358, 0.6931472
      %v1360 = vlog2.pop %v1192
      %v1361 = vmul.f32 %v1360, 0.6931472
      %v1362 = vlog2.pop %v1197
      %v1363 = vmul.f32 %v1362, 0.6931472
      %v1364 = vlog2.pop %v1202
      %v1365 = vmul.f32 %v1364, 0.6931472
      %v1366 = vlog2.pop %v1207
      %v1367 = vmul.f32 %v1366, 0.6931472
      %v1368 = vlog2.pop %v1212
      %v1369 = vmul.f32 %v1368, 0.6931472
      %v1370 = vlog2.pop %v1217
      %v1371 = vmul.f32 %v1370, 0.6931472
      %v1372 = vlog2.pop %v1222
      %v1373 = vmul.f32 %v1372, 0.6931472
      %v1374 = vlog2.pop %v1227
      %v1375 = vmul.f32 %v1374, 0.6931472
      %v1376 = vlog2.pop %v1232
      %v1377 = vmul.f32 %v1376, 0.6931472
      %v1378 = vlog2.pop %v1237
      %v1379 = vmul.f32 %v1378, 0.6931472
      %v1380 = vlog2.pop %v1242
      %v1381 = vmul.f32 %v1380, 0.6931472
      %v1382 = vlog2.pop %v1247
      %v1383 = vmul.f32 %v1382, 0.6931472
      %v1384 = vlog2.pop %v1252
      %v1385 = vmul.f32 %v1384, 0.6931472
      %v1386 = vlog2.pop %v1257
      %v1387 = vmul.f32 %v1386, 0.6931472
      %v1388 = vlog2.pop %v1262
      %v1389 = vmul.f32 %v1388, 0.6931472
      %v1390 = vlog2.pop %v1267
      %v1391 = vmul.f32 %v1390, 0.6931472
      %v1392 = vlog2.pop %v1272
      %v1393 = vmul.f32 %v1392, 0.6931472
      %v1394 = vlog2.pop %v1277
      %v1395 = vmul.f32 %v1394, 0.6931472
      %v1396 = vlog2.pop %v1282
      %v1397 = vmul.f32 %v1396, 0.6931472
      %v1398 = vlog2.pop %v1287
      %v1399 = vmul.f32 %v1398, 0.6931472
      %v1400 = vlog2.pop %v1292
      %v1401 = vmul.f32 %v1400, 0.6931472
      %v1402 = vlog2.pop %v1297
      %v1403 = vmul.f32 %v1402, 0.6931472
      %v1404 = vlog2.pop %v1302
      %v1405 = vmul.f32 %v1404, 0.6931472
      %v1406 = vlog2.pop %v1307
      %v1407 = vmul.f32 %v1406, 0.6931472
      %v1408 = vlog2.pop %v1312
      %v1409 = vmul.f32 %v1408, 0.6931472
      %v1410 = vlog2.pop %v1317
      %v1411 = vmul.f32 %v1410, 0.6931472
      %v1412 = vlog2.pop %v1322
      %v1413 = vmul.f32 %v1412, 0.6931472
      %v1414 = vlog2.pop %v1327
      %v1415 = vmul.f32 %v1414, 0.6931472
      %v1416 = vlog2.pop %v1332
      %v1417 = vmul.f32 %v1416, 0.6931472
      %v1418 = vlog2.pop %v1337
      %v1419 = vmul.f32 %v1418, 0.6931472
      %v1420 = vmul.f32 %v1341, 4.3429446
      %v1421 = vmul.f32 %v1343, 4.3429446
      %v1422 = vmul.f32 %v1345, 4.3429446
      %v1423 = vmul.f32 %v1347, 4.3429446
      %v1424 = vmul.f32 %v1349, 4.3429446
      %v1425 = vmul.f32 %v1351, 4.3429446
      %v1426 = vmul.f32 %v1353, 4.3429446
      %v1427 = vmul.f32 %v1355, 4.3429446
      %v1428 = vmul.f32 %v1357, 4.3429446
      %v1429 = vmul.f32 %v1359, 4.3429446
      %v1430 = vmul.f32 %v1361, 4.3429446
      %v1431 = vmul.f32 %v1363, 4.3429446
      %v1432 = vmul.f32 %v1365, 4.3429446
      %v1433 = vmul.f32 %v1367, 4.3429446
      %v1434 = vmul.f32 %v1369, 4.3429446
      %v1435 = vmul.f32 %v1371, 4.3429446
      %v1436 = vmul.f32 %v1373, 4.3429446
      %v1437 = vmul.f32 %v1375, 4.3429446
      %v1438 = vmul.f32 %v1377, 4.3429446
      %v1439 = vmul.f32 %v1379, 4.3429446
      %v1440 = vmul.f32 %v1381, 4.3429446
      %v1441 = vmul.f32 %v1383, 4.3429446
      %v1442 = vmul.f32 %v1385, 4.3429446
      %v1443 = vmul.f32 %v1387, 4.3429446
      %v1444 = vmul.f32 %v1389, 4.3429446
      %v1445 = vmul.f32 %v1391, 4.3429446
      %v1446 = vmul.f32 %v1393, 4.3429446
      %v1447 = vmul.f32 %v1395, 4.3429446
      %v1448 = vmul.f32 %v1397, 4.3429446
      %v1449 = vmul.f32 %v1399, 4.3429446
      %v1450 = vmul.f32 %v1401, 4.3429446
      %v1451 = vmul.f32 %v1403, 4.3429446
      %v1452 = vmul.f32 %v1405, 4.3429446
      %v1453 = vmul.f32 %v1407, 4.3429446
      %v1454 = vmul.f32 %v1409, 4.3429446
      %v1455 = vmul.f32 %v1411, 4.3429446
      %v1456 = vmul.f32 %v1413, 4.3429446
      %v1457 = vmul.f32 %v1415, 4.3429446
      %v1458 = vmul.f32 %v1417, 4.3429446
      %v1459 = vmul.f32 %v1419, 4.3429446
      %1460 = vst [vmem:[#allocation2] sm:$0xff] %v1420
      %1461 = vst [vmem:[#allocation2 + $0x8] sm:$0xff] %v1421
      %1462 = vst [vmem:[#allocation2 + $0x10] sm:$0xff] %v1422
      %1463 = vst [vmem:[#allocation2 + $0x18] sm:$0xff] %v1423
      %1464 = vst [vmem:[#allocation2 + $0x20] sm:$0xff] %v1424
      %1465 = vst [vmem:[#allocation2 + $0x28] sm:$0xff] %v1425
      %1466 = vst [vmem:[#allocation2 + $0x30] sm:$0xff] %v1426
      %1467 = vst [vmem:[#allocation2 + $0x38] sm:$0xff] %v1427
      %1468 = vst [vmem:[#allocation2 + $0x40] sm:$0xff] %v1428
      %1469 = vst [vmem:[#allocation2 + $0x48] sm:$0xff] %v1429
      %1470 = vst [vmem:[#allocation2 + $0x50] sm:$0xff] %v1430
      %1471 = vst [vmem:[#allocation2 + $0x58] sm:$0xff] %v1431
      %1472 = vst [vmem:[#allocation2 + $0x60] sm:$0xff] %v1432
      %1473 = vst [vmem:[#allocation2 + $0x68] sm:$0xff] %v1433
      %1474 = vst [vmem:[#allocation2 + $0x70] sm:$0xff] %v1434
      %1475 = vst [vmem:[#allocation2 + $0x78] sm:$0xff] %v1435
      %1476 = vst [vmem:[#allocation2 + $0x80] sm:$0xff] %v1436
      %1477 = vst [vmem:[#allocation2 + $0x88] sm:$0xff] %v1437
      %1478 = vst [vmem:[#allocation2 + $0x90] sm:$0xff] %v1438
      %1479 = vst [vmem:[#allocation2 + $0x98] sm:$0xff] %v1439
      %1480 = vst [vmem:[#allocation2 + $0xa0] sm:$0xff] %v1440
      %1481 = vst [vmem:[#allocation2 + $0xa8] sm:$0xff] %v1441
      %1482 = vst [vmem:[#allocation2 + $0xb0] sm:$0xff] %v1442
      %1483 = vst [vmem:[#allocation2 + $0xb8] sm:$0xff] %v1443
      %1484 = vst [vmem:[#allocation2 + $0xc0] sm:$0xff] %v1444
      %1485 = vst [vmem:[#allocation2 + $0xc8] sm:$0xff] %v1445
      %1486 = vst [vmem:[#allocation2 + $0xd0] sm:$0xff] %v1446
      %1487 = vst [vmem:[#allocation2 + $0xd8] sm:$0xff] %v1447
      %1488 = vst [vmem:[#allocation2 + $0xe0] sm:$0xff] %v1448
      %1489 = vst [vmem:[#allocation2 + $0xe8] sm:$0xff] %v1449
      %1490 = vst [vmem:[#allocation2 + $0xf0] sm:$0xff] %v1450
      %1491 = vst [vmem:[#allocation2 + $0xf8] sm:$0xff] %v1451
      %1492 = vst [vmem:[#allocation2 + $0x100] sm:$0xff] %v1452
      %1493 = vst [vmem:[#allocation2 + $0x108] sm:$0xff] %v1453
      %1494 = vst [vmem:[#allocation2 + $0x110] sm:$0xff] %v1454
      %1495 = vst [vmem:[#allocation2 + $0x118] sm:$0xff] %v1455
      %1496 = vst [vmem:[#allocation2 + $0x120] sm:$0xff] %v1456
      %1497 = vst [vmem:[#allocation2 + $0x128] sm:$0xff] %v1457
      %1498 = vst [vmem:[#allocation2 + $0x130] sm:$0xff] %v1458
      %1499 = vst [vmem:[#allocation2 + $0x138] sm:$0xff] %v1459
      %v1500 = vld [vmem:[#allocation2] sm:$0xff]
      %v1501 = vld [vmem:[#allocation2 + $0x8] sm:$0xff]
      %v1502 = vld [vmem:[#allocation2 + $0x10] sm:$0xff]
      %v1503 = vld [vmem:[#allocation2 + $0x18] sm:$0xff]
      %v1504 = vld [vmem:[#allocation2 + $0x20] sm:$0xff]
      %v1505 = vld [vmem:[#allocation2 + $0x28] sm:$0xff]
      %v1506 = vld [vmem:[#allocation2 + $0x30] sm:$0xff]
      %v1507 = vld [vmem:[#allocation2 + $0x38] sm:$0xff]
      %v1508 = vld [vmem:[#allocation2 + $0x40] sm:$0xff]
      %v1509 = vld [vmem:[#allocation2 + $0x48] sm:$0xff]
      %v1510 = vld [vmem:[#allocation2 + $0x50] sm:$0xff]
      %v1511 = vld [vmem:[#allocation2 + $0x58] sm:$0xff]
      %v1512 = vld [vmem:[#allocation2 + $0x60] sm:$0xff]
      %v1513 = vld [vmem:[#allocation2 + $0x68] sm:$0xff]
      %v1514 = vld [vmem:[#allocation2 + $0x70] sm:$0xff]
      %v1515 = vld [vmem:[#allocation2 + $0x78] sm:$0xff]
      %v1516 = vld [vmem:[#allocation2 + $0x80] sm:$0xff]
      %v1517 = vld [vmem:[#allocation2 + $0x88] sm:$0xff]
      %v1518 = vld [vmem:[#allocation2 + $0x90] sm:$0xff]
      %v1519 = vld [vmem:[#allocation2 + $0x98] sm:$0xff]
      %v1520 = vld [vmem:[#allocation2 + $0xa0] sm:$0xff]
      %v1521 = vld [vmem:[#allocation2 + $0xa8] sm:$0xff]
      %v1522 = vld [vmem:[#allocation2 + $0xb0] sm:$0xff]
      %v1523 = vld [vmem:[#allocation2 + $0xb8] sm:$0xff]
      %v1524 = vld [vmem:[#allocation2 + $0xc0] sm:$0xff]
      %v1525 = vld [vmem:[#allocation2 + $0xc8] sm:$0xff]
      %v1526 = vld [vmem:[#allocation2 + $0xd0] sm:$0xff]
      %v1527 = vld [vmem:[#allocation2 + $0xd8] sm:$0xff]
      %v1528 = vld [vmem:[#allocation2 + $0xe0] sm:$0xff]
      %v1529 = vld [vmem:[#allocation2 + $0xe8] sm:$0xff]
      %v1530 = vld [vmem:[#allocation2 + $0xf0] sm:$0xff]
      %v1531 = vld [vmem:[#allocation2 + $0xf8] sm:$0xff]
      %v1532 = vld [vmem:[#allocation2 + $0x100] sm:$0xff]
      %v1533 = vld [vmem:[#allocation2 + $0x108] sm:$0xff]
      %v1534 = vld [vmem:[#allocation2 + $0x110] sm:$0xff]
      %v1535 = vld [vmem:[#allocation2 + $0x118] sm:$0xff]
      %v1536 = vld [vmem:[#allocation2 + $0x120] sm:$0xff]
      %v1537 = vld [vmem:[#allocation2 + $0x128] sm:$0xff]
      %v1538 = vld [vmem:[#allocation2 + $0x130] sm:$0xff]
      %1539 = vst [vmem:[#allocation3] sm:$0xff] %v1500
      %1540 = vst [vmem:[#allocation3 + $0x28] sm:$0xff] %v1501
      %1541 = vst [vmem:[#allocation3 + $0x50] sm:$0xff] %v1502
      %1542 = vst [vmem:[#allocation3 + $0x78] sm:$0xff] %v1503
      %1543 = vst [vmem:[#allocation3 + $0xa0] sm:$0xff] %v1504
      %1544 = vst [vmem:[#allocation3 + $0xc8] sm:$0xff] %v1505
      %1545 = vst [vmem:[#allocation3 + $0xf0] sm:$0xff] %v1506
      %1546 = vst [vmem:[#allocation3 + $0x118] sm:$0xff] %v1507
      %1547 = vst [vmem:[#allocation3 + $0x140] sm:$0xff] %v1508
      %1548 = vst [vmem:[#allocation3 + $0x168] sm:$0xff] %v1509
      %1549 = vst [vmem:[#allocation3 + $0x190] sm:$0xff] %v1510
      %1550 = vst [vmem:[#allocation3 + $0x1b8] sm:$0xff] %v1511
      %1551 = vst [vmem:[#allocation3 + $0x1e0] sm:$0xff] %v1512
      %1552 = vst [vmem:[#allocation3 + $0x208] sm:$0xff] %v1513
      %1553 = vst [vmem:[#allocation3 + $0x230] sm:$0xff] %v1514
      %1554 = vst [vmem:[#allocation3 + $0x258] sm:$0xff] %v1515
      %1555 = vst [vmem:[#allocation3 + $0x280] sm:$0xff] %v1516
      %1556 = vst [vmem:[#allocation3 + $0x2a8] sm:$0xff] %v1517
      %1557 = vst [vmem:[#allocation3 + $0x2d0] sm:$0xff] %v1518
      %1558 = vst [vmem:[#allocation3 + $0x2f8] sm:$0xff] %v1519
      %1559 = vst [vmem:[#allocation3 + $0x320] sm:$0xff] %v1520
      %1560 = vst [vmem:[#allocation3 + $0x348] sm:$0xff] %v1521
      %1561 = vst [vmem:[#allocation3 + $0x370] sm:$0xff] %v1522
      %1562 = vst [vmem:[#allocation3 + $0x398] sm:$0xff] %v1523
      %1563 = vst [vmem:[#allocation3 + $0x3c0] sm:$0xff] %v1524
      %1564 = vst [vmem:[#allocation3 + $0x3e8] sm:$0xff] %v1525
      %1565 = vst [vmem:[#allocation3 + $0x410] sm:$0xff] %v1526
      %1566 = vst [vmem:[#allocation3 + $0x438] sm:$0xff] %v1527
      %1567 = vst [vmem:[#allocation3 + $0x460] sm:$0xff] %v1528
      %1568 = vst [vmem:[#allocation3 + $0x488] sm:$0xff] %v1529
      %1569 = vst [vmem:[#allocation3 + $0x4b0] sm:$0xff] %v1530
      %1570 = vst [vmem:[#allocation3 + $0x4d8] sm:$0xff] %v1531
      %1571 = vst [vmem:[#allocation3 + $0x500] sm:$0xff] %v1532
      %1572 = vst [vmem:[#allocation3 + $0x528] sm:$0xff] %v1533
      %1573 = vst [vmem:[#allocation3 + $0x550] sm:$0xff] %v1534
      %1574 = vst [vmem:[#allocation3 + $0x578] sm:$0xff] %v1535
      %1575 = vst [vmem:[#allocation3 + $0x5a0] sm:$0xff] %v1536
      %1576 = vst [vmem:[#allocation3 + $0x5c8] sm:$0xff] %v1537
      %1577 = vst [vmem:[#allocation3 + $0x5f0] sm:$0xff] %v1538
      %v1578 = vld [vmem:[#allocation2 + $0x1] sm:$0xff]
      %v1579 = vld [vmem:[#allocation2 + $0x9] sm:$0xff]
      %v1580 = vld [vmem:[#allocation2 + $0x11] sm:$0xff]
      %v1581 = vld [vmem:[#allocation2 + $0x19] sm:$0xff]
      %v1582 = vld [vmem:[#allocation2 + $0x21] sm:$0xff]
      %v1583 = vld [vmem:[#allocation2 + $0x29] sm:$0xff]
      %v1584 = vld [vmem:[#allocation2 + $0x31] sm:$0xff]
      %v1585 = vld [vmem:[#allocation2 + $0x39] sm:$0xff]
      %v1586 = vld [vmem:[#allocation2 + $0x41] sm:$0xff]
      %v1587 = vld [vmem:[#allocation2 + $0x49] sm:$0xff]
      %v1588 = vld [vmem:[#allocation2 + $0x51] sm:$0xff]
      %v1589 = vld [vmem:[#allocation2 + $0x59] sm:$0xff]
      %v1590 = vld [vmem:[#allocation2 + $0x61] sm:$0xff]
      %v1591 = vld [vmem:[#allocation2 + $0x69] sm:$0xff]
      %v1592 = vld [vmem:[#allocation2 + $0x71] sm:$0xff]
      %v1593 = vld [vmem:[#allocation2 + $0x79] sm:$0xff]
      %v1594 = vld [vmem:[#allocation2 + $0x81] sm:$0xff]
      %v1595 = vld [vmem:[#allocation2 + $0x89] sm:$0xff]
      %v1596 = vld [vmem:[#allocation2 + $0x91] sm:$0xff]
      %v1597 = vld [vmem:[#allocation2 + $0x99] sm:$0xff]
      %v1598 = vld [vmem:[#allocation2 + $0xa1] sm:$0xff]
      %v1599 = vld [vmem:[#allocation2 + $0xa9] sm:$0xff]
      %v1600 = vld [vmem:[#allocation2 + $0xb1] sm:$0xff]
      %v1601 = vld [vmem:[#allocation2 + $0xb9] sm:$0xff]
      %v1602 = vld [vmem:[#allocation2 + $0xc1] sm:$0xff]
      %v1603 = vld [vmem:[#allocation2 + $0xc9] sm:$0xff]
      %v1604 = vld [vmem:[#allocation2 + $0xd1] sm:$0xff]
      %v1605 = vld [vmem:[#allocation2 + $0xd9] sm:$0xff]
      %v1606 = vld [vmem:[#allocation2 + $0xe1] sm:$0xff]
      %v1607 = vld [vmem:[#allocation2 + $0xe9] sm:$0xff]
      %v1608 = vld [vmem:[#allocation2 + $0xf1] sm:$0xff]
      %v1609 = vld [vmem:[#allocation2 + $0xf9] sm:$0xff]
      %v1610 = vld [vmem:[#allocation2 + $0x101] sm:$0xff]
      %v1611 = vld [vmem:[#allocation2 + $0x109] sm:$0xff]
      %v1612 = vld [vmem:[#allocation2 + $0x111] sm:$0xff]
      %v1613 = vld [vmem:[#allocation2 + $0x119] sm:$0xff]
      %v1614 = vld [vmem:[#allocation2 + $0x121] sm:$0xff]
      %v1615 = vld [vmem:[#allocation2 + $0x129] sm:$0xff]
      %v1616 = vld [vmem:[#allocation2 + $0x131] sm:$0xff]
      %1617 = vst [vmem:[#allocation3 + $0x8] sm:$0xff] %v1578
      %1618 = vst [vmem:[#allocation3 + $0x30] sm:$0xff] %v1579
      %1619 = vst [vmem:[#allocation3 + $0x58] sm:$0xff] %v1580
      %1620 = vst [vmem:[#allocation3 + $0x80] sm:$0xff] %v1581
      %1621 = vst [vmem:[#allocation3 + $0xa8] sm:$0xff] %v1582
      %1622 = vst [vmem:[#allocation3 + $0xd0] sm:$0xff] %v1583
      %1623 = vst [vmem:[#allocation3 + $0xf8] sm:$0xff] %v1584
      %1624 = vst [vmem:[#allocation3 + $0x120] sm:$0xff] %v1585
      %1625 = vst [vmem:[#allocation3 + $0x148] sm:$0xff] %v1586
      %1626 = vst [vmem:[#allocation3 + $0x170] sm:$0xff] %v1587
      %1627 = vst [vmem:[#allocation3 + $0x198] sm:$0xff] %v1588
      %1628 = vst [vmem:[#allocation3 + $0x1c0] sm:$0xff] %v1589
      %1629 = vst [vmem:[#allocation3 + $0x1e8] sm:$0xff] %v1590
      %1630 = vst [vmem:[#allocation3 + $0x210] sm:$0xff] %v1591
      %1631 = vst [vmem:[#allocation3 + $0x238] sm:$0xff] %v1592
      %1632 = vst [vmem:[#allocation3 + $0x260] sm:$0xff] %v1593
      %1633 = vst [vmem:[#allocation3 + $0x288] sm:$0xff] %v1594
      %1634 = vst [vmem:[#allocation3 + $0x2b0] sm:$0xff] %v1595
      %1635 = vst [vmem:[#allocation3 + $0x2d8] sm:$0xff] %v1596
      %1636 = vst [vmem:[#allocation3 + $0x300] sm:$0xff] %v1597
      %1637 = vst [vmem:[#allocation3 + $0x328] sm:$0xff] %v1598
      %1638 = vst [vmem:[#allocation3 + $0x350] sm:$0xff] %v1599
      %1639 = vst [vmem:[#allocation3 + $0x378] sm:$0xff] %v1600
      %1640 = vst [vmem:[#allocation3 + $0x3a0] sm:$0xff] %v1601
      %1641 = vst [vmem:[#allocation3 + $0x3c8] sm:$0xff] %v1602
      %1642 = vst [vmem:[#allocation3 + $0x3f0] sm:$0xff] %v1603
      %1643 = vst [vmem:[#allocation3 + $0x418] sm:$0xff] %v1604
      %1644 = vst [vmem:[#allocation3 + $0x440] sm:$0xff] %v1605
      %1645 = vst [vmem:[#allocation3 + $0x468] sm:$0xff] %v1606
      %1646 = vst [vmem:[#allocation3 + $0x490] sm:$0xff] %v1607
      %1647 = vst [vmem:[#allocation3 + $0x4b8] sm:$0xff] %v1608
      %1648 = vst [vmem:[#allocation3 + $0x4e0] sm:$0xff] %v1609
      %1649 = vst [vmem:[#allocation3 + $0x508] sm:$0xff] %v1610
      %1650 = vst [vmem:[#allocation3 + $0x530] sm:$0xff] %v1611
      %1651 = vst [vmem:[#allocation3 + $0x558] sm:$0xff] %v1612
      %1652 = vst [vmem:[#allocation3 + $0x580] sm:$0xff] %v1613
      %1653 = vst [vmem:[#allocation3 + $0x5a8] sm:$0xff] %v1614
      %1654 = vst [vmem:[#allocation3 + $0x5d0] sm:$0xff] %v1615
      %1655 = vst [vmem:[#allocation3 + $0x5f8] sm:$0xff] %v1616
      %v1656 = vld [vmem:[#allocation2 + $0x2] sm:$0xff]
      %v1657 = vld [vmem:[#allocation2 + $0xa] sm:$0xff]
      %v1658 = vld [vmem:[#allocation2 + $0x12] sm:$0xff]
      %v1659 = vld [vmem:[#allocation2 + $0x1a] sm:$0xff]
      %v1660 = vld [vmem:[#allocation2 + $0x22] sm:$0xff]
      %v1661 = vld [vmem:[#allocation2 + $0x2a] sm:$0xff]
      %v1662 = vld [vmem:[#allocation2 + $0x32] sm:$0xff]
      %v1663 = vld [vmem:[#allocation2 + $0x3a] sm:$0xff]
      %v1664 = vld [vmem:[#allocation2 + $0x42] sm:$0xff]
      %v1665 = vld [vmem:[#allocation2 + $0x4a] sm:$0xff]
      %v1666 = vld [vmem:[#allocation2 + $0x52] sm:$0xff]
      %v1667 = vld [vmem:[#allocation2 + $0x5a] sm:$0xff]
      %v1668 = vld [vmem:[#allocation2 + $0x62] sm:$0xff]
      %v1669 = vld [vmem:[#allocation2 + $0x6a] sm:$0xff]
      %v1670 = vld [vmem:[#allocation2 + $0x72] sm:$0xff]
      %v1671 = vld [vmem:[#allocation2 + $0x7a] sm:$0xff]
      %v1672 = vld [vmem:[#allocation2 + $0x82] sm:$0xff]
      %v1673 = vld [vmem:[#allocation2 + $0x8a] sm:$0xff]
      %v1674 = vld [vmem:[#allocation2 + $0x92] sm:$0xff]
      %v1675 = vld [vmem:[#allocation2 + $0x9a] sm:$0xff]
      %v1676 = vld [vmem:[#allocation2 + $0xa2] sm:$0xff]
      %v1677 = vld [vmem:[#allocation2 + $0xaa] sm:$0xff]
      %v1678 = vld [vmem:[#allocation2 + $0xb2] sm:$0xff]
      %v1679 = vld [vmem:[#allocation2 + $0xba] sm:$0xff]
      %v1680 = vld [vmem:[#allocation2 + $0xc2] sm:$0xff]
      %v1681 = vld [vmem:[#allocation2 + $0xca] sm:$0xff]
      %v1682 = vld [vmem:[#allocation2 + $0xd2] sm:$0xff]
      %v1683 = vld [vmem:[#allocation2 + $0xda] sm:$0xff]
      %v1684 = vld [vmem:[#allocation2 + $0xe2] sm:$0xff]
      %v1685 = vld [vmem:[#allocation2 + $0xea] sm:$0xff]
      %v1686 = vld [vmem:[#allocation2 + $0xf2] sm:$0xff]
      %v1687 = vld [vmem:[#allocation2 + $0xfa] sm:$0xff]
      %v1688 = vld [vmem:[#allocation2 + $0x102] sm:$0xff]
      %v1689 = vld [vmem:[#allocation2 + $0x10a] sm:$0xff]
      %v1690 = vld [vmem:[#allocation2 + $0x112] sm:$0xff]
      %v1691 = vld [vmem:[#allocation2 + $0x11a] sm:$0xff]
      %v1692 = vld [vmem:[#allocation2 + $0x122] sm:$0xff]
      %v1693 = vld [vmem:[#allocation2 + $0x12a] sm:$0xff]
      %v1694 = vld [vmem:[#allocation2 + $0x132] sm:$0xff]
      %1695 = vst [vmem:[#allocation3 + $0x10] sm:$0xff] %v1656
      %1696 = vst [vmem:[#allocation3 + $0x38] sm:$0xff] %v1657
      %1697 = vst [vmem:[#allocation3 + $0x60] sm:$0xff] %v1658
      %1698 = vst [vmem:[#allocation3 + $0x88] sm:$0xff] %v1659
      %1699 = vst [vmem:[#allocation3 + $0xb0] sm:$0xff] %v1660
      %1700 = vst [vmem:[#allocation3 + $0xd8] sm:$0xff] %v1661
      %1701 = vst [vmem:[#allocation3 + $0x100] sm:$0xff] %v1662
      %1702 = vst [vmem:[#allocation3 + $0x128] sm:$0xff] %v1663
      %1703 = vst [vmem:[#allocation3 + $0x150] sm:$0xff] %v1664
      %1704 = vst [vmem:[#allocation3 + $0x178] sm:$0xff] %v1665
      %1705 = vst [vmem:[#allocation3 + $0x1a0] sm:$0xff] %v1666
      %1706 = vst [vmem:[#allocation3 + $0x1c8] sm:$0xff] %v1667
      %1707 = vst [vmem:[#allocation3 + $0x1f0] sm:$0xff] %v1668
      %1708 = vst [vmem:[#allocation3 + $0x218] sm:$0xff] %v1669
      %1709 = vst [vmem:[#allocation3 + $0x240] sm:$0xff] %v1670
      %1710 = vst [vmem:[#allocation3 + $0x268] sm:$0xff] %v1671
      %1711 = vst [vmem:[#allocation3 + $0x290] sm:$0xff] %v1672
      %1712 = vst [vmem:[#allocation3 + $0x2b8] sm:$0xff] %v1673
      %1713 = vst [vmem:[#allocation3 + $0x2e0] sm:$0xff] %v1674
      %1714 = vst [vmem:[#allocation3 + $0x308] sm:$0xff] %v1675
      %1715 = vst [vmem:[#allocation3 + $0x330] sm:$0xff] %v1676
      %1716 = vst [vmem:[#allocation3 + $0x358] sm:$0xff] %v1677
      %1717 = vst [vmem:[#allocation3 + $0x380] sm:$0xff] %v1678
      %1718 = vst [vmem:[#allocation3 + $0x3a8] sm:$0xff] %v1679
      %1719 = vst [vmem:[#allocation3 + $0x3d0] sm:$0xff] %v1680
      %1720 = vst [vmem:[#allocation3 + $0x3f8] sm:$0xff] %v1681
      %1721 = vst [vmem:[#allocation3 + $0x420] sm:$0xff] %v1682
      %1722 = vst [vmem:[#allocation3 + $0x448] sm:$0xff] %v1683
      %1723 = vst [vmem:[#allocation3 + $0x470] sm:$0xff] %v1684
      %1724 = vst [vmem:[#allocation3 + $0x498] sm:$0xff] %v1685
      %1725 = vst [vmem:[#allocation3 + $0x4c0] sm:$0xff] %v1686
      %1726 = vst [vmem:[#allocation3 + $0x4e8] sm:$0xff] %v1687
      %1727 = vst [vmem:[#allocation3 + $0x510] sm:$0xff] %v1688
      %1728 = vst [vmem:[#allocation3 + $0x538] sm:$0xff] %v1689
      %1729 = vst [vmem:[#allocation3 + $0x560] sm:$0xff] %v1690
      %1730 = vst [vmem:[#allocation3 + $0x588] sm:$0xff] %v1691
      %1731 = vst [vmem:[#allocation3 + $0x5b0] sm:$0xff] %v1692
      %1732 = vst [vmem:[#allocation3 + $0x5d8] sm:$0xff] %v1693
      %1733 = vst [vmem:[#allocation3 + $0x600] sm:$0xff] %v1694
      %v1734 = vld [vmem:[#allocation2 + $0x3] sm:$0xff]
      %v1735 = vld [vmem:[#allocation2 + $0xb] sm:$0xff]
      %v1736 = vld [vmem:[#allocation2 + $0x13] sm:$0xff]
      %v1737 = vld [vmem:[#allocation2 + $0x1b] sm:$0xff]
      %v1738 = vld [vmem:[#allocation2 + $0x23] sm:$0xff]
      %v1739 = vld [vmem:[#allocation2 + $0x2b] sm:$0xff]
      %v1740 = vld [vmem:[#allocation2 + $0x33] sm:$0xff]
      %v1741 = vld [vmem:[#allocation2 + $0x3b] sm:$0xff]
      %v1742 = vld [vmem:[#allocation2 + $0x43] sm:$0xff]
      %v1743 = vld [vmem:[#allocation2 + $0x4b] sm:$0xff]
      %v1744 = vld [vmem:[#allocation2 + $0x53] sm:$0xff]
      %v1745 = vld [vmem:[#allocation2 + $0x5b] sm:$0xff]
      %v1746 = vld [vmem:[#allocation2 + $0x63] sm:$0xff]
      %v1747 = vld [vmem:[#allocation2 + $0x6b] sm:$0xff]
      %v1748 = vld [vmem:[#allocation2 + $0x73] sm:$0xff]
      %v1749 = vld [vmem:[#allocation2 + $0x7b] sm:$0xff]
      %v1750 = vld [vmem:[#allocation2 + $0x83] sm:$0xff]
      %v1751 = vld [vmem:[#allocation2 + $0x8b] sm:$0xff]
      %v1752 = vld [vmem:[#allocation2 + $0x93] sm:$0xff]
      %v1753 = vld [vmem:[#allocation2 + $0x9b] sm:$0xff]
      %v1754 = vld [vmem:[#allocation2 + $0xa3] sm:$0xff]
      %v1755 = vld [vmem:[#allocation2 + $0xab] sm:$0xff]
      %v1756 = vld [vmem:[#allocation2 + $0xb3] sm:$0xff]
      %v1757 = vld [vmem:[#allocation2 + $0xbb] sm:$0xff]
      %v1758 = vld [vmem:[#allocation2 + $0xc3] sm:$0xff]
      %v1759 = vld [vmem:[#allocation2 + $0xcb] sm:$0xff]
      %v1760 = vld [vmem:[#allocation2 + $0xd3] sm:$0xff]
      %v1761 = vld [vmem:[#allocation2 + $0xdb] sm:$0xff]
      %v1762 = vld [vmem:[#allocation2 + $0xe3] sm:$0xff]
      %v1763 = vld [vmem:[#allocation2 + $0xeb] sm:$0xff]
      %v1764 = vld [vmem:[#allocation2 + $0xf3] sm:$0xff]
      %v1765 = vld [vmem:[#allocation2 + $0xfb] sm:$0xff]
      %v1766 = vld [vmem:[#allocation2 + $0x103] sm:$0xff]
      %v1767 = vld [vmem:[#allocation2 + $0x10b] sm:$0xff]
      %v1768 = vld [vmem:[#allocation2 + $0x113] sm:$0xff]
      %v1769 = vld [vmem:[#allocation2 + $0x11b] sm:$0xff]
      %v1770 = vld [vmem:[#allocation2 + $0x123] sm:$0xff]
      %v1771 = vld [vmem:[#allocation2 + $0x12b] sm:$0xff]
      %v1772 = vld [vmem:[#allocation2 + $0x133] sm:$0xff]
      %1773 = vst [vmem:[#allocation3 + $0x18] sm:$0xff] %v1734
      %1774 = vst [vmem:[#allocation3 + $0x40] sm:$0xff] %v1735
      %1775 = vst [vmem:[#allocation3 + $0x68] sm:$0xff] %v1736
      %1776 = vst [vmem:[#allocation3 + $0x90] sm:$0xff] %v1737
      %1777 = vst [vmem:[#allocation3 + $0xb8] sm:$0xff] %v1738
      %1778 = vst [vmem:[#allocation3 + $0xe0] sm:$0xff] %v1739
      %1779 = vst [vmem:[#allocation3 + $0x108] sm:$0xff] %v1740
      %1780 = vst [vmem:[#allocation3 + $0x130] sm:$0xff] %v1741
      %1781 = vst [vmem:[#allocation3 + $0x158] sm:$0xff] %v1742
      %1782 = vst [vmem:[#allocation3 + $0x180] sm:$0xff] %v1743
      %1783 = vst [vmem:[#allocation3 + $0x1a8] sm:$0xff] %v1744
      %1784 = vst [vmem:[#allocation3 + $0x1d0] sm:$0xff] %v1745
      %1785 = vst [vmem:[#allocation3 + $0x1f8] sm:$0xff] %v1746
      %1786 = vst [vmem:[#allocation3 + $0x220] sm:$0xff] %v1747
      %1787 = vst [vmem:[#allocation3 + $0x248] sm:$0xff] %v1748
      %1788 = vst [vmem:[#allocation3 + $0x270] sm:$0xff] %v1749
      %1789 = vst [vmem:[#allocation3 + $0x298] sm:$0xff] %v1750
      %1790 = vst [vmem:[#allocation3 + $0x2c0] sm:$0xff] %v1751
      %1791 = vst [vmem:[#allocation3 + $0x2e8] sm:$0xff] %v1752
      %1792 = vst [vmem:[#allocation3 + $0x310] sm:$0xff] %v1753
      %1793 = vst [vmem:[#allocation3 + $0x338] sm:$0xff] %v1754
      %1794 = vst [vmem:[#allocation3 + $0x360] sm:$0xff] %v1755
      %1795 = vst [vmem:[#allocation3 + $0x388] sm:$0xff] %v1756
      %1796 = vst [vmem:[#allocation3 + $0x3b0] sm:$0xff] %v1757
      %1797 = vst [vmem:[#allocation3 + $0x3d8] sm:$0xff] %v1758
      %1798 = vst [vmem:[#allocation3 + $0x400] sm:$0xff] %v1759
      %1799 = vst [vmem:[#allocation3 + $0x428] sm:$0xff] %v1760
      %1800 = vst [vmem:[#allocation3 + $0x450] sm:$0xff] %v1761
      %1801 = vst [vmem:[#allocation3 + $0x478] sm:$0xff] %v1762
      %1802 = vst [vmem:[#allocation3 + $0x4a0] sm:$0xff] %v1763
      %1803 = vst [vmem:[#allocation3 + $0x4c8] sm:$0xff] %v1764
      %1804 = vst [vmem:[#allocation3 + $0x4f0] sm:$0xff] %v1765
      %1805 = vst [vmem:[#allocation3 + $0x518] sm:$0xff] %v1766
      %1806 = vst [vmem:[#allocation3 + $0x540] sm:$0xff] %v1767
      %1807 = vst [vmem:[#allocation3 + $0x568] sm:$0xff] %v1768
      %1808 = vst [vmem:[#allocation3 + $0x590] sm:$0xff] %v1769
      %1809 = vst [vmem:[#allocation3 + $0x5b8] sm:$0xff] %v1770
      %1810 = vst [vmem:[#allocation3 + $0x5e0] sm:$0xff] %v1771
      %1811 = vst [vmem:[#allocation3 + $0x608] sm:$0xff] %v1772
      %v1812 = vld [vmem:[#allocation2 + $0x4] sm:$0xff]
      %v1813 = vld [vmem:[#allocation2 + $0xc] sm:$0xff]
      %v1814 = vld [vmem:[#allocation2 + $0x14] sm:$0xff]
      %v1815 = vld [vmem:[#allocation2 + $0x1c] sm:$0xff]
      %v1816 = vld [vmem:[#allocation2 + $0x24] sm:$0xff]
      %v1817 = vld [vmem:[#allocation2 + $0x2c] sm:$0xff]
      %v1818 = vld [vmem:[#allocation2 + $0x34] sm:$0xff]
      %v1819 = vld [vmem:[#allocation2 + $0x3c] sm:$0xff]
      %v1820 = vld [vmem:[#allocation2 + $0x44] sm:$0xff]
      %v1821 = vld [vmem:[#allocation2 + $0x4c] sm:$0xff]
      %v1822 = vld [vmem:[#allocation2 + $0x54] sm:$0xff]
      %v1823 = vld [vmem:[#allocation2 + $0x5c] sm:$0xff]
      %v1824 = vld [vmem:[#allocation2 + $0x64] sm:$0xff]
      %v1825 = vld [vmem:[#allocation2 + $0x6c] sm:$0xff]
      %v1826 = vld [vmem:[#allocation2 + $0x74] sm:$0xff]
      %v1827 = vld [vmem:[#allocation2 + $0x7c] sm:$0xff]
      %v1828 = vld [vmem:[#allocation2 + $0x84] sm:$0xff]
      %v1829 = vld [vmem:[#allocation2 + $0x8c] sm:$0xff]
      %v1830 = vld [vmem:[#allocation2 + $0x94] sm:$0xff]
      %v1831 = vld [vmem:[#allocation2 + $0x9c] sm:$0xff]
      %v1832 = vld [vmem:[#allocation2 + $0xa4] sm:$0xff]
      %v1833 = vld [vmem:[#allocation2 + $0xac] sm:$0xff]
      %v1834 = vld [vmem:[#allocation2 + $0xb4] sm:$0xff]
      %v1835 = vld [vmem:[#allocation2 + $0xbc] sm:$0xff]
      %v1836 = vld [vmem:[#allocation2 + $0xc4] sm:$0xff]
      %v1837 = vld [vmem:[#allocation2 + $0xcc] sm:$0xff]
      %v1838 = vld [vmem:[#allocation2 + $0xd4] sm:$0xff]
      %v1839 = vld [vmem:[#allocation2 + $0xdc] sm:$0xff]
      %v1840 = vld [vmem:[#allocation2 + $0xe4] sm:$0xff]
      %v1841 = vld [vmem:[#allocation2 + $0xec] sm:$0xff]
      %v1842 = vld [vmem:[#allocation2 + $0xf4] sm:$0xff]
      %v1843 = vld [vmem:[#allocation2 + $0xfc] sm:$0xff]
      %v1844 = vld [vmem:[#allocation2 + $0x104] sm:$0xff]
      %v1845 = vld [vmem:[#allocation2 + $0x10c] sm:$0xff]
      %v1846 = vld [vmem:[#allocation2 + $0x114] sm:$0xff]
      %v1847 = vld [vmem:[#allocation2 + $0x11c] sm:$0xff]
      %v1848 = vld [vmem:[#allocation2 + $0x124] sm:$0xff]
      %v1849 = vld [vmem:[#allocation2 + $0x12c] sm:$0xff]
      %v1850 = vld [vmem:[#allocation2 + $0x134] sm:$0xff]
      %1851 = vst [vmem:[#allocation3 + $0x20] sm:$0xff] %v1812
      %1852 = vst [vmem:[#allocation3 + $0x48] sm:$0xff] %v1813
      %1853 = vst [vmem:[#allocation3 + $0x70] sm:$0xff] %v1814
      %1854 = vst [vmem:[#allocation3 + $0x98] sm:$0xff] %v1815
      %1855 = vst [vmem:[#allocation3 + $0xc0] sm:$0xff] %v1816
      %1856 = vst [vmem:[#allocation3 + $0xe8] sm:$0xff] %v1817
      %1857 = vst [vmem:[#allocation3 + $0x110] sm:$0xff] %v1818
      %1858 = vst [vmem:[#allocation3 + $0x138] sm:$0xff] %v1819
      %1859 = vst [vmem:[#allocation3 + $0x160] sm:$0xff] %v1820
      %1860 = vst [vmem:[#allocation3 + $0x188] sm:$0xff] %v1821
      %1861 = vst [vmem:[#allocation3 + $0x1b0] sm:$0xff] %v1822
      %1862 = vst [vmem:[#allocation3 + $0x1d8] sm:$0xff] %v1823
      %1863 = vst [vmem:[#allocation3 + $0x200] sm:$0xff] %v1824
      %1864 = vst [vmem:[#allocation3 + $0x228] sm:$0xff] %v1825
      %1865 = vst [vmem:[#allocation3 + $0x250] sm:$0xff] %v1826
      %1866 = vst [vmem:[#allocation3 + $0x278] sm:$0xff] %v1827
      %1867 = vst [vmem:[#allocation3 + $0x2a0] sm:$0xff] %v1828
      %1868 = vst [vmem:[#allocation3 + $0x2c8] sm:$0xff] %v1829
      %1869 = vst [vmem:[#allocation3 + $0x2f0] sm:$0xff] %v1830
      %1870 = vst [vmem:[#allocation3 + $0x318] sm:$0xff] %v1831
      %1871 = vst [vmem:[#allocation3 + $0x340] sm:$0xff] %v1832
      %1872 = vst [vmem:[#allocation3 + $0x368] sm:$0xff] %v1833
      %1873 = vst [vmem:[#allocation3 + $0x390] sm:$0xff] %v1834
      %1874 = vst [vmem:[#allocation3 + $0x3b8] sm:$0xff] %v1835
      %1875 = vst [vmem:[#allocation3 + $0x3e0] sm:$0xff] %v1836
      %1876 = vst [vmem:[#allocation3 + $0x408] sm:$0xff] %v1837
      %1877 = vst [vmem:[#allocation3 + $0x430] sm:$0xff] %v1838
      %1878 = vst [vmem:[#allocation3 + $0x458] sm:$0xff] %v1839
      %1879 = vst [vmem:[#allocation3 + $0x480] sm:$0xff] %v1840
      %1880 = vst [vmem:[#allocation3 + $0x4a8] sm:$0xff] %v1841
      %1881 = vst [vmem:[#allocation3 + $0x4d0] sm:$0xff] %v1842
      %1882 = vst [vmem:[#allocation3 + $0x4f8] sm:$0xff] %v1843
      %1883 = vst [vmem:[#allocation3 + $0x520] sm:$0xff] %v1844
      %1884 = vst [vmem:[#allocation3 + $0x548] sm:$0xff] %v1845
      %1885 = vst [vmem:[#allocation3 + $0x570] sm:$0xff] %v1846
      %1886 = vst [vmem:[#allocation3 + $0x598] sm:$0xff] %v1847
      %1887 = vst [vmem:[#allocation3 + $0x5c0] sm:$0xff] %v1848
      %1888 = vst [vmem:[#allocation3 + $0x5e8] sm:$0xff] %v1849
      %1889 = vst [vmem:[#allocation3 + $0x610] sm:$0xff] %v1850
      %v1890 = vld [vmem:[#allocation3] sm:$0xff]
      %v1891 = vld [vmem:[#allocation3 + $0x8] sm:$0xff]
      %v1892 = vld [vmem:[#allocation3 + $0x10] sm:$0xff]
      %v1893 = vld [vmem:[#allocation3 + $0x18] sm:$0xff]
      %v1894 = vld [vmem:[#allocation3 + $0x20] sm:$0xff]
      %v1895 = vld [vmem:[#allocation3 + $0x28] sm:$0xff]
      %v1896 = vld [vmem:[#allocation3 + $0x30] sm:$0xff]
      %v1897 = vld [vmem:[#allocation3 + $0x38] sm:$0xff]
      %v1898 = vld [vmem:[#allocation3 + $0x40] sm:$0xff]
      %v1899 = vld [vmem:[#allocation3 + $0x48] sm:$0xff]
      %v1900 = vld [vmem:[#allocation3 + $0x50] sm:$0xff]
      %v1901 = vld [vmem:[#allocation3 + $0x58] sm:$0xff]
      %v1902 = vld [vmem:[#allocation3 + $0x60] sm:$0xff]
      %v1903 = vld [vmem:[#allocation3 + $0x68] sm:$0xff]
      %v1904 = vld [vmem:[#allocation3 + $0x70] sm:$0xff]
      %v1905 = vld [vmem:[#allocation3 + $0x78] sm:$0xff]
      %v1906 = vld [vmem:[#allocation3 + $0x80] sm:$0xff]
      %v1907 = vld [vmem:[#allocation3 + $0x88] sm:$0xff]
      %v1908 = vld [vmem:[#allocation3 + $0x90] sm:$0xff]
      %v1909 = vld [vmem:[#allocation3 + $0x98] sm:$0xff]
      %v1910 = vld [vmem:[#allocation3 + $0xa0] sm:$0xff]
      %v1911 = vld [vmem:[#allocation3 + $0xa8] sm:$0xff]
      %v1912 = vld [vmem:[#allocation3 + $0xb0] sm:$0xff]
      %v1913 = vld [vmem:[#allocation3 + $0xb8] sm:$0xff]
      %v1914 = vld [vmem:[#allocation3 + $0xc0] sm:$0xff]
      %v1915 = vld [vmem:[#allocation3 + $0xc8] sm:$0xff]
      %v1916 = vld [vmem:[#allocation3 + $0xd0] sm:$0xff]
      %v1917 = vld [vmem:[#allocation3 + $0xd8] sm:$0xff]
      %v1918 = vld [vmem:[#allocation3 + $0xe0] sm:$0xff]
      %v1919 = vld [vmem:[#allocation3 + $0xe8] sm:$0xff]
      %v1920 = vld [vmem:[#allocation3 + $0xf0] sm:$0xff]
      %v1921 = vld [vmem:[#allocation3 + $0xf8] sm:$0xff]
      %v1922 = vld [vmem:[#allocation3 + $0x100] sm:$0xff]
      %v1923 = vld [vmem:[#allocation3 + $0x108] sm:$0xff]
      %v1924 = vld [vmem:[#allocation3 + $0x110] sm:$0xff]
      %v1925 = vld [vmem:[#allocation3 + $0x118] sm:$0xff]
      %v1926 = vld [vmem:[#allocation3 + $0x120] sm:$0xff]
      %v1927 = vld [vmem:[#allocation3 + $0x128] sm:$0xff]
      %v1928 = vld [vmem:[#allocation3 + $0x130] sm:$0xff]
      %v1929 = vld [vmem:[#allocation3 + $0x138] sm:$0xff]
      %v1930 = vld [vmem:[#allocation3 + $0x140] sm:$0xff]
      %v1931 = vld [vmem:[#allocation3 + $0x148] sm:$0xff]
      %v1932 = vld [vmem:[#allocation3 + $0x150] sm:$0xff]
      %v1933 = vld [vmem:[#allocation3 + $0x158] sm:$0xff]
      %v1934 = vld [vmem:[#allocation3 + $0x160] sm:$0xff]
      %v1935 = vld [vmem:[#allocation3 + $0x168] sm:$0xff]
      %v1936 = vld [vmem:[#allocation3 + $0x170] sm:$0xff]
      %v1937 = vld [vmem:[#allocation3 + $0x178] sm:$0xff]
      %v1938 = vld [vmem:[#allocation3 + $0x180] sm:$0xff]
      %v1939 = vld [vmem:[#allocation3 + $0x188] sm:$0xff]
      %v1940 = vld [vmem:[#allocation3 + $0x190] sm:$0xff]
      %v1941 = vld [vmem:[#allocation3 + $0x198] sm:$0xff]
      %v1942 = vld [vmem:[#allocation3 + $0x1a0] sm:$0xff]
      %v1943 = vld [vmem:[#allocation3 + $0x1a8] sm:$0xff]
      %v1944 = vld [vmem:[#allocation3 + $0x1b0] sm:$0xff]
      %v1945 = vld [vmem:[#allocation3 + $0x1b8] sm:$0xff]
      %v1946 = vld [vmem:[#allocation3 + $0x1c0] sm:$0xff]
      %v1947 = vld [vmem:[#allocation3 + $0x1c8] sm:$0xff]
      %v1948 = vld [vmem:[#allocation3 + $0x1d0] sm:$0xff]
      %v1949 = vld [vmem:[#allocation3 + $0x1d8] sm:$0xff]
      %v1950 = vld [vmem:[#allocation3 + $0x1e0] sm:$0xff]
      %v1951 = vld [vmem:[#allocation3 + $0x1e8] sm:$0xff]
      %v1952 = vld [vmem:[#allocation3 + $0x1f0] sm:$0xff]
      %v1953 = vld [vmem:[#allocation3 + $0x1f8] sm:$0xff]
      %v1954 = vld [vmem:[#allocation3 + $0x200] sm:$0xff]
      %v1955 = vld [vmem:[#allocation3 + $0x208] sm:$0xff]
      %v1956 = vld [vmem:[#allocation3 + $0x210] sm:$0xff]
      %v1957 = vld [vmem:[#allocation3 + $0x218] sm:$0xff]
      %v1958 = vld [vmem:[#allocation3 + $0x220] sm:$0xff]
      %v1959 = vld [vmem:[#allocation3 + $0x228] sm:$0xff]
      %v1960 = vld [vmem:[#allocation3 + $0x230] sm:$0xff]
      %v1961 = vld [vmem:[#allocation3 + $0x238] sm:$0xff]
      %v1962 = vld [vmem:[#allocation3 + $0x240] sm:$0xff]
      %v1963 = vld [vmem:[#allocation3 + $0x248] sm:$0xff]
      %v1964 = vld [vmem:[#allocation3 + $0x250] sm:$0xff]
      %v1965 = vld [vmem:[#allocation3 + $0x258] sm:$0xff]
      %v1966 = vld [vmem:[#allocation3 + $0x260] sm:$0xff]
      %v1967 = vld [vmem:[#allocation3 + $0x268] sm:$0xff]
      %v1968 = vld [vmem:[#allocation3 + $0x270] sm:$0xff]
      %v1969 = vld [vmem:[#allocation3 + $0x278] sm:$0xff]
      %v1970 = vld [vmem:[#allocation3 + $0x280] sm:$0xff]
      %v1971 = vld [vmem:[#allocation3 + $0x288] sm:$0xff]
      %v1972 = vld [vmem:[#allocation3 + $0x290] sm:$0xff]
      %v1973 = vld [vmem:[#allocation3 + $0x298] sm:$0xff]
      %v1974 = vld [vmem:[#allocation3 + $0x2a0] sm:$0xff]
      %v1975 = vld [vmem:[#allocation3 + $0x2a8] sm:$0xff]
      %v1976 = vld [vmem:[#allocation3 + $0x2b0] sm:$0xff]
      %v1977 = vld [vmem:[#allocation3 + $0x2b8] sm:$0xff]
      %v1978 = vld [vmem:[#allocation3 + $0x2c0] sm:$0xff]
      %v1979 = vld [vmem:[#allocation3 + $0x2c8] sm:$0xff]
      %v1980 = vld [vmem:[#allocation3 + $0x2d0] sm:$0xff]
      %v1981 = vld [vmem:[#allocation3 + $0x2d8] sm:$0xff]
      %v1982 = vld [vmem:[#allocation3 + $0x2e0] sm:$0xff]
      %v1983 = vld [vmem:[#allocation3 + $0x2e8] sm:$0xff]
      %v1984 = vld [vmem:[#allocation3 + $0x2f0] sm:$0xff]
      %v1985 = vld [vmem:[#allocation3 + $0x2f8] sm:$0xff]
      %v1986 = vld [vmem:[#allocation3 + $0x300] sm:$0xff]
      %v1987 = vld [vmem:[#allocation3 + $0x308] sm:$0xff]
      %v1988 = vld [vmem:[#allocation3 + $0x310] sm:$0xff]
      %v1989 = vld [vmem:[#allocation3 + $0x318] sm:$0xff]
      %v1990 = vld [vmem:[#allocation3 + $0x320] sm:$0xff]
      %v1991 = vld [vmem:[#allocation3 + $0x328] sm:$0xff]
      %v1992 = vld [vmem:[#allocation3 + $0x330] sm:$0xff]
      %v1993 = vld [vmem:[#allocation3 + $0x338] sm:$0xff]
      %v1994 = vld [vmem:[#allocation3 + $0x340] sm:$0xff]
      %v1995 = vld [vmem:[#allocation3 + $0x348] sm:$0xff]
      %v1996 = vld [vmem:[#allocation3 + $0x350] sm:$0xff]
      %v1997 = vld [vmem:[#allocation3 + $0x358] sm:$0xff]
      %v1998 = vld [vmem:[#allocation3 + $0x360] sm:$0xff]
      %v1999 = vld [vmem:[#allocation3 + $0x368] sm:$0xff]
      %v2000 = vld [vmem:[#allocation3 + $0x370] sm:$0xff]
      %v2001 = vld [vmem:[#allocation3 + $0x378] sm:$0xff]
      %v2002 = vld [vmem:[#allocation3 + $0x380] sm:$0xff]
      %v2003 = vld [vmem:[#allocation3 + $0x388] sm:$0xff]
      %v2004 = vld [vmem:[#allocation3 + $0x390] sm:$0xff]
      %v2005 = vld [vmem:[#allocation3 + $0x398] sm:$0xff]
      %v2006 = vld [vmem:[#allocation3 + $0x3a0] sm:$0xff]
      %v2007 = vld [vmem:[#allocation3 + $0x3a8] sm:$0xff]
      %v2008 = vld [vmem:[#allocation3 + $0x3b0] sm:$0xff]
      %v2009 = vld [vmem:[#allocation3 + $0x3b8] sm:$0xff]
      %v2010 = vld [vmem:[#allocation3 + $0x3c0] sm:$0xff]
      %v2011 = vld [vmem:[#allocation3 + $0x3c8] sm:$0xff]
      %v2012 = vld [vmem:[#allocation3 + $0x3d0] sm:$0xff]
      %v2013 = vld [vmem:[#allocation3 + $0x3d8] sm:$0xff]
      %v2014 = vld [vmem:[#allocation3 + $0x3e0] sm:$0xff]
      %v2015 = vld [vmem:[#allocation3 + $0x3e8] sm:$0xff]
      %v2016 = vld [vmem:[#allocation3 + $0x3f0] sm:$0xff]
      %v2017 = vld [vmem:[#allocation3 + $0x3f8] sm:$0xff]
      %v2018 = vld [vmem:[#allocation3 + $0x400] sm:$0xff]
      %v2019 = vld [vmem:[#allocation3 + $0x408] sm:$0xff]
      %v2020 = vld [vmem:[#allocation3 + $0x410] sm:$0xff]
      %v2021 = vld [vmem:[#allocation3 + $0x418] sm:$0xff]
      %v2022 = vld [vmem:[#allocation3 + $0x420] sm:$0xff]
      %v2023 = vld [vmem:[#allocation3 + $0x428] sm:$0xff]
      %v2024 = vld [vmem:[#allocation3 + $0x430] sm:$0xff]
      %v2025 = vld [vmem:[#allocation3 + $0x438] sm:$0xff]
      %v2026 = vld [vmem:[#allocation3 + $0x440] sm:$0xff]
      %v2027 = vld [vmem:[#allocation3 + $0x448] sm:$0xff]
      %v2028 = vld [vmem:[#allocation3 + $0x450] sm:$0xff]
      %v2029 = vld [vmem:[#allocation3 + $0x458] sm:$0xff]
      %v2030 = vld [vmem:[#allocation3 + $0x460] sm:$0xff]
      %v2031 = vld [vmem:[#allocation3 + $0x468] sm:$0xff]
      %v2032 = vld [vmem:[#allocation3 + $0x470] sm:$0xff]
      %v2033 = vld [vmem:[#allocation3 + $0x478] sm:$0xff]
      %v2034 = vld [vmem:[#allocation3 + $0x480] sm:$0xff]
      %v2035 = vld [vmem:[#allocation3 + $0x488] sm:$0xff]
      %v2036 = vld [vmem:[#allocation3 + $0x490] sm:$0xff]
      %v2037 = vld [vmem:[#allocation3 + $0x498] sm:$0xff]
      %v2038 = vld [vmem:[#allocation3 + $0x4a0] sm:$0xff]
      %v2039 = vld [vmem:[#allocation3 + $0x4a8] sm:$0xff]
      %v2040 = vld [vmem:[#allocation3 + $0x4b0] sm:$0xff]
      %v2041 = vld [vmem:[#allocation3 + $0x4b8] sm:$0xff]
      %v2042 = vld [vmem:[#allocation3 + $0x4c0] sm:$0xff]
      %v2043 = vld [vmem:[#allocation3 + $0x4c8] sm:$0xff]
      %v2044 = vld [vmem:[#allocation3 + $0x4d0] sm:$0xff]
      %v2045 = vld [vmem:[#allocation3 + $0x4d8] sm:$0xff]
      %v2046 = vld [vmem:[#allocation3 + $0x4e0] sm:$0xff]
      %v2047 = vld [vmem:[#allocation3 + $0x4e8] sm:$0xff]
      %v2048 = vld [vmem:[#allocation3 + $0x4f0] sm:$0xff]
      %v2049 = vld [vmem:[#allocation3 + $0x4f8] sm:$0xff]
      %v2050 = vld [vmem:[#allocation3 + $0x500] sm:$0xff]
      %v2051 = vld [vmem:[#allocation3 + $0x508] sm:$0xff]
      %v2052 = vld [vmem:[#allocation3 + $0x510] sm:$0xff]
      %v2053 = vld [vmem:[#allocation3 + $0x518] sm:$0xff]
      %v2054 = vld [vmem:[#allocation3 + $0x520] sm:$0xff]
      %v2055 = vld [vmem:[#allocation3 + $0x528] sm:$0xff]
      %v2056 = vld [vmem:[#allocation3 + $0x530] sm:$0xff]
      %v2057 = vld [vmem:[#allocation3 + $0x538] sm:$0xff]
      %v2058 = vld [vmem:[#allocation3 + $0x540] sm:$0xff]
      %v2059 = vld [vmem:[#allocation3 + $0x548] sm:$0xff]
      %v2060 = vld [vmem:[#allocation3 + $0x550] sm:$0xff]
      %v2061 = vld [vmem:[#allocation3 + $0x558] sm:$0xff]
      %v2062 = vld [vmem:[#allocation3 + $0x560] sm:$0xff]
      %v2063 = vld [vmem:[#allocation3 + $0x568] sm:$0xff]
      %v2064 = vld [vmem:[#allocation3 + $0x570] sm:$0xff]
      %v2065 = vld [vmem:[#allocation3 + $0x578] sm:$0xff]
      %v2066 = vld [vmem:[#allocation3 + $0x580] sm:$0xff]
      %v2067 = vld [vmem:[#allocation3 + $0x588] sm:$0xff]
      %v2068 = vld [vmem:[#allocation3 + $0x590] sm:$0xff]
      %v2069 = vld [vmem:[#allocation3 + $0x598] sm:$0xff]
      %v2070 = vld [vmem:[#allocation3 + $0x5a0] sm:$0xff]
      %v2071 = vld [vmem:[#allocation3 + $0x5a8] sm:$0xff]
      %v2072 = vld [vmem:[#allocation3 + $0x5b0] sm:$0xff]
      %v2073 = vld [vmem:[#allocation3 + $0x5b8] sm:$0xff]
      %v2074 = vld [vmem:[#allocation3 + $0x5c0] sm:$0xff]
      %v2075 = vld [vmem:[#allocation3 + $0x5c8] sm:$0xff]
      %v2076 = vld [vmem:[#allocation3 + $0x5d0] sm:$0xff]
      %v2077 = vld [vmem:[#allocation3 + $0x5d8] sm:$0xff]
      %v2078 = vld [vmem:[#allocation3 + $0x5e0] sm:$0xff]
      %v2079 = vld [vmem:[#allocation3 + $0x5e8] sm:$0xff]
      %v2080 = vld [vmem:[#allocation3 + $0x5f0] sm:$0x1f]
      %v2081 = vld [vmem:[#allocation3 + $0x5f8] sm:$0x1f]
      %v2082 = vld [vmem:[#allocation3 + $0x600] sm:$0x1f]
      %v2083 = vld [vmem:[#allocation3 + $0x608] sm:$0x1f]
      %v2084 = vld [vmem:[#allocation3 + $0x610] sm:$0x1f]
      %2085 = vst [vmem:[%s259] sm:$0xff] %v1890
      %2086 = vst [vmem:[%s259 + $0x8] sm:$0xff] %v1891
      %2087 = vst [vmem:[%s259 + $0x10] sm:$0xff] %v1892
      %2088 = vst [vmem:[%s259 + $0x18] sm:$0xff] %v1893
      %2089 = vst [vmem:[%s259 + $0x20] sm:$0xff] %v1894
      %2090 = vst [vmem:[%s259 + $0x28] sm:$0xff] %v1895
      %2091 = vst [vmem:[%s259 + $0x30] sm:$0xff] %v1896
      %2092 = vst [vmem:[%s259 + $0x38] sm:$0xff] %v1897
      %2093 = vst [vmem:[%s259 + $0x40] sm:$0xff] %v1898
      %2094 = vst [vmem:[%s259 + $0x48] sm:$0xff] %v1899
      %2095 = vst [vmem:[%s259 + $0x50] sm:$0xff] %v1900
      %2096 = vst [vmem:[%s259 + $0x58] sm:$0xff] %v1901
      %2097 = vst [vmem:[%s259 + $0x60] sm:$0xff] %v1902
      %2098 = vst [vmem:[%s259 + $0x68] sm:$0xff] %v1903
      %2099 = vst [vmem:[%s259 + $0x70] sm:$0xff] %v1904
      %2100 = vst [vmem:[%s259 + $0x78] sm:$0xff] %v1905
      %2101 = vst [vmem:[%s259 + $0x80] sm:$0xff] %v1906
      %2102 = vst [vmem:[%s259 + $0x88] sm:$0xff] %v1907
      %2103 = vst [vmem:[%s259 + $0x90] sm:$0xff] %v1908
      %2104 = vst [vmem:[%s259 + $0x98] sm:$0xff] %v1909
      %2105 = vst [vmem:[%s259 + $0xa0] sm:$0xff] %v1910
      %2106 = vst [vmem:[%s259 + $0xa8] sm:$0xff] %v1911
      %2107 = vst [vmem:[%s259 + $0xb0] sm:$0xff] %v1912
      %2108 = vst [vmem:[%s259 + $0xb8] sm:$0xff] %v1913
      %2109 = vst [vmem:[%s259 + $0xc0] sm:$0xff] %v1914
      %2110 = vst [vmem:[%s259 + $0xc8] sm:$0xff] %v1915
      %2111 = vst [vmem:[%s259 + $0xd0] sm:$0xff] %v1916
      %2112 = vst [vmem:[%s259 + $0xd8] sm:$0xff] %v1917
      %2113 = vst [vmem:[%s259 + $0xe0] sm:$0xff] %v1918
      %2114 = vst [vmem:[%s259 + $0xe8] sm:$0xff] %v1919
      %2115 = vst [vmem:[%s259 + $0xf0] sm:$0xff] %v1920
      %2116 = vst [vmem:[%s259 + $0xf8] sm:$0xff] %v1921
      %2117 = vst [vmem:[%s259 + $0x100] sm:$0xff] %v1922
      %2118 = vst [vmem:[%s259 + $0x108] sm:$0xff] %v1923
      %2119 = vst [vmem:[%s259 + $0x110] sm:$0xff] %v1924
      %2120 = vst [vmem:[%s259 + $0x118] sm:$0xff] %v1925
      %2121 = vst [vmem:[%s259 + $0x120] sm:$0xff] %v1926
      %2122 = vst [vmem:[%s259 + $0x128] sm:$0xff] %v1927
      %2123 = vst [vmem:[%s259 + $0x130] sm:$0xff] %v1928
      %2124 = vst [vmem:[%s259 + $0x138] sm:$0xff] %v1929
      %2125 = vst [vmem:[%s259 + $0x140] sm:$0xff] %v1930
      %2126 = vst [vmem:[%s259 + $0x148] sm:$0xff] %v1931
      %2127 = vst [vmem:[%s259 + $0x150] sm:$0xff] %v1932
      %2128 = vst [vmem:[%s259 + $0x158] sm:$0xff] %v1933
      %2129 = vst [vmem:[%s259 + $0x160] sm:$0xff] %v1934
      %2130 = vst [vmem:[%s259 + $0x168] sm:$0xff] %v1935
      %2131 = vst [vmem:[%s259 + $0x170] sm:$0xff] %v1936
      %2132 = vst [vmem:[%s259 + $0x178] sm:$0xff] %v1937
      %2133 = vst [vmem:[%s259 + $0x180] sm:$0xff] %v1938
      %2134 = vst [vmem:[%s259 + $0x188] sm:$0xff] %v1939
      %2135 = vst [vmem:[%s259 + $0x190] sm:$0xff] %v1940
      %2136 = vst [vmem:[%s259 + $0x198] sm:$0xff] %v1941
      %2137 = vst [vmem:[%s259 + $0x1a0] sm:$0xff] %v1942
      %2138 = vst [vmem:[%s259 + $0x1a8] sm:$0xff] %v1943
      %2139 = vst [vmem:[%s259 + $0x1b0] sm:$0xff] %v1944
      %2140 = vst [vmem:[%s259 + $0x1b8] sm:$0xff] %v1945
      %2141 = vst [vmem:[%s259 + $0x1c0] sm:$0xff] %v1946
      %2142 = vst [vmem:[%s259 + $0x1c8] sm:$0xff] %v1947
      %2143 = vst [vmem:[%s259 + $0x1d0] sm:$0xff] %v1948
      %2144 = vst [vmem:[%s259 + $0x1d8] sm:$0xff] %v1949
      %2145 = vst [vmem:[%s259 + $0x1e0] sm:$0xff] %v1950
      %2146 = vst [vmem:[%s259 + $0x1e8] sm:$0xff] %v1951
      %2147 = vst [vmem:[%s259 + $0x1f0] sm:$0xff] %v1952
      %2148 = vst [vmem:[%s259 + $0x1f8] sm:$0xff] %v1953
      %2149 = vst [vmem:[%s259 + $0x200] sm:$0xff] %v1954
      %2150 = vst [vmem:[%s259 + $0x208] sm:$0xff] %v1955
      %2151 = vst [vmem:[%s259 + $0x210] sm:$0xff] %v1956
      %2152 = vst [vmem:[%s259 + $0x218] sm:$0xff] %v1957
      %2153 = vst [vmem:[%s259 + $0x220] sm:$0xff] %v1958
      %2154 = vst [vmem:[%s259 + $0x228] sm:$0xff] %v1959
      %2155 = vst [vmem:[%s259 + $0x230] sm:$0xff] %v1960
      %2156 = vst [vmem:[%s259 + $0x238] sm:$0xff] %v1961
      %2157 = vst [vmem:[%s259 + $0x240] sm:$0xff] %v1962
      %2158 = vst [vmem:[%s259 + $0x248] sm:$0xff] %v1963
      %2159 = vst [vmem:[%s259 + $0x250] sm:$0xff] %v1964
      %2160 = vst [vmem:[%s259 + $0x258] sm:$0xff] %v1965
      %2161 = vst [vmem:[%s259 + $0x260] sm:$0xff] %v1966
      %2162 = vst [vmem:[%s259 + $0x268] sm:$0xff] %v1967
      %2163 = vst [vmem:[%s259 + $0x270] sm:$0xff] %v1968
      %2164 = vst [vmem:[%s259 + $0x278] sm:$0xff] %v1969
      %2165 = vst [vmem:[%s259 + $0x280] sm:$0xff] %v1970
      %2166 = vst [vmem:[%s259 + $0x288] sm:$0xff] %v1971
      %2167 = vst [vmem:[%s259 + $0x290] sm:$0xff] %v1972
      %2168 = vst [vmem:[%s259 + $0x298] sm:$0xff] %v1973
      %2169 = vst [vmem:[%s259 + $0x2a0] sm:$0xff] %v1974
      %2170 = vst [vmem:[%s259 + $0x2a8] sm:$0xff] %v1975
      %2171 = vst [vmem:[%s259 + $0x2b0] sm:$0xff] %v1976
      %2172 = vst [vmem:[%s259 + $0x2b8] sm:$0xff] %v1977
      %2173 = vst [vmem:[%s259 + $0x2c0] sm:$0xff] %v1978
      %2174 = vst [vmem:[%s259 + $0x2c8] sm:$0xff] %v1979
      %2175 = vst [vmem:[%s259 + $0x2d0] sm:$0xff] %v1980
      %2176 = vst [vmem:[%s259 + $0x2d8] sm:$0xff] %v1981
      %2177 = vst [vmem:[%s259 + $0x2e0] sm:$0xff] %v1982
      %2178 = vst [vmem:[%s259 + $0x2e8] sm:$0xff] %v1983
      %2179 = vst [vmem:[%s259 + $0x2f0] sm:$0xff] %v1984
      %2180 = vst [vmem:[%s259 + $0x2f8] sm:$0xff] %v1985
      %2181 = vst [vmem:[%s259 + $0x300] sm:$0xff] %v1986
      %2182 = vst [vmem:[%s259 + $0x308] sm:$0xff] %v1987
      %2183 = vst [vmem:[%s259 + $0x310] sm:$0xff] %v1988
      %2184 = vst [vmem:[%s259 + $0x318] sm:$0xff] %v1989
      %2185 = vst [vmem:[%s259 + $0x320] sm:$0xff] %v1990
      %2186 = vst [vmem:[%s259 + $0x328] sm:$0xff] %v1991
      %2187 = vst [vmem:[%s259 + $0x330] sm:$0xff] %v1992
      %2188 = vst [vmem:[%s259 + $0x338] sm:$0xff] %v1993
      %2189 = vst [vmem:[%s259 + $0x340] sm:$0xff] %v1994
      %2190 = vst [vmem:[%s259 + $0x348] sm:$0xff] %v1995
      %2191 = vst [vmem:[%s259 + $0x350] sm:$0xff] %v1996
      %2192 = vst [vmem:[%s259 + $0x358] sm:$0xff] %v1997
      %2193 = vst [vmem:[%s259 + $0x360] sm:$0xff] %v1998
      %2194 = vst [vmem:[%s259 + $0x368] sm:$0xff] %v1999
      %2195 = vst [vmem:[%s259 + $0x370] sm:$0xff] %v2000
      %2196 = vst [vmem:[%s259 + $0x378] sm:$0xff] %v2001
      %2197 = vst [vmem:[%s259 + $0x380] sm:$0xff] %v2002
      %2198 = vst [vmem:[%s259 + $0x388] sm:$0xff] %v2003
      %2199 = vst [vmem:[%s259 + $0x390] sm:$0xff] %v2004
      %2200 = vst [vmem:[%s259 + $0x398] sm:$0xff] %v2005
      %2201 = vst [vmem:[%s259 + $0x3a0] sm:$0xff] %v2006
      %2202 = vst [vmem:[%s259 + $0x3a8] sm:$0xff] %v2007
      %2203 = vst [vmem:[%s259 + $0x3b0] sm:$0xff] %v2008
      %2204 = vst [vmem:[%s259 + $0x3b8] sm:$0xff] %v2009
      %2205 = vst [vmem:[%s259 + $0x3c0] sm:$0xff] %v2010
      %2206 = vst [vmem:[%s259 + $0x3c8] sm:$0xff] %v2011
      %2207 = vst [vmem:[%s259 + $0x3d0] sm:$0xff] %v2012
      %2208 = vst [vmem:[%s259 + $0x3d8] sm:$0xff] %v2013
      %2209 = vst [vmem:[%s259 + $0x3e0] sm:$0xff] %v2014
      %2210 = vst [vmem:[%s259 + $0x3e8] sm:$0xff] %v2015
      %2211 = vst [vmem:[%s259 + $0x3f0] sm:$0xff] %v2016
      %2212 = vst [vmem:[%s259 + $0x3f8] sm:$0xff] %v2017
      %2213 = vst [vmem:[%s259 + $0x400] sm:$0xff] %v2018
      %2214 = vst [vmem:[%s259 + $0x408] sm:$0xff] %v2019
      %2215 = vst [vmem:[%s259 + $0x410] sm:$0xff] %v2020
      %2216 = vst [vmem:[%s259 + $0x418] sm:$0xff] %v2021
      %2217 = vst [vmem:[%s259 + $0x420] sm:$0xff] %v2022
      %2218 = vst [vmem:[%s259 + $0x428] sm:$0xff] %v2023
      %2219 = vst [vmem:[%s259 + $0x430] sm:$0xff] %v2024
      %2220 = vst [vmem:[%s259 + $0x438] sm:$0xff] %v2025
      %2221 = vst [vmem:[%s259 + $0x440] sm:$0xff] %v2026
      %2222 = vst [vmem:[%s259 + $0x448] sm:$0xff] %v2027
      %2223 = vst [vmem:[%s259 + $0x450] sm:$0xff] %v2028
      %2224 = vst [vmem:[%s259 + $0x458] sm:$0xff] %v2029
      %2225 = vst [vmem:[%s259 + $0x460] sm:$0xff] %v2030
      %2226 = vst [vmem:[%s259 + $0x468] sm:$0xff] %v2031
      %2227 = vst [vmem:[%s259 + $0x470] sm:$0xff] %v2032
      %2228 = vst [vmem:[%s259 + $0x478] sm:$0xff] %v2033
      %2229 = vst [vmem:[%s259 + $0x480] sm:$0xff] %v2034
      %2230 = vst [vmem:[%s259 + $0x488] sm:$0xff] %v2035
      %2231 = vst [vmem:[%s259 + $0x490] sm:$0xff] %v2036
      %2232 = vst [vmem:[%s259 + $0x498] sm:$0xff] %v2037
      %2233 = vst [vmem:[%s259 + $0x4a0] sm:$0xff] %v2038
      %2234 = vst [vmem:[%s259 + $0x4a8] sm:$0xff] %v2039
      %2235 = vst [vmem:[%s259 + $0x4b0] sm:$0xff] %v2040
      %2236 = vst [vmem:[%s259 + $0x4b8] sm:$0xff] %v2041
      %2237 = vst [vmem:[%s259 + $0x4c0] sm:$0xff] %v2042
      %2238 = vst [vmem:[%s259 + $0x4c8] sm:$0xff] %v2043
      %2239 = vst [vmem:[%s259 + $0x4d0] sm:$0xff] %v2044
      %2240 = vst [vmem:[%s259 + $0x4d8] sm:$0xff] %v2045
      %2241 = vst [vmem:[%s259 + $0x4e0] sm:$0xff] %v2046
      %2242 = vst [vmem:[%s259 + $0x4e8] sm:$0xff] %v2047
      %2243 = vst [vmem:[%s259 + $0x4f0] sm:$0xff] %v2048
      %2244 = vst [vmem:[%s259 + $0x4f8] sm:$0xff] %v2049
      %2245 = vst [vmem:[%s259 + $0x500] sm:$0xff] %v2050
      %2246 = vst [vmem:[%s259 + $0x508] sm:$0xff] %v2051
      %2247 = vst [vmem:[%s259 + $0x510] sm:$0xff] %v2052
      %2248 = vst [vmem:[%s259 + $0x518] sm:$0xff] %v2053
      %2249 = vst [vmem:[%s259 + $0x520] sm:$0xff] %v2054
      %2250 = vst [vmem:[%s259 + $0x528] sm:$0xff] %v2055
      %2251 = vst [vmem:[%s259 + $0x530] sm:$0xff] %v2056
      %2252 = vst [vmem:[%s259 + $0x538] sm:$0xff] %v2057
      %2253 = vst [vmem:[%s259 + $0x540] sm:$0xff] %v2058
      %2254 = vst [vmem:[%s259 + $0x548] sm:$0xff] %v2059
      %2255 = vst [vmem:[%s259 + $0x550] sm:$0xff] %v2060
      %2256 = vst [vmem:[%s259 + $0x558] sm:$0xff] %v2061
      %2257 = vst [vmem:[%s259 + $0x560] sm:$0xff] %v2062
      %2258 = vst [vmem:[%s259 + $0x568] sm:$0xff] %v2063
      %2259 = vst [vmem:[%s259 + $0x570] sm:$0xff] %v2064
      %2260 = vst [vmem:[%s259 + $0x578] sm:$0xff] %v2065
      %2261 = vst [vmem:[%s259 + $0x580] sm:$0xff] %v2066
      %2262 = vst [vmem:[%s259 + $0x588] sm:$0xff] %v2067
      %2263 = vst [vmem:[%s259 + $0x590] sm:$0xff] %v2068
      %2264 = vst [vmem:[%s259 + $0x598] sm:$0xff] %v2069
      %2265 = vst [vmem:[%s259 + $0x5a0] sm:$0xff] %v2070
      %2266 = vst [vmem:[%s259 + $0x5a8] sm:$0xff] %v2071
      %2267 = vst [vmem:[%s259 + $0x5b0] sm:$0xff] %v2072
      %2268 = vst [vmem:[%s259 + $0x5b8] sm:$0xff] %v2073
      %2269 = vst [vmem:[%s259 + $0x5c0] sm:$0xff] %v2074
      %2270 = vst [vmem:[%s259 + $0x5c8] sm:$0xff] %v2075
      %2271 = vst [vmem:[%s259 + $0x5d0] sm:$0xff] %v2076
      %2272 = vst [vmem:[%s259 + $0x5d8] sm:$0xff] %v2077
      %2273 = vst [vmem:[%s259 + $0x5e0] sm:$0xff] %v2078
      %2274 = vst [vmem:[%s259 + $0x5e8] sm:$0xff] %v2079
      %2275 = vst [vmem:[%s259 + $0x5f0] sm:$0x1f] %v2080
      %2276 = vst [vmem:[%s259 + $0x5f8] sm:$0x1f] %v2081
      %2277 = vst [vmem:[%s259 + $0x600] sm:$0x1f] %v2082
      %2278 = vst [vmem:[%s259 + $0x608] sm:$0x1f] %v2083
      %2279 = vst [vmem:[%s259 + $0x610] sm:$0x1f] %v2084
      %v2280 = vld [vmem:[#allocation3] sm:$0xff]
      %v2281 = vld [vmem:[#allocation3 + $0x8] sm:$0xff]
      %v2282 = vld [vmem:[#allocation3 + $0x10] sm:$0xff]
      %v2283 = vld [vmem:[#allocation3 + $0x18] sm:$0xff]
      %v2284 = vld [vmem:[#allocation3 + $0x20] sm:$0xff]
      %v2285 = vld [vmem:[#allocation3 + $0x28] sm:$0xff]
      %v2286 = vld [vmem:[#allocation3 + $0x30] sm:$0xff]
      %v2287 = vld [vmem:[#allocation3 + $0x38] sm:$0xff]
      %v2288 = vld [vmem:[#allocation3 + $0x40] sm:$0xff]
      %v2289 = vld [vmem:[#allocation3 + $0x48] sm:$0xff]
      %v2290 = vld [vmem:[#allocation3 + $0x50] sm:$0xff]
      %v2291 = vld [vmem:[#allocation3 + $0x58] sm:$0xff]
      %v2292 = vld [vmem:[#allocation3 + $0x60] sm:$0xff]
      %v2293 = vld [vmem:[#allocation3 + $0x68] sm:$0xff]
      %v2294 = vld [vmem:[#allocation3 + $0x70] sm:$0xff]
      %v2295 = vld [vmem:[#allocation3 + $0x78] sm:$0xff]
      %v2296 = vld [vmem:[#allocation3 + $0x80] sm:$0xff]
      %v2297 = vld [vmem:[#allocation3 + $0x88] sm:$0xff]
      %v2298 = vld [vmem:[#allocation3 + $0x90] sm:$0xff]
      %v2299 = vld [vmem:[#allocation3 + $0x98] sm:$0xff]
      %v2300 = vld [vmem:[#allocation3 + $0xa0] sm:$0xff]
      %v2301 = vld [vmem:[#allocation3 + $0xa8] sm:$0xff]
      %v2302 = vld [vmem:[#allocation3 + $0xb0] sm:$0xff]
      %v2303 = vld [vmem:[#allocation3 + $0xb8] sm:$0xff]
      %v2304 = vld [vmem:[#allocation3 + $0xc0] sm:$0xff]
      %v2305 = vld [vmem:[#allocation3 + $0xc8] sm:$0xff]
      %v2306 = vld [vmem:[#allocation3 + $0xd0] sm:$0xff]
      %v2307 = vld [vmem:[#allocation3 + $0xd8] sm:$0xff]
      %v2308 = vld [vmem:[#allocation3 + $0xe0] sm:$0xff]
      %v2309 = vld [vmem:[#allocation3 + $0xe8] sm:$0xff]
      %v2310 = vld [vmem:[#allocation3 + $0xf0] sm:$0xff]
      %v2311 = vld [vmem:[#allocation3 + $0xf8] sm:$0xff]
      %v2312 = vld [vmem:[#allocation3 + $0x100] sm:$0xff]
      %v2313 = vld [vmem:[#allocation3 + $0x108] sm:$0xff]
      %v2314 = vld [vmem:[#allocation3 + $0x110] sm:$0xff]
      %v2315 = vld [vmem:[#allocation3 + $0x118] sm:$0xff]
      %v2316 = vld [vmem:[#allocation3 + $0x120] sm:$0xff]
      %v2317 = vld [vmem:[#allocation3 + $0x128] sm:$0xff]
      %v2318 = vld [vmem:[#allocation3 + $0x130] sm:$0xff]
      %v2319 = vld [vmem:[#allocation3 + $0x138] sm:$0xff]
      %v2320 = vld [vmem:[#allocation3 + $0x140] sm:$0xff]
      %v2321 = vld [vmem:[#allocation3 + $0x148] sm:$0xff]
      %v2322 = vld [vmem:[#allocation3 + $0x150] sm:$0xff]
      %v2323 = vld [vmem:[#allocation3 + $0x158] sm:$0xff]
      %v2324 = vld [vmem:[#allocation3 + $0x160] sm:$0xff]
      %v2325 = vld [vmem:[#allocation3 + $0x168] sm:$0xff]
      %v2326 = vld [vmem:[#allocation3 + $0x170] sm:$0xff]
      %v2327 = vld [vmem:[#allocation3 + $0x178] sm:$0xff]
      %v2328 = vld [vmem:[#allocation3 + $0x180] sm:$0xff]
      %v2329 = vld [vmem:[#allocation3 + $0x188] sm:$0xff]
      %v2330 = vld [vmem:[#allocation3 + $0x190] sm:$0xff]
      %v2331 = vld [vmem:[#allocation3 + $0x198] sm:$0xff]
      %v2332 = vld [vmem:[#allocation3 + $0x1a0] sm:$0xff]
      %v2333 = vld [vmem:[#allocation3 + $0x1a8] sm:$0xff]
      %v2334 = vld [vmem:[#allocation3 + $0x1b0] sm:$0xff]
      %v2335 = vld [vmem:[#allocation3 + $0x1b8] sm:$0xff]
      %v2336 = vld [vmem:[#allocation3 + $0x1c0] sm:$0xff]
      %v2337 = vld [vmem:[#allocation3 + $0x1c8] sm:$0xff]
      %v2338 = vld [vmem:[#allocation3 + $0x1d0] sm:$0xff]
      %v2339 = vld [vmem:[#allocation3 + $0x1d8] sm:$0xff]
      %v2340 = vld [vmem:[#allocation3 + $0x1e0] sm:$0xff]
      %v2341 = vld [vmem:[#allocation3 + $0x1e8] sm:$0xff]
      %v2342 = vld [vmem:[#allocation3 + $0x1f0] sm:$0xff]
      %v2343 = vld [vmem:[#allocation3 + $0x1f8] sm:$0xff]
      %v2344 = vld [vmem:[#allocation3 + $0x200] sm:$0xff]
      %v2345 = vld [vmem:[#allocation3 + $0x208] sm:$0xff]
      %v2346 = vld [vmem:[#allocation3 + $0x210] sm:$0xff]
      %v2347 = vld [vmem:[#allocation3 + $0x218] sm:$0xff]
      %v2348 = vld [vmem:[#allocation3 + $0x220] sm:$0xff]
      %v2349 = vld [vmem:[#allocation3 + $0x228] sm:$0xff]
      %v2350 = vld [vmem:[#allocation3 + $0x230] sm:$0xff]
      %v2351 = vld [vmem:[#allocation3 + $0x238] sm:$0xff]
      %v2352 = vld [vmem:[#allocation3 + $0x240] sm:$0xff]
      %v2353 = vld [vmem:[#allocation3 + $0x248] sm:$0xff]
      %v2354 = vld [vmem:[#allocation3 + $0x250] sm:$0xff]
      %v2355 = vld [vmem:[#allocation3 + $0x258] sm:$0xff]
      %v2356 = vld [vmem:[#allocation3 + $0x260] sm:$0xff]
      %v2357 = vld [vmem:[#allocation3 + $0x268] sm:$0xff]
      %v2358 = vld [vmem:[#allocation3 + $0x270] sm:$0xff]
      %v2359 = vld [vmem:[#allocation3 + $0x278] sm:$0xff]
      %v2360 = vld [vmem:[#allocation3 + $0x280] sm:$0xff]
      %v2361 = vld [vmem:[#allocation3 + $0x288] sm:$0xff]
      %v2362 = vld [vmem:[#allocation3 + $0x290] sm:$0xff]
      %v2363 = vld [vmem:[#allocation3 + $0x298] sm:$0xff]
      %v2364 = vld [vmem:[#allocation3 + $0x2a0] sm:$0xff]
      %v2365 = vld [vmem:[#allocation3 + $0x2a8] sm:$0xff]
      %v2366 = vld [vmem:[#allocation3 + $0x2b0] sm:$0xff]
      %v2367 = vld [vmem:[#allocation3 + $0x2b8] sm:$0xff]
      %v2368 = vld [vmem:[#allocation3 + $0x2c0] sm:$0xff]
      %v2369 = vld [vmem:[#allocation3 + $0x2c8] sm:$0xff]
      %v2370 = vld [vmem:[#allocation3 + $0x2d0] sm:$0xff]
      %v2371 = vld [vmem:[#allocation3 + $0x2d8] sm:$0xff]
      %v2372 = vld [vmem:[#allocation3 + $0x2e0] sm:$0xff]
      %v2373 = vld [vmem:[#allocation3 + $0x2e8] sm:$0xff]
      %v2374 = vld [vmem:[#allocation3 + $0x2f0] sm:$0xff]
      %v2375 = vld [vmem:[#allocation3 + $0x2f8] sm:$0xff]
      %v2376 = vld [vmem:[#allocation3 + $0x300] sm:$0xff]
      %v2377 = vld [vmem:[#allocation3 + $0x308] sm:$0xff]
      %v2378 = vld [vmem:[#allocation3 + $0x310] sm:$0xff]
      %v2379 = vld [vmem:[#allocation3 + $0x318] sm:$0xff]
      %v2380 = vld [vmem:[#allocation3 + $0x320] sm:$0xff]
      %v2381 = vld [vmem:[#allocation3 + $0x328] sm:$0xff]
      %v2382 = vld [vmem:[#allocation3 + $0x330] sm:$0xff]
      %v2383 = vld [vmem:[#allocation3 + $0x338] sm:$0xff]
      %v2384 = vld [vmem:[#allocation3 + $0x340] sm:$0xff]
      %v2385 = vld [vmem:[#allocation3 + $0x348] sm:$0xff]
      %v2386 = vld [vmem:[#allocation3 + $0x350] sm:$0xff]
      %v2387 = vld [vmem:[#allocation3 + $0x358] sm:$0xff]
      %v2388 = vld [vmem:[#allocation3 + $0x360] sm:$0xff]
      %v2389 = vld [vmem:[#allocation3 + $0x368] sm:$0xff]
      %v2390 = vld [vmem:[#allocation3 + $0x370] sm:$0xff]
      %v2391 = vld [vmem:[#allocation3 + $0x378] sm:$0xff]
      %v2392 = vld [vmem:[#allocation3 + $0x380] sm:$0xff]
      %v2393 = vld [vmem:[#allocation3 + $0x388] sm:$0xff]
      %v2394 = vld [vmem:[#allocation3 + $0x390] sm:$0xff]
      %v2395 = vld [vmem:[#allocation3 + $0x398] sm:$0xff]
      %v2396 = vld [vmem:[#allocation3 + $0x3a0] sm:$0xff]
      %v2397 = vld [vmem:[#allocation3 + $0x3a8] sm:$0xff]
      %v2398 = vld [vmem:[#allocation3 + $0x3b0] sm:$0xff]
      %v2399 = vld [vmem:[#allocation3 + $0x3b8] sm:$0xff]
      %v2400 = vld [vmem:[#allocation3 + $0x3c0] sm:$0xff]
      %v2401 = vld [vmem:[#allocation3 + $0x3c8] sm:$0xff]
      %v2402 = vld [vmem:[#allocation3 + $0x3d0] sm:$0xff]
      %v2403 = vld [vmem:[#allocation3 + $0x3d8] sm:$0xff]
      %v2404 = vld [vmem:[#allocation3 + $0x3e0] sm:$0xff]
      %v2405 = vld [vmem:[#allocation3 + $0x3e8] sm:$0xff]
      %v2406 = vld [vmem:[#allocation3 + $0x3f0] sm:$0xff]
      %v2407 = vld [vmem:[#allocation3 + $0x3f8] sm:$0xff]
      %v2408 = vld [vmem:[#allocation3 + $0x400] sm:$0xff]
      %v2409 = vld [vmem:[#allocation3 + $0x408] sm:$0xff]
      %v2410 = vld [vmem:[#allocation3 + $0x410] sm:$0xff]
      %v2411 = vld [vmem:[#allocation3 + $0x418] sm:$0xff]
      %v2412 = vld [vmem:[#allocation3 + $0x420] sm:$0xff]
      %v2413 = vld [vmem:[#allocation3 + $0x428] sm:$0xff]
      %v2414 = vld [vmem:[#allocation3 + $0x430] sm:$0xff]
      %v2415 = vld [vmem:[#allocation3 + $0x438] sm:$0xff]
      %v2416 = vld [vmem:[#allocation3 + $0x440] sm:$0xff]
      %v2417 = vld [vmem:[#allocation3 + $0x448] sm:$0xff]
      %v2418 = vld [vmem:[#allocation3 + $0x450] sm:$0xff]
      %v2419 = vld [vmem:[#allocation3 + $0x458] sm:$0xff]
      %v2420 = vld [vmem:[#allocation3 + $0x460] sm:$0xff]
      %v2421 = vld [vmem:[#allocation3 + $0x468] sm:$0xff]
      %v2422 = vld [vmem:[#allocation3 + $0x470] sm:$0xff]
      %v2423 = vld [vmem:[#allocation3 + $0x478] sm:$0xff]
      %v2424 = vld [vmem:[#allocation3 + $0x480] sm:$0xff]
      %v2425 = vld [vmem:[#allocation3 + $0x488] sm:$0xff]
      %v2426 = vld [vmem:[#allocation3 + $0x490] sm:$0xff]
      %v2427 = vld [vmem:[#allocation3 + $0x498] sm:$0xff]
      %v2428 = vld [vmem:[#allocation3 + $0x4a0] sm:$0xff]
      %v2429 = vld [vmem:[#allocation3 + $0x4a8] sm:$0xff]
      %v2430 = vld [vmem:[#allocation3 + $0x4b0] sm:$0xff]
      %v2431 = vld [vmem:[#allocation3 + $0x4b8] sm:$0xff]
      %v2432 = vld [vmem:[#allocation3 + $0x4c0] sm:$0xff]
      %v2433 = vld [vmem:[#allocation3 + $0x4c8] sm:$0xff]
      %v2434 = vld [vmem:[#allocation3 + $0x4d0] sm:$0xff]
      %v2435 = vld [vmem:[#allocation3 + $0x4d8] sm:$0xff]
      %v2436 = vld [vmem:[#allocation3 + $0x4e0] sm:$0xff]
      %v2437 = vld [vmem:[#allocation3 + $0x4e8] sm:$0xff]
      %v2438 = vld [vmem:[#allocation3 + $0x4f0] sm:$0xff]
      %v2439 = vld [vmem:[#allocation3 + $0x4f8] sm:$0xff]
      %v2440 = vld [vmem:[#allocation3 + $0x500] sm:$0xff]
      %v2441 = vld [vmem:[#allocation3 + $0x508] sm:$0xff]
      %v2442 = vld [vmem:[#allocation3 + $0x510] sm:$0xff]
      %v2443 = vld [vmem:[#allocation3 + $0x518] sm:$0xff]
      %v2444 = vld [vmem:[#allocation3 + $0x520] sm:$0xff]
      %v2445 = vld [vmem:[#allocation3 + $0x528] sm:$0xff]
      %v2446 = vld [vmem:[#allocation3 + $0x530] sm:$0xff]
      %v2447 = vld [vmem:[#allocation3 + $0x538] sm:$0xff]
      %v2448 = vld [vmem:[#allocation3 + $0x540] sm:$0xff]
      %v2449 = vld [vmem:[#allocation3 + $0x548] sm:$0xff]
      %v2450 = vld [vmem:[#allocation3 + $0x550] sm:$0xff]
      %v2451 = vld [vmem:[#allocation3 + $0x558] sm:$0xff]
      %v2452 = vld [vmem:[#allocation3 + $0x560] sm:$0xff]
      %v2453 = vld [vmem:[#allocation3 + $0x568] sm:$0xff]
      %v2454 = vld [vmem:[#allocation3 + $0x570] sm:$0xff]
      %v2455 = vld [vmem:[#allocation3 + $0x578] sm:$0xff]
      %v2456 = vld [vmem:[#allocation3 + $0x580] sm:$0xff]
      %v2457 = vld [vmem:[#allocation3 + $0x588] sm:$0xff]
      %v2458 = vld [vmem:[#allocation3 + $0x590] sm:$0xff]
      %v2459 = vld [vmem:[#allocation3 + $0x598] sm:$0xff]
      %v2460 = vld [vmem:[#allocation3 + $0x5a0] sm:$0xff]
      %v2461 = vld [vmem:[#allocation3 + $0x5a8] sm:$0xff]
      %v2462 = vld [vmem:[#allocation3 + $0x5b0] sm:$0xff]
      %v2463 = vld [vmem:[#allocation3 + $0x5b8] sm:$0xff]
      %v2464 = vld [vmem:[#allocation3 + $0x5c0] sm:$0xff]
      %v2465 = vld [vmem:[#allocation3 + $0x5c8] sm:$0xff]
      %v2466 = vld [vmem:[#allocation3 + $0x5d0] sm:$0xff]
      %v2467 = vld [vmem:[#allocation3 + $0x5d8] sm:$0xff]
      %v2468 = vld [vmem:[#allocation3 + $0x5e0] sm:$0xff]
      %v2469 = vld [vmem:[#allocation3 + $0x5e8] sm:$0xff]
      %v2470 = vld [vmem:[#allocation3 + $0x5f0] sm:$0xff]
      %v2471 = vld [vmem:[#allocation3 + $0x5f8] sm:$0xff]
      %v2472 = vld [vmem:[#allocation3 + $0x600] sm:$0xff]
      %v2473 = vld [vmem:[#allocation3 + $0x608] sm:$0xff]
      %v2474 = vld [vmem:[#allocation3 + $0x610] sm:$0xff]
      %v2475 = vld [vmem:[%s1 + $0x280] sm:$0xff]
      %v2476 = vld [vmem:[%s1 + $0x288] sm:$0xff]
      %v2477 = vld [vmem:[%s1 + $0x290] sm:$0xff]
      %v2478 = vld [vmem:[%s1 + $0x298] sm:$0xff]
      %v2479 = vld [vmem:[%s1 + $0x2a0] sm:$0xff]
      %v2480 = vld [vmem:[%s1 + $0x2a8] sm:$0xff]
      %v2481 = vld [vmem:[%s1 + $0x2b0] sm:$0xff]
      %v2482 = vld [vmem:[%s1 + $0x2b8] sm:$0xff]
      %v2483 = vld [vmem:[%s1 + $0x2c0] sm:$0xff]
      %v2484 = vld [vmem:[%s1 + $0x2c8] sm:$0xff]
      %v2485 = vld [vmem:[%s1 + $0x2d0] sm:$0xff]
      %v2486 = vld [vmem:[%s1 + $0x2d8] sm:$0xff]
      %v2487 = vld [vmem:[%s1 + $0x2e0] sm:$0xff]
      %v2488 = vld [vmem:[%s1 + $0x2e8] sm:$0xff]
      %v2489 = vld [vmem:[%s1 + $0x2f0] sm:$0xff]
      %v2490 = vld [vmem:[%s1 + $0x2f8] sm:$0xff]
      %v2491 = vld [vmem:[%s1 + $0x300] sm:$0xff]
      %v2492 = vld [vmem:[%s1 + $0x308] sm:$0xff]
      %v2493 = vld [vmem:[%s1 + $0x310] sm:$0xff]
      %v2494 = vld [vmem:[%s1 + $0x318] sm:$0xff]
      %v2495 = vld [vmem:[%s1 + $0x320] sm:$0xff]
      %v2496 = vld [vmem:[%s1 + $0x328] sm:$0xff]
      %v2497 = vld [vmem:[%s1 + $0x330] sm:$0xff]
      %v2498 = vld [vmem:[%s1 + $0x338] sm:$0xff]
      %v2499 = vld [vmem:[%s1 + $0x340] sm:$0xff]
      %v2500 = vld [vmem:[%s1 + $0x348] sm:$0xff]
      %v2501 = vld [vmem:[%s1 + $0x350] sm:$0xff]
      %v2502 = vld [vmem:[%s1 + $0x358] sm:$0xff]
      %v2503 = vld [vmem:[%s1 + $0x360] sm:$0xff]
      %v2504 = vld [vmem:[%s1 + $0x368] sm:$0xff]
      %v2505 = vld [vmem:[%s1 + $0x370] sm:$0xff]
      %v2506 = vld [vmem:[%s1 + $0x378] sm:$0xff]
      %v2507 = vld [vmem:[%s1 + $0x380] sm:$0xff]
      %v2508 = vld [vmem:[%s1 + $0x388] sm:$0xff]
      %v2509 = vld [vmem:[%s1 + $0x390] sm:$0xff]
      %v2510 = vld [vmem:[%s1 + $0x398] sm:$0xff]
      %v2511 = vld [vmem:[%s1 + $0x3a0] sm:$0xff]
      %v2512 = vld [vmem:[%s1 + $0x3a8] sm:$0xff]
      %v2513 = vld [vmem:[%s1 + $0x3b0] sm:$0xff]
      %v2514 = vld [vmem:[%s1 + $0x3b8] sm:$0xff]
      %v2515 = vld [vmem:[%s1 + $0x3c0] sm:$0xff]
      %v2516 = vld [vmem:[%s1 + $0x3c8] sm:$0xff]
      %v2517 = vld [vmem:[%s1 + $0x3d0] sm:$0xff]
      %v2518 = vld [vmem:[%s1 + $0x3d8] sm:$0xff]
      %v2519 = vld [vmem:[%s1 + $0x3e0] sm:$0xff]
      %v2520 = vld [vmem:[%s1 + $0x3e8] sm:$0xff]
      %v2521 = vld [vmem:[%s1 + $0x3f0] sm:$0xff]
      %v2522 = vld [vmem:[%s1 + $0x3f8] sm:$0xff]
      %v2523 = vld [vmem:[%s1 + $0x400] sm:$0xff]
      %v2524 = vld [vmem:[%s1 + $0x408] sm:$0xff]
      %v2525 = vld [vmem:[%s1 + $0x410] sm:$0xff]
      %v2526 = vld [vmem:[%s1 + $0x418] sm:$0xff]
      %v2527 = vld [vmem:[%s1 + $0x420] sm:$0xff]
      %v2528 = vld [vmem:[%s1 + $0x428] sm:$0xff]
      %v2529 = vld [vmem:[%s1 + $0x430] sm:$0xff]
      %v2530 = vld [vmem:[%s1 + $0x438] sm:$0xff]
      %v2531 = vld [vmem:[%s1 + $0x440] sm:$0xff]
      %v2532 = vld [vmem:[%s1 + $0x448] sm:$0xff]
      %v2533 = vld [vmem:[%s1 + $0x450] sm:$0xff]
      %v2534 = vld [vmem:[%s1 + $0x458] sm:$0xff]
      %v2535 = vld [vmem:[%s1 + $0x460] sm:$0xff]
      %v2536 = vld [vmem:[%s1 + $0x468] sm:$0xff]
      %v2537 = vld [vmem:[%s1 + $0x470] sm:$0xff]
      %v2538 = vld [vmem:[%s1 + $0x478] sm:$0xff]
      %v2539 = vld [vmem:[%s1 + $0x480] sm:$0xff]
      %v2540 = vld [vmem:[%s1 + $0x488] sm:$0xff]
      %v2541 = vld [vmem:[%s1 + $0x490] sm:$0xff]
      %v2542 = vld [vmem:[%s1 + $0x498] sm:$0xff]
      %v2543 = vld [vmem:[%s1 + $0x4a0] sm:$0xff]
      %v2544 = vld [vmem:[%s1 + $0x4a8] sm:$0xff]
      %v2545 = vld [vmem:[%s1 + $0x4b0] sm:$0xff]
      %v2546 = vld [vmem:[%s1 + $0x4b8] sm:$0xff]
      %v2547 = vld [vmem:[%s1 + $0x4c0] sm:$0xff]
      %v2548 = vld [vmem:[%s1 + $0x4c8] sm:$0xff]
      %v2549 = vld [vmem:[%s1 + $0x4d0] sm:$0xff]
      %v2550 = vld [vmem:[%s1 + $0x4d8] sm:$0xff]
      %v2551 = vld [vmem:[%s1 + $0x4e0] sm:$0xff]
      %v2552 = vld [vmem:[%s1 + $0x4e8] sm:$0xff]
      %v2553 = vld [vmem:[%s1 + $0x4f0] sm:$0xff]
      %v2554 = vld [vmem:[%s1 + $0x4f8] sm:$0xff]
      %v2555 = vld [vmem:[%s4] ss:$0 sm:$0xff]
      %2556 = vmatprep.subr.mxu0 0.0
      %2557 = vmatpush1.msra.mxu0 %v2475
      %2558 = vmatprep.subr.mxu0 0.0
      %2559 = vmatpush1.msra.mxu0 %v2476
      %2560 = vmatprep.subr.mxu0 0.0
      %2561 = vmatpush1.msra.mxu0 %v2477
      %2562 = vmatprep.subr.mxu0 0.0
      %2563 = vmatpush1.msra.mxu0 %v2478
      %2564 = vmatprep.subr.mxu0 0.0
      %2565 = vmatpush1.msra.mxu0 %v2479
      %2566 = vmatprep.subr.mxu0 0.0
      %2567 = vmatpush1.msra.mxu0 %v2480
      %2568 = vmatprep.subr.mxu0 0.0
      %2569 = vmatpush1.msra.mxu0 %v2481
      %2570 = vmatprep.subr.mxu0 0.0
      %2571 = vmatpush1.msra.mxu0 %v2482
      %2572 = vmatprep.subr.mxu0 0.0
      %2573 = vmatpush1.msra.mxu0 %v2483
      %2574 = vmatprep.subr.mxu0 0.0
      %2575 = vmatpush1.msra.mxu0 %v2484
      %2576 = vmatprep.subr.mxu0 0.0
      %2577 = vmatpush1.msra.mxu0 %v2485
      %2578 = vmatprep.subr.mxu0 0.0
      %2579 = vmatpush1.msra.mxu0 %v2486
      %2580 = vmatprep.subr.mxu0 0.0
      %2581 = vmatpush1.msra.mxu0 %v2487
      %2582 = vmatprep.subr.mxu0 0.0
      %2583 = vmatpush1.msra.mxu0 %v2488
      %2584 = vmatprep.subr.mxu0 0.0
      %2585 = vmatpush1.msra.mxu0 %v2489
      %2586 = vmatprep.subr.mxu0 0.0
      %2587 = vmatpush1.msra.mxu0 %v2490
      %2588 = vmatprep.subr.mxu0 0.0
      %2589 = vmatpush1.msra.mxu0 %v2491
      %2590 = vmatprep.subr.mxu0 0.0
      %2591 = vmatpush1.msra.mxu0 %v2492
      %2592 = vmatprep.subr.mxu0 0.0
      %2593 = vmatpush1.msra.mxu0 %v2493
      %2594 = vmatprep.subr.mxu0 0.0
      %2595 = vmatpush1.msra.mxu0 %v2494
      %2596 = vmatprep.subr.mxu0 0.0
      %2597 = vmatpush1.msra.mxu0 %v2495
      %2598 = vmatprep.subr.mxu0 0.0
      %2599 = vmatpush1.msra.mxu0 %v2496
      %2600 = vmatprep.subr.mxu0 0.0
      %2601 = vmatpush1.msra.mxu0 %v2497
      %2602 = vmatprep.subr.mxu0 0.0
      %2603 = vmatpush1.msra.mxu0 %v2498
      %2604 = vmatprep.subr.mxu0 0.0
      %2605 = vmatpush1.msra.mxu0 %v2499
      %2606 = vmatprep.subr.mxu0 0.0
      %2607 = vmatpush1.msra.mxu0 %v2500
      %2608 = vmatprep.subr.mxu0 0.0
      %2609 = vmatpush1.msra.mxu0 %v2501
      %2610 = vmatprep.subr.mxu0 0.0
      %2611 = vmatpush1.msra.mxu0 %v2502
      %2612 = vmatprep.subr.mxu0 0.0
      %2613 = vmatpush1.msra.mxu0 %v2503
      %2614 = vmatprep.subr.mxu0 0.0
      %2615 = vmatpush1.msra.mxu0 %v2504
      %2616 = vmatprep.subr.mxu0 0.0
      %2617 = vmatpush1.msra.mxu0 %v2505
      %2618 = vmatprep.subr.mxu0 0.0
      %2619 = vmatpush1.msra.mxu0 %v2506
      %2620 = vmatprep.mubr.f32.mxu0 %v2281
      %2621 = vmatmul.mubr.f32.gmra.mrb[0].mxu0 %v2280
      %v2622 = vpop.f32.mrb[0].mxu0
      %v2623 = vadd.f32 %v2555, %v2622
      %v2624 = vpop.f32.mrb[0].mxu0
      %2625 = vmatprep.mubr.f32.mxu0 %v2286
      %2626 = vmatmul.mubr.f32.gmra.mrb[0].mxu0 %v2285
      %v2627 = vpop.f32.mrb[0].mxu0
      %v2628 = vadd.f32 %v2555, %v2627
      %v2629 = vpop.f32.mrb[0].mxu0
      %2630 = vmatprep.mubr.f32.mxu0 %v2291
      %2631 = vmatmul.mubr.f32.gmra.mrb[0].mxu0 %v2290
      %v2632 = vpop.f32.mrb[0].mxu0
      %v2633 = vadd.f32 %v2555, %v2632
      %v2634 = vpop.f32.mrb[0].mxu0
      %2635 = vmatprep.mubr.f32.mxu0 %v2296
      %2636 = vmatmul.mubr.f32.gmra.mrb[0].mxu0 %v2295
      %v2637 = vpop.f32.mrb[0].mxu0
      %v2638 = vadd.f32 %v2555, %v2637
      %v2639 = vpop.f32.mrb[0].mxu0
      %2640 = vmatprep.mubr.f32.mxu0 %v2301
      %2641 = vmatmul.mubr.f32.gmra.mrb[0].mxu0 %v2300
      %v2642 = vpop.f32.mrb[0].mxu0
      %v2643 = vadd.f32 %v2555, %v2642
      %v2644 = vpop.f32.mrb[0].mxu0
      %2645 = vmatprep.mubr.f32.mxu0 %v2306
      %2646 = vmatmul.mubr.f32.gmra.mrb[0].mxu0 %v2305
      %v2647 = vpop.f32.mrb[0].mxu0
      %v2648 = vadd.f32 %v2555, %v2647
      %v2649 = vpop.f32.mrb[0].mxu0
      %2650 = vmatprep.mubr.f32.mxu0 %v2311
      %2651 = vmatmul.mubr.f32.gmra.mrb[0].mxu0 %v2310
      %v2652 = vpop.f32.mrb[0].mxu0
      %v2653 = vadd.f32 %v2555, %v2652
      %v2654 = vpop.f32.mrb[0].mxu0
      %2655 = vmatprep.mubr.f32.mxu0 %v2316
      %2656 = vmatmul.mubr.f32.gmra.mrb[0].mxu0 %v2315
      %v2657 = vpop.f32.mrb[0].mxu0
      %v2658 = vadd.f32 %v2555, %v2657
      %v2659 = vpop.f32.mrb[0].mxu0
      %2660 = vmatprep.mubr.f32.mxu0 %v2321
      %2661 = vmatmul.mubr.f32.gmra.mrb[0].mxu0 %v2320
      %v2662 = vpop.f32.mrb[0].mxu0
      %v2663 = vadd.f32 %v2555, %v2662
      %v2664 = vpop.f32.mrb[0].mxu0
      %2665 = vmatprep.mubr.f32.mxu0 %v2326
      %2666 = vmatmul.mubr.f32.gmra.mrb[0].mxu0 %v2325
      %v2667 = vpop.f32.mrb[0].mxu0
      %v2668 = vadd.f32 %v2555, %v2667
      %v2669 = vpop.f32.mrb[0].mxu0
      %2670 = vmatprep.mubr.f32.mxu0 %v2331
      %2671 = vmatmul.mubr.f32.gmra.mrb[0].mxu0 %v2330
      %v2672 = vpop.f32.mrb[0].mxu0
      %v2673 = vadd.f32 %v2555, %v2672
      %v2674 = vpop.f32.mrb[0].mxu0
      %2675 = vmatprep.mubr.f32.mxu0 %v2336
      %2676 = vmatmul.mubr.f32.gmra.mrb[0].mxu0 %v2335
      %v2677 = vpop.f32.mrb[0].mxu0
      %v2678 = vadd.f32 %v2555, %v2677
      %v2679 = vpop.f32.mrb[0].mxu0
      %2680 = vmatprep.mubr.f32.mxu0 %v2341
      %2681 = vmatmul.mubr.f32.gmra.mrb[0].mxu0 %v2340
      %v2682 = vpop.f32.mrb[0].mxu0
      %v2683 = vadd.f32 %v2555, %v2682
      %v2684 = vpop.f32.mrb[0].mxu0
      %2685 = vmatprep.mubr.f32.mxu0 %v2346
      %2686 = vmatmul.mubr.f32.gmra.mrb[0].mxu0 %v2345
      %v2687 = vpop.f32.mrb[0].mxu0
      %v2688 = vadd.f32 %v2555, %v2687
      %v2689 = vpop.f32.mrb[0].mxu0
      %2690 = vmatprep.mubr.f32.mxu0 %v2351
      %2691 = vmatmul.mubr.f32.gmra.mrb[0].mxu0 %v2350
      %v2692 = vpop.f32.mrb[0].mxu0
      %v2693 = vadd.f32 %v2555, %v2692
      %v2694 = vpop.f32.mrb[0].mxu0
      %2695 = vmatprep.mubr.f32.mxu0 %v2356
      %2696 = vmatmul.mubr.f32.gmra.mrb[0].mxu0 %v2355
      %v2697 = vpop.f32.mrb[0].mxu0
      %v2698 = vadd.f32 %v2555, %v2697
      %v2699 = vpop.f32.mrb[0].mxu0
      %2700 = vmatprep.mubr.f32.mxu0 %v2361
      %2701 = vmatmul.mubr.f32.gmra.mrb[0].mxu0 %v2360
      %v2702 = vpop.f32.mrb[0].mxu0
      %v2703 = vadd.f32 %v2555, %v2702
      %v2704 = vpop.f32.mrb[0].mxu0
      %2705 = vmatprep.mubr.f32.mxu0 %v2366
      %2706 = vmatmul.mubr.f32.gmra.mrb[0].mxu0 %v2365
      %v2707 = vpop.f32.mrb[0].mxu0
      %v2708 = vadd.f32 %v2555, %v2707
      %v2709 = vpop.f32.mrb[0].mxu0
      %2710 = vmatprep.mubr.f32.mxu0 %v2371
      %2711 = vmatmul.mubr.f32.gmra.mrb[0].mxu0 %v2370
      %v2712 = vpop.f32.mrb[0].mxu0
      %v2713 = vadd.f32 %v2555, %v2712
      %v2714 = vpop.f32.mrb[0].mxu0
      %2715 = vmatprep.mubr.f32.mxu0 %v2376
      %2716 = vmatmul.mubr.f32.gmra.mrb[0].mxu0 %v2375
      %v2717 = vpop.f32.mrb[0].mxu0
      %v2718 = vadd.f32 %v2555, %v2717
      %v2719 = vpop.f32.mrb[0].mxu0
      %2720 = vmatprep.mubr.f32.mxu0 %v2381
      %2721 = vmatmul.mubr.f32.gmra.mrb[0].mxu0 %v2380
      %v2722 = vpop.f32.mrb[0].mxu0
      %v2723 = vadd.f32 %v2555, %v2722
      %v2724 = vpop.f32.mrb[0].mxu0
      %2725 = vmatprep.mubr.f32.mxu0 %v2386
      %2726 = vmatmul.mubr.f32.gmra.mrb[0].mxu0 %v2385
      %v2727 = vpop.f32.mrb[0].mxu0
      %v2728 = vadd.f32 %v2555, %v2727
      %v2729 = vpop.f32.mrb[0].mxu0
      %2730 = vmatprep.mubr.f32.mxu0 %v2391
      %2731 = vmatmul.mubr.f32.gmra.mrb[0].mxu0 %v2390
      %v2732 = vpop.f32.mrb[0].mxu0
      %v2733 = vadd.f32 %v2555, %v2732
      %v2734 = vpop.f32.mrb[0].mxu0
      %2735 = vmatprep.mubr.f32.mxu0 %v2396
      %2736 = vmatmul.mubr.f32.gmra.mrb[0].mxu0 %v2395
      %v2737 = vpop.f32.mrb[0].mxu0
      %v2738 = vadd.f32 %v2555, %v2737
      %v2739 = vpop.f32.mrb[0].mxu0
      %2740 = vmatprep.mubr.f32.mxu0 %v2401
      %2741 = vmatmul.mubr.f32.gmra.mrb[0].mxu0 %v2400
      %v2742 = vpop.f32.mrb[0].mxu0
      %v2743 = vadd.f32 %v2555, %v2742
      %v2744 = vpop.f32.mrb[0].mxu0
      %2745 = vmatprep.mubr.f32.mxu0 %v2406
      %2746 = vmatmul.mubr.f32.gmra.mrb[0].mxu0 %v2405
      %v2747 = vpop.f32.mrb[0].mxu0
      %v2748 = vadd.f32 %v2555, %v2747
      %v2749 = vpop.f32.mrb[0].mxu0
      %2750 = vmatprep.mubr.f32.mxu0 %v2411
      %2751 = vmatmul.mubr.f32.gmra.mrb[0].mxu0 %v2410
      %v2752 = vpop.f32.mrb[0].mxu0
      %v2753 = vadd.f32 %v2555, %v2752
      %v2754 = vpop.f32.mrb[0].mxu0
      %2755 = vmatprep.mubr.f32.mxu0 %v2416
      %2756 = vmatmul.mubr.f32.gmra.mrb[0].mxu0 %v2415
      %v2757 = vpop.f32.mrb[0].mxu0
      %v2758 = vadd.f32 %v2555, %v2757
      %v2759 = vpop.f32.mrb[0].mxu0
      %2760 = vmatprep.mubr.f32.mxu0 %v2421
      %2761 = vmatmul.mubr.f32.gmra.mrb[0].mxu0 %v2420
      %v2762 = vpop.f32.mrb[0].mxu0
      %v2763 = vadd.f32 %v2555, %v2762
      %v2764 = vpop.f32.mrb[0].mxu0
      %2765 = vmatprep.mubr.f32.mxu0 %v2426
      %2766 = vmatmul.mubr.f32.gmra.mrb[0].mxu0 %v2425
      %v2767 = vpop.f32.mrb[0].mxu0
      %v2768 = vadd.f32 %v2555, %v2767
      %v2769 = vpop.f32.mrb[0].mxu0
      %2770 = vmatprep.mubr.f32.mxu0 %v2431
      %2771 = vmatmul.mubr.f32.gmra.mrb[0].mxu0 %v2430
      %v2772 = vpop.f32.mrb[0].mxu0
      %v2773 = vadd.f32 %v2555, %v2772
      %v2774 = vpop.f32.mrb[0].mxu0
      %2775 = vmatprep.mubr.f32.mxu0 %v2436
      %2776 = vmatmul.mubr.f32.gmra.mrb[0].mxu0 %v2435
      %v2777 = vpop.f32.mrb[0].mxu0
      %v2778 = vadd.f32 %v2555, %v2777
      %v2779 = vpop.f32.mrb[0].mxu0
      %2780 = vmatprep.mubr.f32.mxu0 %v2441
      %2781 = vmatmul.mubr.f32.gmra.mrb[0].mxu0 %v2440
      %v2782 = vpop.f32.mrb[0].mxu0
      %v2783 = vadd.f32 %v2555, %v2782
      %v2784 = vpop.f32.mrb[0].mxu0
      %2785 = vmatprep.mubr.f32.mxu0 %v2446
      %2786 = vmatmul.mubr.f32.gmra.mrb[0].mxu0 %v2445
      %v2787 = vpop.f32.mrb[0].mxu0
      %v2788 = vadd.f32 %v2555, %v2787
      %v2789 = vpop.f32.mrb[0].mxu0
      %2790 = vmatprep.mubr.f32.mxu0 %v2451
      %2791 = vmatmul.mubr.f32.gmra.mrb[0].mxu0 %v2450
      %v2792 = vpop.f32.mrb[0].mxu0
      %v2793 = vadd.f32 %v2555, %v2792
      %v2794 = vpop.f32.mrb[0].mxu0
      %2795 = vmatprep.mubr.f32.mxu0 %v2456
      %2796 = vmatmul.mubr.f32.gmra.mrb[0].mxu0 %v2455
      %v2797 = vpop.f32.mrb[0].mxu0
      %v2798 = vadd.f32 %v2555, %v2797
      %v2799 = vpop.f32.mrb[0].mxu0
      %2800 = vmatprep.mubr.f32.mxu0 %v2461
      %2801 = vmatmul.mubr.f32.gmra.mrb[0].mxu0 %v2460
      %v2802 = vpop.f32.mrb[0].mxu0
      %v2803 = vadd.f32 %v2555, %v2802
      %v2804 = vpop.f32.mrb[0].mxu0
      %2805 = vmatprep.mubr.f32.mxu0 %v2466
      %2806 = vmatmul.mubr.f32.gmra.mrb[0].mxu0 %v2465
      %v2807 = vpop.f32.mrb[0].mxu0
      %v2808 = vadd.f32 %v2555, %v2807
      %v2809 = vpop.f32.mrb[0].mxu0
      %2810 = vmatprep.mubr.f32.mxu0 %v2471
      %2811 = vmatmul.mubr.f32.gmra.mrb[0].mxu0 %v2470
      %v2812 = vpop.f32.mrb[0].mxu0
      %v2813 = vadd.f32 %v2555, %v2812
      %v2814 = vpop.f32.mrb[0].mxu0
      %2815 = vdwg.mxu0
      %2816 = vmatprep.subr.mxu0 0.0
      %2817 = vmatpush1.msra.mxu0 %v2507
      %2818 = vmatprep.subr.mxu0 0.0
      %2819 = vmatpush1.msra.mxu0 %v2508
      %2820 = vmatprep.subr.mxu0 0.0
      %2821 = vmatpush1.msra.mxu0 %v2509
      %2822 = vmatprep.subr.mxu0 0.0
      %2823 = vmatpush1.msra.mxu0 %v2510
      %2824 = vmatprep.subr.mxu0 0.0
      %2825 = vmatpush1.msra.mxu0 %v2511
      %2826 = vmatprep.subr.mxu0 0.0
      %2827 = vmatpush1.msra.mxu0 %v2512
      %2828 = vmatprep.subr.mxu0 0.0
      %2829 = vmatpush1.msra.mxu0 %v2513
      %2830 = vmatprep.subr.mxu0 0.0
      %2831 = vmatpush1.msra.mxu0 %v2514
      %2832 = vmatprep.subr.mxu0 0.0
      %2833 = vmatpush1.msra.mxu0 %v2515
      %2834 = vmatprep.subr.mxu0 0.0
      %2835 = vmatpush1.msra.mxu0 %v2516
      %2836 = vmatprep.subr.mxu0 0.0
      %2837 = vmatpush1.msra.mxu0 %v2517
      %2838 = vmatprep.subr.mxu0 0.0
      %2839 = vmatpush1.msra.mxu0 %v2518
      %2840 = vmatprep.subr.mxu0 0.0
      %2841 = vmatpush1.msra.mxu0 %v2519
      %2842 = vmatprep.subr.mxu0 0.0
      %2843 = vmatpush1.msra.mxu0 %v2520
      %2844 = vmatprep.subr.mxu0 0.0
      %2845 = vmatpush1.msra.mxu0 %v2521
      %2846 = vmatprep.subr.mxu0 0.0
      %2847 = vmatpush1.msra.mxu0 %v2522
      %2848 = vmatprep.subr.mxu0 0.0
      %2849 = vmatpush1.msra.mxu0 %v2523
      %2850 = vmatprep.subr.mxu0 0.0
      %2851 = vmatpush1.msra.mxu0 %v2524
      %2852 = vmatprep.subr.mxu0 0.0
      %2853 = vmatpush1.msra.mxu0 %v2525
      %2854 = vmatprep.subr.mxu0 0.0
      %2855 = vmatpush1.msra.mxu0 %v2526
      %2856 = vmatprep.subr.mxu0 0.0
      %2857 = vmatpush1.msra.mxu0 %v2527
      %2858 = vmatprep.subr.mxu0 0.0
      %2859 = vmatpush1.msra.mxu0 %v2528
      %2860 = vmatprep.subr.mxu0 0.0
      %2861 = vmatpush1.msra.mxu0 %v2529
      %2862 = vmatprep.subr.mxu0 0.0
      %2863 = vmatpush1.msra.mxu0 %v2530
      %2864 = vmatprep.subr.mxu0 0.0
      %2865 = vmatpush1.msra.mxu0 %v2531
      %2866 = vmatprep.subr.mxu0 0.0
      %2867 = vmatpush1.msra.mxu0 %v2532
      %2868 = vmatprep.subr.mxu0 0.0
      %2869 = vmatpush1.msra.mxu0 %v2533
      %2870 = vmatprep.subr.mxu0 0.0
      %2871 = vmatpush1.msra.mxu0 %v2534
      %2872 = vmatprep.subr.mxu0 0.0
      %2873 = vmatpush1.msra.mxu0 %v2535
      %2874 = vmatprep.subr.mxu0 0.0
      %2875 = vmatpush1.msra.mxu0 %v2536
      %2876 = vmatprep.subr.mxu0 0.0
      %2877 = vmatpush1.msra.mxu0 %v2537
      %2878 = vmatprep.subr.mxu0 0.0
      %2879 = vmatpush1.msra.mxu0 %v2538
      %2880 = vmatprep.mubr.f32.mxu0 %v2283
      %2881 = vmatmul.mubr.f32.gmra.mrb[0].mxu0 %v2282
      %v2882 = vpop.f32.mrb[0].mxu0
      %v2883 = vadd.f32 %v2623, %v2882
      %v2884 = vpop.f32.mrb[0].mxu0
      %2885 = vmatprep.mubr.f32.mxu0 %v2288
      %2886 = vmatmul.mubr.f32.gmra.mrb[0].mxu0 %v2287
      %v2887 = vpop.f32.mrb[0].mxu0
      %v2888 = vadd.f32 %v2628, %v2887
      %v2889 = vpop.f32.mrb[0].mxu0
      %2890 = vmatprep.mubr.f32.mxu0 %v2293
      %2891 = vmatmul.mubr.f32.gmra.mrb[0].mxu0 %v2292
      %v2892 = vpop.f32.mrb[0].mxu0
      %v2893 = vadd.f32 %v2633, %v2892
      %v2894 = vpop.f32.mrb[0].mxu0
      %2895 = vmatprep.mubr.f32.mxu0 %v2298
      %2896 = vmatmul.mubr.f32.gmra.mrb[0].mxu0 %v2297
      %v2897 = vpop.f32.mrb[0].mxu0
      %v2898 = vadd.f32 %v2638, %v2897
      %v2899 = vpop.f32.mrb[0].mxu0
      %2900 = vmatprep.mubr.f32.mxu0 %v2303
      %2901 = vmatmul.mubr.f32.gmra.mrb[0].mxu0 %v2302
      %v2902 = vpop.f32.mrb[0].mxu0
      %v2903 = vadd.f32 %v2643, %v2902
      %v2904 = vpop.f32.mrb[0].mxu0
      %2905 = vmatprep.mubr.f32.mxu0 %v2308
      %2906 = vmatmul.mubr.f32.gmra.mrb[0].mxu0 %v2307
      %v2907 = vpop.f32.mrb[0].mxu0
      %v2908 = vadd.f32 %v2648, %v2907
      %v2909 = vpop.f32.mrb[0].mxu0
      %2910 = vmatprep.mubr.f32.mxu0 %v2313
      %2911 = vmatmul.mubr.f32.gmra.mrb[0].mxu0 %v2312
      %v2912 = vpop.f32.mrb[0].mxu0
      %v2913 = vadd.f32 %v2653, %v2912
      %v2914 = vpop.f32.mrb[0].mxu0
      %2915 = vmatprep.mubr.f32.mxu0 %v2318
      %2916 = vmatmul.mubr.f32.gmra.mrb[0].mxu0 %v2317
      %v2917 = vpop.f32.mrb[0].mxu0
      %v2918 = vadd.f32 %v2658, %v2917
      %v2919 = vpop.f32.mrb[0].mxu0
      %2920 = vmatprep.mubr.f32.mxu0 %v2323
      %2921 = vmatmul.mubr.f32.gmra.mrb[0].mxu0 %v2322
      %v2922 = vpop.f32.mrb[0].mxu0
      %v2923 = vadd.f32 %v2663, %v2922
      %v2924 = vpop.f32.mrb[0].mxu0
      %2925 = vmatprep.mubr.f32.mxu0 %v2328
      %2926 = vmatmul.mubr.f32.gmra.mrb[0].mxu0 %v2327
      %v2927 = vpop.f32.mrb[0].mxu0
      %v2928 = vadd.f32 %v2668, %v2927
      %v2929 = vpop.f32.mrb[0].mxu0
      %2930 = vmatprep.mubr.f32.mxu0 %v2333
      %2931 = vmatmul.mubr.f32.gmra.mrb[0].mxu0 %v2332
      %v2932 = vpop.f32.mrb[0].mxu0
      %v2933 = vadd.f32 %v2673, %v2932
      %v2934 = vpop.f32.mrb[0].mxu0
      %2935 = vmatprep.mubr.f32.mxu0 %v2338
      %2936 = vmatmul.mubr.f32.gmra.mrb[0].mxu0 %v2337
      %v2937 = vpop.f32.mrb[0].mxu0
      %v2938 = vadd.f32 %v2678, %v2937
      %v2939 = vpop.f32.mrb[0].mxu0
      %2940 = vmatprep.mubr.f32.mxu0 %v2343
      %2941 = vmatmul.mubr.f32.gmra.mrb[0].mxu0 %v2342
      %v2942 = vpop.f32.mrb[0].mxu0
      %v2943 = vadd.f32 %v2683, %v2942
      %v2944 = vpop.f32.mrb[0].mxu0
      %2945 = vmatprep.mubr.f32.mxu0 %v2348
      %2946 = vmatmul.mubr.f32.gmra.mrb[0].mxu0 %v2347
      %v2947 = vpop.f32.mrb[0].mxu0
      %v2948 = vadd.f32 %v2688, %v2947
      %v2949 = vpop.f32.mrb[0].mxu0
      %2950 = vmatprep.mubr.f32.mxu0 %v2353
      %2951 = vmatmul.mubr.f32.gmra.mrb[0].mxu0 %v2352
      %v2952 = vpop.f32.mrb[0].mxu0
      %v2953 = vadd.f32 %v2693, %v2952
      %v2954 = vpop.f32.mrb[0].mxu0
      %2955 = vmatprep.mubr.f32.mxu0 %v2358
      %2956 = vmatmul.mubr.f32.gmra.mrb[0].mxu0 %v2357
      %v2957 = vpop.f32.mrb[0].mxu0
      %v2958 = vadd.f32 %v2698, %v2957
      %v2959 = vpop.f32.mrb[0].mxu0
      %2960 = vmatprep.mubr.f32.mxu0 %v2363
      %2961 = vmatmul.mubr.f32.gmra.mrb[0].mxu0 %v2362
      %v2962 = vpop.f32.mrb[0].mxu0
      %v2963 = vadd.f32 %v2703, %v2962
      %v2964 = vpop.f32.mrb[0].mxu0
      %2965 = vmatprep.mubr.f32.mxu0 %v2368
      %2966 = vmatmul.mubr.f32.gmra.mrb[0].mxu0 %v2367
      %v2967 = vpop.f32.mrb[0].mxu0
      %v2968 = vadd.f32 %v2708, %v2967
      %v2969 = vpop.f32.mrb[0].mxu0
      %2970 = vmatprep.mubr.f32.mxu0 %v2373
      %2971 = vmatmul.mubr.f32.gmra.mrb[0].mxu0 %v2372
      %v2972 = vpop.f32.mrb[0].mxu0
      %v2973 = vadd.f32 %v2713, %v2972
      %v2974 = vpop.f32.mrb[0].mxu0
      %2975 = vmatprep.mubr.f32.mxu0 %v2378
      %2976 = vmatmul.mubr.f32.gmra.mrb[0].mxu0 %v2377
      %v2977 = vpop.f32.mrb[0].mxu0
      %v2978 = vadd.f32 %v2718, %v2977
      %v2979 = vpop.f32.mrb[0].mxu0
      %2980 = vmatprep.mubr.f32.mxu0 %v2383
      %2981 = vmatmul.mubr.f32.gmra.mrb[0].mxu0 %v2382
      %v2982 = vpop.f32.mrb[0].mxu0
      %v2983 = vadd.f32 %v2723, %v2982
      %v2984 = vpop.f32.mrb[0].mxu0
      %2985 = vmatprep.mubr.f32.mxu0 %v2388
      %2986 = vmatmul.mubr.f32.gmra.mrb[0].mxu0 %v2387
      %v2987 = vpop.f32.mrb[0].mxu0
      %v2988 = vadd.f32 %v2728, %v2987
      %v2989 = vpop.f32.mrb[0].mxu0
      %2990 = vmatprep.mubr.f32.mxu0 %v2393
      %2991 = vmatmul.mubr.f32.gmra.mrb[0].mxu0 %v2392
      %v2992 = vpop.f32.mrb[0].mxu0
      %v2993 = vadd.f32 %v2733, %v2992
      %v2994 = vpop.f32.mrb[0].mxu0
      %2995 = vmatprep.mubr.f32.mxu0 %v2398
      %2996 = vmatmul.mubr.f32.gmra.mrb[0].mxu0 %v2397
      %v2997 = vpop.f32.mrb[0].mxu0
      %v2998 = vadd.f32 %v2738, %v2997
      %v2999 = vpop.f32.mrb[0].mxu0
      %3000 = vmatprep.mubr.f32.mxu0 %v2403
      %3001 = vmatmul.mubr.f32.gmra.mrb[0].mxu0 %v2402
      %v3002 = vpop.f32.mrb[0].mxu0
      %v3003 = vadd.f32 %v2743, %v3002
      %v3004 = vpop.f32.mrb[0].mxu0
      %3005 = vmatprep.mubr.f32.mxu0 %v2408
      %3006 = vmatmul.mubr.f32.gmra.mrb[0].mxu0 %v2407
      %v3007 = vpop.f32.mrb[0].mxu0
      %v3008 = vadd.f32 %v2748, %v3007
      %v3009 = vpop.f32.mrb[0].mxu0
      %3010 = vmatprep.mubr.f32.mxu0 %v2413
      %3011 = vmatmul.mubr.f32.gmra.mrb[0].mxu0 %v2412
      %v3012 = vpop.f32.mrb[0].mxu0
      %v3013 = vadd.f32 %v2753, %v3012
      %v3014 = vpop.f32.mrb[0].mxu0
      %3015 = vmatprep.mubr.f32.mxu0 %v2418
      %3016 = vmatmul.mubr.f32.gmra.mrb[0].mxu0 %v2417
      %v3017 = vpop.f32.mrb[0].mxu0
      %v3018 = vadd.f32 %v2758, %v3017
      %v3019 = vpop.f32.mrb[0].mxu0
      %3020 = vmatprep.mubr.f32.mxu0 %v2423
      %3021 = vmatmul.mubr.f32.gmra.mrb[0].mxu0 %v2422
      %v3022 = vpop.f32.mrb[0].mxu0
      %v3023 = vadd.f32 %v2763, %v3022
      %v3024 = vpop.f32.mrb[0].mxu0
      %3025 = vmatprep.mubr.f32.mxu0 %v2428
      %3026 = vmatmul.mubr.f32.gmra.mrb[0].mxu0 %v2427
      %v3027 = vpop.f32.mrb[0].mxu0
      %v3028 = vadd.f32 %v2768, %v3027
      %v3029 = vpop.f32.mrb[0].mxu0
      %3030 = vmatprep.mubr.f32.mxu0 %v2433
      %3031 = vmatmul.mubr.f32.gmra.mrb[0].mxu0 %v2432
      %v3032 = vpop.f32.mrb[0].mxu0
      %v3033 = vadd.f32 %v2773, %v3032
      %v3034 = vpop.f32.mrb[0].mxu0
      %3035 = vmatprep.mubr.f32.mxu0 %v2438
      %3036 = vmatmul.mubr.f32.gmra.mrb[0].mxu0 %v2437
      %v3037 = vpop.f32.mrb[0].mxu0
      %v3038 = vadd.f32 %v2778, %v3037
      %v3039 = vpop.f32.mrb[0].mxu0
      %3040 = vmatprep.mubr.f32.mxu0 %v2443
      %3041 = vmatmul.mubr.f32.gmra.mrb[0].mxu0 %v2442
      %v3042 = vpop.f32.mrb[0].mxu0
      %v3043 = vadd.f32 %v2783, %v3042
      %v3044 = vpop.f32.mrb[0].mxu0
      %3045 = vmatprep.mubr.f32.mxu0 %v2448
      %3046 = vmatmul.mubr.f32.gmra.mrb[0].mxu0 %v2447
      %v3047 = vpop.f32.mrb[0].mxu0
      %v3048 = vadd.f32 %v2788, %v3047
      %v3049 = vpop.f32.mrb[0].mxu0
      %3050 = vmatprep.mubr.f32.mxu0 %v2453
      %3051 = vmatmul.mubr.f32.gmra.mrb[0].mxu0 %v2452
      %v3052 = vpop.f32.mrb[0].mxu0
      %v3053 = vadd.f32 %v2793, %v3052
      %v3054 = vpop.f32.mrb[0].mxu0
      %3055 = vmatprep.mubr.f32.mxu0 %v2458
      %3056 = vmatmul.mubr.f32.gmra.mrb[0].mxu0 %v2457
      %v3057 = vpop.f32.mrb[0].mxu0
      %v3058 = vadd.f32 %v2798, %v3057
      %v3059 = vpop.f32.mrb[0].mxu0
      %3060 = vmatprep.mubr.f32.mxu0 %v2463
      %3061 = vmatmul.mubr.f32.gmra.mrb[0].mxu0 %v2462
      %v3062 = vpop.f32.mrb[0].mxu0
      %v3063 = vadd.f32 %v2803, %v3062
      %v3064 = vpop.f32.mrb[0].mxu0
      %3065 = vmatprep.mubr.f32.mxu0 %v2468
      %3066 = vmatmul.mubr.f32.gmra.mrb[0].mxu0 %v2467
      %v3067 = vpop.f32.mrb[0].mxu0
      %v3068 = vadd.f32 %v2808, %v3067
      %v3069 = vpop.f32.mrb[0].mxu0
      %3070 = vmatprep.mubr.f32.mxu0 %v2473
      %3071 = vmatmul.mubr.f32.gmra.mrb[0].mxu0 %v2472
      %v3072 = vpop.f32.mrb[0].mxu0
      %v3073 = vadd.f32 %v2813, %v3072
      %v3074 = vpop.f32.mrb[0].mxu0
      %3075 = vdwg.mxu0
      %3076 = vmatprep.subr.mxu0 0.0
      %3077 = vmatpush1.msra.mxu0 %v2539
      %3078 = vmatprep.subr.mxu0 0.0
      %3079 = vmatpush1.msra.mxu0 %v2540
      %3080 = vmatprep.subr.mxu0 0.0
      %3081 = vmatpush1.msra.mxu0 %v2541
      %3082 = vmatprep.subr.mxu0 0.0
      %3083 = vmatpush1.msra.mxu0 %v2542
      %3084 = vmatprep.subr.mxu0 0.0
      %3085 = vmatpush1.msra.mxu0 %v2543
      %3086 = vmatprep.subr.mxu0 0.0
      %3087 = vmatpush1.msra.mxu0 %v2544
      %3088 = vmatprep.subr.mxu0 0.0
      %3089 = vmatpush1.msra.mxu0 %v2545
      %3090 = vmatprep.subr.mxu0 0.0
      %3091 = vmatpush1.msra.mxu0 %v2546
      %3092 = vmatprep.subr.mxu0 0.0
      %3093 = vmatpush1.msra.mxu0 %v2547
      %3094 = vmatprep.subr.mxu0 0.0
      %3095 = vmatpush1.msra.mxu0 %v2548
      %3096 = vmatprep.subr.mxu0 0.0
      %3097 = vmatpush1.msra.mxu0 %v2549
      %3098 = vmatprep.subr.mxu0 0.0
      %3099 = vmatpush1.msra.mxu0 %v2550
      %3100 = vmatprep.subr.mxu0 0.0
      %3101 = vmatpush1.msra.mxu0 %v2551
      %3102 = vmatprep.subr.mxu0 0.0
      %3103 = vmatpush1.msra.mxu0 %v2552
      %3104 = vmatprep.subr.mxu0 0.0
      %3105 = vmatpush1.msra.mxu0 %v2553
      %3106 = vmatprep.subr.mxu0 0.0
      %3107 = vmatpush1.msra.mxu0 %v2554
      %3108 = vmatprep.subr.mxu0 0.0
      %3109 = vmatpush1.msra.mxu0 0.0
      %3110 = vmatprep.subr.mxu0 0.0
      %3111 = vmatpush1.msra.mxu0 0.0
      %3112 = vmatprep.subr.mxu0 0.0
      %3113 = vmatpush1.msra.mxu0 0.0
      %3114 = vmatprep.subr.mxu0 0.0
      %3115 = vmatpush1.msra.mxu0 0.0
      %3116 = vmatprep.subr.mxu0 0.0
      %3117 = vmatpush1.msra.mxu0 0.0
      %3118 = vmatprep.subr.mxu0 0.0
      %3119 = vmatpush1.msra.mxu0 0.0
      %3120 = vmatprep.subr.mxu0 0.0
      %3121 = vmatpush1.msra.mxu0 0.0
      %3122 = vmatprep.subr.mxu0 0.0
      %3123 = vmatpush1.msra.mxu0 0.0
      %3124 = vmatprep.subr.mxu0 0.0
      %3125 = vmatpush1.msra.mxu0 0.0
      %3126 = vmatprep.subr.mxu0 0.0
      %3127 = vmatpush1.msra.mxu0 0.0
      %3128 = vmatprep.subr.mxu0 0.0
      %3129 = vmatpush1.msra.mxu0 0.0
      %3130 = vmatprep.subr.mxu0 0.0
      %3131 = vmatpush1.msra.mxu0 0.0
      %3132 = vmatprep.subr.mxu0 0.0
      %3133 = vmatpush1.msra.mxu0 0.0
      %3134 = vmatprep.subr.mxu0 0.0
      %3135 = vmatpush1.msra.mxu0 0.0
      %3136 = vmatprep.subr.mxu0 0.0
      %3137 = vmatpush1.msra.mxu0 0.0
      %3138 = vmatprep.subr.mxu0 0.0
      %3139 = vmatpush1.msra.mxu0 0.0
      %3140 = vmatprep.mubr.f32.mxu0 0.0
      %3141 = vmatmul.mubr.f32.gmra.mrb[0].mxu0 %v2284
      %v3142 = vpop.f32.mrb[0].mxu0
      %v3143 = vadd.f32 %v2883, %v3142
      %v3144 = vpop.f32.mrb[0].mxu0
      %3145 = vmatprep.mubr.f32.mxu0 0.0
      %3146 = vmatmul.mubr.f32.gmra.mrb[0].mxu0 %v2289
      %v3147 = vpop.f32.mrb[0].mxu0
      %v3148 = vadd.f32 %v2888, %v3147
      %v3149 = vpop.f32.mrb[0].mxu0
      %3150 = vmatprep.mubr.f32.mxu0 0.0
      %3151 = vmatmul.mubr.f32.gmra.mrb[0].mxu0 %v2294
      %v3152 = vpop.f32.mrb[0].mxu0
      %v3153 = vadd.f32 %v2893, %v3152
      %v3154 = vpop.f32.mrb[0].mxu0
      %3155 = vmatprep.mubr.f32.mxu0 0.0
      %3156 = vmatmul.mubr.f32.gmra.mrb[0].mxu0 %v2299
      %v3157 = vpop.f32.mrb[0].mxu0
      %v3158 = vadd.f32 %v2898, %v3157
      %v3159 = vpop.f32.mrb[0].mxu0
      %3160 = vmatprep.mubr.f32.mxu0 0.0
      %3161 = vmatmul.mubr.f32.gmra.mrb[0].mxu0 %v2304
      %v3162 = vpop.f32.mrb[0].mxu0
      %v3163 = vadd.f32 %v2903, %v3162
      %v3164 = vpop.f32.mrb[0].mxu0
      %3165 = vmatprep.mubr.f32.mxu0 0.0
      %3166 = vmatmul.mubr.f32.gmra.mrb[0].mxu0 %v2309
      %v3167 = vpop.f32.mrb[0].mxu0
      %v3168 = vadd.f32 %v2908, %v3167
      %v3169 = vpop.f32.mrb[0].mxu0
      %3170 = vmatprep.mubr.f32.mxu0 0.0
      %3171 = vmatmul.mubr.f32.gmra.mrb[0].mxu0 %v2314
      %v3172 = vpop.f32.mrb[0].mxu0
      %v3173 = vadd.f32 %v2913, %v3172
      %v3174 = vpop.f32.mrb[0].mxu0
      %3175 = vmatprep.mubr.f32.mxu0 0.0
      %3176 = vmatmul.mubr.f32.gmra.mrb[0].mxu0 %v2319
      %v3177 = vpop.f32.mrb[0].mxu0
      %v3178 = vadd.f32 %v2918, %v3177
      %v3179 = vpop.f32.mrb[0].mxu0
      %3180 = vmatprep.mubr.f32.mxu0 0.0
      %3181 = vmatmul.mubr.f32.gmra.mrb[0].mxu0 %v2324
      %v3182 = vpop.f32.mrb[0].mxu0
      %v3183 = vadd.f32 %v2923, %v3182
      %v3184 = vpop.f32.mrb[0].mxu0
      %3185 = vmatprep.mubr.f32.mxu0 0.0
      %3186 = vmatmul.mubr.f32.gmra.mrb[0].mxu0 %v2329
      %v3187 = vpop.f32.mrb[0].mxu0
      %v3188 = vadd.f32 %v2928, %v3187
      %v3189 = vpop.f32.mrb[0].mxu0
      %3190 = vmatprep.mubr.f32.mxu0 0.0
      %3191 = vmatmul.mubr.f32.gmra.mrb[0].mxu0 %v2334
      %v3192 = vpop.f32.mrb[0].mxu0
      %v3193 = vadd.f32 %v2933, %v3192
      %v3194 = vpop.f32.mrb[0].mxu0
      %3195 = vmatprep.mubr.f32.mxu0 0.0
      %3196 = vmatmul.mubr.f32.gmra.mrb[0].mxu0 %v2339
      %v3197 = vpop.f32.mrb[0].mxu0
      %v3198 = vadd.f32 %v2938, %v3197
      %v3199 = vpop.f32.mrb[0].mxu0
      %3200 = vmatprep.mubr.f32.mxu0 0.0
      %3201 = vmatmul.mubr.f32.gmra.mrb[0].mxu0 %v2344
      %v3202 = vpop.f32.mrb[0].mxu0
      %v3203 = vadd.f32 %v2943, %v3202
      %v3204 = vpop.f32.mrb[0].mxu0
      %3205 = vmatprep.mubr.f32.mxu0 0.0
      %3206 = vmatmul.mubr.f32.gmra.mrb[0].mxu0 %v2349
      %v3207 = vpop.f32.mrb[0].mxu0
      %v3208 = vadd.f32 %v2948, %v3207
      %v3209 = vpop.f32.mrb[0].mxu0
      %3210 = vmatprep.mubr.f32.mxu0 0.0
      %3211 = vmatmul.mubr.f32.gmra.mrb[0].mxu0 %v2354
      %v3212 = vpop.f32.mrb[0].mxu0
      %v3213 = vadd.f32 %v2953, %v3212
      %v3214 = vpop.f32.mrb[0].mxu0
      %3215 = vmatprep.mubr.f32.mxu0 0.0
      %3216 = vmatmul.mubr.f32.gmra.mrb[0].mxu0 %v2359
      %v3217 = vpop.f32.mrb[0].mxu0
      %v3218 = vadd.f32 %v2958, %v3217
      %v3219 = vpop.f32.mrb[0].mxu0
      %3220 = vmatprep.mubr.f32.mxu0 0.0
      %3221 = vmatmul.mubr.f32.gmra.mrb[0].mxu0 %v2364
      %v3222 = vpop.f32.mrb[0].mxu0
      %v3223 = vadd.f32 %v2963, %v3222
      %v3224 = vpop.f32.mrb[0].mxu0
      %3225 = vmatprep.mubr.f32.mxu0 0.0
      %3226 = vmatmul.mubr.f32.gmra.mrb[0].mxu0 %v2369
      %v3227 = vpop.f32.mrb[0].mxu0
      %v3228 = vadd.f32 %v2968, %v3227
      %v3229 = vpop.f32.mrb[0].mxu0
      %3230 = vmatprep.mubr.f32.mxu0 0.0
      %3231 = vmatmul.mubr.f32.gmra.mrb[0].mxu0 %v2374
      %v3232 = vpop.f32.mrb[0].mxu0
      %v3233 = vadd.f32 %v2973, %v3232
      %v3234 = vpop.f32.mrb[0].mxu0
      %3235 = vmatprep.mubr.f32.mxu0 0.0
      %3236 = vmatmul.mubr.f32.gmra.mrb[0].mxu0 %v2379
      %v3237 = vpop.f32.mrb[0].mxu0
      %v3238 = vadd.f32 %v2978, %v3237
      %v3239 = vpop.f32.mrb[0].mxu0
      %3240 = vmatprep.mubr.f32.mxu0 0.0
      %3241 = vmatmul.mubr.f32.gmra.mrb[0].mxu0 %v2384
      %v3242 = vpop.f32.mrb[0].mxu0
      %v3243 = vadd.f32 %v2983, %v3242
      %v3244 = vpop.f32.mrb[0].mxu0
      %3245 = vmatprep.mubr.f32.mxu0 0.0
      %3246 = vmatmul.mubr.f32.gmra.mrb[0].mxu0 %v2389
      %v3247 = vpop.f32.mrb[0].mxu0
      %v3248 = vadd.f32 %v2988, %v3247
      %v3249 = vpop.f32.mrb[0].mxu0
      %3250 = vmatprep.mubr.f32.mxu0 0.0
      %3251 = vmatmul.mubr.f32.gmra.mrb[0].mxu0 %v2394
      %v3252 = vpop.f32.mrb[0].mxu0
      %v3253 = vadd.f32 %v2993, %v3252
      %v3254 = vpop.f32.mrb[0].mxu0
      %3255 = vmatprep.mubr.f32.mxu0 0.0
      %3256 = vmatmul.mubr.f32.gmra.mrb[0].mxu0 %v2399
      %v3257 = vpop.f32.mrb[0].mxu0
      %v3258 = vadd.f32 %v2998, %v3257
      %v3259 = vpop.f32.mrb[0].mxu0
      %3260 = vmatprep.mubr.f32.mxu0 0.0
      %3261 = vmatmul.mubr.f32.gmra.mrb[0].mxu0 %v2404
      %v3262 = vpop.f32.mrb[0].mxu0
      %v3263 = vadd.f32 %v3003, %v3262
      %v3264 = vpop.f32.mrb[0].mxu0
      %3265 = vmatprep.mubr.f32.mxu0 0.0
      %3266 = vmatmul.mubr.f32.gmra.mrb[0].mxu0 %v2409
      %v3267 = vpop.f32.mrb[0].mxu0
      %v3268 = vadd.f32 %v3008, %v3267
      %v3269 = vpop.f32.mrb[0].mxu0
      %3270 = vmatprep.mubr.f32.mxu0 0.0
      %3271 = vmatmul.mubr.f32.gmra.mrb[0].mxu0 %v2414
      %v3272 = vpop.f32.mrb[0].mxu0
      %v3273 = vadd.f32 %v3013, %v3272
      %v3274 = vpop.f32.mrb[0].mxu0
      %3275 = vmatprep.mubr.f32.mxu0 0.0
      %3276 = vmatmul.mubr.f32.gmra.mrb[0].mxu0 %v2419
      %v3277 = vpop.f32.mrb[0].mxu0
      %v3278 = vadd.f32 %v3018, %v3277
      %v3279 = vpop.f32.mrb[0].mxu0
      %3280 = vmatprep.mubr.f32.mxu0 0.0
      %3281 = vmatmul.mubr.f32.gmra.mrb[0].mxu0 %v2424
      %v3282 = vpop.f32.mrb[0].mxu0
      %v3283 = vadd.f32 %v3023, %v3282
      %v3284 = vpop.f32.mrb[0].mxu0
      %3285 = vmatprep.mubr.f32.mxu0 0.0
      %3286 = vmatmul.mubr.f32.gmra.mrb[0].mxu0 %v2429
      %v3287 = vpop.f32.mrb[0].mxu0
      %v3288 = vadd.f32 %v3028, %v3287
      %v3289 = vpop.f32.mrb[0].mxu0
      %3290 = vmatprep.mubr.f32.mxu0 0.0
      %3291 = vmatmul.mubr.f32.gmra.mrb[0].mxu0 %v2434
      %v3292 = vpop.f32.mrb[0].mxu0
      %v3293 = vadd.f32 %v3033, %v3292
      %v3294 = vpop.f32.mrb[0].mxu0
      %3295 = vmatprep.mubr.f32.mxu0 0.0
      %3296 = vmatmul.mubr.f32.gmra.mrb[0].mxu0 %v2439
      %v3297 = vpop.f32.mrb[0].mxu0
      %v3298 = vadd.f32 %v3038, %v3297
      %v3299 = vpop.f32.mrb[0].mxu0
      %3300 = vmatprep.mubr.f32.mxu0 0.0
      %3301 = vmatmul.mubr.f32.gmra.mrb[0].mxu0 %v2444
      %v3302 = vpop.f32.mrb[0].mxu0
      %v3303 = vadd.f32 %v3043, %v3302
      %v3304 = vpop.f32.mrb[0].mxu0
      %3305 = vmatprep.mubr.f32.mxu0 0.0
      %3306 = vmatmul.mubr.f32.gmra.mrb[0].mxu0 %v2449
      %v3307 = vpop.f32.mrb[0].mxu0
      %v3308 = vadd.f32 %v3048, %v3307
      %v3309 = vpop.f32.mrb[0].mxu0
      %3310 = vmatprep.mubr.f32.mxu0 0.0
      %3311 = vmatmul.mubr.f32.gmra.mrb[0].mxu0 %v2454
      %v3312 = vpop.f32.mrb[0].mxu0
      %v3313 = vadd.f32 %v3053, %v3312
      %v3314 = vpop.f32.mrb[0].mxu0
      %3315 = vmatprep.mubr.f32.mxu0 0.0
      %3316 = vmatmul.mubr.f32.gmra.mrb[0].mxu0 %v2459
      %v3317 = vpop.f32.mrb[0].mxu0
      %v3318 = vadd.f32 %v3058, %v3317
      %v3319 = vpop.f32.mrb[0].mxu0
      %3320 = vmatprep.mubr.f32.mxu0 0.0
      %3321 = vmatmul.mubr.f32.gmra.mrb[0].mxu0 %v2464
      %v3322 = vpop.f32.mrb[0].mxu0
      %v3323 = vadd.f32 %v3063, %v3322
      %v3324 = vpop.f32.mrb[0].mxu0
      %3325 = vmatprep.mubr.f32.mxu0 0.0
      %3326 = vmatmul.mubr.f32.gmra.mrb[0].mxu0 %v2469
      %v3327 = vpop.f32.mrb[0].mxu0
      %v3328 = vadd.f32 %v3068, %v3327
      %v3329 = vpop.f32.mrb[0].mxu0
      %3330 = vmatprep.mubr.f32.mxu0 0.0
      %3331 = vmatmul.mubr.f32.gmra.mrb[0].mxu0 %v2474
      %v3332 = vpop.f32.mrb[0].mxu0
      %v3333 = vadd.f32 %v3073, %v3332
      %v3334 = vpop.f32.mrb[0].mxu0
      %3335 = vdwg.mxu0
      %v3336 = vmax.f32 %v3143, 0.0
      %v3337 = vmax.f32 %v3148, 0.0
      %v3338 = vmax.f32 %v3153, 0.0
      %v3339 = vmax.f32 %v3158, 0.0
      %v3340 = vmax.f32 %v3163, 0.0
      %v3341 = vmax.f32 %v3168, 0.0
      %v3342 = vmax.f32 %v3173, 0.0
      %v3343 = vmax.f32 %v3178, 0.0
      %v3344 = vmax.f32 %v3183, 0.0
      %v3345 = vmax.f32 %v3188, 0.0
      %v3346 = vmax.f32 %v3193, 0.0
      %v3347 = vmax.f32 %v3198, 0.0
      %v3348 = vmax.f32 %v3203, 0.0
      %v3349 = vmax.f32 %v3208, 0.0
      %v3350 = vmax.f32 %v3213, 0.0
      %v3351 = vmax.f32 %v3218, 0.0
      %v3352 = vmax.f32 %v3223, 0.0
      %v3353 = vmax.f32 %v3228, 0.0
      %v3354 = vmax.f32 %v3233, 0.0
      %v3355 = vmax.f32 %v3238, 0.0
      %v3356 = vmax.f32 %v3243, 0.0
      %v3357 = vmax.f32 %v3248, 0.0
      %v3358 = vmax.f32 %v3253, 0.0
      %v3359 = vmax.f32 %v3258, 0.0
      %v3360 = vmax.f32 %v3263, 0.0
      %v3361 = vmax.f32 %v3268, 0.0
      %v3362 = vmax.f32 %v3273, 0.0
      %v3363 = vmax.f32 %v3278, 0.0
      %v3364 = vmax.f32 %v3283, 0.0
      %v3365 = vmax.f32 %v3288, 0.0
      %v3366 = vmax.f32 %v3293, 0.0
      %v3367 = vmax.f32 %v3298, 0.0
      %v3368 = vmax.f32 %v3303, 0.0
      %v3369 = vmax.f32 %v3308, 0.0
      %v3370 = vmax.f32 %v3313, 0.0
      %v3371 = vmax.f32 %v3318, 0.0
      %v3372 = vmax.f32 %v3323, 0.0
      %v3373 = vmax.f32 %v3328, 0.0
      %v3374 = vmax.f32 %v3333, 0.0
      %v3375 = vld [vmem:[%s2] sm:$0xff]
      %v3376 = vld [vmem:[%s2 + $0x8] sm:$0xff]
      %v3377 = vld [vmem:[%s2 + $0x10] sm:$0xff]
      %v3378 = vld [vmem:[%s2 + $0x18] sm:$0xff]
      %v3379 = vld [vmem:[%s2 + $0x20] sm:$0xff]
      %v3380 = vld [vmem:[%s2 + $0x28] sm:$0xff]
      %v3381 = vld [vmem:[%s2 + $0x30] sm:$0xff]
      %v3382 = vld [vmem:[%s2 + $0x38] sm:$0xff]
      %v3383 = vld [vmem:[%s2 + $0x40] sm:$0xff]
      %v3384 = vld [vmem:[%s2 + $0x48] sm:$0xff]
      %v3385 = vld [vmem:[%s2 + $0x50] sm:$0xff]
      %v3386 = vld [vmem:[%s2 + $0x58] sm:$0xff]
      %v3387 = vld [vmem:[%s2 + $0x60] sm:$0xff]
      %v3388 = vld [vmem:[%s2 + $0x68] sm:$0xff]
      %v3389 = vld [vmem:[%s2 + $0x70] sm:$0xff]
      %v3390 = vld [vmem:[%s2 + $0x78] sm:$0xff]
      %v3391 = vld [vmem:[%s4 + $0x1] ss:$0 sm:$0xff]
      %3392 = vmatprep.subr.mxu0 0.0
      %3393 = vmatpush1.msra.mxu0 %v3375
      %3394 = vmatprep.subr.mxu0 0.0
      %3395 = vmatpush1.msra.mxu0 %v3376
      %3396 = vmatprep.subr.mxu0 0.0
      %3397 = vmatpush1.msra.mxu0 %v3377
      %3398 = vmatprep.subr.mxu0 0.0
      %3399 = vmatpush1.msra.mxu0 %v3378
      %3400 = vmatprep.subr.mxu0 0.0
      %3401 = vmatpush1.msra.mxu0 %v3379
      %3402 = vmatprep.subr.mxu0 0.0
      %3403 = vmatpush1.msra.mxu0 %v3380
      %3404 = vmatprep.subr.mxu0 0.0
      %3405 = vmatpush1.msra.mxu0 %v3381
      %3406 = vmatprep.subr.mxu0 0.0
      %3407 = vmatpush1.msra.mxu0 %v3382
      %3408 = vmatprep.subr.mxu0 0.0
      %3409 = vmatpush1.msra.mxu0 %v3383
      %3410 = vmatprep.subr.mxu0 0.0
      %3411 = vmatpush1.msra.mxu0 %v3384
      %3412 = vmatprep.subr.mxu0 0.0
      %3413 = vmatpush1.msra.mxu0 %v3385
      %3414 = vmatprep.subr.mxu0 0.0
      %3415 = vmatpush1.msra.mxu0 %v3386
      %3416 = vmatprep.subr.mxu0 0.0
      %3417 = vmatpush1.msra.mxu0 %v3387
      %3418 = vmatprep.subr.mxu0 0.0
      %3419 = vmatpush1.msra.mxu0 %v3388
      %3420 = vmatprep.subr.mxu0 0.0
      %3421 = vmatpush1.msra.mxu0 %v3389
      %3422 = vmatprep.subr.mxu0 0.0
      %3423 = vmatpush1.msra.mxu0 %v3390
      %3424 = vmatprep.subr.mxu0 0.0
      %3425 = vmatpush1.msra.mxu0 0.0
      %3426 = vmatprep.subr.mxu0 0.0
      %3427 = vmatpush1.msra.mxu0 0.0
      %3428 = vmatprep.subr.mxu0 0.0
      %3429 = vmatpush1.msra.mxu0 0.0
      %3430 = vmatprep.subr.mxu0 0.0
      %3431 = vmatpush1.msra.mxu0 0.0
      %3432 = vmatprep.subr.mxu0 0.0
      %3433 = vmatpush1.msra.mxu0 0.0
      %3434 = vmatprep.subr.mxu0 0.0
      %3435 = vmatpush1.msra.mxu0 0.0
      %3436 = vmatprep.subr.mxu0 0.0
      %3437 = vmatpush1.msra.mxu0 0.0
      %3438 = vmatprep.subr.mxu0 0.0
      %3439 = vmatpush1.msra.mxu0 0.0
      %3440 = vmatprep.subr.mxu0 0.0
      %3441 = vmatpush1.msra.mxu0 0.0
      %3442 = vmatprep.subr.mxu0 0.0
      %3443 = vmatpush1.msra.mxu0 0.0
      %3444 = vmatprep.subr.mxu0 0.0
      %3445 = vmatpush1.msra.mxu0 0.0
      %3446 = vmatprep.subr.mxu0 0.0
      %3447 = vmatpush1.msra.mxu0 0.0
      %3448 = vmatprep.subr.mxu0 0.0
      %3449 = vmatpush1.msra.mxu0 0.0
      %3450 = vmatprep.subr.mxu0 0.0
      %3451 = vmatpush1.msra.mxu0 0.0
      %3452 = vmatprep.subr.mxu0 0.0
      %3453 = vmatpush1.msra.mxu0 0.0
      %3454 = vmatprep.subr.mxu0 0.0
      %3455 = vmatpush1.msra.mxu0 0.0
      %3456 = vmatprep.mubr.f32.mxu0 0.0
      %3457 = vmatmul.mubr.f32.gmra.mrb[0].mxu0 %v3336
      %v3458 = vpop.f32.mrb[0].mxu0
      %v3459 = vadd.f32 %v3391, %v3458
      %v3460 = vpop.f32.mrb[0].mxu0
      %3461 = vmatprep.mubr.f32.mxu0 0.0
      %3462 = vmatmul.mubr.f32.gmra.mrb[0].mxu0 %v3337
      %v3463 = vpop.f32.mrb[0].mxu0
      %v3464 = vadd.f32 %v3391, %v3463
      %v3465 = vpop.f32.mrb[0].mxu0
      %3466 = vmatprep.mubr.f32.mxu0 0.0
      %3467 = vmatmul.mubr.f32.gmra.mrb[0].mxu0 %v3338
      %v3468 = vpop.f32.mrb[0].mxu0
      %v3469 = vadd.f32 %v3391, %v3468
      %v3470 = vpop.f32.mrb[0].mxu0
      %3471 = vmatprep.mubr.f32.mxu0 0.0
      %3472 = vmatmul.mubr.f32.gmra.mrb[0].mxu0 %v3339
      %v3473 = vpop.f32.mrb[0].mxu0
      %v3474 = vadd.f32 %v3391, %v3473
      %v3475 = vpop.f32.mrb[0].mxu0
      %3476 = vmatprep.mubr.f32.mxu0 0.0
      %3477 = vmatmul.mubr.f32.gmra.mrb[0].mxu0 %v3340
      %v3478 = vpop.f32.mrb[0].mxu0
      %v3479 = vadd.f32 %v3391, %v3478
      %v3480 = vpop.f32.mrb[0].mxu0
      %3481 = vmatprep.mubr.f32.mxu0 0.0
      %3482 = vmatmul.mubr.f32.gmra.mrb[0].mxu0 %v3341
      %v3483 = vpop.f32.mrb[0].mxu0
      %v3484 = vadd.f32 %v3391, %v3483
      %v3485 = vpop.f32.mrb[0].mxu0
      %3486 = vmatprep.mubr.f32.mxu0 0.0
      %3487 = vmatmul.mubr.f32.gmra.mrb[0].mxu0 %v3342
      %v3488 = vpop.f32.mrb[0].mxu0
      %v3489 = vadd.f32 %v3391, %v3488
      %v3490 = vpop.f32.mrb[0].mxu0
      %3491 = vmatprep.mubr.f32.mxu0 0.0
      %3492 = vmatmul.mubr.f32.gmra.mrb[0].mxu0 %v3343
      %v3493 = vpop.f32.mrb[0].mxu0
      %v3494 = vadd.f32 %v3391, %v3493
      %v3495 = vpop.f32.mrb[0].mxu0
      %3496 = vmatprep.mubr.f32.mxu0 0.0
      %3497 = vmatmul.mubr.f32.gmra.mrb[0].mxu0 %v3344
      %v3498 = vpop.f32.mrb[0].mxu0
      %v3499 = vadd.f32 %v3391, %v3498
      %v3500 = vpop.f32.mrb[0].mxu0
      %3501 = vmatprep.mubr.f32.mxu0 0.0
      %3502 = vmatmul.mubr.f32.gmra.mrb[0].mxu0 %v3345
      %v3503 = vpop.f32.mrb[0].mxu0
      %v3504 = vadd.f32 %v3391, %v3503
      %v3505 = vpop.f32.mrb[0].mxu0
      %3506 = vmatprep.mubr.f32.mxu0 0.0
      %3507 = vmatmul.mubr.f32.gmra.mrb[0].mxu0 %v3346
      %v3508 = vpop.f32.mrb[0].mxu0
      %v3509 = vadd.f32 %v3391, %v3508
      %v3510 = vpop.f32.mrb[0].mxu0
      %3511 = vmatprep.mubr.f32.mxu0 0.0
      %3512 = vmatmul.mubr.f32.gmra.mrb[0].mxu0 %v3347
      %v3513 = vpop.f32.mrb[0].mxu0
      %v3514 = vadd.f32 %v3391, %v3513
      %v3515 = vpop.f32.mrb[0].mxu0
      %3516 = vmatprep.mubr.f32.mxu0 0.0
      %3517 = vmatmul.mubr.f32.gmra.mrb[0].mxu0 %v3348
      %v3518 = vpop.f32.mrb[0].mxu0
      %v3519 = vadd.f32 %v3391, %v3518
      %v3520 = vpop.f32.mrb[0].mxu0
      %3521 = vmatprep.mubr.f32.mxu0 0.0
      %3522 = vmatmul.mubr.f32.gmra.mrb[0].mxu0 %v3349
      %v3523 = vpop.f32.mrb[0].mxu0
      %v3524 = vadd.f32 %v3391, %v3523
      %v3525 = vpop.f32.mrb[0].mxu0
      %3526 = vmatprep.mubr.f32.mxu0 0.0
      %3527 = vmatmul.mubr.f32.gmra.mrb[0].mxu0 %v3350
      %v3528 = vpop.f32.mrb[0].mxu0
      %v3529 = vadd.f32 %v3391, %v3528
      %v3530 = vpop.f32.mrb[0].mxu0
      %3531 = vmatprep.mubr.f32.mxu0 0.0
      %3532 = vmatmul.mubr.f32.gmra.mrb[0].mxu0 %v3351
      %v3533 = vpop.f32.mrb[0].mxu0
      %v3534 = vadd.f32 %v3391, %v3533
      %v3535 = vpop.f32.mrb[0].mxu0
      %3536 = vmatprep.mubr.f32.mxu0 0.0
      %3537 = vmatmul.mubr.f32.gmra.mrb[0].mxu0 %v3352
      %v3538 = vpop.f32.mrb[0].mxu0
      %v3539 = vadd.f32 %v3391, %v3538
      %v3540 = vpop.f32.mrb[0].mxu0
      %3541 = vmatprep.mubr.f32.mxu0 0.0
      %3542 = vmatmul.mubr.f32.gmra.mrb[0].mxu0 %v3353
      %v3543 = vpop.f32.mrb[0].mxu0
      %v3544 = vadd.f32 %v3391, %v3543
      %v3545 = vpop.f32.mrb[0].mxu0
      %3546 = vmatprep.mubr.f32.mxu0 0.0
      %3547 = vmatmul.mubr.f32.gmra.mrb[0].mxu0 %v3354
      %v3548 = vpop.f32.mrb[0].mxu0
      %v3549 = vadd.f32 %v3391, %v3548
      %v3550 = vpop.f32.mrb[0].mxu0
      %3551 = vmatprep.mubr.f32.mxu0 0.0
      %3552 = vmatmul.mubr.f32.gmra.mrb[0].mxu0 %v3355
      %v3553 = vpop.f32.mrb[0].mxu0
      %v3554 = vadd.f32 %v3391, %v3553
      %v3555 = vpop.f32.mrb[0].mxu0
      %3556 = vmatprep.mubr.f32.mxu0 0.0
      %3557 = vmatmul.mubr.f32.gmra.mrb[0].mxu0 %v3356
      %v3558 = vpop.f32.mrb[0].mxu0
      %v3559 = vadd.f32 %v3391, %v3558
      %v3560 = vpop.f32.mrb[0].mxu0
      %3561 = vmatprep.mubr.f32.mxu0 0.0
      %3562 = vmatmul.mubr.f32.gmra.mrb[0].mxu0 %v3357
      %v3563 = vpop.f32.mrb[0].mxu0
      %v3564 = vadd.f32 %v3391, %v3563
      %v3565 = vpop.f32.mrb[0].mxu0
      %3566 = vmatprep.mubr.f32.mxu0 0.0
      %3567 = vmatmul.mubr.f32.gmra.mrb[0].mxu0 %v3358
      %v3568 = vpop.f32.mrb[0].mxu0
      %v3569 = vadd.f32 %v3391, %v3568
      %v3570 = vpop.f32.mrb[0].mxu0
      %3571 = vmatprep.mubr.f32.mxu0 0.0
      %3572 = vmatmul.mubr.f32.gmra.mrb[0].mxu0 %v3359
      %v3573 = vpop.f32.mrb[0].mxu0
      %v3574 = vadd.f32 %v3391, %v3573
      %v3575 = vpop.f32.mrb[0].mxu0
      %3576 = vmatprep.mubr.f32.mxu0 0.0
      %3577 = vmatmul.mubr.f32.gmra.mrb[0].mxu0 %v3360
      %v3578 = vpop.f32.mrb[0].mxu0
      %v3579 = vadd.f32 %v3391, %v3578
      %v3580 = vpop.f32.mrb[0].mxu0
      %3581 = vmatprep.mubr.f32.mxu0 0.0
      %3582 = vmatmul.mubr.f32.gmra.mrb[0].mxu0 %v3361
      %v3583 = vpop.f32.mrb[0].mxu0
      %v3584 = vadd.f32 %v3391, %v3583
      %v3585 = vpop.f32.mrb[0].mxu0
      %3586 = vmatprep.mubr.f32.mxu0 0.0
      %3587 = vmatmul.mubr.f32.gmra.mrb[0].mxu0 %v3362
      %v3588 = vpop.f32.mrb[0].mxu0
      %v3589 = vadd.f32 %v3391, %v3588
      %v3590 = vpop.f32.mrb[0].mxu0
      %3591 = vmatprep.mubr.f32.mxu0 0.0
      %3592 = vmatmul.mubr.f32.gmra.mrb[0].mxu0 %v3363
      %v3593 = vpop.f32.mrb[0].mxu0
      %v3594 = vadd.f32 %v3391, %v3593
      %v3595 = vpop.f32.mrb[0].mxu0
      %3596 = vmatprep.mubr.f32.mxu0 0.0
      %3597 = vmatmul.mubr.f32.gmra.mrb[0].mxu0 %v3364
      %v3598 = vpop.f32.mrb[0].mxu0
      %v3599 = vadd.f32 %v3391, %v3598
      %v3600 = vpop.f32.mrb[0].mxu0
      %3601 = vmatprep.mubr.f32.mxu0 0.0
      %3602 = vmatmul.mubr.f32.gmra.mrb[0].mxu0 %v3365
      %v3603 = vpop.f32.mrb[0].mxu0
      %v3604 = vadd.f32 %v3391, %v3603
      %v3605 = vpop.f32.mrb[0].mxu0
      %3606 = vmatprep.mubr.f32.mxu0 0.0
      %3607 = vmatmul.mubr.f32.gmra.mrb[0].mxu0 %v3366
      %v3608 = vpop.f32.mrb[0].mxu0
      %v3609 = vadd.f32 %v3391, %v3608
      %v3610 = vpop.f32.mrb[0].mxu0
      %3611 = vmatprep.mubr.f32.mxu0 0.0
      %3612 = vmatmul.mubr.f32.gmra.mrb[0].mxu0 %v3367
      %v3613 = vpop.f32.mrb[0].mxu0
      %v3614 = vadd.f32 %v3391, %v3613
      %v3615 = vpop.f32.mrb[0].mxu0
      %3616 = vmatprep.mubr.f32.mxu0 0.0
      %3617 = vmatmul.mubr.f32.gmra.mrb[0].mxu0 %v3368
      %v3618 = vpop.f32.mrb[0].mxu0
      %v3619 = vadd.f32 %v3391, %v3618
      %v3620 = vpop.f32.mrb[0].mxu0
      %3621 = vmatprep.mubr.f32.mxu0 0.0
      %3622 = vmatmul.mubr.f32.gmra.mrb[0].mxu0 %v3369
      %v3623 = vpop.f32.mrb[0].mxu0
      %v3624 = vadd.f32 %v3391, %v3623
      %v3625 = vpop.f32.mrb[0].mxu0
      %3626 = vmatprep.mubr.f32.mxu0 0.0
      %3627 = vmatmul.mubr.f32.gmra.mrb[0].mxu0 %v3370
      %v3628 = vpop.f32.mrb[0].mxu0
      %v3629 = vadd.f32 %v3391, %v3628
      %v3630 = vpop.f32.mrb[0].mxu0
      %3631 = vmatprep.mubr.f32.mxu0 0.0
      %3632 = vmatmul.mubr.f32.gmra.mrb[0].mxu0 %v3371
      %v3633 = vpop.f32.mrb[0].mxu0
      %v3634 = vadd.f32 %v3391, %v3633
      %v3635 = vpop.f32.mrb[0].mxu0
      %3636 = vmatprep.mubr.f32.mxu0 0.0
      %3637 = vmatmul.mubr.f32.gmra.mrb[0].mxu0 %v3372
      %v3638 = vpop.f32.mrb[0].mxu0
      %v3639 = vadd.f32 %v3391, %v3638
      %v3640 = vpop.f32.mrb[0].mxu0
      %3641 = vmatprep.mubr.f32.mxu0 0.0
      %3642 = vmatmul.mubr.f32.gmra.mrb[0].mxu0 %v3373
      %v3643 = vpop.f32.mrb[0].mxu0
      %v3644 = vadd.f32 %v3391, %v3643
      %v3645 = vpop.f32.mrb[0].mxu0
      %3646 = vmatprep.mubr.f32.mxu0 0.0
      %3647 = vmatmul.mubr.f32.gmra.mrb[0].mxu0 %v3374
      %v3648 = vpop.f32.mrb[0].mxu0
      %v3649 = vadd.f32 %v3391, %v3648
      %v3650 = vpop.f32.mrb[0].mxu0
      %3651 = vdwg.mxu0
      %v3652 = vmax.f32 %v3459, 0.0
      %v3653 = vmax.f32 %v3464, 0.0
      %v3654 = vmax.f32 %v3469, 0.0
      %v3655 = vmax.f32 %v3474, 0.0
      %v3656 = vmax.f32 %v3479, 0.0
      %v3657 = vmax.f32 %v3484, 0.0
      %v3658 = vmax.f32 %v3489, 0.0
      %v3659 = vmax.f32 %v3494, 0.0
      %v3660 = vmax.f32 %v3499, 0.0
      %v3661 = vmax.f32 %v3504, 0.0
      %v3662 = vmax.f32 %v3509, 0.0
      %v3663 = vmax.f32 %v3514, 0.0
      %v3664 = vmax.f32 %v3519, 0.0
      %v3665 = vmax.f32 %v3524, 0.0
      %v3666 = vmax.f32 %v3529, 0.0
      %v3667 = vmax.f32 %v3534, 0.0
      %v3668 = vmax.f32 %v3539, 0.0
      %v3669 = vmax.f32 %v3544, 0.0
      %v3670 = vmax.f32 %v3549, 0.0
      %v3671 = vmax.f32 %v3554, 0.0
      %v3672 = vmax.f32 %v3559, 0.0
      %v3673 = vmax.f32 %v3564, 0.0
      %v3674 = vmax.f32 %v3569, 0.0
      %v3675 = vmax.f32 %v3574, 0.0
      %v3676 = vmax.f32 %v3579, 0.0
      %v3677 = vmax.f32 %v3584, 0.0
      %v3678 = vmax.f32 %v3589, 0.0
      %v3679 = vmax.f32 %v3594, 0.0
      %v3680 = vmax.f32 %v3599, 0.0
      %v3681 = vmax.f32 %v3604, 0.0
      %v3682 = vmax.f32 %v3609, 0.0
      %v3683 = vmax.f32 %v3614, 0.0
      %v3684 = vmax.f32 %v3619, 0.0
      %v3685 = vmax.f32 %v3624, 0.0
      %v3686 = vmax.f32 %v3629, 0.0
      %v3687 = vmax.f32 %v3634, 0.0
      %v3688 = vmax.f32 %v3639, 0.0
      %v3689 = vmax.f32 %v3644, 0.0
      %v3690 = vmax.f32 %v3649, 0.0
      %v3691 = vld [vmem:[%s2 + $0x80] sm:$0xff]
      %v3692 = vld [vmem:[%s2 + $0x88] sm:$0xff]
      %v3693 = vld [vmem:[%s2 + $0x90] sm:$0xff]
      %v3694 = vld [vmem:[%s2 + $0x98] sm:$0xff]
      %v3695 = vld [vmem:[%s2 + $0xa0] sm:$0xff]
      %v3696 = vld [vmem:[%s2 + $0xa8] sm:$0xff]
      %v3697 = vld [vmem:[%s2 + $0xb0] sm:$0xff]
      %v3698 = vld [vmem:[%s2 + $0xb8] sm:$0xff]
      %v3699 = vld [vmem:[%s2 + $0xc0] sm:$0xff]
      %v3700 = vld [vmem:[%s2 + $0xc8] sm:$0xff]
      %v3701 = vld [vmem:[%s2 + $0xd0] sm:$0xff]
      %v3702 = vld [vmem:[%s2 + $0xd8] sm:$0xff]
      %v3703 = vld [vmem:[%s2 + $0xe0] sm:$0xff]
      %v3704 = vld [vmem:[%s2 + $0xe8] sm:$0xff]
      %v3705 = vld [vmem:[%s2 + $0xf0] sm:$0xff]
      %v3706 = vld [vmem:[%s2 + $0xf8] sm:$0xff]
      %v3707 = vld [vmem:[%s4 + $0x2] ss:$0 sm:$0xff]
      %3708 = vmatprep.subr.mxu0 0.0
      %3709 = vmatpush1.msra.mxu0 %v3691
      %3710 = vmatprep.subr.mxu0 0.0
      %3711 = vmatpush1.msra.mxu0 %v3692
      %3712 = vmatprep.subr.mxu0 0.0
      %3713 = vmatpush1.msra.mxu0 %v3693
      %3714 = vmatprep.subr.mxu0 0.0
      %3715 = vmatpush1.msra.mxu0 %v3694
      %3716 = vmatprep.subr.mxu0 0.0
      %3717 = vmatpush1.msra.mxu0 %v3695
      %3718 = vmatprep.subr.mxu0 0.0
      %3719 = vmatpush1.msra.mxu0 %v3696
      %3720 = vmatprep.subr.mxu0 0.0
      %3721 = vmatpush1.msra.mxu0 %v3697
      %3722 = vmatprep.subr.mxu0 0.0
      %3723 = vmatpush1.msra.mxu0 %v3698
      %3724 = vmatprep.subr.mxu0 0.0
      %3725 = vmatpush1.msra.mxu0 %v3699
      %3726 = vmatprep.subr.mxu0 0.0
      %3727 = vmatpush1.msra.mxu0 %v3700
      %3728 = vmatprep.subr.mxu0 0.0
      %3729 = vmatpush1.msra.mxu0 %v3701
      %3730 = vmatprep.subr.mxu0 0.0
      %3731 = vmatpush1.msra.mxu0 %v3702
      %3732 = vmatprep.subr.mxu0 0.0
      %3733 = vmatpush1.msra.mxu0 %v3703
      %3734 = vmatprep.subr.mxu0 0.0
      %3735 = vmatpush1.msra.mxu0 %v3704
      %3736 = vmatprep.subr.mxu0 0.0
      %3737 = vmatpush1.msra.mxu0 %v3705
      %3738 = vmatprep.subr.mxu0 0.0
      %3739 = vmatpush1.msra.mxu0 %v3706
      %3740 = vmatprep.subr.mxu0 0.0
      %3741 = vmatpush1.msra.mxu0 0.0
      %3742 = vmatprep.subr.mxu0 0.0
      %3743 = vmatpush1.msra.mxu0 0.0
      %3744 = vmatprep.subr.mxu0 0.0
      %3745 = vmatpush1.msra.mxu0 0.0
      %3746 = vmatprep.subr.mxu0 0.0
      %3747 = vmatpush1.msra.mxu0 0.0
      %3748 = vmatprep.subr.mxu0 0.0
      %3749 = vmatpush1.msra.mxu0 0.0
      %3750 = vmatprep.subr.mxu0 0.0
      %3751 = vmatpush1.msra.mxu0 0.0
      %3752 = vmatprep.subr.mxu0 0.0
      %3753 = vmatpush1.msra.mxu0 0.0
      %3754 = vmatprep.subr.mxu0 0.0
      %3755 = vmatpush1.msra.mxu0 0.0
      %3756 = vmatprep.subr.mxu0 0.0
      %3757 = vmatpush1.msra.mxu0 0.0
      %3758 = vmatprep.subr.mxu0 0.0
      %3759 = vmatpush1.msra.mxu0 0.0
      %3760 = vmatprep.subr.mxu0 0.0
      %3761 = vmatpush1.msra.mxu0 0.0
      %3762 = vmatprep.subr.mxu0 0.0
      %3763 = vmatpush1.msra.mxu0 0.0
      %3764 = vmatprep.subr.mxu0 0.0
      %3765 = vmatpush1.msra.mxu0 0.0
      %3766 = vmatprep.subr.mxu0 0.0
      %3767 = vmatpush1.msra.mxu0 0.0
      %3768 = vmatprep.subr.mxu0 0.0
      %3769 = vmatpush1.msra.mxu0 0.0
      %3770 = vmatprep.subr.mxu0 0.0
      %3771 = vmatpush1.msra.mxu0 0.0
      %3772 = vmatprep.mubr.f32.mxu0 0.0
      %3773 = vmatmul.mubr.f32.gmra.mrb[0].mxu0 %v3652
      %v3774 = vpop.f32.mrb[0].mxu0
      %v3775 = vadd.f32 %v3707, %v3774
      %v3776 = vpop.f32.mrb[0].mxu0
      %3777 = vmatprep.mubr.f32.mxu0 0.0
      %3778 = vmatmul.mubr.f32.gmra.mrb[0].mxu0 %v3653
      %v3779 = vpop.f32.mrb[0].mxu0
      %v3780 = vadd.f32 %v3707, %v3779
      %v3781 = vpop.f32.mrb[0].mxu0
      %3782 = vmatprep.mubr.f32.mxu0 0.0
      %3783 = vmatmul.mubr.f32.gmra.mrb[0].mxu0 %v3654
      %v3784 = vpop.f32.mrb[0].mxu0
      %v3785 = vadd.f32 %v3707, %v3784
      %v3786 = vpop.f32.mrb[0].mxu0
      %3787 = vmatprep.mubr.f32.mxu0 0.0
      %3788 = vmatmul.mubr.f32.gmra.mrb[0].mxu0 %v3655
      %v3789 = vpop.f32.mrb[0].mxu0
      %v3790 = vadd.f32 %v3707, %v3789
      %v3791 = vpop.f32.mrb[0].mxu0
      %3792 = vmatprep.mubr.f32.mxu0 0.0
      %3793 = vmatmul.mubr.f32.gmra.mrb[0].mxu0 %v3656
      %v3794 = vpop.f32.mrb[0].mxu0
      %v3795 = vadd.f32 %v3707, %v3794
      %v3796 = vpop.f32.mrb[0].mxu0
      %3797 = vmatprep.mubr.f32.mxu0 0.0
      %3798 = vmatmul.mubr.f32.gmra.mrb[0].mxu0 %v3657
      %v3799 = vpop.f32.mrb[0].mxu0
      %v3800 = vadd.f32 %v3707, %v3799
      %v3801 = vpop.f32.mrb[0].mxu0
      %3802 = vmatprep.mubr.f32.mxu0 0.0
      %3803 = vmatmul.mubr.f32.gmra.mrb[0].mxu0 %v3658
      %v3804 = vpop.f32.mrb[0].mxu0
      %v3805 = vadd.f32 %v3707, %v3804
      %v3806 = vpop.f32.mrb[0].mxu0
      %3807 = vmatprep.mubr.f32.mxu0 0.0
      %3808 = vmatmul.mubr.f32.gmra.mrb[0].mxu0 %v3659
      %v3809 = vpop.f32.mrb[0].mxu0
      %v3810 = vadd.f32 %v3707, %v3809
      %v3811 = vpop.f32.mrb[0].mxu0
      %3812 = vmatprep.mubr.f32.mxu0 0.0
      %3813 = vmatmul.mubr.f32.gmra.mrb[0].mxu0 %v3660
      %v3814 = vpop.f32.mrb[0].mxu0
      %v3815 = vadd.f32 %v3707, %v3814
      %v3816 = vpop.f32.mrb[0].mxu0
      %3817 = vmatprep.mubr.f32.mxu0 0.0
      %3818 = vmatmul.mubr.f32.gmra.mrb[0].mxu0 %v3661
      %v3819 = vpop.f32.mrb[0].mxu0
      %v3820 = vadd.f32 %v3707, %v3819
      %v3821 = vpop.f32.mrb[0].mxu0
      %3822 = vmatprep.mubr.f32.mxu0 0.0
      %3823 = vmatmul.mubr.f32.gmra.mrb[0].mxu0 %v3662
      %v3824 = vpop.f32.mrb[0].mxu0
      %v3825 = vadd.f32 %v3707, %v3824
      %v3826 = vpop.f32.mrb[0].mxu0
      %3827 = vmatprep.mubr.f32.mxu0 0.0
      %3828 = vmatmul.mubr.f32.gmra.mrb[0].mxu0 %v3663
      %v3829 = vpop.f32.mrb[0].mxu0
      %v3830 = vadd.f32 %v3707, %v3829
      %v3831 = vpop.f32.mrb[0].mxu0
      %3832 = vmatprep.mubr.f32.mxu0 0.0
      %3833 = vmatmul.mubr.f32.gmra.mrb[0].mxu0 %v3664
      %v3834 = vpop.f32.mrb[0].mxu0
      %v3835 = vadd.f32 %v3707, %v3834
      %v3836 = vpop.f32.mrb[0].mxu0
      %3837 = vmatprep.mubr.f32.mxu0 0.0
      %3838 = vmatmul.mubr.f32.gmra.mrb[0].mxu0 %v3665
      %v3839 = vpop.f32.mrb[0].mxu0
      %v3840 = vadd.f32 %v3707, %v3839
      %v3841 = vpop.f32.mrb[0].mxu0
      %3842 = vmatprep.mubr.f32.mxu0 0.0
      %3843 = vmatmul.mubr.f32.gmra.mrb[0].mxu0 %v3666
      %v3844 = vpop.f32.mrb[0].mxu0
      %v3845 = vadd.f32 %v3707, %v3844
      %v3846 = vpop.f32.mrb[0].mxu0
      %3847 = vmatprep.mubr.f32.mxu0 0.0
      %3848 = vmatmul.mubr.f32.gmra.mrb[0].mxu0 %v3667
      %v3849 = vpop.f32.mrb[0].mxu0
      %v3850 = vadd.f32 %v3707, %v3849
      %v3851 = vpop.f32.mrb[0].mxu0
      %3852 = vmatprep.mubr.f32.mxu0 0.0
      %3853 = vmatmul.mubr.f32.gmra.mrb[0].mxu0 %v3668
      %v3854 = vpop.f32.mrb[0].mxu0
      %v3855 = vadd.f32 %v3707, %v3854
      %v3856 = vpop.f32.mrb[0].mxu0
      %3857 = vmatprep.mubr.f32.mxu0 0.0
      %3858 = vmatmul.mubr.f32.gmra.mrb[0].mxu0 %v3669
      %v3859 = vpop.f32.mrb[0].mxu0
      %v3860 = vadd.f32 %v3707, %v3859
      %v3861 = vpop.f32.mrb[0].mxu0
      %3862 = vmatprep.mubr.f32.mxu0 0.0
      %3863 = vmatmul.mubr.f32.gmra.mrb[0].mxu0 %v3670
      %v3864 = vpop.f32.mrb[0].mxu0
      %v3865 = vadd.f32 %v3707, %v3864
      %v3866 = vpop.f32.mrb[0].mxu0
      %3867 = vmatprep.mubr.f32.mxu0 0.0
      %3868 = vmatmul.mubr.f32.gmra.mrb[0].mxu0 %v3671
      %v3869 = vpop.f32.mrb[0].mxu0
      %v3870 = vadd.f32 %v3707, %v3869
      %v3871 = vpop.f32.mrb[0].mxu0
      %3872 = vmatprep.mubr.f32.mxu0 0.0
      %3873 = vmatmul.mubr.f32.gmra.mrb[0].mxu0 %v3672
      %v3874 = vpop.f32.mrb[0].mxu0
      %v3875 = vadd.f32 %v3707, %v3874
      %v3876 = vpop.f32.mrb[0].mxu0
      %3877 = vmatprep.mubr.f32.mxu0 0.0
      %3878 = vmatmul.mubr.f32.gmra.mrb[0].mxu0 %v3673
      %v3879 = vpop.f32.mrb[0].mxu0
      %v3880 = vadd.f32 %v3707, %v3879
      %v3881 = vpop.f32.mrb[0].mxu0
      %3882 = vmatprep.mubr.f32.mxu0 0.0
      %3883 = vmatmul.mubr.f32.gmra.mrb[0].mxu0 %v3674
      %v3884 = vpop.f32.mrb[0].mxu0
      %v3885 = vadd.f32 %v3707, %v3884
      %v3886 = vpop.f32.mrb[0].mxu0
      %3887 = vmatprep.mubr.f32.mxu0 0.0
      %3888 = vmatmul.mubr.f32.gmra.mrb[0].mxu0 %v3675
      %v3889 = vpop.f32.mrb[0].mxu0
      %v3890 = vadd.f32 %v3707, %v3889
      %v3891 = vpop.f32.mrb[0].mxu0
      %3892 = vmatprep.mubr.f32.mxu0 0.0
      %3893 = vmatmul.mubr.f32.gmra.mrb[0].mxu0 %v3676
      %v3894 = vpop.f32.mrb[0].mxu0
      %v3895 = vadd.f32 %v3707, %v3894
      %v3896 = vpop.f32.mrb[0].mxu0
      %3897 = vmatprep.mubr.f32.mxu0 0.0
      %3898 = vmatmul.mubr.f32.gmra.mrb[0].mxu0 %v3677
      %v3899 = vpop.f32.mrb[0].mxu0
      %v3900 = vadd.f32 %v3707, %v3899
      %v3901 = vpop.f32.mrb[0].mxu0
      %3902 = vmatprep.mubr.f32.mxu0 0.0
      %3903 = vmatmul.mubr.f32.gmra.mrb[0].mxu0 %v3678
      %v3904 = vpop.f32.mrb[0].mxu0
      %v3905 = vadd.f32 %v3707, %v3904
      %v3906 = vpop.f32.mrb[0].mxu0
      %3907 = vmatprep.mubr.f32.mxu0 0.0
      %3908 = vmatmul.mubr.f32.gmra.mrb[0].mxu0 %v3679
      %v3909 = vpop.f32.mrb[0].mxu0
      %v3910 = vadd.f32 %v3707, %v3909
      %v3911 = vpop.f32.mrb[0].mxu0
      %3912 = vmatprep.mubr.f32.mxu0 0.0
      %3913 = vmatmul.mubr.f32.gmra.mrb[0].mxu0 %v3680
      %v3914 = vpop.f32.mrb[0].mxu0
      %v3915 = vadd.f32 %v3707, %v3914
      %v3916 = vpop.f32.mrb[0].mxu0
      %3917 = vmatprep.mubr.f32.mxu0 0.0
      %3918 = vmatmul.mubr.f32.gmra.mrb[0].mxu0 %v3681
      %v3919 = vpop.f32.mrb[0].mxu0
      %v3920 = vadd.f32 %v3707, %v3919
      %v3921 = vpop.f32.mrb[0].mxu0
      %3922 = vmatprep.mubr.f32.mxu0 0.0
      %3923 = vmatmul.mubr.f32.gmra.mrb[0].mxu0 %v3682
      %v3924 = vpop.f32.mrb[0].mxu0
      %v3925 = vadd.f32 %v3707, %v3924
      %v3926 = vpop.f32.mrb[0].mxu0
      %3927 = vmatprep.mubr.f32.mxu0 0.0
      %3928 = vmatmul.mubr.f32.gmra.mrb[0].mxu0 %v3683
      %v3929 = vpop.f32.mrb[0].mxu0
      %v3930 = vadd.f32 %v3707, %v3929
      %v3931 = vpop.f32.mrb[0].mxu0
      %3932 = vmatprep.mubr.f32.mxu0 0.0
      %3933 = vmatmul.mubr.f32.gmra.mrb[0].mxu0 %v3684
      %v3934 = vpop.f32.mrb[0].mxu0
      %v3935 = vadd.f32 %v3707, %v3934
      %v3936 = vpop.f32.mrb[0].mxu0
      %3937 = vmatprep.mubr.f32.mxu0 0.0
      %3938 = vmatmul.mubr.f32.gmra.mrb[0].mxu0 %v3685
      %v3939 = vpop.f32.mrb[0].mxu0
      %v3940 = vadd.f32 %v3707, %v3939
      %v3941 = vpop.f32.mrb[0].mxu0
      %3942 = vmatprep.mubr.f32.mxu0 0.0
      %3943 = vmatmul.mubr.f32.gmra.mrb[0].mxu0 %v3686
      %v3944 = vpop.f32.mrb[0].mxu0
      %v3945 = vadd.f32 %v3707, %v3944
      %v3946 = vpop.f32.mrb[0].mxu0
      %3947 = vmatprep.mubr.f32.mxu0 0.0
      %3948 = vmatmul.mubr.f32.gmra.mrb[0].mxu0 %v3687
      %v3949 = vpop.f32.mrb[0].mxu0
      %v3950 = vadd.f32 %v3707, %v3949
      %v3951 = vpop.f32.mrb[0].mxu0
      %3952 = vmatprep.mubr.f32.mxu0 0.0
      %3953 = vmatmul.mubr.f32.gmra.mrb[0].mxu0 %v3688
      %v3954 = vpop.f32.mrb[0].mxu0
      %v3955 = vadd.f32 %v3707, %v3954
      %v3956 = vpop.f32.mrb[0].mxu0
      %3957 = vmatprep.mubr.f32.mxu0 0.0
      %3958 = vmatmul.mubr.f32.gmra.mrb[0].mxu0 %v3689
      %v3959 = vpop.f32.mrb[0].mxu0
      %v3960 = vadd.f32 %v3707, %v3959
      %v3961 = vpop.f32.mrb[0].mxu0
      %3962 = vmatprep.mubr.f32.mxu0 0.0
      %3963 = vmatmul.mubr.f32.gmra.mrb[0].mxu0 %v3690
      %v3964 = vpop.f32.mrb[0].mxu0
      %v3965 = vadd.f32 %v3707, %v3964
      %v3966 = vpop.f32.mrb[0].mxu0
      %3967 = vdwg.mxu0
      %v3968 = vmax.f32 %v3775, 0.0
      %v3969 = vmax.f32 %v3780, 0.0
      %v3970 = vmax.f32 %v3785, 0.0
      %v3971 = vmax.f32 %v3790, 0.0
      %v3972 = vmax.f32 %v3795, 0.0
      %v3973 = vmax.f32 %v3800, 0.0
      %v3974 = vmax.f32 %v3805, 0.0
      %v3975 = vmax.f32 %v3810, 0.0
      %v3976 = vmax.f32 %v3815, 0.0
      %v3977 = vmax.f32 %v3820, 0.0
      %v3978 = vmax.f32 %v3825, 0.0
      %v3979 = vmax.f32 %v3830, 0.0
      %v3980 = vmax.f32 %v3835, 0.0
      %v3981 = vmax.f32 %v3840, 0.0
      %v3982 = vmax.f32 %v3845, 0.0
      %v3983 = vmax.f32 %v3850, 0.0
      %v3984 = vmax.f32 %v3855, 0.0
      %v3985 = vmax.f32 %v3860, 0.0
      %v3986 = vmax.f32 %v3865, 0.0
      %v3987 = vmax.f32 %v3870, 0.0
      %v3988 = vmax.f32 %v3875, 0.0
      %v3989 = vmax.f32 %v3880, 0.0
      %v3990 = vmax.f32 %v3885, 0.0
      %v3991 = vmax.f32 %v3890, 0.0
      %v3992 = vmax.f32 %v3895, 0.0
      %v3993 = vmax.f32 %v3900, 0.0
      %v3994 = vmax.f32 %v3905, 0.0
      %v3995 = vmax.f32 %v3910, 0.0
      %v3996 = vmax.f32 %v3915, 0.0
      %v3997 = vmax.f32 %v3920, 0.0
      %v3998 = vmax.f32 %v3925, 0.0
      %v3999 = vmax.f32 %v3930, 0.0
      %v4000 = vmax.f32 %v3935, 0.0
      %v4001 = vmax.f32 %v3940, 0.0
      %v4002 = vmax.f32 %v3945, 0.0
      %v4003 = vmax.f32 %v3950, 0.0
      %v4004 = vmax.f32 %v3955, 0.0
      %v4005 = vmax.f32 %v3960, 0.0
      %v4006 = vmax.f32 %v3965, 0.0
      %v4007 = vld [vmem:[%s2 + $0x100] sm:$0xff]
      %v4008 = vld [vmem:[%s2 + $0x108] sm:$0xff]
      %v4009 = vld [vmem:[%s2 + $0x110] sm:$0xff]
      %v4010 = vld [vmem:[%s2 + $0x118] sm:$0xff]
      %v4011 = vld [vmem:[%s2 + $0x120] sm:$0xff]
      %v4012 = vld [vmem:[%s2 + $0x128] sm:$0xff]
      %v4013 = vld [vmem:[%s2 + $0x130] sm:$0xff]
      %v4014 = vld [vmem:[%s2 + $0x138] sm:$0xff]
      %v4015 = vld [vmem:[%s2 + $0x140] sm:$0xff]
      %v4016 = vld [vmem:[%s2 + $0x148] sm:$0xff]
      %v4017 = vld [vmem:[%s2 + $0x150] sm:$0xff]
      %v4018 = vld [vmem:[%s2 + $0x158] sm:$0xff]
      %v4019 = vld [vmem:[%s2 + $0x160] sm:$0xff]
      %v4020 = vld [vmem:[%s2 + $0x168] sm:$0xff]
      %v4021 = vld [vmem:[%s2 + $0x170] sm:$0xff]
      %v4022 = vld [vmem:[%s2 + $0x178] sm:$0xff]
      %v4023 = vld [vmem:[%s4 + $0x3] ss:$0 sm:$0xff]
      %4024 = vmatprep.subr.mxu0 0.0
      %4025 = vmatpush1.msra.mxu0 %v4007
      %4026 = vmatprep.subr.mxu0 0.0
      %4027 = vmatpush1.msra.mxu0 %v4008
      %4028 = vmatprep.subr.mxu0 0.0
      %4029 = vmatpush1.msra.mxu0 %v4009
      %4030 = vmatprep.subr.mxu0 0.0
      %4031 = vmatpush1.msra.mxu0 %v4010
      %4032 = vmatprep.subr.mxu0 0.0
      %4033 = vmatpush1.msra.mxu0 %v4011
      %4034 = vmatprep.subr.mxu0 0.0
      %4035 = vmatpush1.msra.mxu0 %v4012
      %4036 = vmatprep.subr.mxu0 0.0
      %4037 = vmatpush1.msra.mxu0 %v4013
      %4038 = vmatprep.subr.mxu0 0.0
      %4039 = vmatpush1.msra.mxu0 %v4014
      %4040 = vmatprep.subr.mxu0 0.0
      %4041 = vmatpush1.msra.mxu0 %v4015
      %4042 = vmatprep.subr.mxu0 0.0
      %4043 = vmatpush1.msra.mxu0 %v4016
      %4044 = vmatprep.subr.mxu0 0.0
      %4045 = vmatpush1.msra.mxu0 %v4017
      %4046 = vmatprep.subr.mxu0 0.0
      %4047 = vmatpush1.msra.mxu0 %v4018
      %4048 = vmatprep.subr.mxu0 0.0
      %4049 = vmatpush1.msra.mxu0 %v4019
      %4050 = vmatprep.subr.mxu0 0.0
      %4051 = vmatpush1.msra.mxu0 %v4020
      %4052 = vmatprep.subr.mxu0 0.0
      %4053 = vmatpush1.msra.mxu0 %v4021
      %4054 = vmatprep.subr.mxu0 0.0
      %4055 = vmatpush1.msra.mxu0 %v4022
      %4056 = vmatprep.subr.mxu0 0.0
      %4057 = vmatpush1.msra.mxu0 0.0
      %4058 = vmatprep.subr.mxu0 0.0
      %4059 = vmatpush1.msra.mxu0 0.0
      %4060 = vmatprep.subr.mxu0 0.0
      %4061 = vmatpush1.msra.mxu0 0.0
      %4062 = vmatprep.subr.mxu0 0.0
      %4063 = vmatpush1.msra.mxu0 0.0
      %4064 = vmatprep.subr.mxu0 0.0
      %4065 = vmatpush1.msra.mxu0 0.0
      %4066 = vmatprep.subr.mxu0 0.0
      %4067 = vmatpush1.msra.mxu0 0.0
      %4068 = vmatprep.subr.mxu0 0.0
      %4069 = vmatpush1.msra.mxu0 0.0
      %4070 = vmatprep.subr.mxu0 0.0
      %4071 = vmatpush1.msra.mxu0 0.0
      %4072 = vmatprep.subr.mxu0 0.0
      %4073 = vmatpush1.msra.mxu0 0.0
      %4074 = vmatprep.subr.mxu0 0.0
      %4075 = vmatpush1.msra.mxu0 0.0
      %4076 = vmatprep.subr.mxu0 0.0
      %4077 = vmatpush1.msra.mxu0 0.0
      %4078 = vmatprep.subr.mxu0 0.0
      %4079 = vmatpush1.msra.mxu0 0.0
      %4080 = vmatprep.subr.mxu0 0.0
      %4081 = vmatpush1.msra.mxu0 0.0
      %4082 = vmatprep.subr.mxu0 0.0
      %4083 = vmatpush1.msra.mxu0 0.0
      %4084 = vmatprep.subr.mxu0 0.0
      %4085 = vmatpush1.msra.mxu0 0.0
      %4086 = vmatprep.subr.mxu0 0.0
      %4087 = vmatpush1.msra.mxu0 0.0
      %4088 = vmatprep.mubr.f32.mxu0 0.0
      %4089 = vmatmul.mubr.f32.gmra.mrb[0].mxu0 %v3968
      %v4090 = vpop.f32.mrb[0].mxu0
      %v4091 = vadd.f32 %v4023, %v4090
      %v4092 = vpop.f32.mrb[0].mxu0
      %4093 = vmatprep.mubr.f32.mxu0 0.0
      %4094 = vmatmul.mubr.f32.gmra.mrb[0].mxu0 %v3969
      %v4095 = vpop.f32.mrb[0].mxu0
      %v4096 = vadd.f32 %v4023, %v4095
      %v4097 = vpop.f32.mrb[0].mxu0
      %4098 = vmatprep.mubr.f32.mxu0 0.0
      %4099 = vmatmul.mubr.f32.gmra.mrb[0].mxu0 %v3970
      %v4100 = vpop.f32.mrb[0].mxu0
      %v4101 = vadd.f32 %v4023, %v4100
      %v4102 = vpop.f32.mrb[0].mxu0
      %4103 = vmatprep.mubr.f32.mxu0 0.0
      %4104 = vmatmul.mubr.f32.gmra.mrb[0].mxu0 %v3971
      %v4105 = vpop.f32.mrb[0].mxu0
      %v4106 = vadd.f32 %v4023, %v4105
      %v4107 = vpop.f32.mrb[0].mxu0
      %4108 = vmatprep.mubr.f32.mxu0 0.0
      %4109 = vmatmul.mubr.f32.gmra.mrb[0].mxu0 %v3972
      %v4110 = vpop.f32.mrb[0].mxu0
      %v4111 = vadd.f32 %v4023, %v4110
      %v4112 = vpop.f32.mrb[0].mxu0
      %4113 = vmatprep.mubr.f32.mxu0 0.0
      %4114 = vmatmul.mubr.f32.gmra.mrb[0].mxu0 %v3973
      %v4115 = vpop.f32.mrb[0].mxu0
      %v4116 = vadd.f32 %v4023, %v4115
      %v4117 = vpop.f32.mrb[0].mxu0
      %4118 = vmatprep.mubr.f32.mxu0 0.0
      %4119 = vmatmul.mubr.f32.gmra.mrb[0].mxu0 %v3974
      %v4120 = vpop.f32.mrb[0].mxu0
      %v4121 = vadd.f32 %v4023, %v4120
      %v4122 = vpop.f32.mrb[0].mxu0
      %4123 = vmatprep.mubr.f32.mxu0 0.0
      %4124 = vmatmul.mubr.f32.gmra.mrb[0].mxu0 %v3975
      %v4125 = vpop.f32.mrb[0].mxu0
      %v4126 = vadd.f32 %v4023, %v4125
      %v4127 = vpop.f32.mrb[0].mxu0
      %4128 = vmatprep.mubr.f32.mxu0 0.0
      %4129 = vmatmul.mubr.f32.gmra.mrb[0].mxu0 %v3976
      %v4130 = vpop.f32.mrb[0].mxu0
      %v4131 = vadd.f32 %v4023, %v4130
      %v4132 = vpop.f32.mrb[0].mxu0
      %4133 = vmatprep.mubr.f32.mxu0 0.0
      %4134 = vmatmul.mubr.f32.gmra.mrb[0].mxu0 %v3977
      %v4135 = vpop.f32.mrb[0].mxu0
      %v4136 = vadd.f32 %v4023, %v4135
      %v4137 = vpop.f32.mrb[0].mxu0
      %4138 = vmatprep.mubr.f32.mxu0 0.0
      %4139 = vmatmul.mubr.f32.gmra.mrb[0].mxu0 %v3978
      %v4140 = vpop.f32.mrb[0].mxu0
      %v4141 = vadd.f32 %v4023, %v4140
      %v4142 = vpop.f32.mrb[0].mxu0
      %4143 = vmatprep.mubr.f32.mxu0 0.0
      %4144 = vmatmul.mubr.f32.gmra.mrb[0].mxu0 %v3979
      %v4145 = vpop.f32.mrb[0].mxu0
      %v4146 = vadd.f32 %v4023, %v4145
      %v4147 = vpop.f32.mrb[0].mxu0
      %4148 = vmatprep.mubr.f32.mxu0 0.0
      %4149 = vmatmul.mubr.f32.gmra.mrb[0].mxu0 %v3980
      %v4150 = vpop.f32.mrb[0].mxu0
      %v4151 = vadd.f32 %v4023, %v4150
      %v4152 = vpop.f32.mrb[0].mxu0
      %4153 = vmatprep.mubr.f32.mxu0 0.0
      %4154 = vmatmul.mubr.f32.gmra.mrb[0].mxu0 %v3981
      %v4155 = vpop.f32.mrb[0].mxu0
      %v4156 = vadd.f32 %v4023, %v4155
      %v4157 = vpop.f32.mrb[0].mxu0
      %4158 = vmatprep.mubr.f32.mxu0 0.0
      %4159 = vmatmul.mubr.f32.gmra.mrb[0].mxu0 %v3982
      %v4160 = vpop.f32.mrb[0].mxu0
      %v4161 = vadd.f32 %v4023, %v4160
      %v4162 = vpop.f32.mrb[0].mxu0
      %4163 = vmatprep.mubr.f32.mxu0 0.0
      %4164 = vmatmul.mubr.f32.gmra.mrb[0].mxu0 %v3983
      %v4165 = vpop.f32.mrb[0].mxu0
      %v4166 = vadd.f32 %v4023, %v4165
      %v4167 = vpop.f32.mrb[0].mxu0
      %4168 = vmatprep.mubr.f32.mxu0 0.0
      %4169 = vmatmul.mubr.f32.gmra.mrb[0].mxu0 %v3984
      %v4170 = vpop.f32.mrb[0].mxu0
      %v4171 = vadd.f32 %v4023, %v4170
      %v4172 = vpop.f32.mrb[0].mxu0
      %4173 = vmatprep.mubr.f32.mxu0 0.0
      %4174 = vmatmul.mubr.f32.gmra.mrb[0].mxu0 %v3985
      %v4175 = vpop.f32.mrb[0].mxu0
      %v4176 = vadd.f32 %v4023, %v4175
      %v4177 = vpop.f32.mrb[0].mxu0
      %4178 = vmatprep.mubr.f32.mxu0 0.0
      %4179 = vmatmul.mubr.f32.gmra.mrb[0].mxu0 %v3986
      %v4180 = vpop.f32.mrb[0].mxu0
      %v4181 = vadd.f32 %v4023, %v4180
      %v4182 = vpop.f32.mrb[0].mxu0
      %4183 = vmatprep.mubr.f32.mxu0 0.0
      %4184 = vmatmul.mubr.f32.gmra.mrb[0].mxu0 %v3987
      %v4185 = vpop.f32.mrb[0].mxu0
      %v4186 = vadd.f32 %v4023, %v4185
      %v4187 = vpop.f32.mrb[0].mxu0
      %4188 = vmatprep.mubr.f32.mxu0 0.0
      %4189 = vmatmul.mubr.f32.gmra.mrb[0].mxu0 %v3988
      %v4190 = vpop.f32.mrb[0].mxu0
      %v4191 = vadd.f32 %v4023, %v4190
      %v4192 = vpop.f32.mrb[0].mxu0
      %4193 = vmatprep.mubr.f32.mxu0 0.0
      %4194 = vmatmul.mubr.f32.gmra.mrb[0].mxu0 %v3989
      %v4195 = vpop.f32.mrb[0].mxu0
      %v4196 = vadd.f32 %v4023, %v4195
      %v4197 = vpop.f32.mrb[0].mxu0
      %4198 = vmatprep.mubr.f32.mxu0 0.0
      %4199 = vmatmul.mubr.f32.gmra.mrb[0].mxu0 %v3990
      %v4200 = vpop.f32.mrb[0].mxu0
      %v4201 = vadd.f32 %v4023, %v4200
      %v4202 = vpop.f32.mrb[0].mxu0
      %4203 = vmatprep.mubr.f32.mxu0 0.0
      %4204 = vmatmul.mubr.f32.gmra.mrb[0].mxu0 %v3991
      %v4205 = vpop.f32.mrb[0].mxu0
      %v4206 = vadd.f32 %v4023, %v4205
      %v4207 = vpop.f32.mrb[0].mxu0
      %4208 = vmatprep.mubr.f32.mxu0 0.0
      %4209 = vmatmul.mubr.f32.gmra.mrb[0].mxu0 %v3992
      %v4210 = vpop.f32.mrb[0].mxu0
      %v4211 = vadd.f32 %v4023, %v4210
      %v4212 = vpop.f32.mrb[0].mxu0
      %4213 = vmatprep.mubr.f32.mxu0 0.0
      %4214 = vmatmul.mubr.f32.gmra.mrb[0].mxu0 %v3993
      %v4215 = vpop.f32.mrb[0].mxu0
      %v4216 = vadd.f32 %v4023, %v4215
      %v4217 = vpop.f32.mrb[0].mxu0
      %4218 = vmatprep.mubr.f32.mxu0 0.0
      %4219 = vmatmul.mubr.f32.gmra.mrb[0].mxu0 %v3994
      %v4220 = vpop.f32.mrb[0].mxu0
      %v4221 = vadd.f32 %v4023, %v4220
      %v4222 = vpop.f32.mrb[0].mxu0
      %4223 = vmatprep.mubr.f32.mxu0 0.0
      %4224 = vmatmul.mubr.f32.gmra.mrb[0].mxu0 %v3995
      %v4225 = vpop.f32.mrb[0].mxu0
      %v4226 = vadd.f32 %v4023, %v4225
      %v4227 = vpop.f32.mrb[0].mxu0
      %4228 = vmatprep.mubr.f32.mxu0 0.0
      %4229 = vmatmul.mubr.f32.gmra.mrb[0].mxu0 %v3996
      %v4230 = vpop.f32.mrb[0].mxu0
      %v4231 = vadd.f32 %v4023, %v4230
      %v4232 = vpop.f32.mrb[0].mxu0
      %4233 = vmatprep.mubr.f32.mxu0 0.0
      %4234 = vmatmul.mubr.f32.gmra.mrb[0].mxu0 %v3997
      %v4235 = vpop.f32.mrb[0].mxu0
      %v4236 = vadd.f32 %v4023, %v4235
      %v4237 = vpop.f32.mrb[0].mxu0
      %4238 = vmatprep.mubr.f32.mxu0 0.0
      %4239 = vmatmul.mubr.f32.gmra.mrb[0].mxu0 %v3998
      %v4240 = vpop.f32.mrb[0].mxu0
      %v4241 = vadd.f32 %v4023, %v4240
      %v4242 = vpop.f32.mrb[0].mxu0
      %4243 = vmatprep.mubr.f32.mxu0 0.0
      %4244 = vmatmul.mubr.f32.gmra.mrb[0].mxu0 %v3999
      %v4245 = vpop.f32.mrb[0].mxu0
      %v4246 = vadd.f32 %v4023, %v4245
      %v4247 = vpop.f32.mrb[0].mxu0
      %4248 = vmatprep.mubr.f32.mxu0 0.0
      %4249 = vmatmul.mubr.f32.gmra.mrb[0].mxu0 %v4000
      %v4250 = vpop.f32.mrb[0].mxu0
      %v4251 = vadd.f32 %v4023, %v4250
      %v4252 = vpop.f32.mrb[0].mxu0
      %4253 = vmatprep.mubr.f32.mxu0 0.0
      %4254 = vmatmul.mubr.f32.gmra.mrb[0].mxu0 %v4001
      %v4255 = vpop.f32.mrb[0].mxu0
      %v4256 = vadd.f32 %v4023, %v4255
      %v4257 = vpop.f32.mrb[0].mxu0
      %4258 = vmatprep.mubr.f32.mxu0 0.0
      %4259 = vmatmul.mubr.f32.gmra.mrb[0].mxu0 %v4002
      %v4260 = vpop.f32.mrb[0].mxu0
      %v4261 = vadd.f32 %v4023, %v4260
      %v4262 = vpop.f32.mrb[0].mxu0
      %4263 = vmatprep.mubr.f32.mxu0 0.0
      %4264 = vmatmul.mubr.f32.gmra.mrb[0].mxu0 %v4003
      %v4265 = vpop.f32.mrb[0].mxu0
      %v4266 = vadd.f32 %v4023, %v4265
      %v4267 = vpop.f32.mrb[0].mxu0
      %4268 = vmatprep.mubr.f32.mxu0 0.0
      %4269 = vmatmul.mubr.f32.gmra.mrb[0].mxu0 %v4004
      %v4270 = vpop.f32.mrb[0].mxu0
      %v4271 = vadd.f32 %v4023, %v4270
      %v4272 = vpop.f32.mrb[0].mxu0
      %4273 = vmatprep.mubr.f32.mxu0 0.0
      %4274 = vmatmul.mubr.f32.gmra.mrb[0].mxu0 %v4005
      %v4275 = vpop.f32.mrb[0].mxu0
      %v4276 = vadd.f32 %v4023, %v4275
      %v4277 = vpop.f32.mrb[0].mxu0
      %4278 = vmatprep.mubr.f32.mxu0 0.0
      %4279 = vmatmul.mubr.f32.gmra.mrb[0].mxu0 %v4006
      %v4280 = vpop.f32.mrb[0].mxu0
      %v4281 = vadd.f32 %v4023, %v4280
      %v4282 = vpop.f32.mrb[0].mxu0
      %4283 = vdwg.mxu0
      %v4284 = vmax.f32 %v4091, 0.0
      %v4285 = vmax.f32 %v4096, 0.0
      %v4286 = vmax.f32 %v4101, 0.0
      %v4287 = vmax.f32 %v4106, 0.0
      %v4288 = vmax.f32 %v4111, 0.0
      %v4289 = vmax.f32 %v4116, 0.0
      %v4290 = vmax.f32 %v4121, 0.0
      %v4291 = vmax.f32 %v4126, 0.0
      %v4292 = vmax.f32 %v4131, 0.0
      %v4293 = vmax.f32 %v4136, 0.0
      %v4294 = vmax.f32 %v4141, 0.0
      %v4295 = vmax.f32 %v4146, 0.0
      %v4296 = vmax.f32 %v4151, 0.0
      %v4297 = vmax.f32 %v4156, 0.0
      %v4298 = vmax.f32 %v4161, 0.0
      %v4299 = vmax.f32 %v4166, 0.0
      %v4300 = vmax.f32 %v4171, 0.0
      %v4301 = vmax.f32 %v4176, 0.0
      %v4302 = vmax.f32 %v4181, 0.0
      %v4303 = vmax.f32 %v4186, 0.0
      %v4304 = vmax.f32 %v4191, 0.0
      %v4305 = vmax.f32 %v4196, 0.0
      %v4306 = vmax.f32 %v4201, 0.0
      %v4307 = vmax.f32 %v4206, 0.0
      %v4308 = vmax.f32 %v4211, 0.0
      %v4309 = vmax.f32 %v4216, 0.0
      %v4310 = vmax.f32 %v4221, 0.0
      %v4311 = vmax.f32 %v4226, 0.0
      %v4312 = vmax.f32 %v4231, 0.0
      %v4313 = vmax.f32 %v4236, 0.0
      %v4314 = vmax.f32 %v4241, 0.0
      %v4315 = vmax.f32 %v4246, 0.0
      %v4316 = vmax.f32 %v4251, 0.0
      %v4317 = vmax.f32 %v4256, 0.0
      %v4318 = vmax.f32 %v4261, 0.0
      %v4319 = vmax.f32 %v4266, 0.0
      %v4320 = vmax.f32 %v4271, 0.0
      %v4321 = vmax.f32 %v4276, 0.0
      %v4322 = vmax.f32 %v4281, 0.0
      %v4323 = vld [vmem:[%s2 + $0x180] sm:$0xff]
      %v4324 = vld [vmem:[%s2 + $0x188] sm:$0xff]
      %v4325 = vld [vmem:[%s2 + $0x190] sm:$0xff]
      %v4326 = vld [vmem:[%s2 + $0x198] sm:$0xff]
      %v4327 = vld [vmem:[%s2 + $0x1a0] sm:$0xff]
      %v4328 = vld [vmem:[%s2 + $0x1a8] sm:$0xff]
      %v4329 = vld [vmem:[%s2 + $0x1b0] sm:$0xff]
      %v4330 = vld [vmem:[%s2 + $0x1b8] sm:$0xff]
      %v4331 = vld [vmem:[%s2 + $0x1c0] sm:$0xff]
      %v4332 = vld [vmem:[%s2 + $0x1c8] sm:$0xff]
      %v4333 = vld [vmem:[%s2 + $0x1d0] sm:$0xff]
      %v4334 = vld [vmem:[%s2 + $0x1d8] sm:$0xff]
      %v4335 = vld [vmem:[%s2 + $0x1e0] sm:$0xff]
      %v4336 = vld [vmem:[%s2 + $0x1e8] sm:$0xff]
      %v4337 = vld [vmem:[%s2 + $0x1f0] sm:$0xff]
      %v4338 = vld [vmem:[%s2 + $0x1f8] sm:$0xff]
      %v4339 = vld [vmem:[%s4 + $0x4] ss:$0 sm:$0xff]
      %4340 = vmatprep.subr.mxu0 0.0
      %4341 = vmatpush1.msra.mxu0 %v4323
      %4342 = vmatprep.subr.mxu0 0.0
      %4343 = vmatpush1.msra.mxu0 %v4324
      %4344 = vmatprep.subr.mxu0 0.0
      %4345 = vmatpush1.msra.mxu0 %v4325
      %4346 = vmatprep.subr.mxu0 0.0
      %4347 = vmatpush1.msra.mxu0 %v4326
      %4348 = vmatprep.subr.mxu0 0.0
      %4349 = vmatpush1.msra.mxu0 %v4327
      %4350 = vmatprep.subr.mxu0 0.0
      %4351 = vmatpush1.msra.mxu0 %v4328
      %4352 = vmatprep.subr.mxu0 0.0
      %4353 = vmatpush1.msra.mxu0 %v4329
      %4354 = vmatprep.subr.mxu0 0.0
      %4355 = vmatpush1.msra.mxu0 %v4330
      %4356 = vmatprep.subr.mxu0 0.0
      %4357 = vmatpush1.msra.mxu0 %v4331
      %4358 = vmatprep.subr.mxu0 0.0
      %4359 = vmatpush1.msra.mxu0 %v4332
      %4360 = vmatprep.subr.mxu0 0.0
      %4361 = vmatpush1.msra.mxu0 %v4333
      %4362 = vmatprep.subr.mxu0 0.0
      %4363 = vmatpush1.msra.mxu0 %v4334
      %4364 = vmatprep.subr.mxu0 0.0
      %4365 = vmatpush1.msra.mxu0 %v4335
      %4366 = vmatprep.subr.mxu0 0.0
      %4367 = vmatpush1.msra.mxu0 %v4336
      %4368 = vmatprep.subr.mxu0 0.0
      %4369 = vmatpush1.msra.mxu0 %v4337
      %4370 = vmatprep.subr.mxu0 0.0
      %4371 = vmatpush1.msra.mxu0 %v4338
      %4372 = vmatprep.subr.mxu0 0.0
      %4373 = vmatpush1.msra.mxu0 0.0
      %4374 = vmatprep.subr.mxu0 0.0
      %4375 = vmatpush1.msra.mxu0 0.0
      %4376 = vmatprep.subr.mxu0 0.0
      %4377 = vmatpush1.msra.mxu0 0.0
      %4378 = vmatprep.subr.mxu0 0.0
      %4379 = vmatpush1.msra.mxu0 0.0
      %4380 = vmatprep.subr.mxu0 0.0
      %4381 = vmatpush1.msra.mxu0 0.0
      %4382 = vmatprep.subr.mxu0 0.0
      %4383 = vmatpush1.msra.mxu0 0.0
      %4384 = vmatprep.subr.mxu0 0.0
      %4385 = vmatpush1.msra.mxu0 0.0
      %4386 = vmatprep.subr.mxu0 0.0
      %4387 = vmatpush1.msra.mxu0 0.0
      %4388 = vmatprep.subr.mxu0 0.0
      %4389 = vmatpush1.msra.mxu0 0.0
      %4390 = vmatprep.subr.mxu0 0.0
      %4391 = vmatpush1.msra.mxu0 0.0
      %4392 = vmatprep.subr.mxu0 0.0
      %4393 = vmatpush1.msra.mxu0 0.0
      %4394 = vmatprep.subr.mxu0 0.0
      %4395 = vmatpush1.msra.mxu0 0.0
      %4396 = vmatprep.subr.mxu0 0.0
      %4397 = vmatpush1.msra.mxu0 0.0
      %4398 = vmatprep.subr.mxu0 0.0
      %4399 = vmatpush1.msra.mxu0 0.0
      %4400 = vmatprep.subr.mxu0 0.0
      %4401 = vmatpush1.msra.mxu0 0.0
      %4402 = vmatprep.subr.mxu0 0.0
      %4403 = vmatpush1.msra.mxu0 0.0
      %4404 = vmatprep.mubr.f32.mxu0 0.0
      %4405 = vmatmul.mubr.f32.gmra.mrb[0].mxu0 %v4284
      %v4406 = vpop.f32.mrb[0].mxu0
      %v4407 = vadd.f32 %v4339, %v4406
      %v4408 = vpop.f32.mrb[0].mxu0
      %4409 = vmatprep.mubr.f32.mxu0 0.0
      %4410 = vmatmul.mubr.f32.gmra.mrb[0].mxu0 %v4285
      %v4411 = vpop.f32.mrb[0].mxu0
      %v4412 = vadd.f32 %v4339, %v4411
      %v4413 = vpop.f32.mrb[0].mxu0
      %4414 = vmatprep.mubr.f32.mxu0 0.0
      %4415 = vmatmul.mubr.f32.gmra.mrb[0].mxu0 %v4286
      %v4416 = vpop.f32.mrb[0].mxu0
      %v4417 = vadd.f32 %v4339, %v4416
      %v4418 = vpop.f32.mrb[0].mxu0
      %4419 = vmatprep.mubr.f32.mxu0 0.0
      %4420 = vmatmul.mubr.f32.gmra.mrb[0].mxu0 %v4287
      %v4421 = vpop.f32.mrb[0].mxu0
      %v4422 = vadd.f32 %v4339, %v4421
      %v4423 = vpop.f32.mrb[0].mxu0
      %4424 = vmatprep.mubr.f32.mxu0 0.0
      %4425 = vmatmul.mubr.f32.gmra.mrb[0].mxu0 %v4288
      %v4426 = vpop.f32.mrb[0].mxu0
      %v4427 = vadd.f32 %v4339, %v4426
      %v4428 = vpop.f32.mrb[0].mxu0
      %4429 = vmatprep.mubr.f32.mxu0 0.0
      %4430 = vmatmul.mubr.f32.gmra.mrb[0].mxu0 %v4289
      %v4431 = vpop.f32.mrb[0].mxu0
      %v4432 = vadd.f32 %v4339, %v4431
      %v4433 = vpop.f32.mrb[0].mxu0
      %4434 = vmatprep.mubr.f32.mxu0 0.0
      %4435 = vmatmul.mubr.f32.gmra.mrb[0].mxu0 %v4290
      %v4436 = vpop.f32.mrb[0].mxu0
      %v4437 = vadd.f32 %v4339, %v4436
      %v4438 = vpop.f32.mrb[0].mxu0
      %4439 = vmatprep.mubr.f32.mxu0 0.0
      %4440 = vmatmul.mubr.f32.gmra.mrb[0].mxu0 %v4291
      %v4441 = vpop.f32.mrb[0].mxu0
      %v4442 = vadd.f32 %v4339, %v4441
      %v4443 = vpop.f32.mrb[0].mxu0
      %4444 = vmatprep.mubr.f32.mxu0 0.0
      %4445 = vmatmul.mubr.f32.gmra.mrb[0].mxu0 %v4292
      %v4446 = vpop.f32.mrb[0].mxu0
      %v4447 = vadd.f32 %v4339, %v4446
      %v4448 = vpop.f32.mrb[0].mxu0
      %4449 = vmatprep.mubr.f32.mxu0 0.0
      %4450 = vmatmul.mubr.f32.gmra.mrb[0].mxu0 %v4293
      %v4451 = vpop.f32.mrb[0].mxu0
      %v4452 = vadd.f32 %v4339, %v4451
      %v4453 = vpop.f32.mrb[0].mxu0
      %4454 = vmatprep.mubr.f32.mxu0 0.0
      %4455 = vmatmul.mubr.f32.gmra.mrb[0].mxu0 %v4294
      %v4456 = vpop.f32.mrb[0].mxu0
      %v4457 = vadd.f32 %v4339, %v4456
      %v4458 = vpop.f32.mrb[0].mxu0
      %4459 = vmatprep.mubr.f32.mxu0 0.0
      %4460 = vmatmul.mubr.f32.gmra.mrb[0].mxu0 %v4295
      %v4461 = vpop.f32.mrb[0].mxu0
      %v4462 = vadd.f32 %v4339, %v4461
      %v4463 = vpop.f32.mrb[0].mxu0
      %4464 = vmatprep.mubr.f32.mxu0 0.0
      %4465 = vmatmul.mubr.f32.gmra.mrb[0].mxu0 %v4296
      %v4466 = vpop.f32.mrb[0].mxu0
      %v4467 = vadd.f32 %v4339, %v4466
      %v4468 = vpop.f32.mrb[0].mxu0
      %4469 = vmatprep.mubr.f32.mxu0 0.0
      %4470 = vmatmul.mubr.f32.gmra.mrb[0].mxu0 %v4297
      %v4471 = vpop.f32.mrb[0].mxu0
      %v4472 = vadd.f32 %v4339, %v4471
      %v4473 = vpop.f32.mrb[0].mxu0
      %4474 = vmatprep.mubr.f32.mxu0 0.0
      %4475 = vmatmul.mubr.f32.gmra.mrb[0].mxu0 %v4298
      %v4476 = vpop.f32.mrb[0].mxu0
      %v4477 = vadd.f32 %v4339, %v4476
      %v4478 = vpop.f32.mrb[0].mxu0
      %4479 = vmatprep.mubr.f32.mxu0 0.0
      %4480 = vmatmul.mubr.f32.gmra.mrb[0].mxu0 %v4299
      %v4481 = vpop.f32.mrb[0].mxu0
      %v4482 = vadd.f32 %v4339, %v4481
      %v4483 = vpop.f32.mrb[0].mxu0
      %4484 = vmatprep.mubr.f32.mxu0 0.0
      %4485 = vmatmul.mubr.f32.gmra.mrb[0].mxu0 %v4300
      %v4486 = vpop.f32.mrb[0].mxu0
      %v4487 = vadd.f32 %v4339, %v4486
      %v4488 = vpop.f32.mrb[0].mxu0
      %4489 = vmatprep.mubr.f32.mxu0 0.0
      %4490 = vmatmul.mubr.f32.gmra.mrb[0].mxu0 %v4301
      %v4491 = vpop.f32.mrb[0].mxu0
      %v4492 = vadd.f32 %v4339, %v4491
      %v4493 = vpop.f32.mrb[0].mxu0
      %4494 = vmatprep.mubr.f32.mxu0 0.0
      %4495 = vmatmul.mubr.f32.gmra.mrb[0].mxu0 %v4302
      %v4496 = vpop.f32.mrb[0].mxu0
      %v4497 = vadd.f32 %v4339, %v4496
      %v4498 = vpop.f32.mrb[0].mxu0
      %4499 = vmatprep.mubr.f32.mxu0 0.0
      %4500 = vmatmul.mubr.f32.gmra.mrb[0].mxu0 %v4303
      %v4501 = vpop.f32.mrb[0].mxu0
      %v4502 = vadd.f32 %v4339, %v4501
      %v4503 = vpop.f32.mrb[0].mxu0
      %4504 = vmatprep.mubr.f32.mxu0 0.0
      %4505 = vmatmul.mubr.f32.gmra.mrb[0].mxu0 %v4304
      %v4506 = vpop.f32.mrb[0].mxu0
      %v4507 = vadd.f32 %v4339, %v4506
      %v4508 = vpop.f32.mrb[0].mxu0
      %4509 = vmatprep.mubr.f32.mxu0 0.0
      %4510 = vmatmul.mubr.f32.gmra.mrb[0].mxu0 %v4305
      %v4511 = vpop.f32.mrb[0].mxu0
      %v4512 = vadd.f32 %v4339, %v4511
      %v4513 = vpop.f32.mrb[0].mxu0
      %4514 = vmatprep.mubr.f32.mxu0 0.0
      %4515 = vmatmul.mubr.f32.gmra.mrb[0].mxu0 %v4306
      %v4516 = vpop.f32.mrb[0].mxu0
      %v4517 = vadd.f32 %v4339, %v4516
      %v4518 = vpop.f32.mrb[0].mxu0
      %4519 = vmatprep.mubr.f32.mxu0 0.0
      %4520 = vmatmul.mubr.f32.gmra.mrb[0].mxu0 %v4307
      %v4521 = vpop.f32.mrb[0].mxu0
      %v4522 = vadd.f32 %v4339, %v4521
      %v4523 = vpop.f32.mrb[0].mxu0
      %4524 = vmatprep.mubr.f32.mxu0 0.0
      %4525 = vmatmul.mubr.f32.gmra.mrb[0].mxu0 %v4308
      %v4526 = vpop.f32.mrb[0].mxu0
      %v4527 = vadd.f32 %v4339, %v4526
      %v4528 = vpop.f32.mrb[0].mxu0
      %4529 = vmatprep.mubr.f32.mxu0 0.0
      %4530 = vmatmul.mubr.f32.gmra.mrb[0].mxu0 %v4309
      %v4531 = vpop.f32.mrb[0].mxu0
      %v4532 = vadd.f32 %v4339, %v4531
      %v4533 = vpop.f32.mrb[0].mxu0
      %4534 = vmatprep.mubr.f32.mxu0 0.0
      %4535 = vmatmul.mubr.f32.gmra.mrb[0].mxu0 %v4310
      %v4536 = vpop.f32.mrb[0].mxu0
      %v4537 = vadd.f32 %v4339, %v4536
      %v4538 = vpop.f32.mrb[0].mxu0
      %4539 = vmatprep.mubr.f32.mxu0 0.0
      %4540 = vmatmul.mubr.f32.gmra.mrb[0].mxu0 %v4311
      %v4541 = vpop.f32.mrb[0].mxu0
      %v4542 = vadd.f32 %v4339, %v4541
      %v4543 = vpop.f32.mrb[0].mxu0
      %4544 = vmatprep.mubr.f32.mxu0 0.0
      %4545 = vmatmul.mubr.f32.gmra.mrb[0].mxu0 %v4312
      %v4546 = vpop.f32.mrb[0].mxu0
      %v4547 = vadd.f32 %v4339, %v4546
      %v4548 = vpop.f32.mrb[0].mxu0
      %4549 = vmatprep.mubr.f32.mxu0 0.0
      %4550 = vmatmul.mubr.f32.gmra.mrb[0].mxu0 %v4313
      %v4551 = vpop.f32.mrb[0].mxu0
      %v4552 = vadd.f32 %v4339, %v4551
      %v4553 = vpop.f32.mrb[0].mxu0
      %4554 = vmatprep.mubr.f32.mxu0 0.0
      %4555 = vmatmul.mubr.f32.gmra.mrb[0].mxu0 %v4314
      %v4556 = vpop.f32.mrb[0].mxu0
      %v4557 = vadd.f32 %v4339, %v4556
      %v4558 = vpop.f32.mrb[0].mxu0
      %4559 = vmatprep.mubr.f32.mxu0 0.0
      %4560 = vmatmul.mubr.f32.gmra.mrb[0].mxu0 %v4315
      %v4561 = vpop.f32.mrb[0].mxu0
      %v4562 = vadd.f32 %v4339, %v4561
      %v4563 = vpop.f32.mrb[0].mxu0
      %4564 = vmatprep.mubr.f32.mxu0 0.0
      %4565 = vmatmul.mubr.f32.gmra.mrb[0].mxu0 %v4316
      %v4566 = vpop.f32.mrb[0].mxu0
      %v4567 = vadd.f32 %v4339, %v4566
      %v4568 = vpop.f32.mrb[0].mxu0
      %4569 = vmatprep.mubr.f32.mxu0 0.0
      %4570 = vmatmul.mubr.f32.gmra.mrb[0].mxu0 %v4317
      %v4571 = vpop.f32.mrb[0].mxu0
      %v4572 = vadd.f32 %v4339, %v4571
      %v4573 = vpop.f32.mrb[0].mxu0
      %4574 = vmatprep.mubr.f32.mxu0 0.0
      %4575 = vmatmul.mubr.f32.gmra.mrb[0].mxu0 %v4318
      %v4576 = vpop.f32.mrb[0].mxu0
      %v4577 = vadd.f32 %v4339, %v4576
      %v4578 = vpop.f32.mrb[0].mxu0
      %4579 = vmatprep.mubr.f32.mxu0 0.0
      %4580 = vmatmul.mubr.f32.gmra.mrb[0].mxu0 %v4319
      %v4581 = vpop.f32.mrb[0].mxu0
      %v4582 = vadd.f32 %v4339, %v4581
      %v4583 = vpop.f32.mrb[0].mxu0
      %4584 = vmatprep.mubr.f32.mxu0 0.0
      %4585 = vmatmul.mubr.f32.gmra.mrb[0].mxu0 %v4320
      %v4586 = vpop.f32.mrb[0].mxu0
      %v4587 = vadd.f32 %v4339, %v4586
      %v4588 = vpop.f32.mrb[0].mxu0
      %4589 = vmatprep.mubr.f32.mxu0 0.0
      %4590 = vmatmul.mubr.f32.gmra.mrb[0].mxu0 %v4321
      %v4591 = vpop.f32.mrb[0].mxu0
      %v4592 = vadd.f32 %v4339, %v4591
      %v4593 = vpop.f32.mrb[0].mxu0
      %4594 = vmatprep.mubr.f32.mxu0 0.0
      %4595 = vmatmul.mubr.f32.gmra.mrb[0].mxu0 %v4322
      %v4596 = vpop.f32.mrb[0].mxu0
      %v4597 = vadd.f32 %v4339, %v4596
      %v4598 = vpop.f32.mrb[0].mxu0
      %4599 = vdwg.mxu0
      %v4600 = vmax.f32 %v4407, 0.0
      %v4601 = vmax.f32 %v4412, 0.0
      %v4602 = vmax.f32 %v4417, 0.0
      %v4603 = vmax.f32 %v4422, 0.0
      %v4604 = vmax.f32 %v4427, 0.0
      %v4605 = vmax.f32 %v4432, 0.0
      %v4606 = vmax.f32 %v4437, 0.0
      %v4607 = vmax.f32 %v4442, 0.0
      %v4608 = vmax.f32 %v4447, 0.0
      %v4609 = vmax.f32 %v4452, 0.0
      %v4610 = vmax.f32 %v4457, 0.0
      %v4611 = vmax.f32 %v4462, 0.0
      %v4612 = vmax.f32 %v4467, 0.0
      %v4613 = vmax.f32 %v4472, 0.0
      %v4614 = vmax.f32 %v4477, 0.0
      %v4615 = vmax.f32 %v4482, 0.0
      %v4616 = vmax.f32 %v4487, 0.0
      %v4617 = vmax.f32 %v4492, 0.0
      %v4618 = vmax.f32 %v4497, 0.0
      %v4619 = vmax.f32 %v4502, 0.0
      %v4620 = vmax.f32 %v4507, 0.0
      %v4621 = vmax.f32 %v4512, 0.0
      %v4622 = vmax.f32 %v4517, 0.0
      %v4623 = vmax.f32 %v4522, 0.0
      %v4624 = vmax.f32 %v4527, 0.0
      %v4625 = vmax.f32 %v4532, 0.0
      %v4626 = vmax.f32 %v4537, 0.0
      %v4627 = vmax.f32 %v4542, 0.0
      %v4628 = vmax.f32 %v4547, 0.0
      %v4629 = vmax.f32 %v4552, 0.0
      %v4630 = vmax.f32 %v4557, 0.0
      %v4631 = vmax.f32 %v4562, 0.0
      %v4632 = vmax.f32 %v4567, 0.0
      %v4633 = vmax.f32 %v4572, 0.0
      %v4634 = vmax.f32 %v4577, 0.0
      %v4635 = vmax.f32 %v4582, 0.0
      %v4636 = vmax.f32 %v4587, 0.0
      %v4637 = vmax.f32 %v4592, 0.0
      %v4638 = vmax.f32 %v4597, 0.0
      %v4639 = vld [vmem:[%s2 + $0x200] sm:$0xff]
      %v4640 = vld [vmem:[%s2 + $0x208] sm:$0xff]
      %v4641 = vld [vmem:[%s2 + $0x210] sm:$0xff]
      %v4642 = vld [vmem:[%s2 + $0x218] sm:$0xff]
      %v4643 = vld [vmem:[%s2 + $0x220] sm:$0xff]
      %v4644 = vld [vmem:[%s2 + $0x228] sm:$0xff]
      %v4645 = vld [vmem:[%s2 + $0x230] sm:$0xff]
      %v4646 = vld [vmem:[%s2 + $0x238] sm:$0xff]
      %v4647 = vld [vmem:[%s2 + $0x240] sm:$0xff]
      %v4648 = vld [vmem:[%s2 + $0x248] sm:$0xff]
      %v4649 = vld [vmem:[%s2 + $0x250] sm:$0xff]
      %v4650 = vld [vmem:[%s2 + $0x258] sm:$0xff]
      %v4651 = vld [vmem:[%s2 + $0x260] sm:$0xff]
      %v4652 = vld [vmem:[%s2 + $0x268] sm:$0xff]
      %v4653 = vld [vmem:[%s2 + $0x270] sm:$0xff]
      %v4654 = vld [vmem:[%s2 + $0x278] sm:$0xff]
      %v4655 = vld [vmem:[%s4 + $0x5] ss:$0 sm:$0xff]
      %4656 = vmatprep.subr.mxu0 0.0
      %4657 = vmatpush1.msra.mxu0 %v4639
      %4658 = vmatprep.subr.mxu0 0.0
      %4659 = vmatpush1.msra.mxu0 %v4640
      %4660 = vmatprep.subr.mxu0 0.0
      %4661 = vmatpush1.msra.mxu0 %v4641
      %4662 = vmatprep.subr.mxu0 0.0
      %4663 = vmatpush1.msra.mxu0 %v4642
      %4664 = vmatprep.subr.mxu0 0.0
      %4665 = vmatpush1.msra.mxu0 %v4643
      %4666 = vmatprep.subr.mxu0 0.0
      %4667 = vmatpush1.msra.mxu0 %v4644
      %4668 = vmatprep.subr.mxu0 0.0
      %4669 = vmatpush1.msra.mxu0 %v4645
      %4670 = vmatprep.subr.mxu0 0.0
      %4671 = vmatpush1.msra.mxu0 %v4646
      %4672 = vmatprep.subr.mxu0 0.0
      %4673 = vmatpush1.msra.mxu0 %v4647
      %4674 = vmatprep.subr.mxu0 0.0
      %4675 = vmatpush1.msra.mxu0 %v4648
      %4676 = vmatprep.subr.mxu0 0.0
      %4677 = vmatpush1.msra.mxu0 %v4649
      %4678 = vmatprep.subr.mxu0 0.0
      %4679 = vmatpush1.msra.mxu0 %v4650
      %4680 = vmatprep.subr.mxu0 0.0
      %4681 = vmatpush1.msra.mxu0 %v4651
      %4682 = vmatprep.subr.mxu0 0.0
      %4683 = vmatpush1.msra.mxu0 %v4652
      %4684 = vmatprep.subr.mxu0 0.0
      %4685 = vmatpush1.msra.mxu0 %v4653
      %4686 = vmatprep.subr.mxu0 0.0
      %4687 = vmatpush1.msra.mxu0 %v4654
      %4688 = vmatprep.subr.mxu0 0.0
      %4689 = vmatpush1.msra.mxu0 0.0
      %4690 = vmatprep.subr.mxu0 0.0
      %4691 = vmatpush1.msra.mxu0 0.0
      %4692 = vmatprep.subr.mxu0 0.0
      %4693 = vmatpush1.msra.mxu0 0.0
      %4694 = vmatprep.subr.mxu0 0.0
      %4695 = vmatpush1.msra.mxu0 0.0
      %4696 = vmatprep.subr.mxu0 0.0
      %4697 = vmatpush1.msra.mxu0 0.0
      %4698 = vmatprep.subr.mxu0 0.0
      %4699 = vmatpush1.msra.mxu0 0.0
      %4700 = vmatprep.subr.mxu0 0.0
      %4701 = vmatpush1.msra.mxu0 0.0
      %4702 = vmatprep.subr.mxu0 0.0
      %4703 = vmatpush1.msra.mxu0 0.0
      %4704 = vmatprep.subr.mxu0 0.0
      %4705 = vmatpush1.msra.mxu0 0.0
      %4706 = vmatprep.subr.mxu0 0.0
      %4707 = vmatpush1.msra.mxu0 0.0
      %4708 = vmatprep.subr.mxu0 0.0
      %4709 = vmatpush1.msra.mxu0 0.0
      %4710 = vmatprep.subr.mxu0 0.0
      %4711 = vmatpush1.msra.mxu0 0.0
      %4712 = vmatprep.subr.mxu0 0.0
      %4713 = vmatpush1.msra.mxu0 0.0
      %4714 = vmatprep.subr.mxu0 0.0
      %4715 = vmatpush1.msra.mxu0 0.0
      %4716 = vmatprep.subr.mxu0 0.0
      %4717 = vmatpush1.msra.mxu0 0.0
      %4718 = vmatprep.subr.mxu0 0.0
      %4719 = vmatpush1.msra.mxu0 0.0
      %4720 = vmatprep.mubr.f32.mxu0 0.0
      %4721 = vmatmul.mubr.f32.gmra.mrb[0].mxu0 %v4600
      %v4722 = vpop.f32.mrb[0].mxu0
      %v4723 = vadd.f32 %v4655, %v4722
      %v4724 = vpop.f32.mrb[0].mxu0
      %4725 = vmatprep.mubr.f32.mxu0 0.0
      %4726 = vmatmul.mubr.f32.gmra.mrb[0].mxu0 %v4601
      %v4727 = vpop.f32.mrb[0].mxu0
      %v4728 = vadd.f32 %v4655, %v4727
      %v4729 = vpop.f32.mrb[0].mxu0
      %4730 = vmatprep.mubr.f32.mxu0 0.0
      %4731 = vmatmul.mubr.f32.gmra.mrb[0].mxu0 %v4602
      %v4732 = vpop.f32.mrb[0].mxu0
      %v4733 = vadd.f32 %v4655, %v4732
      %v4734 = vpop.f32.mrb[0].mxu0
      %4735 = vmatprep.mubr.f32.mxu0 0.0
      %4736 = vmatmul.mubr.f32.gmra.mrb[0].mxu0 %v4603
      %v4737 = vpop.f32.mrb[0].mxu0
      %v4738 = vadd.f32 %v4655, %v4737
      %v4739 = vpop.f32.mrb[0].mxu0
      %4740 = vmatprep.mubr.f32.mxu0 0.0
      %4741 = vmatmul.mubr.f32.gmra.mrb[0].mxu0 %v4604
      %v4742 = vpop.f32.mrb[0].mxu0
      %v4743 = vadd.f32 %v4655, %v4742
      %v4744 = vpop.f32.mrb[0].mxu0
      %4745 = vmatprep.mubr.f32.mxu0 0.0
      %4746 = vmatmul.mubr.f32.gmra.mrb[0].mxu0 %v4605
      %v4747 = vpop.f32.mrb[0].mxu0
      %v4748 = vadd.f32 %v4655, %v4747
      %v4749 = vpop.f32.mrb[0].mxu0
      %4750 = vmatprep.mubr.f32.mxu0 0.0
      %4751 = vmatmul.mubr.f32.gmra.mrb[0].mxu0 %v4606
      %v4752 = vpop.f32.mrb[0].mxu0
      %v4753 = vadd.f32 %v4655, %v4752
      %v4754 = vpop.f32.mrb[0].mxu0
      %4755 = vmatprep.mubr.f32.mxu0 0.0
      %4756 = vmatmul.mubr.f32.gmra.mrb[0].mxu0 %v4607
      %v4757 = vpop.f32.mrb[0].mxu0
      %v4758 = vadd.f32 %v4655, %v4757
      %v4759 = vpop.f32.mrb[0].mxu0
      %4760 = vmatprep.mubr.f32.mxu0 0.0
      %4761 = vmatmul.mubr.f32.gmra.mrb[0].mxu0 %v4608
      %v4762 = vpop.f32.mrb[0].mxu0
      %v4763 = vadd.f32 %v4655, %v4762
      %v4764 = vpop.f32.mrb[0].mxu0
      %4765 = vmatprep.mubr.f32.mxu0 0.0
      %4766 = vmatmul.mubr.f32.gmra.mrb[0].mxu0 %v4609
      %v4767 = vpop.f32.mrb[0].mxu0
      %v4768 = vadd.f32 %v4655, %v4767
      %v4769 = vpop.f32.mrb[0].mxu0
      %4770 = vmatprep.mubr.f32.mxu0 0.0
      %4771 = vmatmul.mubr.f32.gmra.mrb[0].mxu0 %v4610
      %v4772 = vpop.f32.mrb[0].mxu0
      %v4773 = vadd.f32 %v4655, %v4772
      %v4774 = vpop.f32.mrb[0].mxu0
      %4775 = vmatprep.mubr.f32.mxu0 0.0
      %4776 = vmatmul.mubr.f32.gmra.mrb[0].mxu0 %v4611
      %v4777 = vpop.f32.mrb[0].mxu0
      %v4778 = vadd.f32 %v4655, %v4777
      %v4779 = vpop.f32.mrb[0].mxu0
      %4780 = vmatprep.mubr.f32.mxu0 0.0
      %4781 = vmatmul.mubr.f32.gmra.mrb[0].mxu0 %v4612
      %v4782 = vpop.f32.mrb[0].mxu0
      %v4783 = vadd.f32 %v4655, %v4782
      %v4784 = vpop.f32.mrb[0].mxu0
      %4785 = vmatprep.mubr.f32.mxu0 0.0
      %4786 = vmatmul.mubr.f32.gmra.mrb[0].mxu0 %v4613
      %v4787 = vpop.f32.mrb[0].mxu0
      %v4788 = vadd.f32 %v4655, %v4787
      %v4789 = vpop.f32.mrb[0].mxu0
      %4790 = vmatprep.mubr.f32.mxu0 0.0
      %4791 = vmatmul.mubr.f32.gmra.mrb[0].mxu0 %v4614
      %v4792 = vpop.f32.mrb[0].mxu0
      %v4793 = vadd.f32 %v4655, %v4792
      %v4794 = vpop.f32.mrb[0].mxu0
      %4795 = vmatprep.mubr.f32.mxu0 0.0
      %4796 = vmatmul.mubr.f32.gmra.mrb[0].mxu0 %v4615
      %v4797 = vpop.f32.mrb[0].mxu0
      %v4798 = vadd.f32 %v4655, %v4797
      %v4799 = vpop.f32.mrb[0].mxu0
      %4800 = vmatprep.mubr.f32.mxu0 0.0
      %4801 = vmatmul.mubr.f32.gmra.mrb[0].mxu0 %v4616
      %v4802 = vpop.f32.mrb[0].mxu0
      %v4803 = vadd.f32 %v4655, %v4802
      %v4804 = vpop.f32.mrb[0].mxu0
      %4805 = vmatprep.mubr.f32.mxu0 0.0
      %4806 = vmatmul.mubr.f32.gmra.mrb[0].mxu0 %v4617
      %v4807 = vpop.f32.mrb[0].mxu0
      %v4808 = vadd.f32 %v4655, %v4807
      %v4809 = vpop.f32.mrb[0].mxu0
      %4810 = vmatprep.mubr.f32.mxu0 0.0
      %4811 = vmatmul.mubr.f32.gmra.mrb[0].mxu0 %v4618
      %v4812 = vpop.f32.mrb[0].mxu0
      %v4813 = vadd.f32 %v4655, %v4812
      %v4814 = vpop.f32.mrb[0].mxu0
      %4815 = vmatprep.mubr.f32.mxu0 0.0
      %4816 = vmatmul.mubr.f32.gmra.mrb[0].mxu0 %v4619
      %v4817 = vpop.f32.mrb[0].mxu0
      %v4818 = vadd.f32 %v4655, %v4817
      %v4819 = vpop.f32.mrb[0].mxu0
      %4820 = vmatprep.mubr.f32.mxu0 0.0
      %4821 = vmatmul.mubr.f32.gmra.mrb[0].mxu0 %v4620
      %v4822 = vpop.f32.mrb[0].mxu0
      %v4823 = vadd.f32 %v4655, %v4822
      %v4824 = vpop.f32.mrb[0].mxu0
      %4825 = vmatprep.mubr.f32.mxu0 0.0
      %4826 = vmatmul.mubr.f32.gmra.mrb[0].mxu0 %v4621
      %v4827 = vpop.f32.mrb[0].mxu0
      %v4828 = vadd.f32 %v4655, %v4827
      %v4829 = vpop.f32.mrb[0].mxu0
      %4830 = vmatprep.mubr.f32.mxu0 0.0
      %4831 = vmatmul.mubr.f32.gmra.mrb[0].mxu0 %v4622
      %v4832 = vpop.f32.mrb[0].mxu0
      %v4833 = vadd.f32 %v4655, %v4832
      %v4834 = vpop.f32.mrb[0].mxu0
      %4835 = vmatprep.mubr.f32.mxu0 0.0
      %4836 = vmatmul.mubr.f32.gmra.mrb[0].mxu0 %v4623
      %v4837 = vpop.f32.mrb[0].mxu0
      %v4838 = vadd.f32 %v4655, %v4837
      %v4839 = vpop.f32.mrb[0].mxu0
      %4840 = vmatprep.mubr.f32.mxu0 0.0
      %4841 = vmatmul.mubr.f32.gmra.mrb[0].mxu0 %v4624
      %v4842 = vpop.f32.mrb[0].mxu0
      %v4843 = vadd.f32 %v4655, %v4842
      %v4844 = vpop.f32.mrb[0].mxu0
      %4845 = vmatprep.mubr.f32.mxu0 0.0
      %4846 = vmatmul.mubr.f32.gmra.mrb[0].mxu0 %v4625
      %v4847 = vpop.f32.mrb[0].mxu0
      %v4848 = vadd.f32 %v4655, %v4847
      %v4849 = vpop.f32.mrb[0].mxu0
      %4850 = vmatprep.mubr.f32.mxu0 0.0
      %4851 = vmatmul.mubr.f32.gmra.mrb[0].mxu0 %v4626
      %v4852 = vpop.f32.mrb[0].mxu0
      %v4853 = vadd.f32 %v4655, %v4852
      %v4854 = vpop.f32.mrb[0].mxu0
      %4855 = vmatprep.mubr.f32.mxu0 0.0
      %4856 = vmatmul.mubr.f32.gmra.mrb[0].mxu0 %v4627
      %v4857 = vpop.f32.mrb[0].mxu0
      %v4858 = vadd.f32 %v4655, %v4857
      %v4859 = vpop.f32.mrb[0].mxu0
      %4860 = vmatprep.mubr.f32.mxu0 0.0
      %4861 = vmatmul.mubr.f32.gmra.mrb[0].mxu0 %v4628
      %v4862 = vpop.f32.mrb[0].mxu0
      %v4863 = vadd.f32 %v4655, %v4862
      %v4864 = vpop.f32.mrb[0].mxu0
      %4865 = vmatprep.mubr.f32.mxu0 0.0
      %4866 = vmatmul.mubr.f32.gmra.mrb[0].mxu0 %v4629
      %v4867 = vpop.f32.mrb[0].mxu0
      %v4868 = vadd.f32 %v4655, %v4867
      %v4869 = vpop.f32.mrb[0].mxu0
      %4870 = vmatprep.mubr.f32.mxu0 0.0
      %4871 = vmatmul.mubr.f32.gmra.mrb[0].mxu0 %v4630
      %v4872 = vpop.f32.mrb[0].mxu0
      %v4873 = vadd.f32 %v4655, %v4872
      %v4874 = vpop.f32.mrb[0].mxu0
      %4875 = vmatprep.mubr.f32.mxu0 0.0
      %4876 = vmatmul.mubr.f32.gmra.mrb[0].mxu0 %v4631
      %v4877 = vpop.f32.mrb[0].mxu0
      %v4878 = vadd.f32 %v4655, %v4877
      %v4879 = vpop.f32.mrb[0].mxu0
      %4880 = vmatprep.mubr.f32.mxu0 0.0
      %4881 = vmatmul.mubr.f32.gmra.mrb[0].mxu0 %v4632
      %v4882 = vpop.f32.mrb[0].mxu0
      %v4883 = vadd.f32 %v4655, %v4882
      %v4884 = vpop.f32.mrb[0].mxu0
      %4885 = vmatprep.mubr.f32.mxu0 0.0
      %4886 = vmatmul.mubr.f32.gmra.mrb[0].mxu0 %v4633
      %v4887 = vpop.f32.mrb[0].mxu0
      %v4888 = vadd.f32 %v4655, %v4887
      %v4889 = vpop.f32.mrb[0].mxu0
      %4890 = vmatprep.mubr.f32.mxu0 0.0
      %4891 = vmatmul.mubr.f32.gmra.mrb[0].mxu0 %v4634
      %v4892 = vpop.f32.mrb[0].mxu0
      %v4893 = vadd.f32 %v4655, %v4892
      %v4894 = vpop.f32.mrb[0].mxu0
      %4895 = vmatprep.mubr.f32.mxu0 0.0
      %4896 = vmatmul.mubr.f32.gmra.mrb[0].mxu0 %v4635
      %v4897 = vpop.f32.mrb[0].mxu0
      %v4898 = vadd.f32 %v4655, %v4897
      %v4899 = vpop.f32.mrb[0].mxu0
      %4900 = vmatprep.mubr.f32.mxu0 0.0
      %4901 = vmatmul.mubr.f32.gmra.mrb[0].mxu0 %v4636
      %v4902 = vpop.f32.mrb[0].mxu0
      %v4903 = vadd.f32 %v4655, %v4902
      %v4904 = vpop.f32.mrb[0].mxu0
      %4905 = vmatprep.mubr.f32.mxu0 0.0
      %4906 = vmatmul.mubr.f32.gmra.mrb[0].mxu0 %v4637
      %v4907 = vpop.f32.mrb[0].mxu0
      %v4908 = vadd.f32 %v4655, %v4907
      %v4909 = vpop.f32.mrb[0].mxu0
      %4910 = vmatprep.mubr.f32.mxu0 0.0
      %4911 = vmatmul.mubr.f32.gmra.mrb[0].mxu0 %v4638
      %v4912 = vpop.f32.mrb[0].mxu0
      %v4913 = vadd.f32 %v4655, %v4912
      %v4914 = vpop.f32.mrb[0].mxu0
      %4915 = vdwg.mxu0
      %v4916 = vmax.f32 %v4723, 0.0
      %v4917 = vmax.f32 %v4728, 0.0
      %v4918 = vmax.f32 %v4733, 0.0
      %v4919 = vmax.f32 %v4738, 0.0
      %v4920 = vmax.f32 %v4743, 0.0
      %v4921 = vmax.f32 %v4748, 0.0
      %v4922 = vmax.f32 %v4753, 0.0
      %v4923 = vmax.f32 %v4758, 0.0
      %v4924 = vmax.f32 %v4763, 0.0
      %v4925 = vmax.f32 %v4768, 0.0
      %v4926 = vmax.f32 %v4773, 0.0
      %v4927 = vmax.f32 %v4778, 0.0
      %v4928 = vmax.f32 %v4783, 0.0
      %v4929 = vmax.f32 %v4788, 0.0
      %v4930 = vmax.f32 %v4793, 0.0
      %v4931 = vmax.f32 %v4798, 0.0
      %v4932 = vmax.f32 %v4803, 0.0
      %v4933 = vmax.f32 %v4808, 0.0
      %v4934 = vmax.f32 %v4813, 0.0
      %v4935 = vmax.f32 %v4818, 0.0
      %v4936 = vmax.f32 %v4823, 0.0
      %v4937 = vmax.f32 %v4828, 0.0
      %v4938 = vmax.f32 %v4833, 0.0
      %v4939 = vmax.f32 %v4838, 0.0
      %v4940 = vmax.f32 %v4843, 0.0
      %v4941 = vmax.f32 %v4848, 0.0
      %v4942 = vmax.f32 %v4853, 0.0
      %v4943 = vmax.f32 %v4858, 0.0
      %v4944 = vmax.f32 %v4863, 0.0
      %v4945 = vmax.f32 %v4868, 0.0
      %v4946 = vmax.f32 %v4873, 0.0
      %v4947 = vmax.f32 %v4878, 0.0
      %v4948 = vmax.f32 %v4883, 0.0
      %v4949 = vmax.f32 %v4888, 0.0
      %v4950 = vmax.f32 %v4893, 0.0
      %v4951 = vmax.f32 %v4898, 0.0
      %v4952 = vmax.f32 %v4903, 0.0
      %v4953 = vmax.f32 %v4908, 0.0
      %v4954 = vmax.f32 %v4913, 0.0
      %v4955 = vld [vmem:[%s2 + $0x280] sm:$0xff]
      %v4956 = vld [vmem:[%s2 + $0x288] sm:$0xff]
      %v4957 = vld [vmem:[%s2 + $0x290] sm:$0xff]
      %v4958 = vld [vmem:[%s2 + $0x298] sm:$0xff]
      %v4959 = vld [vmem:[%s2 + $0x2a0] sm:$0xff]
      %v4960 = vld [vmem:[%s2 + $0x2a8] sm:$0xff]
      %v4961 = vld [vmem:[%s2 + $0x2b0] sm:$0xff]
      %v4962 = vld [vmem:[%s2 + $0x2b8] sm:$0xff]
      %v4963 = vld [vmem:[%s2 + $0x2c0] sm:$0xff]
      %v4964 = vld [vmem:[%s2 + $0x2c8] sm:$0xff]
      %v4965 = vld [vmem:[%s2 + $0x2d0] sm:$0xff]
      %v4966 = vld [vmem:[%s2 + $0x2d8] sm:$0xff]
      %v4967 = vld [vmem:[%s2 + $0x2e0] sm:$0xff]
      %v4968 = vld [vmem:[%s2 + $0x2e8] sm:$0xff]
      %v4969 = vld [vmem:[%s2 + $0x2f0] sm:$0xff]
      %v4970 = vld [vmem:[%s2 + $0x2f8] sm:$0xff]
      %v4971 = vld [vmem:[%s4 + $0x6] ss:$0 sm:$0xff]
      %4972 = vmatprep.subr.mxu0 0.0
      %4973 = vmatpush1.msra.mxu0 %v4955
      %4974 = vmatprep.subr.mxu0 0.0
      %4975 = vmatpush1.msra.mxu0 %v4956
      %4976 = vmatprep.subr.mxu0 0.0
      %4977 = vmatpush1.msra.mxu0 %v4957
      %4978 = vmatprep.subr.mxu0 0.0
      %4979 = vmatpush1.msra.mxu0 %v4958
      %4980 = vmatprep.subr.mxu0 0.0
      %4981 = vmatpush1.msra.mxu0 %v4959
      %4982 = vmatprep.subr.mxu0 0.0
      %4983 = vmatpush1.msra.mxu0 %v4960
      %4984 = vmatprep.subr.mxu0 0.0
      %4985 = vmatpush1.msra.mxu0 %v4961
      %4986 = vmatprep.subr.mxu0 0.0
      %4987 = vmatpush1.msra.mxu0 %v4962
      %4988 = vmatprep.subr.mxu0 0.0
      %4989 = vmatpush1.msra.mxu0 %v4963
      %4990 = vmatprep.subr.mxu0 0.0
      %4991 = vmatpush1.msra.mxu0 %v4964
      %4992 = vmatprep.subr.mxu0 0.0
      %4993 = vmatpush1.msra.mxu0 %v4965
      %4994 = vmatprep.subr.mxu0 0.0
      %4995 = vmatpush1.msra.mxu0 %v4966
      %4996 = vmatprep.subr.mxu0 0.0
      %4997 = vmatpush1.msra.mxu0 %v4967
      %4998 = vmatprep.subr.mxu0 0.0
      %4999 = vmatpush1.msra.mxu0 %v4968
      %5000 = vmatprep.subr.mxu0 0.0
      %5001 = vmatpush1.msra.mxu0 %v4969
      %5002 = vmatprep.subr.mxu0 0.0
      %5003 = vmatpush1.msra.mxu0 %v4970
      %5004 = vmatprep.subr.mxu0 0.0
      %5005 = vmatpush1.msra.mxu0 0.0
      %5006 = vmatprep.subr.mxu0 0.0
      %5007 = vmatpush1.msra.mxu0 0.0
      %5008 = vmatprep.subr.mxu0 0.0
      %5009 = vmatpush1.msra.mxu0 0.0
      %5010 = vmatprep.subr.mxu0 0.0
      %5011 = vmatpush1.msra.mxu0 0.0
      %5012 = vmatprep.subr.mxu0 0.0
      %5013 = vmatpush1.msra.mxu0 0.0
      %5014 = vmatprep.subr.mxu0 0.0
      %5015 = vmatpush1.msra.mxu0 0.0
      %5016 = vmatprep.subr.mxu0 0.0
      %5017 = vmatpush1.msra.mxu0 0.0
      %5018 = vmatprep.subr.mxu0 0.0
      %5019 = vmatpush1.msra.mxu0 0.0
      %5020 = vmatprep.subr.mxu0 0.0
      %5021 = vmatpush1.msra.mxu0 0.0
      %5022 = vmatprep.subr.mxu0 0.0
      %5023 = vmatpush1.msra.mxu0 0.0
      %5024 = vmatprep.subr.mxu0 0.0
      %5025 = vmatpush1.msra.mxu0 0.0
      %5026 = vmatprep.subr.mxu0 0.0
      %5027 = vmatpush1.msra.mxu0 0.0
      %5028 = vmatprep.subr.mxu0 0.0
      %5029 = vmatpush1.msra.mxu0 0.0
      %5030 = vmatprep.subr.mxu0 0.0
      %5031 = vmatpush1.msra.mxu0 0.0
      %5032 = vmatprep.subr.mxu0 0.0
      %5033 = vmatpush1.msra.mxu0 0.0
      %5034 = vmatprep.subr.mxu0 0.0
      %5035 = vmatpush1.msra.mxu0 0.0
      %5036 = vmatprep.mubr.f32.mxu0 0.0
      %5037 = vmatmul.mubr.f32.gmra.mrb[0].mxu0 %v4916
      %v5038 = vpop.f32.mrb[0].mxu0
      %v5039 = vadd.f32 %v4971, %v5038
      %v5040 = vpop.f32.mrb[0].mxu0
      %5041 = vmatprep.mubr.f32.mxu0 0.0
      %5042 = vmatmul.mubr.f32.gmra.mrb[0].mxu0 %v4917
      %v5043 = vpop.f32.mrb[0].mxu0
      %v5044 = vadd.f32 %v4971, %v5043
      %v5045 = vpop.f32.mrb[0].mxu0
      %5046 = vmatprep.mubr.f32.mxu0 0.0
      %5047 = vmatmul.mubr.f32.gmra.mrb[0].mxu0 %v4918
      %v5048 = vpop.f32.mrb[0].mxu0
      %v5049 = vadd.f32 %v4971, %v5048
      %v5050 = vpop.f32.mrb[0].mxu0
      %5051 = vmatprep.mubr.f32.mxu0 0.0
      %5052 = vmatmul.mubr.f32.gmra.mrb[0].mxu0 %v4919
      %v5053 = vpop.f32.mrb[0].mxu0
      %v5054 = vadd.f32 %v4971, %v5053
      %v5055 = vpop.f32.mrb[0].mxu0
      %5056 = vmatprep.mubr.f32.mxu0 0.0
      %5057 = vmatmul.mubr.f32.gmra.mrb[0].mxu0 %v4920
      %v5058 = vpop.f32.mrb[0].mxu0
      %v5059 = vadd.f32 %v4971, %v5058
      %v5060 = vpop.f32.mrb[0].mxu0
      %5061 = vmatprep.mubr.f32.mxu0 0.0
      %5062 = vmatmul.mubr.f32.gmra.mrb[0].mxu0 %v4921
      %v5063 = vpop.f32.mrb[0].mxu0
      %v5064 = vadd.f32 %v4971, %v5063
      %v5065 = vpop.f32.mrb[0].mxu0
      %5066 = vmatprep.mubr.f32.mxu0 0.0
      %5067 = vmatmul.mubr.f32.gmra.mrb[0].mxu0 %v4922
      %v5068 = vpop.f32.mrb[0].mxu0
      %v5069 = vadd.f32 %v4971, %v5068
      %v5070 = vpop.f32.mrb[0].mxu0
      %5071 = vmatprep.mubr.f32.mxu0 0.0
      %5072 = vmatmul.mubr.f32.gmra.mrb[0].mxu0 %v4923
      %v5073 = vpop.f32.mrb[0].mxu0
      %v5074 = vadd.f32 %v4971, %v5073
      %v5075 = vpop.f32.mrb[0].mxu0
      %5076 = vmatprep.mubr.f32.mxu0 0.0
      %5077 = vmatmul.mubr.f32.gmra.mrb[0].mxu0 %v4924
      %v5078 = vpop.f32.mrb[0].mxu0
      %v5079 = vadd.f32 %v4971, %v5078
      %v5080 = vpop.f32.mrb[0].mxu0
      %5081 = vmatprep.mubr.f32.mxu0 0.0
      %5082 = vmatmul.mubr.f32.gmra.mrb[0].mxu0 %v4925
      %v5083 = vpop.f32.mrb[0].mxu0
      %v5084 = vadd.f32 %v4971, %v5083
      %v5085 = vpop.f32.mrb[0].mxu0
      %5086 = vmatprep.mubr.f32.mxu0 0.0
      %5087 = vmatmul.mubr.f32.gmra.mrb[0].mxu0 %v4926
      %v5088 = vpop.f32.mrb[0].mxu0
      %v5089 = vadd.f32 %v4971, %v5088
      %v5090 = vpop.f32.mrb[0].mxu0
      %5091 = vmatprep.mubr.f32.mxu0 0.0
      %5092 = vmatmul.mubr.f32.gmra.mrb[0].mxu0 %v4927
      %v5093 = vpop.f32.mrb[0].mxu0
      %v5094 = vadd.f32 %v4971, %v5093
      %v5095 = vpop.f32.mrb[0].mxu0
      %5096 = vmatprep.mubr.f32.mxu0 0.0
      %5097 = vmatmul.mubr.f32.gmra.mrb[0].mxu0 %v4928
      %v5098 = vpop.f32.mrb[0].mxu0
      %v5099 = vadd.f32 %v4971, %v5098
      %v5100 = vpop.f32.mrb[0].mxu0
      %5101 = vmatprep.mubr.f32.mxu0 0.0
      %5102 = vmatmul.mubr.f32.gmra.mrb[0].mxu0 %v4929
      %v5103 = vpop.f32.mrb[0].mxu0
      %v5104 = vadd.f32 %v4971, %v5103
      %v5105 = vpop.f32.mrb[0].mxu0
      %5106 = vmatprep.mubr.f32.mxu0 0.0
      %5107 = vmatmul.mubr.f32.gmra.mrb[0].mxu0 %v4930
      %v5108 = vpop.f32.mrb[0].mxu0
      %v5109 = vadd.f32 %v4971, %v5108
      %v5110 = vpop.f32.mrb[0].mxu0
      %5111 = vmatprep.mubr.f32.mxu0 0.0
      %5112 = vmatmul.mubr.f32.gmra.mrb[0].mxu0 %v4931
      %v5113 = vpop.f32.mrb[0].mxu0
      %v5114 = vadd.f32 %v4971, %v5113
      %v5115 = vpop.f32.mrb[0].mxu0
      %5116 = vmatprep.mubr.f32.mxu0 0.0
      %5117 = vmatmul.mubr.f32.gmra.mrb[0].mxu0 %v4932
      %v5118 = vpop.f32.mrb[0].mxu0
      %v5119 = vadd.f32 %v4971, %v5118
      %v5120 = vpop.f32.mrb[0].mxu0
      %5121 = vmatprep.mubr.f32.mxu0 0.0
      %5122 = vmatmul.mubr.f32.gmra.mrb[0].mxu0 %v4933
      %v5123 = vpop.f32.mrb[0].mxu0
      %v5124 = vadd.f32 %v4971, %v5123
      %v5125 = vpop.f32.mrb[0].mxu0
      %5126 = vmatprep.mubr.f32.mxu0 0.0
      %5127 = vmatmul.mubr.f32.gmra.mrb[0].mxu0 %v4934
      %v5128 = vpop.f32.mrb[0].mxu0
      %v5129 = vadd.f32 %v4971, %v5128
      %v5130 = vpop.f32.mrb[0].mxu0
      %5131 = vmatprep.mubr.f32.mxu0 0.0
      %5132 = vmatmul.mubr.f32.gmra.mrb[0].mxu0 %v4935
      %v5133 = vpop.f32.mrb[0].mxu0
      %v5134 = vadd.f32 %v4971, %v5133
      %v5135 = vpop.f32.mrb[0].mxu0
      %5136 = vmatprep.mubr.f32.mxu0 0.0
      %5137 = vmatmul.mubr.f32.gmra.mrb[0].mxu0 %v4936
      %v5138 = vpop.f32.mrb[0].mxu0
      %v5139 = vadd.f32 %v4971, %v5138
      %v5140 = vpop.f32.mrb[0].mxu0
      %5141 = vmatprep.mubr.f32.mxu0 0.0
      %5142 = vmatmul.mubr.f32.gmra.mrb[0].mxu0 %v4937
      %v5143 = vpop.f32.mrb[0].mxu0
      %v5144 = vadd.f32 %v4971, %v5143
      %v5145 = vpop.f32.mrb[0].mxu0
      %5146 = vmatprep.mubr.f32.mxu0 0.0
      %5147 = vmatmul.mubr.f32.gmra.mrb[0].mxu0 %v4938
      %v5148 = vpop.f32.mrb[0].mxu0
      %v5149 = vadd.f32 %v4971, %v5148
      %v5150 = vpop.f32.mrb[0].mxu0
      %5151 = vmatprep.mubr.f32.mxu0 0.0
      %5152 = vmatmul.mubr.f32.gmra.mrb[0].mxu0 %v4939
      %v5153 = vpop.f32.mrb[0].mxu0
      %v5154 = vadd.f32 %v4971, %v5153
      %v5155 = vpop.f32.mrb[0].mxu0
      %5156 = vmatprep.mubr.f32.mxu0 0.0
      %5157 = vmatmul.mubr.f32.gmra.mrb[0].mxu0 %v4940
      %v5158 = vpop.f32.mrb[0].mxu0
      %v5159 = vadd.f32 %v4971, %v5158
      %v5160 = vpop.f32.mrb[0].mxu0
      %5161 = vmatprep.mubr.f32.mxu0 0.0
      %5162 = vmatmul.mubr.f32.gmra.mrb[0].mxu0 %v4941
      %v5163 = vpop.f32.mrb[0].mxu0
      %v5164 = vadd.f32 %v4971, %v5163
      %v5165 = vpop.f32.mrb[0].mxu0
      %5166 = vmatprep.mubr.f32.mxu0 0.0
      %5167 = vmatmul.mubr.f32.gmra.mrb[0].mxu0 %v4942
      %v5168 = vpop.f32.mrb[0].mxu0
      %v5169 = vadd.f32 %v4971, %v5168
      %v5170 = vpop.f32.mrb[0].mxu0
      %5171 = vmatprep.mubr.f32.mxu0 0.0
      %5172 = vmatmul.mubr.f32.gmra.mrb[0].mxu0 %v4943
      %v5173 = vpop.f32.mrb[0].mxu0
      %v5174 = vadd.f32 %v4971, %v5173
      %v5175 = vpop.f32.mrb[0].mxu0
      %5176 = vmatprep.mubr.f32.mxu0 0.0
      %5177 = vmatmul.mubr.f32.gmra.mrb[0].mxu0 %v4944
      %v5178 = vpop.f32.mrb[0].mxu0
      %v5179 = vadd.f32 %v4971, %v5178
      %v5180 = vpop.f32.mrb[0].mxu0
      %5181 = vmatprep.mubr.f32.mxu0 0.0
      %5182 = vmatmul.mubr.f32.gmra.mrb[0].mxu0 %v4945
      %v5183 = vpop.f32.mrb[0].mxu0
      %v5184 = vadd.f32 %v4971, %v5183
      %v5185 = vpop.f32.mrb[0].mxu0
      %5186 = vmatprep.mubr.f32.mxu0 0.0
      %5187 = vmatmul.mubr.f32.gmra.mrb[0].mxu0 %v4946
      %v5188 = vpop.f32.mrb[0].mxu0
      %v5189 = vadd.f32 %v4971, %v5188
      %v5190 = vpop.f32.mrb[0].mxu0
      %5191 = vmatprep.mubr.f32.mxu0 0.0
      %5192 = vmatmul.mubr.f32.gmra.mrb[0].mxu0 %v4947
      %v5193 = vpop.f32.mrb[0].mxu0
      %v5194 = vadd.f32 %v4971, %v5193
      %v5195 = vpop.f32.mrb[0].mxu0
      %5196 = vmatprep.mubr.f32.mxu0 0.0
      %5197 = vmatmul.mubr.f32.gmra.mrb[0].mxu0 %v4948
      %v5198 = vpop.f32.mrb[0].mxu0
      %v5199 = vadd.f32 %v4971, %v5198
      %v5200 = vpop.f32.mrb[0].mxu0
      %5201 = vmatprep.mubr.f32.mxu0 0.0
      %5202 = vmatmul.mubr.f32.gmra.mrb[0].mxu0 %v4949
      %v5203 = vpop.f32.mrb[0].mxu0
      %v5204 = vadd.f32 %v4971, %v5203
      %v5205 = vpop.f32.mrb[0].mxu0
      %5206 = vmatprep.mubr.f32.mxu0 0.0
      %5207 = vmatmul.mubr.f32.gmra.mrb[0].mxu0 %v4950
      %v5208 = vpop.f32.mrb[0].mxu0
      %v5209 = vadd.f32 %v4971, %v5208
      %v5210 = vpop.f32.mrb[0].mxu0
      %5211 = vmatprep.mubr.f32.mxu0 0.0
      %5212 = vmatmul.mubr.f32.gmra.mrb[0].mxu0 %v4951
      %v5213 = vpop.f32.mrb[0].mxu0
      %v5214 = vadd.f32 %v4971, %v5213
      %v5215 = vpop.f32.mrb[0].mxu0
      %5216 = vmatprep.mubr.f32.mxu0 0.0
      %5217 = vmatmul.mubr.f32.gmra.mrb[0].mxu0 %v4952
      %v5218 = vpop.f32.mrb[0].mxu0
      %v5219 = vadd.f32 %v4971, %v5218
      %v5220 = vpop.f32.mrb[0].mxu0
      %5221 = vmatprep.mubr.f32.mxu0 0.0
      %5222 = vmatmul.mubr.f32.gmra.mrb[0].mxu0 %v4953
      %v5223 = vpop.f32.mrb[0].mxu0
      %v5224 = vadd.f32 %v4971, %v5223
      %v5225 = vpop.f32.mrb[0].mxu0
      %5226 = vmatprep.mubr.f32.mxu0 0.0
      %5227 = vmatmul.mubr.f32.gmra.mrb[0].mxu0 %v4954
      %v5228 = vpop.f32.mrb[0].mxu0
      %v5229 = vadd.f32 %v4971, %v5228
      %v5230 = vpop.f32.mrb[0].mxu0
      %5231 = vdwg.mxu0
      %v5232 = vmax.f32 %v5039, 0.0
      %v5233 = vmax.f32 %v5044, 0.0
      %v5234 = vmax.f32 %v5049, 0.0
      %v5235 = vmax.f32 %v5054, 0.0
      %v5236 = vmax.f32 %v5059, 0.0
      %v5237 = vmax.f32 %v5064, 0.0
      %v5238 = vmax.f32 %v5069, 0.0
      %v5239 = vmax.f32 %v5074, 0.0
      %v5240 = vmax.f32 %v5079, 0.0
      %v5241 = vmax.f32 %v5084, 0.0
      %v5242 = vmax.f32 %v5089, 0.0
      %v5243 = vmax.f32 %v5094, 0.0
      %v5244 = vmax.f32 %v5099, 0.0
      %v5245 = vmax.f32 %v5104, 0.0
      %v5246 = vmax.f32 %v5109, 0.0
      %v5247 = vmax.f32 %v5114, 0.0
      %v5248 = vmax.f32 %v5119, 0.0
      %v5249 = vmax.f32 %v5124, 0.0
      %v5250 = vmax.f32 %v5129, 0.0
      %v5251 = vmax.f32 %v5134, 0.0
      %v5252 = vmax.f32 %v5139, 0.0
      %v5253 = vmax.f32 %v5144, 0.0
      %v5254 = vmax.f32 %v5149, 0.0
      %v5255 = vmax.f32 %v5154, 0.0
      %v5256 = vmax.f32 %v5159, 0.0
      %v5257 = vmax.f32 %v5164, 0.0
      %v5258 = vmax.f32 %v5169, 0.0
      %v5259 = vmax.f32 %v5174, 0.0
      %v5260 = vmax.f32 %v5179, 0.0
      %v5261 = vmax.f32 %v5184, 0.0
      %v5262 = vmax.f32 %v5189, 0.0
      %v5263 = vmax.f32 %v5194, 0.0
      %v5264 = vmax.f32 %v5199, 0.0
      %v5265 = vmax.f32 %v5204, 0.0
      %v5266 = vmax.f32 %v5209, 0.0
      %v5267 = vmax.f32 %v5214, 0.0
      %v5268 = vmax.f32 %v5219, 0.0
      %v5269 = vmax.f32 %v5224, 0.0
      %v5270 = vmax.f32 %v5229, 0.0
      %v5271 = vld [vmem:[%s2 + $0x300] sm:$0xff]
      %v5272 = vld [vmem:[%s2 + $0x308] sm:$0xff]
      %v5273 = vld [vmem:[%s2 + $0x310] sm:$0xff]
      %v5274 = vld [vmem:[%s2 + $0x318] sm:$0xff]
      %v5275 = vld [vmem:[%s2 + $0x320] sm:$0xff]
      %v5276 = vld [vmem:[%s2 + $0x328] sm:$0xff]
      %v5277 = vld [vmem:[%s2 + $0x330] sm:$0xff]
      %v5278 = vld [vmem:[%s2 + $0x338] sm:$0xff]
      %v5279 = vld [vmem:[%s2 + $0x340] sm:$0xff]
      %v5280 = vld [vmem:[%s2 + $0x348] sm:$0xff]
      %v5281 = vld [vmem:[%s2 + $0x350] sm:$0xff]
      %v5282 = vld [vmem:[%s2 + $0x358] sm:$0xff]
      %v5283 = vld [vmem:[%s2 + $0x360] sm:$0xff]
      %v5284 = vld [vmem:[%s2 + $0x368] sm:$0xff]
      %v5285 = vld [vmem:[%s2 + $0x370] sm:$0xff]
      %v5286 = vld [vmem:[%s2 + $0x378] sm:$0xff]
      %v5287 = vld [vmem:[%s4 + $0x7] ss:$0 sm:$0xff]
      %5288 = vmatprep.subr.mxu0 0.0
      %5289 = vmatpush1.msra.mxu0 %v5271
      %5290 = vmatprep.subr.mxu0 0.0
      %5291 = vmatpush1.msra.mxu0 %v5272
      %5292 = vmatprep.subr.mxu0 0.0
      %5293 = vmatpush1.msra.mxu0 %v5273
      %5294 = vmatprep.subr.mxu0 0.0
      %5295 = vmatpush1.msra.mxu0 %v5274
      %5296 = vmatprep.subr.mxu0 0.0
      %5297 = vmatpush1.msra.mxu0 %v5275
      %5298 = vmatprep.subr.mxu0 0.0
      %5299 = vmatpush1.msra.mxu0 %v5276
      %5300 = vmatprep.subr.mxu0 0.0
      %5301 = vmatpush1.msra.mxu0 %v5277
      %5302 = vmatprep.subr.mxu0 0.0
      %5303 = vmatpush1.msra.mxu0 %v5278
      %5304 = vmatprep.subr.mxu0 0.0
      %5305 = vmatpush1.msra.mxu0 %v5279
      %5306 = vmatprep.subr.mxu0 0.0
      %5307 = vmatpush1.msra.mxu0 %v5280
      %5308 = vmatprep.subr.mxu0 0.0
      %5309 = vmatpush1.msra.mxu0 %v5281
      %5310 = vmatprep.subr.mxu0 0.0
      %5311 = vmatpush1.msra.mxu0 %v5282
      %5312 = vmatprep.subr.mxu0 0.0
      %5313 = vmatpush1.msra.mxu0 %v5283
      %5314 = vmatprep.subr.mxu0 0.0
      %5315 = vmatpush1.msra.mxu0 %v5284
      %5316 = vmatprep.subr.mxu0 0.0
      %5317 = vmatpush1.msra.mxu0 %v5285
      %5318 = vmatprep.subr.mxu0 0.0
      %5319 = vmatpush1.msra.mxu0 %v5286
      %5320 = vmatprep.subr.mxu0 0.0
      %5321 = vmatpush1.msra.mxu0 0.0
      %5322 = vmatprep.subr.mxu0 0.0
      %5323 = vmatpush1.msra.mxu0 0.0
      %5324 = vmatprep.subr.mxu0 0.0
      %5325 = vmatpush1.msra.mxu0 0.0
      %5326 = vmatprep.subr.mxu0 0.0
      %5327 = vmatpush1.msra.mxu0 0.0
      %5328 = vmatprep.subr.mxu0 0.0
      %5329 = vmatpush1.msra.mxu0 0.0
      %5330 = vmatprep.subr.mxu0 0.0
      %5331 = vmatpush1.msra.mxu0 0.0
      %5332 = vmatprep.subr.mxu0 0.0
      %5333 = vmatpush1.msra.mxu0 0.0
      %5334 = vmatprep.subr.mxu0 0.0
      %5335 = vmatpush1.msra.mxu0 0.0
      %5336 = vmatprep.subr.mxu0 0.0
      %5337 = vmatpush1.msra.mxu0 0.0
      %5338 = vmatprep.subr.mxu0 0.0
      %5339 = vmatpush1.msra.mxu0 0.0
      %5340 = vmatprep.subr.mxu0 0.0
      %5341 = vmatpush1.msra.mxu0 0.0
      %5342 = vmatprep.subr.mxu0 0.0
      %5343 = vmatpush1.msra.mxu0 0.0
      %5344 = vmatprep.subr.mxu0 0.0
      %5345 = vmatpush1.msra.mxu0 0.0
      %5346 = vmatprep.subr.mxu0 0.0
      %5347 = vmatpush1.msra.mxu0 0.0
      %5348 = vmatprep.subr.mxu0 0.0
      %5349 = vmatpush1.msra.mxu0 0.0
      %5350 = vmatprep.subr.mxu0 0.0
      %5351 = vmatpush1.msra.mxu0 0.0
      %5352 = vmatprep.mubr.f32.mxu0 0.0
      %5353 = vmatmul.mubr.f32.gmra.mrb[0].mxu0 %v5232
      %v5354 = vpop.f32.mrb[0].mxu0
      %v5355 = vadd.f32 %v5287, %v5354
      %v5356 = vpop.f32.mrb[0].mxu0
      %5357 = vmatprep.mubr.f32.mxu0 0.0
      %5358 = vmatmul.mubr.f32.gmra.mrb[0].mxu0 %v5233
      %v5359 = vpop.f32.mrb[0].mxu0
      %v5360 = vadd.f32 %v5287, %v5359
      %v5361 = vpop.f32.mrb[0].mxu0
      %5362 = vmatprep.mubr.f32.mxu0 0.0
      %5363 = vmatmul.mubr.f32.gmra.mrb[0].mxu0 %v5234
      %v5364 = vpop.f32.mrb[0].mxu0
      %v5365 = vadd.f32 %v5287, %v5364
      %v5366 = vpop.f32.mrb[0].mxu0
      %5367 = vmatprep.mubr.f32.mxu0 0.0
      %5368 = vmatmul.mubr.f32.gmra.mrb[0].mxu0 %v5235
      %v5369 = vpop.f32.mrb[0].mxu0
      %v5370 = vadd.f32 %v5287, %v5369
      %v5371 = vpop.f32.mrb[0].mxu0
      %5372 = vmatprep.mubr.f32.mxu0 0.0
      %5373 = vmatmul.mubr.f32.gmra.mrb[0].mxu0 %v5236
      %v5374 = vpop.f32.mrb[0].mxu0
      %v5375 = vadd.f32 %v5287, %v5374
      %v5376 = vpop.f32.mrb[0].mxu0
      %5377 = vmatprep.mubr.f32.mxu0 0.0
      %5378 = vmatmul.mubr.f32.gmra.mrb[0].mxu0 %v5237
      %v5379 = vpop.f32.mrb[0].mxu0
      %v5380 = vadd.f32 %v5287, %v5379
      %v5381 = vpop.f32.mrb[0].mxu0
      %5382 = vmatprep.mubr.f32.mxu0 0.0
      %5383 = vmatmul.mubr.f32.gmra.mrb[0].mxu0 %v5238
      %v5384 = vpop.f32.mrb[0].mxu0
      %v5385 = vadd.f32 %v5287, %v5384
      %v5386 = vpop.f32.mrb[0].mxu0
      %5387 = vmatprep.mubr.f32.mxu0 0.0
      %5388 = vmatmul.mubr.f32.gmra.mrb[0].mxu0 %v5239
      %v5389 = vpop.f32.mrb[0].mxu0
      %v5390 = vadd.f32 %v5287, %v5389
      %v5391 = vpop.f32.mrb[0].mxu0
      %5392 = vmatprep.mubr.f32.mxu0 0.0
      %5393 = vmatmul.mubr.f32.gmra.mrb[0].mxu0 %v5240
      %v5394 = vpop.f32.mrb[0].mxu0
      %v5395 = vadd.f32 %v5287, %v5394
      %v5396 = vpop.f32.mrb[0].mxu0
      %5397 = vmatprep.mubr.f32.mxu0 0.0
      %5398 = vmatmul.mubr.f32.gmra.mrb[0].mxu0 %v5241
      %v5399 = vpop.f32.mrb[0].mxu0
      %v5400 = vadd.f32 %v5287, %v5399
      %v5401 = vpop.f32.mrb[0].mxu0
      %5402 = vmatprep.mubr.f32.mxu0 0.0
      %5403 = vmatmul.mubr.f32.gmra.mrb[0].mxu0 %v5242
      %v5404 = vpop.f32.mrb[0].mxu0
      %v5405 = vadd.f32 %v5287, %v5404
      %v5406 = vpop.f32.mrb[0].mxu0
      %5407 = vmatprep.mubr.f32.mxu0 0.0
      %5408 = vmatmul.mubr.f32.gmra.mrb[0].mxu0 %v5243
      %v5409 = vpop.f32.mrb[0].mxu0
      %v5410 = vadd.f32 %v5287, %v5409
      %v5411 = vpop.f32.mrb[0].mxu0
      %5412 = vmatprep.mubr.f32.mxu0 0.0
      %5413 = vmatmul.mubr.f32.gmra.mrb[0].mxu0 %v5244
      %v5414 = vpop.f32.mrb[0].mxu0
      %v5415 = vadd.f32 %v5287, %v5414
      %v5416 = vpop.f32.mrb[0].mxu0
      %5417 = vmatprep.mubr.f32.mxu0 0.0
      %5418 = vmatmul.mubr.f32.gmra.mrb[0].mxu0 %v5245
      %v5419 = vpop.f32.mrb[0].mxu0
      %v5420 = vadd.f32 %v5287, %v5419
      %v5421 = vpop.f32.mrb[0].mxu0
      %5422 = vmatprep.mubr.f32.mxu0 0.0
      %5423 = vmatmul.mubr.f32.gmra.mrb[0].mxu0 %v5246
      %v5424 = vpop.f32.mrb[0].mxu0
      %v5425 = vadd.f32 %v5287, %v5424
      %v5426 = vpop.f32.mrb[0].mxu0
      %5427 = vmatprep.mubr.f32.mxu0 0.0
      %5428 = vmatmul.mubr.f32.gmra.mrb[0].mxu0 %v5247
      %v5429 = vpop.f32.mrb[0].mxu0
      %v5430 = vadd.f32 %v5287, %v5429
      %v5431 = vpop.f32.mrb[0].mxu0
      %5432 = vmatprep.mubr.f32.mxu0 0.0
      %5433 = vmatmul.mubr.f32.gmra.mrb[0].mxu0 %v5248
      %v5434 = vpop.f32.mrb[0].mxu0
      %v5435 = vadd.f32 %v5287, %v5434
      %v5436 = vpop.f32.mrb[0].mxu0
      %5437 = vmatprep.mubr.f32.mxu0 0.0
      %5438 = vmatmul.mubr.f32.gmra.mrb[0].mxu0 %v5249
      %v5439 = vpop.f32.mrb[0].mxu0
      %v5440 = vadd.f32 %v5287, %v5439
      %v5441 = vpop.f32.mrb[0].mxu0
      %5442 = vmatprep.mubr.f32.mxu0 0.0
      %5443 = vmatmul.mubr.f32.gmra.mrb[0].mxu0 %v5250
      %v5444 = vpop.f32.mrb[0].mxu0
      %v5445 = vadd.f32 %v5287, %v5444
      %v5446 = vpop.f32.mrb[0].mxu0
      %5447 = vmatprep.mubr.f32.mxu0 0.0
      %5448 = vmatmul.mubr.f32.gmra.mrb[0].mxu0 %v5251
      %v5449 = vpop.f32.mrb[0].mxu0
      %v5450 = vadd.f32 %v5287, %v5449
      %v5451 = vpop.f32.mrb[0].mxu0
      %5452 = vmatprep.mubr.f32.mxu0 0.0
      %5453 = vmatmul.mubr.f32.gmra.mrb[0].mxu0 %v5252
      %v5454 = vpop.f32.mrb[0].mxu0
      %v5455 = vadd.f32 %v5287, %v5454
      %v5456 = vpop.f32.mrb[0].mxu0
      %5457 = vmatprep.mubr.f32.mxu0 0.0
      %5458 = vmatmul.mubr.f32.gmra.mrb[0].mxu0 %v5253
      %v5459 = vpop.f32.mrb[0].mxu0
      %v5460 = vadd.f32 %v5287, %v5459
      %v5461 = vpop.f32.mrb[0].mxu0
      %5462 = vmatprep.mubr.f32.mxu0 0.0
      %5463 = vmatmul.mubr.f32.gmra.mrb[0].mxu0 %v5254
      %v5464 = vpop.f32.mrb[0].mxu0
      %v5465 = vadd.f32 %v5287, %v5464
      %v5466 = vpop.f32.mrb[0].mxu0
      %5467 = vmatprep.mubr.f32.mxu0 0.0
      %5468 = vmatmul.mubr.f32.gmra.mrb[0].mxu0 %v5255
      %v5469 = vpop.f32.mrb[0].mxu0
      %v5470 = vadd.f32 %v5287, %v5469
      %v5471 = vpop.f32.mrb[0].mxu0
      %5472 = vmatprep.mubr.f32.mxu0 0.0
      %5473 = vmatmul.mubr.f32.gmra.mrb[0].mxu0 %v5256
      %v5474 = vpop.f32.mrb[0].mxu0
      %v5475 = vadd.f32 %v5287, %v5474
      %v5476 = vpop.f32.mrb[0].mxu0
      %5477 = vmatprep.mubr.f32.mxu0 0.0
      %5478 = vmatmul.mubr.f32.gmra.mrb[0].mxu0 %v5257
      %v5479 = vpop.f32.mrb[0].mxu0
      %v5480 = vadd.f32 %v5287, %v5479
      %v5481 = vpop.f32.mrb[0].mxu0
      %5482 = vmatprep.mubr.f32.mxu0 0.0
      %5483 = vmatmul.mubr.f32.gmra.mrb[0].mxu0 %v5258
      %v5484 = vpop.f32.mrb[0].mxu0
      %v5485 = vadd.f32 %v5287, %v5484
      %v5486 = vpop.f32.mrb[0].mxu0
      %5487 = vmatprep.mubr.f32.mxu0 0.0
      %5488 = vmatmul.mubr.f32.gmra.mrb[0].mxu0 %v5259
      %v5489 = vpop.f32.mrb[0].mxu0
      %v5490 = vadd.f32 %v5287, %v5489
      %v5491 = vpop.f32.mrb[0].mxu0
      %5492 = vmatprep.mubr.f32.mxu0 0.0
      %5493 = vmatmul.mubr.f32.gmra.mrb[0].mxu0 %v5260
      %v5494 = vpop.f32.mrb[0].mxu0
      %v5495 = vadd.f32 %v5287, %v5494
      %v5496 = vpop.f32.mrb[0].mxu0
      %5497 = vmatprep.mubr.f32.mxu0 0.0
      %5498 = vmatmul.mubr.f32.gmra.mrb[0].mxu0 %v5261
      %v5499 = vpop.f32.mrb[0].mxu0
      %v5500 = vadd.f32 %v5287, %v5499
      %v5501 = vpop.f32.mrb[0].mxu0
      %5502 = vmatprep.mubr.f32.mxu0 0.0
      %5503 = vmatmul.mubr.f32.gmra.mrb[0].mxu0 %v5262
      %v5504 = vpop.f32.mrb[0].mxu0
      %v5505 = vadd.f32 %v5287, %v5504
      %v5506 = vpop.f32.mrb[0].mxu0
      %5507 = vmatprep.mubr.f32.mxu0 0.0
      %5508 = vmatmul.mubr.f32.gmra.mrb[0].mxu0 %v5263
      %v5509 = vpop.f32.mrb[0].mxu0
      %v5510 = vadd.f32 %v5287, %v5509
      %v5511 = vpop.f32.mrb[0].mxu0
      %5512 = vmatprep.mubr.f32.mxu0 0.0
      %5513 = vmatmul.mubr.f32.gmra.mrb[0].mxu0 %v5264
      %v5514 = vpop.f32.mrb[0].mxu0
      %v5515 = vadd.f32 %v5287, %v5514
      %v5516 = vpop.f32.mrb[0].mxu0
      %5517 = vmatprep.mubr.f32.mxu0 0.0
      %5518 = vmatmul.mubr.f32.gmra.mrb[0].mxu0 %v5265
      %v5519 = vpop.f32.mrb[0].mxu0
      %v5520 = vadd.f32 %v5287, %v5519
      %v5521 = vpop.f32.mrb[0].mxu0
      %5522 = vmatprep.mubr.f32.mxu0 0.0
      %5523 = vmatmul.mubr.f32.gmra.mrb[0].mxu0 %v5266
      %v5524 = vpop.f32.mrb[0].mxu0
      %v5525 = vadd.f32 %v5287, %v5524
      %v5526 = vpop.f32.mrb[0].mxu0
      %5527 = vmatprep.mubr.f32.mxu0 0.0
      %5528 = vmatmul.mubr.f32.gmra.mrb[0].mxu0 %v5267
      %v5529 = vpop.f32.mrb[0].mxu0
      %v5530 = vadd.f32 %v5287, %v5529
      %v5531 = vpop.f32.mrb[0].mxu0
      %5532 = vmatprep.mubr.f32.mxu0 0.0
      %5533 = vmatmul.mubr.f32.gmra.mrb[0].mxu0 %v5268
      %v5534 = vpop.f32.mrb[0].mxu0
      %v5535 = vadd.f32 %v5287, %v5534
      %v5536 = vpop.f32.mrb[0].mxu0
      %5537 = vmatprep.mubr.f32.mxu0 0.0
      %5538 = vmatmul.mubr.f32.gmra.mrb[0].mxu0 %v5269
      %v5539 = vpop.f32.mrb[0].mxu0
      %v5540 = vadd.f32 %v5287, %v5539
      %v5541 = vpop.f32.mrb[0].mxu0
      %5542 = vmatprep.mubr.f32.mxu0 0.0
      %5543 = vmatmul.mubr.f32.gmra.mrb[0].mxu0 %v5270
      %v5544 = vpop.f32.mrb[0].mxu0
      %v5545 = vadd.f32 %v5287, %v5544
      %v5546 = vpop.f32.mrb[0].mxu0
      %5547 = vdwg.mxu0
      %v5548 = vmax.f32 %v5355, 0.0
      %v5549 = vmax.f32 %v5360, 0.0
      %v5550 = vmax.f32 %v5365, 0.0
      %v5551 = vmax.f32 %v5370, 0.0
      %v5552 = vmax.f32 %v5375, 0.0
      %v5553 = vmax.f32 %v5380, 0.0
      %v5554 = vmax.f32 %v5385, 0.0
      %v5555 = vmax.f32 %v5390, 0.0
      %v5556 = vmax.f32 %v5395, 0.0
      %v5557 = vmax.f32 %v5400, 0.0
      %v5558 = vmax.f32 %v5405, 0.0
      %v5559 = vmax.f32 %v5410, 0.0
      %v5560 = vmax.f32 %v5415, 0.0
      %v5561 = vmax.f32 %v5420, 0.0
      %v5562 = vmax.f32 %v5425, 0.0
      %v5563 = vmax.f32 %v5430, 0.0
      %v5564 = vmax.f32 %v5435, 0.0
      %v5565 = vmax.f32 %v5440, 0.0
      %v5566 = vmax.f32 %v5445, 0.0
      %v5567 = vmax.f32 %v5450, 0.0
      %v5568 = vmax.f32 %v5455, 0.0
      %v5569 = vmax.f32 %v5460, 0.0
      %v5570 = vmax.f32 %v5465, 0.0
      %v5571 = vmax.f32 %v5470, 0.0
      %v5572 = vmax.f32 %v5475, 0.0
      %v5573 = vmax.f32 %v5480, 0.0
      %v5574 = vmax.f32 %v5485, 0.0
      %v5575 = vmax.f32 %v5490, 0.0
      %v5576 = vmax.f32 %v5495, 0.0
      %v5577 = vmax.f32 %v5500, 0.0
      %v5578 = vmax.f32 %v5505, 0.0
      %v5579 = vmax.f32 %v5510, 0.0
      %v5580 = vmax.f32 %v5515, 0.0
      %v5581 = vmax.f32 %v5520, 0.0
      %v5582 = vmax.f32 %v5525, 0.0
      %v5583 = vmax.f32 %v5530, 0.0
      %v5584 = vmax.f32 %v5535, 0.0
      %v5585 = vmax.f32 %v5540, 0.0
      %v5586 = vmax.f32 %v5545, 0.0
      %v5587 = vld [vmem:[%s2 + $0x380] sm:$0xff]
      %v5588 = vld [vmem:[%s2 + $0x388] sm:$0xff]
      %v5589 = vld [vmem:[%s2 + $0x390] sm:$0xff]
      %v5590 = vld [vmem:[%s2 + $0x398] sm:$0xff]
      %v5591 = vld [vmem:[%s2 + $0x3a0] sm:$0xff]
      %v5592 = vld [vmem:[%s2 + $0x3a8] sm:$0xff]
      %v5593 = vld [vmem:[%s2 + $0x3b0] sm:$0xff]
      %v5594 = vld [vmem:[%s2 + $0x3b8] sm:$0xff]
      %v5595 = vld [vmem:[%s2 + $0x3c0] sm:$0xff]
      %v5596 = vld [vmem:[%s2 + $0x3c8] sm:$0xff]
      %v5597 = vld [vmem:[%s2 + $0x3d0] sm:$0xff]
      %v5598 = vld [vmem:[%s2 + $0x3d8] sm:$0xff]
      %v5599 = vld [vmem:[%s2 + $0x3e0] sm:$0xff]
      %v5600 = vld [vmem:[%s2 + $0x3e8] sm:$0xff]
      %v5601 = vld [vmem:[%s2 + $0x3f0] sm:$0xff]
      %v5602 = vld [vmem:[%s2 + $0x3f8] sm:$0xff]
      %v5603 = vld [vmem:[%s4 + $0x28] ss:$0 sm:$0xff]
      %5604 = vmatprep.subr.mxu0 0.0
      %5605 = vmatpush1.msra.mxu0 %v5587
      %5606 = vmatprep.subr.mxu0 0.0
      %5607 = vmatpush1.msra.mxu0 %v5588
      %5608 = vmatprep.subr.mxu0 0.0
      %5609 = vmatpush1.msra.mxu0 %v5589
      %5610 = vmatprep.subr.mxu0 0.0
      %5611 = vmatpush1.msra.mxu0 %v5590
      %5612 = vmatprep.subr.mxu0 0.0
      %5613 = vmatpush1.msra.mxu0 %v5591
      %5614 = vmatprep.subr.mxu0 0.0
      %5615 = vmatpush1.msra.mxu0 %v5592
      %5616 = vmatprep.subr.mxu0 0.0
      %5617 = vmatpush1.msra.mxu0 %v5593
      %5618 = vmatprep.subr.mxu0 0.0
      %5619 = vmatpush1.msra.mxu0 %v5594
      %5620 = vmatprep.subr.mxu0 0.0
      %5621 = vmatpush1.msra.mxu0 %v5595
      %5622 = vmatprep.subr.mxu0 0.0
      %5623 = vmatpush1.msra.mxu0 %v5596
      %5624 = vmatprep.subr.mxu0 0.0
      %5625 = vmatpush1.msra.mxu0 %v5597
      %5626 = vmatprep.subr.mxu0 0.0
      %5627 = vmatpush1.msra.mxu0 %v5598
      %5628 = vmatprep.subr.mxu0 0.0
      %5629 = vmatpush1.msra.mxu0 %v5599
      %5630 = vmatprep.subr.mxu0 0.0
      %5631 = vmatpush1.msra.mxu0 %v5600
      %5632 = vmatprep.subr.mxu0 0.0
      %5633 = vmatpush1.msra.mxu0 %v5601
      %5634 = vmatprep.subr.mxu0 0.0
      %5635 = vmatpush1.msra.mxu0 %v5602
      %5636 = vmatprep.subr.mxu0 0.0
      %5637 = vmatpush1.msra.mxu0 0.0
      %5638 = vmatprep.subr.mxu0 0.0
      %5639 = vmatpush1.msra.mxu0 0.0
      %5640 = vmatprep.subr.mxu0 0.0
      %5641 = vmatpush1.msra.mxu0 0.0
      %5642 = vmatprep.subr.mxu0 0.0
      %5643 = vmatpush1.msra.mxu0 0.0
      %5644 = vmatprep.subr.mxu0 0.0
      %5645 = vmatpush1.msra.mxu0 0.0
      %5646 = vmatprep.subr.mxu0 0.0
      %5647 = vmatpush1.msra.mxu0 0.0
      %5648 = vmatprep.subr.mxu0 0.0
      %5649 = vmatpush1.msra.mxu0 0.0
      %5650 = vmatprep.subr.mxu0 0.0
      %5651 = vmatpush1.msra.mxu0 0.0
      %5652 = vmatprep.subr.mxu0 0.0
      %5653 = vmatpush1.msra.mxu0 0.0
      %5654 = vmatprep.subr.mxu0 0.0
      %5655 = vmatpush1.msra.mxu0 0.0
      %5656 = vmatprep.subr.mxu0 0.0
      %5657 = vmatpush1.msra.mxu0 0.0
      %5658 = vmatprep.subr.mxu0 0.0
      %5659 = vmatpush1.msra.mxu0 0.0
      %5660 = vmatprep.subr.mxu0 0.0
      %5661 = vmatpush1.msra.mxu0 0.0
      %5662 = vmatprep.subr.mxu0 0.0
      %5663 = vmatpush1.msra.mxu0 0.0
      %5664 = vmatprep.subr.mxu0 0.0
      %5665 = vmatpush1.msra.mxu0 0.0
      %5666 = vmatprep.subr.mxu0 0.0
      %5667 = vmatpush1.msra.mxu0 0.0
      %5668 = vmatprep.mubr.f32.mxu0 0.0
      %5669 = vmatmul.mubr.f32.gmra.mrb[0].mxu0 %v5548
      %v5670 = vpop.f32.mrb[0].mxu0
      %v5671 = vadd.f32 %v5603, %v5670
      %v5672 = vpop.f32.mrb[0].mxu0
      %5673 = vmatprep.mubr.f32.mxu0 0.0
      %5674 = vmatmul.mubr.f32.gmra.mrb[0].mxu0 %v5549
      %v5675 = vpop.f32.mrb[0].mxu0
      %v5676 = vadd.f32 %v5603, %v5675
      %v5677 = vpop.f32.mrb[0].mxu0
      %5678 = vmatprep.mubr.f32.mxu0 0.0
      %5679 = vmatmul.mubr.f32.gmra.mrb[0].mxu0 %v5550
      %v5680 = vpop.f32.mrb[0].mxu0
      %v5681 = vadd.f32 %v5603, %v5680
      %v5682 = vpop.f32.mrb[0].mxu0
      %5683 = vmatprep.mubr.f32.mxu0 0.0
      %5684 = vmatmul.mubr.f32.gmra.mrb[0].mxu0 %v5551
      %v5685 = vpop.f32.mrb[0].mxu0
      %v5686 = vadd.f32 %v5603, %v5685
      %v5687 = vpop.f32.mrb[0].mxu0
      %5688 = vmatprep.mubr.f32.mxu0 0.0
      %5689 = vmatmul.mubr.f32.gmra.mrb[0].mxu0 %v5552
      %v5690 = vpop.f32.mrb[0].mxu0
      %v5691 = vadd.f32 %v5603, %v5690
      %v5692 = vpop.f32.mrb[0].mxu0
      %5693 = vmatprep.mubr.f32.mxu0 0.0
      %5694 = vmatmul.mubr.f32.gmra.mrb[0].mxu0 %v5553
      %v5695 = vpop.f32.mrb[0].mxu0
      %v5696 = vadd.f32 %v5603, %v5695
      %v5697 = vpop.f32.mrb[0].mxu0
      %5698 = vmatprep.mubr.f32.mxu0 0.0
      %5699 = vmatmul.mubr.f32.gmra.mrb[0].mxu0 %v5554
      %v5700 = vpop.f32.mrb[0].mxu0
      %v5701 = vadd.f32 %v5603, %v5700
      %v5702 = vpop.f32.mrb[0].mxu0
      %5703 = vmatprep.mubr.f32.mxu0 0.0
      %5704 = vmatmul.mubr.f32.gmra.mrb[0].mxu0 %v5555
      %v5705 = vpop.f32.mrb[0].mxu0
      %v5706 = vadd.f32 %v5603, %v5705
      %v5707 = vpop.f32.mrb[0].mxu0
      %5708 = vmatprep.mubr.f32.mxu0 0.0
      %5709 = vmatmul.mubr.f32.gmra.mrb[0].mxu0 %v5556
      %v5710 = vpop.f32.mrb[0].mxu0
      %v5711 = vadd.f32 %v5603, %v5710
      %v5712 = vpop.f32.mrb[0].mxu0
      %5713 = vmatprep.mubr.f32.mxu0 0.0
      %5714 = vmatmul.mubr.f32.gmra.mrb[0].mxu0 %v5557
      %v5715 = vpop.f32.mrb[0].mxu0
      %v5716 = vadd.f32 %v5603, %v5715
      %v5717 = vpop.f32.mrb[0].mxu0
      %5718 = vmatprep.mubr.f32.mxu0 0.0
      %5719 = vmatmul.mubr.f32.gmra.mrb[0].mxu0 %v5558
      %v5720 = vpop.f32.mrb[0].mxu0
      %v5721 = vadd.f32 %v5603, %v5720
      %v5722 = vpop.f32.mrb[0].mxu0
      %5723 = vmatprep.mubr.f32.mxu0 0.0
      %5724 = vmatmul.mubr.f32.gmra.mrb[0].mxu0 %v5559
      %v5725 = vpop.f32.mrb[0].mxu0
      %v5726 = vadd.f32 %v5603, %v5725
      %v5727 = vpop.f32.mrb[0].mxu0
      %5728 = vmatprep.mubr.f32.mxu0 0.0
      %5729 = vmatmul.mubr.f32.gmra.mrb[0].mxu0 %v5560
      %v5730 = vpop.f32.mrb[0].mxu0
      %v5731 = vadd.f32 %v5603, %v5730
      %v5732 = vpop.f32.mrb[0].mxu0
      %5733 = vmatprep.mubr.f32.mxu0 0.0
      %5734 = vmatmul.mubr.f32.gmra.mrb[0].mxu0 %v5561
      %v5735 = vpop.f32.mrb[0].mxu0
      %v5736 = vadd.f32 %v5603, %v5735
      %v5737 = vpop.f32.mrb[0].mxu0
      %5738 = vmatprep.mubr.f32.mxu0 0.0
      %5739 = vmatmul.mubr.f32.gmra.mrb[0].mxu0 %v5562
      %v5740 = vpop.f32.mrb[0].mxu0
      %v5741 = vadd.f32 %v5603, %v5740
      %v5742 = vpop.f32.mrb[0].mxu0
      %5743 = vmatprep.mubr.f32.mxu0 0.0
      %5744 = vmatmul.mubr.f32.gmra.mrb[0].mxu0 %v5563
      %v5745 = vpop.f32.mrb[0].mxu0
      %v5746 = vadd.f32 %v5603, %v5745
      %v5747 = vpop.f32.mrb[0].mxu0
      %5748 = vmatprep.mubr.f32.mxu0 0.0
      %5749 = vmatmul.mubr.f32.gmra.mrb[0].mxu0 %v5564
      %v5750 = vpop.f32.mrb[0].mxu0
      %v5751 = vadd.f32 %v5603, %v5750
      %v5752 = vpop.f32.mrb[0].mxu0
      %5753 = vmatprep.mubr.f32.mxu0 0.0
      %5754 = vmatmul.mubr.f32.gmra.mrb[0].mxu0 %v5565
      %v5755 = vpop.f32.mrb[0].mxu0
      %v5756 = vadd.f32 %v5603, %v5755
      %v5757 = vpop.f32.mrb[0].mxu0
      %5758 = vmatprep.mubr.f32.mxu0 0.0
      %5759 = vmatmul.mubr.f32.gmra.mrb[0].mxu0 %v5566
      %v5760 = vpop.f32.mrb[0].mxu0
      %v5761 = vadd.f32 %v5603, %v5760
      %v5762 = vpop.f32.mrb[0].mxu0
      %5763 = vmatprep.mubr.f32.mxu0 0.0
      %5764 = vmatmul.mubr.f32.gmra.mrb[0].mxu0 %v5567
      %v5765 = vpop.f32.mrb[0].mxu0
      %v5766 = vadd.f32 %v5603, %v5765
      %v5767 = vpop.f32.mrb[0].mxu0
      %5768 = vmatprep.mubr.f32.mxu0 0.0
      %5769 = vmatmul.mubr.f32.gmra.mrb[0].mxu0 %v5568
      %v5770 = vpop.f32.mrb[0].mxu0
      %v5771 = vadd.f32 %v5603, %v5770
      %v5772 = vpop.f32.mrb[0].mxu0
      %5773 = vmatprep.mubr.f32.mxu0 0.0
      %5774 = vmatmul.mubr.f32.gmra.mrb[0].mxu0 %v5569
      %v5775 = vpop.f32.mrb[0].mxu0
      %v5776 = vadd.f32 %v5603, %v5775
      %v5777 = vpop.f32.mrb[0].mxu0
      %5778 = vmatprep.mubr.f32.mxu0 0.0
      %5779 = vmatmul.mubr.f32.gmra.mrb[0].mxu0 %v5570
      %v5780 = vpop.f32.mrb[0].mxu0
      %v5781 = vadd.f32 %v5603, %v5780
      %v5782 = vpop.f32.mrb[0].mxu0
      %5783 = vmatprep.mubr.f32.mxu0 0.0
      %5784 = vmatmul.mubr.f32.gmra.mrb[0].mxu0 %v5571
      %v5785 = vpop.f32.mrb[0].mxu0
      %v5786 = vadd.f32 %v5603, %v5785
      %v5787 = vpop.f32.mrb[0].mxu0
      %5788 = vmatprep.mubr.f32.mxu0 0.0
      %5789 = vmatmul.mubr.f32.gmra.mrb[0].mxu0 %v5572
      %v5790 = vpop.f32.mrb[0].mxu0
      %v5791 = vadd.f32 %v5603, %v5790
      %v5792 = vpop.f32.mrb[0].mxu0
      %5793 = vmatprep.mubr.f32.mxu0 0.0
      %5794 = vmatmul.mubr.f32.gmra.mrb[0].mxu0 %v5573
      %v5795 = vpop.f32.mrb[0].mxu0
      %v5796 = vadd.f32 %v5603, %v5795
      %v5797 = vpop.f32.mrb[0].mxu0
      %5798 = vmatprep.mubr.f32.mxu0 0.0
      %5799 = vmatmul.mubr.f32.gmra.mrb[0].mxu0 %v5574
      %v5800 = vpop.f32.mrb[0].mxu0
      %v5801 = vadd.f32 %v5603, %v5800
      %v5802 = vpop.f32.mrb[0].mxu0
      %5803 = vmatprep.mubr.f32.mxu0 0.0
      %5804 = vmatmul.mubr.f32.gmra.mrb[0].mxu0 %v5575
      %v5805 = vpop.f32.mrb[0].mxu0
      %v5806 = vadd.f32 %v5603, %v5805
      %v5807 = vpop.f32.mrb[0].mxu0
      %5808 = vmatprep.mubr.f32.mxu0 0.0
      %5809 = vmatmul.mubr.f32.gmra.mrb[0].mxu0 %v5576
      %v5810 = vpop.f32.mrb[0].mxu0
      %v5811 = vadd.f32 %v5603, %v5810
      %v5812 = vpop.f32.mrb[0].mxu0
      %5813 = vmatprep.mubr.f32.mxu0 0.0
      %5814 = vmatmul.mubr.f32.gmra.mrb[0].mxu0 %v5577
      %v5815 = vpop.f32.mrb[0].mxu0
      %v5816 = vadd.f32 %v5603, %v5815
      %v5817 = vpop.f32.mrb[0].mxu0
      %5818 = vmatprep.mubr.f32.mxu0 0.0
      %5819 = vmatmul.mubr.f32.gmra.mrb[0].mxu0 %v5578
      %v5820 = vpop.f32.mrb[0].mxu0
      %v5821 = vadd.f32 %v5603, %v5820
      %v5822 = vpop.f32.mrb[0].mxu0
      %5823 = vmatprep.mubr.f32.mxu0 0.0
      %5824 = vmatmul.mubr.f32.gmra.mrb[0].mxu0 %v5579
      %v5825 = vpop.f32.mrb[0].mxu0
      %v5826 = vadd.f32 %v5603, %v5825
      %v5827 = vpop.f32.mrb[0].mxu0
      %5828 = vmatprep.mubr.f32.mxu0 0.0
      %5829 = vmatmul.mubr.f32.gmra.mrb[0].mxu0 %v5580
      %v5830 = vpop.f32.mrb[0].mxu0
      %v5831 = vadd.f32 %v5603, %v5830
      %v5832 = vpop.f32.mrb[0].mxu0
      %5833 = vmatprep.mubr.f32.mxu0 0.0
      %5834 = vmatmul.mubr.f32.gmra.mrb[0].mxu0 %v5581
      %v5835 = vpop.f32.mrb[0].mxu0
      %v5836 = vadd.f32 %v5603, %v5835
      %v5837 = vpop.f32.mrb[0].mxu0
      %5838 = vmatprep.mubr.f32.mxu0 0.0
      %5839 = vmatmul.mubr.f32.gmra.mrb[0].mxu0 %v5582
      %v5840 = vpop.f32.mrb[0].mxu0
      %v5841 = vadd.f32 %v5603, %v5840
      %v5842 = vpop.f32.mrb[0].mxu0
      %5843 = vmatprep.mubr.f32.mxu0 0.0
      %5844 = vmatmul.mubr.f32.gmra.mrb[0].mxu0 %v5583
      %v5845 = vpop.f32.mrb[0].mxu0
      %v5846 = vadd.f32 %v5603, %v5845
      %v5847 = vpop.f32.mrb[0].mxu0
      %5848 = vmatprep.mubr.f32.mxu0 0.0
      %5849 = vmatmul.mubr.f32.gmra.mrb[0].mxu0 %v5584
      %v5850 = vpop.f32.mrb[0].mxu0
      %v5851 = vadd.f32 %v5603, %v5850
      %v5852 = vpop.f32.mrb[0].mxu0
      %5853 = vmatprep.mubr.f32.mxu0 0.0
      %5854 = vmatmul.mubr.f32.gmra.mrb[0].mxu0 %v5585
      %v5855 = vpop.f32.mrb[0].mxu0
      %v5856 = vadd.f32 %v5603, %v5855
      %v5857 = vpop.f32.mrb[0].mxu0
      %5858 = vmatprep.mubr.f32.mxu0 0.0
      %5859 = vmatmul.mubr.f32.gmra.mrb[0].mxu0 %v5586
      %v5860 = vpop.f32.mrb[0].mxu0
      %v5861 = vadd.f32 %v5603, %v5860
      %v5862 = vpop.f32.mrb[0].mxu0
      %5863 = vdwg.mxu0
      %v5864 = vmax.f32 %v5671, 0.0
      %v5865 = vmax.f32 %v5676, 0.0
      %v5866 = vmax.f32 %v5681, 0.0
      %v5867 = vmax.f32 %v5686, 0.0
      %v5868 = vmax.f32 %v5691, 0.0
      %v5869 = vmax.f32 %v5696, 0.0
      %v5870 = vmax.f32 %v5701, 0.0
      %v5871 = vmax.f32 %v5706, 0.0
      %v5872 = vmax.f32 %v5711, 0.0
      %v5873 = vmax.f32 %v5716, 0.0
      %v5874 = vmax.f32 %v5721, 0.0
      %v5875 = vmax.f32 %v5726, 0.0
      %v5876 = vmax.f32 %v5731, 0.0
      %v5877 = vmax.f32 %v5736, 0.0
      %v5878 = vmax.f32 %v5741, 0.0
      %v5879 = vmax.f32 %v5746, 0.0
      %v5880 = vmax.f32 %v5751, 0.0
      %v5881 = vmax.f32 %v5756, 0.0
      %v5882 = vmax.f32 %v5761, 0.0
      %v5883 = vmax.f32 %v5766, 0.0
      %v5884 = vmax.f32 %v5771, 0.0
      %v5885 = vmax.f32 %v5776, 0.0
      %v5886 = vmax.f32 %v5781, 0.0
      %v5887 = vmax.f32 %v5786, 0.0
      %v5888 = vmax.f32 %v5791, 0.0
      %v5889 = vmax.f32 %v5796, 0.0
      %v5890 = vmax.f32 %v5801, 0.0
      %v5891 = vmax.f32 %v5806, 0.0
      %v5892 = vmax.f32 %v5811, 0.0
      %v5893 = vmax.f32 %v5816, 0.0
      %v5894 = vmax.f32 %v5821, 0.0
      %v5895 = vmax.f32 %v5826, 0.0
      %v5896 = vmax.f32 %v5831, 0.0
      %v5897 = vmax.f32 %v5836, 0.0
      %v5898 = vmax.f32 %v5841, 0.0
      %v5899 = vmax.f32 %v5846, 0.0
      %v5900 = vmax.f32 %v5851, 0.0
      %v5901 = vmax.f32 %v5856, 0.0
      %v5902 = vmax.f32 %v5861, 0.0
      %v5903 = vld [vmem:[%s3] sm:$0xff]
      %v5904 = vld [vmem:[%s3 + $0x8] sm:$0xff]
      %v5905 = vld [vmem:[%s3 + $0x10] sm:$0xff]
      %v5906 = vld [vmem:[%s3 + $0x18] sm:$0xff]
      %v5907 = vld [vmem:[%s3 + $0x20] sm:$0xff]
      %v5908 = vld [vmem:[%s3 + $0x28] sm:$0xff]
      %v5909 = vld [vmem:[%s3 + $0x30] sm:$0xff]
      %v5910 = vld [vmem:[%s3 + $0x38] sm:$0xff]
      %v5911 = vld [vmem:[%s3 + $0x40] sm:$0xff]
      %v5912 = vld [vmem:[%s3 + $0x48] sm:$0xff]
      %v5913 = vld [vmem:[%s3 + $0x50] sm:$0xff]
      %v5914 = vld [vmem:[%s3 + $0x58] sm:$0xff]
      %v5915 = vld [vmem:[%s3 + $0x60] sm:$0xff]
      %v5916 = vld [vmem:[%s3 + $0x68] sm:$0xff]
      %v5917 = vld [vmem:[%s3 + $0x70] sm:$0xff]
      %v5918 = vld [vmem:[%s3 + $0x78] sm:$0xff]
      %v5919 = vld [vmem:[%s3 + $0x80] sm:$0xff]
      %v5920 = vld [vmem:[%s3 + $0x88] sm:$0xff]
      %v5921 = vld [vmem:[%s3 + $0x90] sm:$0xff]
      %v5922 = vld [vmem:[%s3 + $0x98] sm:$0xff]
      %v5923 = vld [vmem:[%s3 + $0xa0] sm:$0xff]
      %v5924 = vld [vmem:[%s3 + $0xa8] sm:$0xff]
      %v5925 = vld [vmem:[%s3 + $0xb0] sm:$0xff]
      %v5926 = vld [vmem:[%s3 + $0xb8] sm:$0xff]
      %v5927 = vld [vmem:[%s3 + $0xc0] sm:$0xff]
      %v5928 = vld [vmem:[%s3 + $0xc8] sm:$0xff]
      %v5929 = vld [vmem:[%s3 + $0xd0] sm:$0xff]
      %v5930 = vld [vmem:[%s3 + $0xd8] sm:$0xff]
      %v5931 = vld [vmem:[%s3 + $0xe0] sm:$0xff]
      %v5932 = vld [vmem:[%s3 + $0xe8] sm:$0xff]
      %v5933 = vld [vmem:[%s3 + $0xf0] sm:$0xff]
      %v5934 = vld [vmem:[%s3 + $0xf8] sm:$0xff]
      %v5935 = vld [vmem:[%s3 + $0x100] sm:$0xff]
      %v5936 = vld [vmem:[%s3 + $0x108] sm:$0xff]
      %v5937 = vld [vmem:[%s3 + $0x110] sm:$0xff]
      %v5938 = vld [vmem:[%s3 + $0x118] sm:$0xff]
      %v5939 = vld [vmem:[%s3 + $0x120] sm:$0xff]
      %v5940 = vld [vmem:[%s3 + $0x128] sm:$0xff]
      %v5941 = vld [vmem:[%s3 + $0x130] sm:$0xff]
      %v5942 = vld [vmem:[%s3 + $0x138] sm:$0xff]
      %v5943 = vld [vmem:[%s3 + $0x140] sm:$0xff]
      %v5944 = vld [vmem:[%s3 + $0x148] sm:$0xff]
      %v5945 = vld [vmem:[%s3 + $0x150] sm:$0xff]
      %v5946 = vld [vmem:[%s3 + $0x158] sm:$0xff]
      %v5947 = vld [vmem:[%s3 + $0x160] sm:$0xff]
      %v5948 = vld [vmem:[%s3 + $0x168] sm:$0xff]
      %v5949 = vld [vmem:[%s3 + $0x170] sm:$0xff]
      %v5950 = vld [vmem:[%s3 + $0x178] sm:$0xff]
      %v5951 = vld [vmem:[%s3 + $0x180] sm:$0xff]
      %v5952 = vld [vmem:[%s3 + $0x188] sm:$0xff]
      %v5953 = vld [vmem:[%s3 + $0x190] sm:$0xff]
      %v5954 = vld [vmem:[%s3 + $0x198] sm:$0xff]
      %v5955 = vld [vmem:[%s3 + $0x1a0] sm:$0xff]
      %v5956 = vld [vmem:[%s3 + $0x1a8] sm:$0xff]
      %v5957 = vld [vmem:[%s3 + $0x1b0] sm:$0xff]
      %v5958 = vld [vmem:[%s3 + $0x1b8] sm:$0xff]
      %v5959 = vld [vmem:[%s3 + $0x1c0] sm:$0xff]
      %v5960 = vld [vmem:[%s3 + $0x1c8] sm:$0xff]
      %v5961 = vld [vmem:[%s3 + $0x1d0] sm:$0xff]
      %v5962 = vld [vmem:[%s3 + $0x1d8] sm:$0xff]
      %v5963 = vld [vmem:[%s3 + $0x1e0] sm:$0xff]
      %v5964 = vld [vmem:[%s3 + $0x1e8] sm:$0xff]
      %v5965 = vld [vmem:[%s3 + $0x1f0] sm:$0xff]
      %v5966 = vld [vmem:[%s3 + $0x1f8] sm:$0xff]
      %v5967 = vld [vmem:[%s3 + $0x200] sm:$0xff]
      %v5968 = vld [vmem:[%s3 + $0x208] sm:$0xff]
      %v5969 = vld [vmem:[%s3 + $0x210] sm:$0xff]
      %v5970 = vld [vmem:[%s3 + $0x218] sm:$0xff]
      %v5971 = vld [vmem:[%s3 + $0x220] sm:$0xff]
      %v5972 = vld [vmem:[%s3 + $0x228] sm:$0xff]
      %v5973 = vld [vmem:[%s3 + $0x230] sm:$0xff]
      %v5974 = vld [vmem:[%s3 + $0x238] sm:$0xff]
      %v5975 = vld [vmem:[%s3 + $0x240] sm:$0xff]
      %v5976 = vld [vmem:[%s3 + $0x248] sm:$0xff]
      %v5977 = vld [vmem:[%s3 + $0x250] sm:$0xff]
      %v5978 = vld [vmem:[%s3 + $0x258] sm:$0xff]
      %v5979 = vld [vmem:[%s3 + $0x260] sm:$0xff]
      %v5980 = vld [vmem:[%s3 + $0x268] sm:$0xff]
      %v5981 = vld [vmem:[%s3 + $0x270] sm:$0xff]
      %v5982 = vld [vmem:[%s3 + $0x278] sm:$0xff]
      %s5983 = scalar_lea.vmem %s4, 41
      %v5984 = vld [vmem:[%s5983] ss:$8 sm:$0xf]
      %v5985 = vld [vmem:[%s5983] ss:$8 sm:$0x10]
      %v5986 = vor.u32 %v5984, %v5985
      %v5988 = vlaneseq
      %v5989 = vshrl.u32 %v5988, 7
      %v5990 = vsub.s32 0, %v5989
      %v5991 = vrot.slane %v5986, %v5990
      %v5992 = vlaneseq
      %v5993 = vshrl.u32 %v5992, 7
      %v5994 = vsub.s32 1, %v5993
      %v5995 = vrot.slane %v5986, %v5994
      %v5996 = vlaneseq
      %v5997 = vshrl.u32 %v5996, 7
      %v5998 = vsub.s32 2, %v5997
      %v5999 = vrot.slane %v5986, %v5998
      %v6000 = vlaneseq
      %v6001 = vshrl.u32 %v6000, 7
      %v6002 = vsub.s32 3, %v6001
      %v6003 = vrot.slane %v5986, %v6002
      %v6004 = vlaneseq
      %v6005 = vshrl.u32 %v6004, 7
      %v6006 = vsub.s32 4, %v6005
      %v6007 = vrot.slane %v5986, %v6006
      %6013 = vmatprep.subr.mxu0 %v5904
      %6014 = vmatpush1.msra.mxu0 %v5903
      %6015 = vmatprep.subr.mxu0 %v5909
      %6016 = vmatpush1.msra.mxu0 %v5908
      %6017 = vmatprep.subr.mxu0 %v5914
      %6018 = vmatpush1.msra.mxu0 %v5913
      %6019 = vmatprep.subr.mxu0 %v5919
      %6020 = vmatpush1.msra.mxu0 %v5918
      %6021 = vmatprep.subr.mxu0 %v5924
      %6022 = vmatpush1.msra.mxu0 %v5923
      %6023 = vmatprep.subr.mxu0 %v5929
      %6024 = vmatpush1.msra.mxu0 %v5928
      %6025 = vmatprep.subr.mxu0 %v5934
      %6026 = vmatpush1.msra.mxu0 %v5933
      %6027 = vmatprep.subr.mxu0 %v5939
      %6028 = vmatpush1.msra.mxu0 %v5938
      %6029 = vmatprep.subr.mxu0 %v5944
      %6030 = vmatpush1.msra.mxu0 %v5943
      %6031 = vmatprep.subr.mxu0 %v5949
      %6032 = vmatpush1.msra.mxu0 %v5948
      %6033 = vmatprep.subr.mxu0 %v5954
      %6034 = vmatpush1.msra.mxu0 %v5953
      %6035 = vmatprep.subr.mxu0 %v5959
      %6036 = vmatpush1.msra.mxu0 %v5958
      %6037 = vmatprep.subr.mxu0 %v5964
      %6038 = vmatpush1.msra.mxu0 %v5963
      %6039 = vmatprep.subr.mxu0 %v5969
      %6040 = vmatpush1.msra.mxu0 %v5968
      %6041 = vmatprep.subr.mxu0 %v5974
      %6042 = vmatpush1.msra.mxu0 %v5973
      %6043 = vmatprep.subr.mxu0 %v5979
      %6044 = vmatpush1.msra.mxu0 %v5978
      %6045 = vmatprep.subr.mxu0 0.0
      %6046 = vmatpush1.msra.mxu0 0.0
      %6047 = vmatprep.subr.mxu0 0.0
      %6048 = vmatpush1.msra.mxu0 0.0
      %6049 = vmatprep.subr.mxu0 0.0
      %6050 = vmatpush1.msra.mxu0 0.0
      %6051 = vmatprep.subr.mxu0 0.0
      %6052 = vmatpush1.msra.mxu0 0.0
      %6053 = vmatprep.subr.mxu0 0.0
      %6054 = vmatpush1.msra.mxu0 0.0
      %6055 = vmatprep.subr.mxu0 0.0
      %6056 = vmatpush1.msra.mxu0 0.0
      %6057 = vmatprep.subr.mxu0 0.0
      %6058 = vmatpush1.msra.mxu0 0.0
      %6059 = vmatprep.subr.mxu0 0.0
      %6060 = vmatpush1.msra.mxu0 0.0
      %6061 = vmatprep.subr.mxu0 0.0
      %6062 = vmatpush1.msra.mxu0 0.0
      %6063 = vmatprep.subr.mxu0 0.0
      %6064 = vmatpush1.msra.mxu0 0.0
      %6065 = vmatprep.subr.mxu0 0.0
      %6066 = vmatpush1.msra.mxu0 0.0
      %6067 = vmatprep.subr.mxu0 0.0
      %6068 = vmatpush1.msra.mxu0 0.0
      %6069 = vmatprep.subr.mxu0 0.0
      %6070 = vmatpush1.msra.mxu0 0.0
      %6071 = vmatprep.subr.mxu0 0.0
      %6072 = vmatpush1.msra.mxu0 0.0
      %6073 = vmatprep.subr.mxu0 0.0
      %6074 = vmatpush1.msra.mxu0 0.0
      %6075 = vmatprep.subr.mxu0 0.0
      %6076 = vmatpush1.msra.mxu0 0.0
      %6077 = vmatprep.mubr.f32.mxu0 0.0
      %6078 = vmatmul.mubr.f32.gmra.mrb[0].mxu0 %v5864
      %v6079 = vpop.f32.mrb[0].mxu0
      %v6080 = vadd.f32 %v5991, %v6079
      %v6081 = vpop.f32.mrb[0].mxu0
      %v6082 = vadd.f32 %v5995, %v6081
      %6083 = vmatprep.mubr.f32.mxu0 0.0
      %6084 = vmatmul.mubr.f32.gmra.mrb[0].mxu0 %v5865
      %v6085 = vpop.f32.mrb[0].mxu0
      %v6086 = vadd.f32 %v5991, %v6085
      %v6087 = vpop.f32.mrb[0].mxu0
      %v6088 = vadd.f32 %v5995, %v6087
      %6089 = vmatprep.mubr.f32.mxu0 0.0
      %6090 = vmatmul.mubr.f32.gmra.mrb[0].mxu0 %v5866
      %v6091 = vpop.f32.mrb[0].mxu0
      %v6092 = vadd.f32 %v5991, %v6091
      %v6093 = vpop.f32.mrb[0].mxu0
      %v6094 = vadd.f32 %v5995, %v6093
      %6095 = vmatprep.mubr.f32.mxu0 0.0
      %6096 = vmatmul.mubr.f32.gmra.mrb[0].mxu0 %v5867
      %v6097 = vpop.f32.mrb[0].mxu0
      %v6098 = vadd.f32 %v5991, %v6097
      %v6099 = vpop.f32.mrb[0].mxu0
      %v6100 = vadd.f32 %v5995, %v6099
      %6101 = vmatprep.mubr.f32.mxu0 0.0
      %6102 = vmatmul.mubr.f32.gmra.mrb[0].mxu0 %v5868
      %v6103 = vpop.f32.mrb[0].mxu0
      %v6104 = vadd.f32 %v5991, %v6103
      %v6105 = vpop.f32.mrb[0].mxu0
      %v6106 = vadd.f32 %v5995, %v6105
      %6107 = vmatprep.mubr.f32.mxu0 0.0
      %6108 = vmatmul.mubr.f32.gmra.mrb[0].mxu0 %v5869
      %v6109 = vpop.f32.mrb[0].mxu0
      %v6110 = vadd.f32 %v5991, %v6109
      %v6111 = vpop.f32.mrb[0].mxu0
      %v6112 = vadd.f32 %v5995, %v6111
      %6113 = vmatprep.mubr.f32.mxu0 0.0
      %6114 = vmatmul.mubr.f32.gmra.mrb[0].mxu0 %v5870
      %v6115 = vpop.f32.mrb[0].mxu0
      %v6116 = vadd.f32 %v5991, %v6115
      %v6117 = vpop.f32.mrb[0].mxu0
      %v6118 = vadd.f32 %v5995, %v6117
      %6119 = vmatprep.mubr.f32.mxu0 0.0
      %6120 = vmatmul.mubr.f32.gmra.mrb[0].mxu0 %v5871
      %v6121 = vpop.f32.mrb[0].mxu0
      %v6122 = vadd.f32 %v5991, %v6121
      %v6123 = vpop.f32.mrb[0].mxu0
      %v6124 = vadd.f32 %v5995, %v6123
      %6125 = vmatprep.mubr.f32.mxu0 0.0
      %6126 = vmatmul.mubr.f32.gmra.mrb[0].mxu0 %v5872
      %v6127 = vpop.f32.mrb[0].mxu0
      %v6128 = vadd.f32 %v5991, %v6127
      %v6129 = vpop.f32.mrb[0].mxu0
      %v6130 = vadd.f32 %v5995, %v6129
      %6131 = vmatprep.mubr.f32.mxu0 0.0
      %6132 = vmatmul.mubr.f32.gmra.mrb[0].mxu0 %v5873
      %v6133 = vpop.f32.mrb[0].mxu0
      %v6134 = vadd.f32 %v5991, %v6133
      %v6135 = vpop.f32.mrb[0].mxu0
      %v6136 = vadd.f32 %v5995, %v6135
      %6137 = vmatprep.mubr.f32.mxu0 0.0
      %6138 = vmatmul.mubr.f32.gmra.mrb[0].mxu0 %v5874
      %v6139 = vpop.f32.mrb[0].mxu0
      %v6140 = vadd.f32 %v5991, %v6139
      %v6141 = vpop.f32.mrb[0].mxu0
      %v6142 = vadd.f32 %v5995, %v6141
      %6143 = vmatprep.mubr.f32.mxu0 0.0
      %6144 = vmatmul.mubr.f32.gmra.mrb[0].mxu0 %v5875
      %v6145 = vpop.f32.mrb[0].mxu0
      %v6146 = vadd.f32 %v5991, %v6145
      %v6147 = vpop.f32.mrb[0].mxu0
      %v6148 = vadd.f32 %v5995, %v6147
      %6149 = vmatprep.mubr.f32.mxu0 0.0
      %6150 = vmatmul.mubr.f32.gmra.mrb[0].mxu0 %v5876
      %v6151 = vpop.f32.mrb[0].mxu0
      %v6152 = vadd.f32 %v5991, %v6151
      %v6153 = vpop.f32.mrb[0].mxu0
      %v6154 = vadd.f32 %v5995, %v6153
      %6155 = vmatprep.mubr.f32.mxu0 0.0
      %6156 = vmatmul.mubr.f32.gmra.mrb[0].mxu0 %v5877
      %v6157 = vpop.f32.mrb[0].mxu0
      %v6158 = vadd.f32 %v5991, %v6157
      %v6159 = vpop.f32.mrb[0].mxu0
      %v6160 = vadd.f32 %v5995, %v6159
      %6161 = vmatprep.mubr.f32.mxu0 0.0
      %6162 = vmatmul.mubr.f32.gmra.mrb[0].mxu0 %v5878
      %v6163 = vpop.f32.mrb[0].mxu0
      %v6164 = vadd.f32 %v5991, %v6163
      %v6165 = vpop.f32.mrb[0].mxu0
      %v6166 = vadd.f32 %v5995, %v6165
      %6167 = vmatprep.mubr.f32.mxu0 0.0
      %6168 = vmatmul.mubr.f32.gmra.mrb[0].mxu0 %v5879
      %v6169 = vpop.f32.mrb[0].mxu0
      %v6170 = vadd.f32 %v5991, %v6169
      %v6171 = vpop.f32.mrb[0].mxu0
      %v6172 = vadd.f32 %v5995, %v6171
      %6173 = vmatprep.mubr.f32.mxu0 0.0
      %6174 = vmatmul.mubr.f32.gmra.mrb[0].mxu0 %v5880
      %v6175 = vpop.f32.mrb[0].mxu0
      %v6176 = vadd.f32 %v5991, %v6175
      %v6177 = vpop.f32.mrb[0].mxu0
      %v6178 = vadd.f32 %v5995, %v6177
      %6179 = vmatprep.mubr.f32.mxu0 0.0
      %6180 = vmatmul.mubr.f32.gmra.mrb[0].mxu0 %v5881
      %v6181 = vpop.f32.mrb[0].mxu0
      %v6182 = vadd.f32 %v5991, %v6181
      %v6183 = vpop.f32.mrb[0].mxu0
      %v6184 = vadd.f32 %v5995, %v6183
      %6185 = vmatprep.mubr.f32.mxu0 0.0
      %6186 = vmatmul.mubr.f32.gmra.mrb[0].mxu0 %v5882
      %v6187 = vpop.f32.mrb[0].mxu0
      %v6188 = vadd.f32 %v5991, %v6187
      %v6189 = vpop.f32.mrb[0].mxu0
      %v6190 = vadd.f32 %v5995, %v6189
      %6191 = vmatprep.mubr.f32.mxu0 0.0
      %6192 = vmatmul.mubr.f32.gmra.mrb[0].mxu0 %v5883
      %v6193 = vpop.f32.mrb[0].mxu0
      %v6194 = vadd.f32 %v5991, %v6193
      %v6195 = vpop.f32.mrb[0].mxu0
      %v6196 = vadd.f32 %v5995, %v6195
      %6197 = vmatprep.mubr.f32.mxu0 0.0
      %6198 = vmatmul.mubr.f32.gmra.mrb[0].mxu0 %v5884
      %v6199 = vpop.f32.mrb[0].mxu0
      %v6200 = vadd.f32 %v5991, %v6199
      %v6201 = vpop.f32.mrb[0].mxu0
      %v6202 = vadd.f32 %v5995, %v6201
      %6203 = vmatprep.mubr.f32.mxu0 0.0
      %6204 = vmatmul.mubr.f32.gmra.mrb[0].mxu0 %v5885
      %v6205 = vpop.f32.mrb[0].mxu0
      %v6206 = vadd.f32 %v5991, %v6205
      %v6207 = vpop.f32.mrb[0].mxu0
      %v6208 = vadd.f32 %v5995, %v6207
      %6209 = vmatprep.mubr.f32.mxu0 0.0
      %6210 = vmatmul.mubr.f32.gmra.mrb[0].mxu0 %v5886
      %v6211 = vpop.f32.mrb[0].mxu0
      %v6212 = vadd.f32 %v5991, %v6211
      %v6213 = vpop.f32.mrb[0].mxu0
      %v6214 = vadd.f32 %v5995, %v6213
      %6215 = vmatprep.mubr.f32.mxu0 0.0
      %6216 = vmatmul.mubr.f32.gmra.mrb[0].mxu0 %v5887
      %v6217 = vpop.f32.mrb[0].mxu0
      %v6218 = vadd.f32 %v5991, %v6217
      %v6219 = vpop.f32.mrb[0].mxu0
      %v6220 = vadd.f32 %v5995, %v6219
      %6221 = vmatprep.mubr.f32.mxu0 0.0
      %6222 = vmatmul.mubr.f32.gmra.mrb[0].mxu0 %v5888
      %v6223 = vpop.f32.mrb[0].mxu0
      %v6224 = vadd.f32 %v5991, %v6223
      %v6225 = vpop.f32.mrb[0].mxu0
      %v6226 = vadd.f32 %v5995, %v6225
      %6227 = vmatprep.mubr.f32.mxu0 0.0
      %6228 = vmatmul.mubr.f32.gmra.mrb[0].mxu0 %v5889
      %v6229 = vpop.f32.mrb[0].mxu0
      %v6230 = vadd.f32 %v5991, %v6229
      %v6231 = vpop.f32.mrb[0].mxu0
      %v6232 = vadd.f32 %v5995, %v6231
      %6233 = vmatprep.mubr.f32.mxu0 0.0
      %6234 = vmatmul.mubr.f32.gmra.mrb[0].mxu0 %v5890
      %v6235 = vpop.f32.mrb[0].mxu0
      %v6236 = vadd.f32 %v5991, %v6235
      %v6237 = vpop.f32.mrb[0].mxu0
      %v6238 = vadd.f32 %v5995, %v6237
      %6239 = vmatprep.mubr.f32.mxu0 0.0
      %6240 = vmatmul.mubr.f32.gmra.mrb[0].mxu0 %v5891
      %v6241 = vpop.f32.mrb[0].mxu0
      %v6242 = vadd.f32 %v5991, %v6241
      %v6243 = vpop.f32.mrb[0].mxu0
      %v6244 = vadd.f32 %v5995, %v6243
      %6245 = vmatprep.mubr.f32.mxu0 0.0
      %6246 = vmatmul.mubr.f32.gmra.mrb[0].mxu0 %v5892
      %v6247 = vpop.f32.mrb[0].mxu0
      %v6248 = vadd.f32 %v5991, %v6247
      %v6249 = vpop.f32.mrb[0].mxu0
      %v6250 = vadd.f32 %v5995, %v6249
      %6251 = vmatprep.mubr.f32.mxu0 0.0
      %6252 = vmatmul.mubr.f32.gmra.mrb[0].mxu0 %v5893
      %v6253 = vpop.f32.mrb[0].mxu0
      %v6254 = vadd.f32 %v5991, %v6253
      %v6255 = vpop.f32.mrb[0].mxu0
      %v6256 = vadd.f32 %v5995, %v6255
      %6257 = vmatprep.mubr.f32.mxu0 0.0
      %6258 = vmatmul.mubr.f32.gmra.mrb[0].mxu0 %v5894
      %v6259 = vpop.f32.mrb[0].mxu0
      %v6260 = vadd.f32 %v5991, %v6259
      %v6261 = vpop.f32.mrb[0].mxu0
      %v6262 = vadd.f32 %v5995, %v6261
      %6263 = vmatprep.mubr.f32.mxu0 0.0
      %6264 = vmatmul.mubr.f32.gmra.mrb[0].mxu0 %v5895
      %v6265 = vpop.f32.mrb[0].mxu0
      %v6266 = vadd.f32 %v5991, %v6265
      %v6267 = vpop.f32.mrb[0].mxu0
      %v6268 = vadd.f32 %v5995, %v6267
      %6269 = vmatprep.mubr.f32.mxu0 0.0
      %6270 = vmatmul.mubr.f32.gmra.mrb[0].mxu0 %v5896
      %v6271 = vpop.f32.mrb[0].mxu0
      %v6272 = vadd.f32 %v5991, %v6271
      %v6273 = vpop.f32.mrb[0].mxu0
      %v6274 = vadd.f32 %v5995, %v6273
      %6275 = vmatprep.mubr.f32.mxu0 0.0
      %6276 = vmatmul.mubr.f32.gmra.mrb[0].mxu0 %v5897
      %v6277 = vpop.f32.mrb[0].mxu0
      %v6278 = vadd.f32 %v5991, %v6277
      %v6279 = vpop.f32.mrb[0].mxu0
      %v6280 = vadd.f32 %v5995, %v6279
      %6281 = vmatprep.mubr.f32.mxu0 0.0
      %6282 = vmatmul.mubr.f32.gmra.mrb[0].mxu0 %v5898
      %v6283 = vpop.f32.mrb[0].mxu0
      %v6284 = vadd.f32 %v5991, %v6283
      %v6285 = vpop.f32.mrb[0].mxu0
      %v6286 = vadd.f32 %v5995, %v6285
      %6287 = vmatprep.mubr.f32.mxu0 0.0
      %6288 = vmatmul.mubr.f32.gmra.mrb[0].mxu0 %v5899
      %v6289 = vpop.f32.mrb[0].mxu0
      %v6290 = vadd.f32 %v5991, %v6289
      %v6291 = vpop.f32.mrb[0].mxu0
      %v6292 = vadd.f32 %v5995, %v6291
      %6293 = vmatprep.mubr.f32.mxu0 0.0
      %6294 = vmatmul.mubr.f32.gmra.mrb[0].mxu0 %v5900
      %v6295 = vpop.f32.mrb[0].mxu0
      %v6296 = vadd.f32 %v5991, %v6295
      %v6297 = vpop.f32.mrb[0].mxu0
      %v6298 = vadd.f32 %v5995, %v6297
      %6299 = vmatprep.mubr.f32.mxu0 0.0
      %6300 = vmatmul.mubr.f32.gmra.mrb[0].mxu0 %v5901
      %v6301 = vpop.f32.mrb[0].mxu0
      %v6302 = vadd.f32 %v5991, %v6301
      %v6303 = vpop.f32.mrb[0].mxu0
      %v6304 = vadd.f32 %v5995, %v6303
      %6305 = vmatprep.mubr.f32.mxu0 0.0
      %6306 = vmatmul.mubr.f32.gmra.mrb[0].mxu0 %v5902
      %v6307 = vpop.f32.mrb[0].mxu0
      %v6308 = vadd.f32 %v5991, %v6307
      %v6309 = vpop.f32.mrb[0].mxu0
      %v6310 = vadd.f32 %v5995, %v6309
      %6311 = vdwg.mxu0
      %6312 = vmatprep.subr.mxu0 %v5906
      %6313 = vmatpush1.msra.mxu0 %v5905
      %6314 = vmatprep.subr.mxu0 %v5911
      %6315 = vmatpush1.msra.mxu0 %v5910
      %6316 = vmatprep.subr.mxu0 %v5916
      %6317 = vmatpush1.msra.mxu0 %v5915
      %6318 = vmatprep.subr.mxu0 %v5921
      %6319 = vmatpush1.msra.mxu0 %v5920
      %6320 = vmatprep.subr.mxu0 %v5926
      %6321 = vmatpush1.msra.mxu0 %v5925
      %6322 = vmatprep.subr.mxu0 %v5931
      %6323 = vmatpush1.msra.mxu0 %v5930
      %6324 = vmatprep.subr.mxu0 %v5936
      %6325 = vmatpush1.msra.mxu0 %v5935
      %6326 = vmatprep.subr.mxu0 %v5941
      %6327 = vmatpush1.msra.mxu0 %v5940
      %6328 = vmatprep.subr.mxu0 %v5946
      %6329 = vmatpush1.msra.mxu0 %v5945
      %6330 = vmatprep.subr.mxu0 %v5951
      %6331 = vmatpush1.msra.mxu0 %v5950
      %6332 = vmatprep.subr.mxu0 %v5956
      %6333 = vmatpush1.msra.mxu0 %v5955
      %6334 = vmatprep.subr.mxu0 %v5961
      %6335 = vmatpush1.msra.mxu0 %v5960
      %6336 = vmatprep.subr.mxu0 %v5966
      %6337 = vmatpush1.msra.mxu0 %v5965
      %6338 = vmatprep.subr.mxu0 %v5971
      %6339 = vmatpush1.msra.mxu0 %v5970
      %6340 = vmatprep.subr.mxu0 %v5976
      %6341 = vmatpush1.msra.mxu0 %v5975
      %6342 = vmatprep.subr.mxu0 %v5981
      %6343 = vmatpush1.msra.mxu0 %v5980
      %6344 = vmatprep.subr.mxu0 0.0
      %6345 = vmatpush1.msra.mxu0 0.0
      %6346 = vmatprep.subr.mxu0 0.0
      %6347 = vmatpush1.msra.mxu0 0.0
      %6348 = vmatprep.subr.mxu0 0.0
      %6349 = vmatpush1.msra.mxu0 0.0
      %6350 = vmatprep.subr.mxu0 0.0
      %6351 = vmatpush1.msra.mxu0 0.0
      %6352 = vmatprep.subr.mxu0 0.0
      %6353 = vmatpush1.msra.mxu0 0.0
      %6354 = vmatprep.subr.mxu0 0.0
      %6355 = vmatpush1.msra.mxu0 0.0
      %6356 = vmatprep.subr.mxu0 0.0
      %6357 = vmatpush1.msra.mxu0 0.0
      %6358 = vmatprep.subr.mxu0 0.0
      %6359 = vmatpush1.msra.mxu0 0.0
      %6360 = vmatprep.subr.mxu0 0.0
      %6361 = vmatpush1.msra.mxu0 0.0
      %6362 = vmatprep.subr.mxu0 0.0
      %6363 = vmatpush1.msra.mxu0 0.0
      %6364 = vmatprep.subr.mxu0 0.0
      %6365 = vmatpush1.msra.mxu0 0.0
      %6366 = vmatprep.subr.mxu0 0.0
      %6367 = vmatpush1.msra.mxu0 0.0
      %6368 = vmatprep.subr.mxu0 0.0
      %6369 = vmatpush1.msra.mxu0 0.0
      %6370 = vmatprep.subr.mxu0 0.0
      %6371 = vmatpush1.msra.mxu0 0.0
      %6372 = vmatprep.subr.mxu0 0.0
      %6373 = vmatpush1.msra.mxu0 0.0
      %6374 = vmatprep.subr.mxu0 0.0
      %6375 = vmatpush1.msra.mxu0 0.0
      %6376 = vmatprep.mubr.f32.mxu0 0.0
      %6377 = vmatmul.mubr.f32.gmra.mrb[0].mxu0 %v5864
      %v6378 = vpop.f32.mrb[0].mxu0
      %v6379 = vadd.f32 %v5999, %v6378
      %v6380 = vpop.f32.mrb[0].mxu0
      %v6381 = vadd.f32 %v6003, %v6380
      %6382 = vmatprep.mubr.f32.mxu0 0.0
      %6383 = vmatmul.mubr.f32.gmra.mrb[0].mxu0 %v5865
      %v6384 = vpop.f32.mrb[0].mxu0
      %v6385 = vadd.f32 %v5999, %v6384
      %v6386 = vpop.f32.mrb[0].mxu0
      %v6387 = vadd.f32 %v6003, %v6386
      %6388 = vmatprep.mubr.f32.mxu0 0.0
      %6389 = vmatmul.mubr.f32.gmra.mrb[0].mxu0 %v5866
      %v6390 = vpop.f32.mrb[0].mxu0
      %v6391 = vadd.f32 %v5999, %v6390
      %v6392 = vpop.f32.mrb[0].mxu0
      %v6393 = vadd.f32 %v6003, %v6392
      %6394 = vmatprep.mubr.f32.mxu0 0.0
      %6395 = vmatmul.mubr.f32.gmra.mrb[0].mxu0 %v5867
      %v6396 = vpop.f32.mrb[0].mxu0
      %v6397 = vadd.f32 %v5999, %v6396
      %v6398 = vpop.f32.mrb[0].mxu0
      %v6399 = vadd.f32 %v6003, %v6398
      %6400 = vmatprep.mubr.f32.mxu0 0.0
      %6401 = vmatmul.mubr.f32.gmra.mrb[0].mxu0 %v5868
      %v6402 = vpop.f32.mrb[0].mxu0
      %v6403 = vadd.f32 %v5999, %v6402
      %v6404 = vpop.f32.mrb[0].mxu0
      %v6405 = vadd.f32 %v6003, %v6404
      %6406 = vmatprep.mubr.f32.mxu0 0.0
      %6407 = vmatmul.mubr.f32.gmra.mrb[0].mxu0 %v5869
      %v6408 = vpop.f32.mrb[0].mxu0
      %v6409 = vadd.f32 %v5999, %v6408
      %v6410 = vpop.f32.mrb[0].mxu0
      %v6411 = vadd.f32 %v6003, %v6410
      %6412 = vmatprep.mubr.f32.mxu0 0.0
      %6413 = vmatmul.mubr.f32.gmra.mrb[0].mxu0 %v5870
      %v6414 = vpop.f32.mrb[0].mxu0
      %v6415 = vadd.f32 %v5999, %v6414
      %v6416 = vpop.f32.mrb[0].mxu0
      %v6417 = vadd.f32 %v6003, %v6416
      %6418 = vmatprep.mubr.f32.mxu0 0.0
      %6419 = vmatmul.mubr.f32.gmra.mrb[0].mxu0 %v5871
      %v6420 = vpop.f32.mrb[0].mxu0
      %v6421 = vadd.f32 %v5999, %v6420
      %v6422 = vpop.f32.mrb[0].mxu0
      %v6423 = vadd.f32 %v6003, %v6422
      %6424 = vmatprep.mubr.f32.mxu0 0.0
      %6425 = vmatmul.mubr.f32.gmra.mrb[0].mxu0 %v5872
      %v6426 = vpop.f32.mrb[0].mxu0
      %v6427 = vadd.f32 %v5999, %v6426
      %v6428 = vpop.f32.mrb[0].mxu0
      %v6429 = vadd.f32 %v6003, %v6428
      %6430 = vmatprep.mubr.f32.mxu0 0.0
      %6431 = vmatmul.mubr.f32.gmra.mrb[0].mxu0 %v5873
      %v6432 = vpop.f32.mrb[0].mxu0
      %v6433 = vadd.f32 %v5999, %v6432
      %v6434 = vpop.f32.mrb[0].mxu0
      %v6435 = vadd.f32 %v6003, %v6434
      %6436 = vmatprep.mubr.f32.mxu0 0.0
      %6437 = vmatmul.mubr.f32.gmra.mrb[0].mxu0 %v5874
      %v6438 = vpop.f32.mrb[0].mxu0
      %v6439 = vadd.f32 %v5999, %v6438
      %v6440 = vpop.f32.mrb[0].mxu0
      %v6441 = vadd.f32 %v6003, %v6440
      %6442 = vmatprep.mubr.f32.mxu0 0.0
      %6443 = vmatmul.mubr.f32.gmra.mrb[0].mxu0 %v5875
      %v6444 = vpop.f32.mrb[0].mxu0
      %v6445 = vadd.f32 %v5999, %v6444
      %v6446 = vpop.f32.mrb[0].mxu0
      %v6447 = vadd.f32 %v6003, %v6446
      %6448 = vmatprep.mubr.f32.mxu0 0.0
      %6449 = vmatmul.mubr.f32.gmra.mrb[0].mxu0 %v5876
      %v6450 = vpop.f32.mrb[0].mxu0
      %v6451 = vadd.f32 %v5999, %v6450
      %v6452 = vpop.f32.mrb[0].mxu0
      %v6453 = vadd.f32 %v6003, %v6452
      %6454 = vmatprep.mubr.f32.mxu0 0.0
      %6455 = vmatmul.mubr.f32.gmra.mrb[0].mxu0 %v5877
      %v6456 = vpop.f32.mrb[0].mxu0
      %v6457 = vadd.f32 %v5999, %v6456
      %v6458 = vpop.f32.mrb[0].mxu0
      %v6459 = vadd.f32 %v6003, %v6458
      %6460 = vmatprep.mubr.f32.mxu0 0.0
      %6461 = vmatmul.mubr.f32.gmra.mrb[0].mxu0 %v5878
      %v6462 = vpop.f32.mrb[0].mxu0
      %v6463 = vadd.f32 %v5999, %v6462
      %v6464 = vpop.f32.mrb[0].mxu0
      %v6465 = vadd.f32 %v6003, %v6464
      %6466 = vmatprep.mubr.f32.mxu0 0.0
      %6467 = vmatmul.mubr.f32.gmra.mrb[0].mxu0 %v5879
      %v6468 = vpop.f32.mrb[0].mxu0
      %v6469 = vadd.f32 %v5999, %v6468
      %v6470 = vpop.f32.mrb[0].mxu0
      %v6471 = vadd.f32 %v6003, %v6470
      %6472 = vmatprep.mubr.f32.mxu0 0.0
      %6473 = vmatmul.mubr.f32.gmra.mrb[0].mxu0 %v5880
      %v6474 = vpop.f32.mrb[0].mxu0
      %v6475 = vadd.f32 %v5999, %v6474
      %v6476 = vpop.f32.mrb[0].mxu0
      %v6477 = vadd.f32 %v6003, %v6476
      %6478 = vmatprep.mubr.f32.mxu0 0.0
      %6479 = vmatmul.mubr.f32.gmra.mrb[0].mxu0 %v5881
      %v6480 = vpop.f32.mrb[0].mxu0
      %v6481 = vadd.f32 %v5999, %v6480
      %v6482 = vpop.f32.mrb[0].mxu0
      %v6483 = vadd.f32 %v6003, %v6482
      %6484 = vmatprep.mubr.f32.mxu0 0.0
      %6485 = vmatmul.mubr.f32.gmra.mrb[0].mxu0 %v5882
      %v6486 = vpop.f32.mrb[0].mxu0
      %v6487 = vadd.f32 %v5999, %v6486
      %v6488 = vpop.f32.mrb[0].mxu0
      %v6489 = vadd.f32 %v6003, %v6488
      %6490 = vmatprep.mubr.f32.mxu0 0.0
      %6491 = vmatmul.mubr.f32.gmra.mrb[0].mxu0 %v5883
      %v6492 = vpop.f32.mrb[0].mxu0
      %v6493 = vadd.f32 %v5999, %v6492
      %v6494 = vpop.f32.mrb[0].mxu0
      %v6495 = vadd.f32 %v6003, %v6494
      %6496 = vmatprep.mubr.f32.mxu0 0.0
      %6497 = vmatmul.mubr.f32.gmra.mrb[0].mxu0 %v5884
      %v6498 = vpop.f32.mrb[0].mxu0
      %v6499 = vadd.f32 %v5999, %v6498
      %v6500 = vpop.f32.mrb[0].mxu0
      %v6501 = vadd.f32 %v6003, %v6500
      %6502 = vmatprep.mubr.f32.mxu0 0.0
      %6503 = vmatmul.mubr.f32.gmra.mrb[0].mxu0 %v5885
      %v6504 = vpop.f32.mrb[0].mxu0
      %v6505 = vadd.f32 %v5999, %v6504
      %v6506 = vpop.f32.mrb[0].mxu0
      %v6507 = vadd.f32 %v6003, %v6506
      %6508 = vmatprep.mubr.f32.mxu0 0.0
      %6509 = vmatmul.mubr.f32.gmra.mrb[0].mxu0 %v5886
      %v6510 = vpop.f32.mrb[0].mxu0
      %v6511 = vadd.f32 %v5999, %v6510
      %v6512 = vpop.f32.mrb[0].mxu0
      %v6513 = vadd.f32 %v6003, %v6512
      %6514 = vmatprep.mubr.f32.mxu0 0.0
      %6515 = vmatmul.mubr.f32.gmra.mrb[0].mxu0 %v5887
      %v6516 = vpop.f32.mrb[0].mxu0
      %v6517 = vadd.f32 %v5999, %v6516
      %v6518 = vpop.f32.mrb[0].mxu0
      %v6519 = vadd.f32 %v6003, %v6518
      %6520 = vmatprep.mubr.f32.mxu0 0.0
      %6521 = vmatmul.mubr.f32.gmra.mrb[0].mxu0 %v5888
      %v6522 = vpop.f32.mrb[0].mxu0
      %v6523 = vadd.f32 %v5999, %v6522
      %v6524 = vpop.f32.mrb[0].mxu0
      %v6525 = vadd.f32 %v6003, %v6524
      %6526 = vmatprep.mubr.f32.mxu0 0.0
      %6527 = vmatmul.mubr.f32.gmra.mrb[0].mxu0 %v5889
      %v6528 = vpop.f32.mrb[0].mxu0
      %v6529 = vadd.f32 %v5999, %v6528
      %v6530 = vpop.f32.mrb[0].mxu0
      %v6531 = vadd.f32 %v6003, %v6530
      %6532 = vmatprep.mubr.f32.mxu0 0.0
      %6533 = vmatmul.mubr.f32.gmra.mrb[0].mxu0 %v5890
      %v6534 = vpop.f32.mrb[0].mxu0
      %v6535 = vadd.f32 %v5999, %v6534
      %v6536 = vpop.f32.mrb[0].mxu0
      %v6537 = vadd.f32 %v6003, %v6536
      %6538 = vmatprep.mubr.f32.mxu0 0.0
      %6539 = vmatmul.mubr.f32.gmra.mrb[0].mxu0 %v5891
      %v6540 = vpop.f32.mrb[0].mxu0
      %v6541 = vadd.f32 %v5999, %v6540
      %v6542 = vpop.f32.mrb[0].mxu0
      %v6543 = vadd.f32 %v6003, %v6542
      %6544 = vmatprep.mubr.f32.mxu0 0.0
      %6545 = vmatmul.mubr.f32.gmra.mrb[0].mxu0 %v5892
      %v6546 = vpop.f32.mrb[0].mxu0
      %v6547 = vadd.f32 %v5999, %v6546
      %v6548 = vpop.f32.mrb[0].mxu0
      %v6549 = vadd.f32 %v6003, %v6548
      %6550 = vmatprep.mubr.f32.mxu0 0.0
      %6551 = vmatmul.mubr.f32.gmra.mrb[0].mxu0 %v5893
      %v6552 = vpop.f32.mrb[0].mxu0
      %v6553 = vadd.f32 %v5999, %v6552
      %v6554 = vpop.f32.mrb[0].mxu0
      %v6555 = vadd.f32 %v6003, %v6554
      %6556 = vmatprep.mubr.f32.mxu0 0.0
      %6557 = vmatmul.mubr.f32.gmra.mrb[0].mxu0 %v5894
      %v6558 = vpop.f32.mrb[0].mxu0
      %v6559 = vadd.f32 %v5999, %v6558
      %v6560 = vpop.f32.mrb[0].mxu0
      %v6561 = vadd.f32 %v6003, %v6560
      %6562 = vmatprep.mubr.f32.mxu0 0.0
      %6563 = vmatmul.mubr.f32.gmra.mrb[0].mxu0 %v5895
      %v6564 = vpop.f32.mrb[0].mxu0
      %v6565 = vadd.f32 %v5999, %v6564
      %v6566 = vpop.f32.mrb[0].mxu0
      %v6567 = vadd.f32 %v6003, %v6566
      %6568 = vmatprep.mubr.f32.mxu0 0.0
      %6569 = vmatmul.mubr.f32.gmra.mrb[0].mxu0 %v5896
      %v6570 = vpop.f32.mrb[0].mxu0
      %v6571 = vadd.f32 %v5999, %v6570
      %v6572 = vpop.f32.mrb[0].mxu0
      %v6573 = vadd.f32 %v6003, %v6572
      %6574 = vmatprep.mubr.f32.mxu0 0.0
      %6575 = vmatmul.mubr.f32.gmra.mrb[0].mxu0 %v5897
      %v6576 = vpop.f32.mrb[0].mxu0
      %v6577 = vadd.f32 %v5999, %v6576
      %v6578 = vpop.f32.mrb[0].mxu0
      %v6579 = vadd.f32 %v6003, %v6578
      %6580 = vmatprep.mubr.f32.mxu0 0.0
      %6581 = vmatmul.mubr.f32.gmra.mrb[0].mxu0 %v5898
      %v6582 = vpop.f32.mrb[0].mxu0
      %v6583 = vadd.f32 %v5999, %v6582
      %v6584 = vpop.f32.mrb[0].mxu0
      %v6585 = vadd.f32 %v6003, %v6584
      %6586 = vmatprep.mubr.f32.mxu0 0.0
      %6587 = vmatmul.mubr.f32.gmra.mrb[0].mxu0 %v5899
      %v6588 = vpop.f32.mrb[0].mxu0
      %v6589 = vadd.f32 %v5999, %v6588
      %v6590 = vpop.f32.mrb[0].mxu0
      %v6591 = vadd.f32 %v6003, %v6590
      %6592 = vmatprep.mubr.f32.mxu0 0.0
      %6593 = vmatmul.mubr.f32.gmra.mrb[0].mxu0 %v5900
      %v6594 = vpop.f32.mrb[0].mxu0
      %v6595 = vadd.f32 %v5999, %v6594
      %v6596 = vpop.f32.mrb[0].mxu0
      %v6597 = vadd.f32 %v6003, %v6596
      %6598 = vmatprep.mubr.f32.mxu0 0.0
      %6599 = vmatmul.mubr.f32.gmra.mrb[0].mxu0 %v5901
      %v6600 = vpop.f32.mrb[0].mxu0
      %v6601 = vadd.f32 %v5999, %v6600
      %v6602 = vpop.f32.mrb[0].mxu0
      %v6603 = vadd.f32 %v6003, %v6602
      %6604 = vmatprep.mubr.f32.mxu0 0.0
      %6605 = vmatmul.mubr.f32.gmra.mrb[0].mxu0 %v5902
      %v6606 = vpop.f32.mrb[0].mxu0
      %v6607 = vadd.f32 %v5999, %v6606
      %v6608 = vpop.f32.mrb[0].mxu0
      %v6609 = vadd.f32 %v6003, %v6608
      %6610 = vdwg.mxu0
      %6611 = vmatprep.subr.mxu0 0.0
      %6612 = vmatpush1.msra.mxu0 %v5907
      %6613 = vmatprep.subr.mxu0 0.0
      %6614 = vmatpush1.msra.mxu0 %v5912
      %6615 = vmatprep.subr.mxu0 0.0
      %6616 = vmatpush1.msra.mxu0 %v5917
      %6617 = vmatprep.subr.mxu0 0.0
      %6618 = vmatpush1.msra.mxu0 %v5922
      %6619 = vmatprep.subr.mxu0 0.0
      %6620 = vmatpush1.msra.mxu0 %v5927
      %6621 = vmatprep.subr.mxu0 0.0
      %6622 = vmatpush1.msra.mxu0 %v5932
      %6623 = vmatprep.subr.mxu0 0.0
      %6624 = vmatpush1.msra.mxu0 %v5937
      %6625 = vmatprep.subr.mxu0 0.0
      %6626 = vmatpush1.msra.mxu0 %v5942
      %6627 = vmatprep.subr.mxu0 0.0
      %6628 = vmatpush1.msra.mxu0 %v5947
      %6629 = vmatprep.subr.mxu0 0.0
      %6630 = vmatpush1.msra.mxu0 %v5952
      %6631 = vmatprep.subr.mxu0 0.0
      %6632 = vmatpush1.msra.mxu0 %v5957
      %6633 = vmatprep.subr.mxu0 0.0
      %6634 = vmatpush1.msra.mxu0 %v5962
      %6635 = vmatprep.subr.mxu0 0.0
      %6636 = vmatpush1.msra.mxu0 %v5967
      %6637 = vmatprep.subr.mxu0 0.0
      %6638 = vmatpush1.msra.mxu0 %v5972
      %6639 = vmatprep.subr.mxu0 0.0
      %6640 = vmatpush1.msra.mxu0 %v5977
      %6641 = vmatprep.subr.mxu0 0.0
      %6642 = vmatpush1.msra.mxu0 %v5982
      %6643 = vmatprep.subr.mxu0 0.0
      %6644 = vmatpush1.msra.mxu0 0.0
      %6645 = vmatprep.subr.mxu0 0.0
      %6646 = vmatpush1.msra.mxu0 0.0
      %6647 = vmatprep.subr.mxu0 0.0
      %6648 = vmatpush1.msra.mxu0 0.0
      %6649 = vmatprep.subr.mxu0 0.0
      %6650 = vmatpush1.msra.mxu0 0.0
      %6651 = vmatprep.subr.mxu0 0.0
      %6652 = vmatpush1.msra.mxu0 0.0
      %6653 = vmatprep.subr.mxu0 0.0
      %6654 = vmatpush1.msra.mxu0 0.0
      %6655 = vmatprep.subr.mxu0 0.0
      %6656 = vmatpush1.msra.mxu0 0.0
      %6657 = vmatprep.subr.mxu0 0.0
      %6658 = vmatpush1.msra.mxu0 0.0
      %6659 = vmatprep.subr.mxu0 0.0
      %6660 = vmatpush1.msra.mxu0 0.0
      %6661 = vmatprep.subr.mxu0 0.0
      %6662 = vmatpush1.msra.mxu0 0.0
      %6663 = vmatprep.subr.mxu0 0.0
      %6664 = vmatpush1.msra.mxu0 0.0
      %6665 = vmatprep.subr.mxu0 0.0
      %6666 = vmatpush1.msra.mxu0 0.0
      %6667 = vmatprep.subr.mxu0 0.0
      %6668 = vmatpush1.msra.mxu0 0.0
      %6669 = vmatprep.subr.mxu0 0.0
      %6670 = vmatpush1.msra.mxu0 0.0
      %6671 = vmatprep.subr.mxu0 0.0
      %6672 = vmatpush1.msra.mxu0 0.0
      %6673 = vmatprep.subr.mxu0 0.0
      %6674 = vmatpush1.msra.mxu0 0.0
      %6675 = vmatprep.mubr.f32.mxu0 0.0
      %6676 = vmatmul.mubr.f32.gmra.mrb[0].mxu0 %v5864
      %v6677 = vpop.f32.mrb[0].mxu0
      %v6678 = vadd.f32 %v6007, %v6677
      %v6679 = vpop.f32.mrb[0].mxu0
      %6680 = vmatprep.mubr.f32.mxu0 0.0
      %6681 = vmatmul.mubr.f32.gmra.mrb[0].mxu0 %v5865
      %v6682 = vpop.f32.mrb[0].mxu0
      %v6683 = vadd.f32 %v6007, %v6682
      %v6684 = vpop.f32.mrb[0].mxu0
      %6685 = vmatprep.mubr.f32.mxu0 0.0
      %6686 = vmatmul.mubr.f32.gmra.mrb[0].mxu0 %v5866
      %v6687 = vpop.f32.mrb[0].mxu0
      %v6688 = vadd.f32 %v6007, %v6687
      %v6689 = vpop.f32.mrb[0].mxu0
      %6690 = vmatprep.mubr.f32.mxu0 0.0
      %6691 = vmatmul.mubr.f32.gmra.mrb[0].mxu0 %v5867
      %v6692 = vpop.f32.mrb[0].mxu0
      %v6693 = vadd.f32 %v6007, %v6692
      %v6694 = vpop.f32.mrb[0].mxu0
      %6695 = vmatprep.mubr.f32.mxu0 0.0
      %6696 = vmatmul.mubr.f32.gmra.mrb[0].mxu0 %v5868
      %v6697 = vpop.f32.mrb[0].mxu0
      %v6698 = vadd.f32 %v6007, %v6697
      %v6699 = vpop.f32.mrb[0].mxu0
      %6700 = vmatprep.mubr.f32.mxu0 0.0
      %6701 = vmatmul.mubr.f32.gmra.mrb[0].mxu0 %v5869
      %v6702 = vpop.f32.mrb[0].mxu0
      %v6703 = vadd.f32 %v6007, %v6702
      %v6704 = vpop.f32.mrb[0].mxu0
      %6705 = vmatprep.mubr.f32.mxu0 0.0
      %6706 = vmatmul.mubr.f32.gmra.mrb[0].mxu0 %v5870
      %v6707 = vpop.f32.mrb[0].mxu0
      %v6708 = vadd.f32 %v6007, %v6707
      %v6709 = vpop.f32.mrb[0].mxu0
      %6710 = vmatprep.mubr.f32.mxu0 0.0
      %6711 = vmatmul.mubr.f32.gmra.mrb[0].mxu0 %v5871
      %v6712 = vpop.f32.mrb[0].mxu0
      %v6713 = vadd.f32 %v6007, %v6712
      %v6714 = vpop.f32.mrb[0].mxu0
      %6715 = vmatprep.mubr.f32.mxu0 0.0
      %6716 = vmatmul.mubr.f32.gmra.mrb[0].mxu0 %v5872
      %v6717 = vpop.f32.mrb[0].mxu0
      %v6718 = vadd.f32 %v6007, %v6717
      %v6719 = vpop.f32.mrb[0].mxu0
      %6720 = vmatprep.mubr.f32.mxu0 0.0
      %6721 = vmatmul.mubr.f32.gmra.mrb[0].mxu0 %v5873
      %v6722 = vpop.f32.mrb[0].mxu0
      %v6723 = vadd.f32 %v6007, %v6722
      %v6724 = vpop.f32.mrb[0].mxu0
      %6725 = vmatprep.mubr.f32.mxu0 0.0
      %6726 = vmatmul.mubr.f32.gmra.mrb[0].mxu0 %v5874
      %v6727 = vpop.f32.mrb[0].mxu0
      %v6728 = vadd.f32 %v6007, %v6727
      %v6729 = vpop.f32.mrb[0].mxu0
      %6730 = vmatprep.mubr.f32.mxu0 0.0
      %6731 = vmatmul.mubr.f32.gmra.mrb[0].mxu0 %v5875
      %v6732 = vpop.f32.mrb[0].mxu0
      %v6733 = vadd.f32 %v6007, %v6732
      %v6734 = vpop.f32.mrb[0].mxu0
      %6735 = vmatprep.mubr.f32.mxu0 0.0
      %6736 = vmatmul.mubr.f32.gmra.mrb[0].mxu0 %v5876
      %v6737 = vpop.f32.mrb[0].mxu0
      %v6738 = vadd.f32 %v6007, %v6737
      %v6739 = vpop.f32.mrb[0].mxu0
      %6740 = vmatprep.mubr.f32.mxu0 0.0
      %6741 = vmatmul.mubr.f32.gmra.mrb[0].mxu0 %v5877
      %v6742 = vpop.f32.mrb[0].mxu0
      %v6743 = vadd.f32 %v6007, %v6742
      %v6744 = vpop.f32.mrb[0].mxu0
      %6745 = vmatprep.mubr.f32.mxu0 0.0
      %6746 = vmatmul.mubr.f32.gmra.mrb[0].mxu0 %v5878
      %v6747 = vpop.f32.mrb[0].mxu0
      %v6748 = vadd.f32 %v6007, %v6747
      %v6749 = vpop.f32.mrb[0].mxu0
      %6750 = vmatprep.mubr.f32.mxu0 0.0
      %6751 = vmatmul.mubr.f32.gmra.mrb[0].mxu0 %v5879
      %v6752 = vpop.f32.mrb[0].mxu0
      %v6753 = vadd.f32 %v6007, %v6752
      %v6754 = vpop.f32.mrb[0].mxu0
      %6755 = vmatprep.mubr.f32.mxu0 0.0
      %6756 = vmatmul.mubr.f32.gmra.mrb[0].mxu0 %v5880
      %v6757 = vpop.f32.mrb[0].mxu0
      %v6758 = vadd.f32 %v6007, %v6757
      %v6759 = vpop.f32.mrb[0].mxu0
      %6760 = vmatprep.mubr.f32.mxu0 0.0
      %6761 = vmatmul.mubr.f32.gmra.mrb[0].mxu0 %v5881
      %v6762 = vpop.f32.mrb[0].mxu0
      %v6763 = vadd.f32 %v6007, %v6762
      %v6764 = vpop.f32.mrb[0].mxu0
      %6765 = vmatprep.mubr.f32.mxu0 0.0
      %6766 = vmatmul.mubr.f32.gmra.mrb[0].mxu0 %v5882
      %v6767 = vpop.f32.mrb[0].mxu0
      %v6768 = vadd.f32 %v6007, %v6767
      %v6769 = vpop.f32.mrb[0].mxu0
      %6770 = vmatprep.mubr.f32.mxu0 0.0
      %6771 = vmatmul.mubr.f32.gmra.mrb[0].mxu0 %v5883
      %v6772 = vpop.f32.mrb[0].mxu0
      %v6773 = vadd.f32 %v6007, %v6772
      %v6774 = vpop.f32.mrb[0].mxu0
      %6775 = vmatprep.mubr.f32.mxu0 0.0
      %6776 = vmatmul.mubr.f32.gmra.mrb[0].mxu0 %v5884
      %v6777 = vpop.f32.mrb[0].mxu0
      %v6778 = vadd.f32 %v6007, %v6777
      %v6779 = vpop.f32.mrb[0].mxu0
      %6780 = vmatprep.mubr.f32.mxu0 0.0
      %6781 = vmatmul.mubr.f32.gmra.mrb[0].mxu0 %v5885
      %v6782 = vpop.f32.mrb[0].mxu0
      %v6783 = vadd.f32 %v6007, %v6782
      %v6784 = vpop.f32.mrb[0].mxu0
      %6785 = vmatprep.mubr.f32.mxu0 0.0
      %6786 = vmatmul.mubr.f32.gmra.mrb[0].mxu0 %v5886
      %v6787 = vpop.f32.mrb[0].mxu0
      %v6788 = vadd.f32 %v6007, %v6787
      %v6789 = vpop.f32.mrb[0].mxu0
      %6790 = vmatprep.mubr.f32.mxu0 0.0
      %6791 = vmatmul.mubr.f32.gmra.mrb[0].mxu0 %v5887
      %v6792 = vpop.f32.mrb[0].mxu0
      %v6793 = vadd.f32 %v6007, %v6792
      %v6794 = vpop.f32.mrb[0].mxu0
      %6795 = vmatprep.mubr.f32.mxu0 0.0
      %6796 = vmatmul.mubr.f32.gmra.mrb[0].mxu0 %v5888
      %v6797 = vpop.f32.mrb[0].mxu0
      %v6798 = vadd.f32 %v6007, %v6797
      %v6799 = vpop.f32.mrb[0].mxu0
      %6800 = vmatprep.mubr.f32.mxu0 0.0
      %6801 = vmatmul.mubr.f32.gmra.mrb[0].mxu0 %v5889
      %v6802 = vpop.f32.mrb[0].mxu0
      %v6803 = vadd.f32 %v6007, %v6802
      %v6804 = vpop.f32.mrb[0].mxu0
      %6805 = vmatprep.mubr.f32.mxu0 0.0
      %6806 = vmatmul.mubr.f32.gmra.mrb[0].mxu0 %v5890
      %v6807 = vpop.f32.mrb[0].mxu0
      %v6808 = vadd.f32 %v6007, %v6807
      %v6809 = vpop.f32.mrb[0].mxu0
      %6810 = vmatprep.mubr.f32.mxu0 0.0
      %6811 = vmatmul.mubr.f32.gmra.mrb[0].mxu0 %v5891
      %v6812 = vpop.f32.mrb[0].mxu0
      %v6813 = vadd.f32 %v6007, %v6812
      %v6814 = vpop.f32.mrb[0].mxu0
      %6815 = vmatprep.mubr.f32.mxu0 0.0
      %6816 = vmatmul.mubr.f32.gmra.mrb[0].mxu0 %v5892
      %v6817 = vpop.f32.mrb[0].mxu0
      %v6818 = vadd.f32 %v6007, %v6817
      %v6819 = vpop.f32.mrb[0].mxu0
      %6820 = vmatprep.mubr.f32.mxu0 0.0
      %6821 = vmatmul.mubr.f32.gmra.mrb[0].mxu0 %v5893
      %v6822 = vpop.f32.mrb[0].mxu0
      %v6823 = vadd.f32 %v6007, %v6822
      %v6824 = vpop.f32.mrb[0].mxu0
      %6825 = vmatprep.mubr.f32.mxu0 0.0
      %6826 = vmatmul.mubr.f32.gmra.mrb[0].mxu0 %v5894
      %v6827 = vpop.f32.mrb[0].mxu0
      %v6828 = vadd.f32 %v6007, %v6827
      %v6829 = vpop.f32.mrb[0].mxu0
      %6830 = vmatprep.mubr.f32.mxu0 0.0
      %6831 = vmatmul.mubr.f32.gmra.mrb[0].mxu0 %v5895
      %v6832 = vpop.f32.mrb[0].mxu0
      %v6833 = vadd.f32 %v6007, %v6832
      %v6834 = vpop.f32.mrb[0].mxu0
      %6835 = vmatprep.mubr.f32.mxu0 0.0
      %6836 = vmatmul.mubr.f32.gmra.mrb[0].mxu0 %v5896
      %v6837 = vpop.f32.mrb[0].mxu0
      %v6838 = vadd.f32 %v6007, %v6837
      %v6839 = vpop.f32.mrb[0].mxu0
      %6840 = vmatprep.mubr.f32.mxu0 0.0
      %6841 = vmatmul.mubr.f32.gmra.mrb[0].mxu0 %v5897
      %v6842 = vpop.f32.mrb[0].mxu0
      %v6843 = vadd.f32 %v6007, %v6842
      %v6844 = vpop.f32.mrb[0].mxu0
      %6845 = vmatprep.mubr.f32.mxu0 0.0
      %6846 = vmatmul.mubr.f32.gmra.mrb[0].mxu0 %v5898
      %v6847 = vpop.f32.mrb[0].mxu0
      %v6848 = vadd.f32 %v6007, %v6847
      %v6849 = vpop.f32.mrb[0].mxu0
      %6850 = vmatprep.mubr.f32.mxu0 0.0
      %6851 = vmatmul.mubr.f32.gmra.mrb[0].mxu0 %v5899
      %v6852 = vpop.f32.mrb[0].mxu0
      %v6853 = vadd.f32 %v6007, %v6852
      %v6854 = vpop.f32.mrb[0].mxu0
      %6855 = vmatprep.mubr.f32.mxu0 0.0
      %6856 = vmatmul.mubr.f32.gmra.mrb[0].mxu0 %v5900
      %v6857 = vpop.f32.mrb[0].mxu0
      %v6858 = vadd.f32 %v6007, %v6857
      %v6859 = vpop.f32.mrb[0].mxu0
      %6860 = vmatprep.mubr.f32.mxu0 0.0
      %6861 = vmatmul.mubr.f32.gmra.mrb[0].mxu0 %v5901
      %v6862 = vpop.f32.mrb[0].mxu0
      %v6863 = vadd.f32 %v6007, %v6862
      %v6864 = vpop.f32.mrb[0].mxu0
      %6865 = vmatprep.mubr.f32.mxu0 0.0
      %6866 = vmatmul.mubr.f32.gmra.mrb[0].mxu0 %v5902
      %v6867 = vpop.f32.mrb[0].mxu0
      %v6868 = vadd.f32 %v6007, %v6867
      %v6869 = vpop.f32.mrb[0].mxu0
      %6870 = vdwg.mxu0
      %6871 = vst [vmem:[%s264] sm:$0xff] %v6080
      %6872 = vst [vmem:[%s264 + $0x8] sm:$0xff] %v6082
      %6873 = vst [vmem:[%s264 + $0x10] sm:$0xff] %v6379
      %6874 = vst [vmem:[%s264 + $0x18] sm:$0xff] %v6381
      %6875 = vst [vmem:[%s264 + $0x20] sm:$0xff] %v6678
      %6876 = vst [vmem:[%s264 + $0x28] sm:$0xff] %v6086
      %6877 = vst [vmem:[%s264 + $0x30] sm:$0xff] %v6088
      %6878 = vst [vmem:[%s264 + $0x38] sm:$0xff] %v6385
      %6879 = vst [vmem:[%s264 + $0x40] sm:$0xff] %v6387
      %6880 = vst [vmem:[%s264 + $0x48] sm:$0xff] %v6683
      %6881 = vst [vmem:[%s264 + $0x50] sm:$0xff] %v6092
      %6882 = vst [vmem:[%s264 + $0x58] sm:$0xff] %v6094
      %6883 = vst [vmem:[%s264 + $0x60] sm:$0xff] %v6391
      %6884 = vst [vmem:[%s264 + $0x68] sm:$0xff] %v6393
      %6885 = vst [vmem:[%s264 + $0x70] sm:$0xff] %v6688
      %6886 = vst [vmem:[%s264 + $0x78] sm:$0xff] %v6098
      %6887 = vst [vmem:[%s264 + $0x80] sm:$0xff] %v6100
      %6888 = vst [vmem:[%s264 + $0x88] sm:$0xff] %v6397
      %6889 = vst [vmem:[%s264 + $0x90] sm:$0xff] %v6399
      %6890 = vst [vmem:[%s264 + $0x98] sm:$0xff] %v6693
      %6891 = vst [vmem:[%s264 + $0xa0] sm:$0xff] %v6104
      %6892 = vst [vmem:[%s264 + $0xa8] sm:$0xff] %v6106
      %6893 = vst [vmem:[%s264 + $0xb0] sm:$0xff] %v6403
      %6894 = vst [vmem:[%s264 + $0xb8] sm:$0xff] %v6405
      %6895 = vst [vmem:[%s264 + $0xc0] sm:$0xff] %v6698
      %6896 = vst [vmem:[%s264 + $0xc8] sm:$0xff] %v6110
      %6897 = vst [vmem:[%s264 + $0xd0] sm:$0xff] %v6112
      %6898 = vst [vmem:[%s264 + $0xd8] sm:$0xff] %v6409
      %6899 = vst [vmem:[%s264 + $0xe0] sm:$0xff] %v6411
      %6900 = vst [vmem:[%s264 + $0xe8] sm:$0xff] %v6703
      %6901 = vst [vmem:[%s264 + $0xf0] sm:$0xff] %v6116
      %6902 = vst [vmem:[%s264 + $0xf8] sm:$0xff] %v6118
      %6903 = vst [vmem:[%s264 + $0x100] sm:$0xff] %v6415
      %6904 = vst [vmem:[%s264 + $0x108] sm:$0xff] %v6417
      %6905 = vst [vmem:[%s264 + $0x110] sm:$0xff] %v6708
      %6906 = vst [vmem:[%s264 + $0x118] sm:$0xff] %v6122
      %6907 = vst [vmem:[%s264 + $0x120] sm:$0xff] %v6124
      %6908 = vst [vmem:[%s264 + $0x128] sm:$0xff] %v6421
      %6909 = vst [vmem:[%s264 + $0x130] sm:$0xff] %v6423
      %6910 = vst [vmem:[%s264 + $0x138] sm:$0xff] %v6713
      %6911 = vst [vmem:[%s264 + $0x140] sm:$0xff] %v6128
      %6912 = vst [vmem:[%s264 + $0x148] sm:$0xff] %v6130
      %6913 = vst [vmem:[%s264 + $0x150] sm:$0xff] %v6427
      %6914 = vst [vmem:[%s264 + $0x158] sm:$0xff] %v6429
      %6915 = vst [vmem:[%s264 + $0x160] sm:$0xff] %v6718
      %6916 = vst [vmem:[%s264 + $0x168] sm:$0xff] %v6134
      %6917 = vst [vmem:[%s264 + $0x170] sm:$0xff] %v6136
      %6918 = vst [vmem:[%s264 + $0x178] sm:$0xff] %v6433
      %6919 = vst [vmem:[%s264 + $0x180] sm:$0xff] %v6435
      %6920 = vst [vmem:[%s264 + $0x188] sm:$0xff] %v6723
      %6921 = vst [vmem:[%s264 + $0x190] sm:$0xff] %v6140
      %6922 = vst [vmem:[%s264 + $0x198] sm:$0xff] %v6142
      %6923 = vst [vmem:[%s264 + $0x1a0] sm:$0xff] %v6439
      %6924 = vst [vmem:[%s264 + $0x1a8] sm:$0xff] %v6441
      %6925 = vst [vmem:[%s264 + $0x1b0] sm:$0xff] %v6728
      %6926 = vst [vmem:[%s264 + $0x1b8] sm:$0xff] %v6146
      %6927 = vst [vmem:[%s264 + $0x1c0] sm:$0xff] %v6148
      %6928 = vst [vmem:[%s264 + $0x1c8] sm:$0xff] %v6445
      %6929 = vst [vmem:[%s264 + $0x1d0] sm:$0xff] %v6447
      %6930 = vst [vmem:[%s264 + $0x1d8] sm:$0xff] %v6733
      %6931 = vst [vmem:[%s264 + $0x1e0] sm:$0xff] %v6152
      %6932 = vst [vmem:[%s264 + $0x1e8] sm:$0xff] %v6154
      %6933 = vst [vmem:[%s264 + $0x1f0] sm:$0xff] %v6451
      %6934 = vst [vmem:[%s264 + $0x1f8] sm:$0xff] %v6453
      %6935 = vst [vmem:[%s264 + $0x200] sm:$0xff] %v6738
      %6936 = vst [vmem:[%s264 + $0x208] sm:$0xff] %v6158
      %6937 = vst [vmem:[%s264 + $0x210] sm:$0xff] %v6160
      %6938 = vst [vmem:[%s264 + $0x218] sm:$0xff] %v6457
      %6939 = vst [vmem:[%s264 + $0x220] sm:$0xff] %v6459
      %6940 = vst [vmem:[%s264 + $0x228] sm:$0xff] %v6743
      %6941 = vst [vmem:[%s264 + $0x230] sm:$0xff] %v6164
      %6942 = vst [vmem:[%s264 + $0x238] sm:$0xff] %v6166
      %6943 = vst [vmem:[%s264 + $0x240] sm:$0xff] %v6463
      %6944 = vst [vmem:[%s264 + $0x248] sm:$0xff] %v6465
      %6945 = vst [vmem:[%s264 + $0x250] sm:$0xff] %v6748
      %6946 = vst [vmem:[%s264 + $0x258] sm:$0xff] %v6170
      %6947 = vst [vmem:[%s264 + $0x260] sm:$0xff] %v6172
      %6948 = vst [vmem:[%s264 + $0x268] sm:$0xff] %v6469
      %6949 = vst [vmem:[%s264 + $0x270] sm:$0xff] %v6471
      %6950 = vst [vmem:[%s264 + $0x278] sm:$0xff] %v6753
      %6951 = vst [vmem:[%s264 + $0x280] sm:$0xff] %v6176
      %6952 = vst [vmem:[%s264 + $0x288] sm:$0xff] %v6178
      %6953 = vst [vmem:[%s264 + $0x290] sm:$0xff] %v6475
      %6954 = vst [vmem:[%s264 + $0x298] sm:$0xff] %v6477
      %6955 = vst [vmem:[%s264 + $0x2a0] sm:$0xff] %v6758
      %6956 = vst [vmem:[%s264 + $0x2a8] sm:$0xff] %v6182
      %6957 = vst [vmem:[%s264 + $0x2b0] sm:$0xff] %v6184
      %6958 = vst [vmem:[%s264 + $0x2b8] sm:$0xff] %v6481
      %6959 = vst [vmem:[%s264 + $0x2c0] sm:$0xff] %v6483
      %6960 = vst [vmem:[%s264 + $0x2c8] sm:$0xff] %v6763
      %6961 = vst [vmem:[%s264 + $0x2d0] sm:$0xff] %v6188
      %6962 = vst [vmem:[%s264 + $0x2d8] sm:$0xff] %v6190
      %6963 = vst [vmem:[%s264 + $0x2e0] sm:$0xff] %v6487
      %6964 = vst [vmem:[%s264 + $0x2e8] sm:$0xff] %v6489
      %6965 = vst [vmem:[%s264 + $0x2f0] sm:$0xff] %v6768
      %6966 = vst [vmem:[%s264 + $0x2f8] sm:$0xff] %v6194
      %6967 = vst [vmem:[%s264 + $0x300] sm:$0xff] %v6196
      %6968 = vst [vmem:[%s264 + $0x308] sm:$0xff] %v6493
      %6969 = vst [vmem:[%s264 + $0x310] sm:$0xff] %v6495
      %6970 = vst [vmem:[%s264 + $0x318] sm:$0xff] %v6773
      %6971 = vst [vmem:[%s264 + $0x320] sm:$0xff] %v6200
      %6972 = vst [vmem:[%s264 + $0x328] sm:$0xff] %v6202
      %6973 = vst [vmem:[%s264 + $0x330] sm:$0xff] %v6499
      %6974 = vst [vmem:[%s264 + $0x338] sm:$0xff] %v6501
      %6975 = vst [vmem:[%s264 + $0x340] sm:$0xff] %v6778
      %6976 = vst [vmem:[%s264 + $0x348] sm:$0xff] %v6206
      %6977 = vst [vmem:[%s264 + $0x350] sm:$0xff] %v6208
      %6978 = vst [vmem:[%s264 + $0x358] sm:$0xff] %v6505
      %6979 = vst [vmem:[%s264 + $0x360] sm:$0xff] %v6507
      %6980 = vst [vmem:[%s264 + $0x368] sm:$0xff] %v6783
      %6981 = vst [vmem:[%s264 + $0x370] sm:$0xff] %v6212
      %6982 = vst [vmem:[%s264 + $0x378] sm:$0xff] %v6214
      %6983 = vst [vmem:[%s264 + $0x380] sm:$0xff] %v6511
      %6984 = vst [vmem:[%s264 + $0x388] sm:$0xff] %v6513
      %6985 = vst [vmem:[%s264 + $0x390] sm:$0xff] %v6788
      %6986 = vst [vmem:[%s264 + $0x398] sm:$0xff] %v6218
      %6987 = vst [vmem:[%s264 + $0x3a0] sm:$0xff] %v6220
      %6988 = vst [vmem:[%s264 + $0x3a8] sm:$0xff] %v6517
      %6989 = vst [vmem:[%s264 + $0x3b0] sm:$0xff] %v6519
      %6990 = vst [vmem:[%s264 + $0x3b8] sm:$0xff] %v6793
      %6991 = vst [vmem:[%s264 + $0x3c0] sm:$0xff] %v6224
      %6992 = vst [vmem:[%s264 + $0x3c8] sm:$0xff] %v6226
      %6993 = vst [vmem:[%s264 + $0x3d0] sm:$0xff] %v6523
      %6994 = vst [vmem:[%s264 + $0x3d8] sm:$0xff] %v6525
      %6995 = vst [vmem:[%s264 + $0x3e0] sm:$0xff] %v6798
      %6996 = vst [vmem:[%s264 + $0x3e8] sm:$0xff] %v6230
      %6997 = vst [vmem:[%s264 + $0x3f0] sm:$0xff] %v6232
      %6998 = vst [vmem:[%s264 + $0x3f8] sm:$0xff] %v6529
      %6999 = vst [vmem:[%s264 + $0x400] sm:$0xff] %v6531
      %7000 = vst [vmem:[%s264 + $0x408] sm:$0xff] %v6803
      %7001 = vst [vmem:[%s264 + $0x410] sm:$0xff] %v6236
      %7002 = vst [vmem:[%s264 + $0x418] sm:$0xff] %v6238
      %7003 = vst [vmem:[%s264 + $0x420] sm:$0xff] %v6535
      %7004 = vst [vmem:[%s264 + $0x428] sm:$0xff] %v6537
      %7005 = vst [vmem:[%s264 + $0x430] sm:$0xff] %v6808
      %7006 = vst [vmem:[%s264 + $0x438] sm:$0xff] %v6242
      %7007 = vst [vmem:[%s264 + $0x440] sm:$0xff] %v6244
      %7008 = vst [vmem:[%s264 + $0x448] sm:$0xff] %v6541
      %7009 = vst [vmem:[%s264 + $0x450] sm:$0xff] %v6543
      %7010 = vst [vmem:[%s264 + $0x458] sm:$0xff] %v6813
      %7011 = vst [vmem:[%s264 + $0x460] sm:$0xff] %v6248
      %7012 = vst [vmem:[%s264 + $0x468] sm:$0xff] %v6250
      %7013 = vst [vmem:[%s264 + $0x470] sm:$0xff] %v6547
      %7014 = vst [vmem:[%s264 + $0x478] sm:$0xff] %v6549
      %7015 = vst [vmem:[%s264 + $0x480] sm:$0xff] %v6818
      %7016 = vst [vmem:[%s264 + $0x488] sm:$0xff] %v6254
      %7017 = vst [vmem:[%s264 + $0x490] sm:$0xff] %v6256
      %7018 = vst [vmem:[%s264 + $0x498] sm:$0xff] %v6553
      %7019 = vst [vmem:[%s264 + $0x4a0] sm:$0xff] %v6555
      %7020 = vst [vmem:[%s264 + $0x4a8] sm:$0xff] %v6823
      %7021 = vst [vmem:[%s264 + $0x4b0] sm:$0xff] %v6260
      %7022 = vst [vmem:[%s264 + $0x4b8] sm:$0xff] %v6262
      %7023 = vst [vmem:[%s264 + $0x4c0] sm:$0xff] %v6559
      %7024 = vst [vmem:[%s264 + $0x4c8] sm:$0xff] %v6561
      %7025 = vst [vmem:[%s264 + $0x4d0] sm:$0xff] %v6828
      %7026 = vst [vmem:[%s264 + $0x4d8] sm:$0xff] %v6266
      %7027 = vst [vmem:[%s264 + $0x4e0] sm:$0xff] %v6268
      %7028 = vst [vmem:[%s264 + $0x4e8] sm:$0xff] %v6565
      %7029 = vst [vmem:[%s264 + $0x4f0] sm:$0xff] %v6567
      %7030 = vst [vmem:[%s264 + $0x4f8] sm:$0xff] %v6833
      %7031 = vst [vmem:[%s264 + $0x500] sm:$0xff] %v6272
      %7032 = vst [vmem:[%s264 + $0x508] sm:$0xff] %v6274
      %7033 = vst [vmem:[%s264 + $0x510] sm:$0xff] %v6571
      %7034 = vst [vmem:[%s264 + $0x518] sm:$0xff] %v6573
      %7035 = vst [vmem:[%s264 + $0x520] sm:$0xff] %v6838
      %7036 = vst [vmem:[%s264 + $0x528] sm:$0xff] %v6278
      %7037 = vst [vmem:[%s264 + $0x530] sm:$0xff] %v6280
      %7038 = vst [vmem:[%s264 + $0x538] sm:$0xff] %v6577
      %7039 = vst [vmem:[%s264 + $0x540] sm:$0xff] %v6579
      %7040 = vst [vmem:[%s264 + $0x548] sm:$0xff] %v6843
      %7041 = vst [vmem:[%s264 + $0x550] sm:$0xff] %v6284
      %7042 = vst [vmem:[%s264 + $0x558] sm:$0xff] %v6286
      %7043 = vst [vmem:[%s264 + $0x560] sm:$0xff] %v6583
      %7044 = vst [vmem:[%s264 + $0x568] sm:$0xff] %v6585
      %7045 = vst [vmem:[%s264 + $0x570] sm:$0xff] %v6848
      %7046 = vst [vmem:[%s264 + $0x578] sm:$0xff] %v6290
      %7047 = vst [vmem:[%s264 + $0x580] sm:$0xff] %v6292
      %7048 = vst [vmem:[%s264 + $0x588] sm:$0xff] %v6589
      %7049 = vst [vmem:[%s264 + $0x590] sm:$0xff] %v6591
      %7050 = vst [vmem:[%s264 + $0x598] sm:$0xff] %v6853
      %7051 = vst [vmem:[%s264 + $0x5a0] sm:$0xff] %v6296
      %7052 = vst [vmem:[%s264 + $0x5a8] sm:$0xff] %v6298
      %7053 = vst [vmem:[%s264 + $0x5b0] sm:$0xff] %v6595
      %7054 = vst [vmem:[%s264 + $0x5b8] sm:$0xff] %v6597
      %7055 = vst [vmem:[%s264 + $0x5c0] sm:$0xff] %v6858
      %7056 = vst [vmem:[%s264 + $0x5c8] sm:$0xff] %v6302
      %7057 = vst [vmem:[%s264 + $0x5d0] sm:$0xff] %v6304
      %7058 = vst [vmem:[%s264 + $0x5d8] sm:$0xff] %v6601
      %7059 = vst [vmem:[%s264 + $0x5e0] sm:$0xff] %v6603
      %7060 = vst [vmem:[%s264 + $0x5e8] sm:$0xff] %v6863
      %7061 = vst [vmem:[%s264 + $0x5f0] sm:$0x1f] %v6308
      %7062 = vst [vmem:[%s264 + $0x5f8] sm:$0x1f] %v6310
      %7063 = vst [vmem:[%s264 + $0x600] sm:$0x1f] %v6607
      %7064 = vst [vmem:[%s264 + $0x608] sm:$0x1f] %v6609
      %7065 = vst [vmem:[%s264 + $0x610] sm:$0x1f] %v6868
      %p7066 = scmp.lt.s32.totalorder %s18, 1
      %s7067 = scalar_select %p7066, %s18, 1
      %s7068 = smul.addr %s7067, 195
      %s7069 = smul.addr %s7068, 8
      %s7070 = scalar_lea.vmem %s5, %s7069
      %p7071 = scmp.lt.s32.totalorder %s18, 1
      %s7072 = scalar_select %p7071, %s18, 1
      %s7073 = smul.addr %s7072, 195
      %s7074 = smul.addr %s7073, 8
      %s7075 = scalar_lea.vmem %s6, %s7074
      // Predicated region
      $region41: #{ae_dcase_forward.1} parent=39 // pred_check
        %p7076 = pneg %p146
      $region42: #{ae_dcase_forward.1} parent=39 // pred_check_branch
        %7078 = sbr.rel (%p7076) target = $region44
      $region43: #{ae_dcase_forward.1} parent=39 // pred_region
        _
      $region44: #{ae_dcase_forward.1} parent=39 // pred_fallthru
        _
      // Predicated region
      $region45: #{ae_dcase_forward.1} parent=39 // pred_check
        %p7079 = pneg %p172
      $region46: #{ae_dcase_forward.1} parent=39 // pred_check_branch
        %7081 = sbr.rel (%p7079) target = $region48
      $region47: #{ae_dcase_forward.1} parent=39 // pred_region
        _
      $region48: #{ae_dcase_forward.1} parent=39 // pred_fallthru
        _
    $region40: #{ae_dcase_forward.1} parent=5 // pred_fallthru
      _
    %p7082 = scmp.le.s32.totalorder 2, %s13
    // Predicated region
    $region49: #{ae_dcase_forward.1} parent=5 // pred_check
      %p7083 = pneg %p7082
    $region50: #{ae_dcase_forward.1} parent=5 // pred_check_branch
      %7085 = sbr.rel (%p7083) target = $region52
    $region51: #{ae_dcase_forward.1} parent=5 // pred_region
      %s7086 = ssub.s32 %s13, 2
      // Predicated region
      $region53: #{ae_dcase_forward.1} parent=51 // pred_check
        %p7087 = pneg %p152
      $region54: #{ae_dcase_forward.1} parent=51 // pred_check_branch
        %7089 = sbr.rel (%p7087) target = $region56
      $region55: #{ae_dcase_forward.1} parent=51 // pred_region
        %p7090 = scmp.lt.s32.totalorder %s19, 1
        %s7091 = scalar_select %p7090, %s19, 1
        %s7092 = smul.addr %s7091, 195
        %s7093 = smul.addr %s7092, 8
        %s7094 = scalar_lea.vmem %s5, %s7093
      $region56: #{ae_dcase_forward.1} parent=51 // pred_fallthru
        _
      // Predicated region
      $region57: #{ae_dcase_forward.1} parent=51 // pred_check
        %p7095 = pneg %p178
      $region58: #{ae_dcase_forward.1} parent=51 // pred_check_branch
        %7097 = sbr.rel (%p7095) target = $region60
      $region59: #{ae_dcase_forward.1} parent=51 // pred_region
        %p7098 = scmp.lt.s32.totalorder %s19, 1
        %s7099 = scalar_select %p7098, %s19, 1
        %s7100 = smul.addr %s7099, 195
        %s7101 = smul.addr %s7100, 8
        %s7102 = scalar_lea.vmem %s6, %s7101
      $region60: #{ae_dcase_forward.1} parent=51 // pred_fallthru
        _
    $region52: #{ae_dcase_forward.1} parent=5 // pred_fallthru
      _
  $region6: #{ae_dcase_forward.1} parent=0 // loop_footer
    %s17 = sadd.s32 1, %s13
  $region7: #{ae_dcase_forward.1} parent=0 // loop_footer_branch
    %12 = sbr.rel target = $region3
  $region8: #{ae_dcase_forward.1} parent=0 // loop_exit
    _

</llo_original>
